<compile_context>
chip_gen: v7x
topology: tpu7x:2x2x1
jax: 0.10.0
libtpu: 0.0.40
codegen_flags: <defaults>
</compile_context>

<pallas_src>
import jax
import jax.numpy as jnp
from jax import lax
from jax.experimental import pallas as pl
from jax.experimental.pallas import tpu as pltpu


H1, H2, H3 = 48, 32, 16          # hidden sizes of the three bi-LSTM layers


# ---------------------------------------------------------------------------
# Fused Pallas kernel
# ---------------------------------------------------------------------------
def make_kernel(T, B, D0):
    """Fused 3-layer bidirectional LSTM kernel.

    Weight layout (per direction): W (D, 4H), U (H, 4H), b (1, 4H) with the
    fused-gate order (i, f, o, g) along the last axis; b = b_ih + b_hh.
    """

    def cell(pre, h, c, u, H):
        # pre: (B, 4H) precomputed x-projection (+bias) for this time step.
        pre = pre + jnp.dot(h, u, preferred_element_type=jnp.float32)
        sig = jax.nn.sigmoid(pre[:, : 3 * H])      # i, f, o in one EUP pass
        i_g = sig[:, :H]
        f_g = sig[:, H:2 * H]
        o_g = sig[:, 2 * H:3 * H]
        g_g = jnp.tanh(pre[:, 3 * H:])
        c_new = f_g * c + i_g * g_g
        h_new = o_g * jnp.tanh(c_new)
        return h_new, c_new

    def kernel(x_ref,
               w1f_ref, u1f_ref, b1f_ref, w1b_ref, u1b_ref, b1b_ref,
               w2f_ref, u2f_ref, b2f_ref, w2b_ref, u2b_ref, b2b_ref,
               w3b_ref, u3b_ref, b3b_ref,
               out_ref,
               xw1f, xw1b, a1f, a1b,
               xw2f, xw2b, a2f, a2b,
               xw3b):
        # ------------------------- layer 1 (bi) -------------------------
        x = x_ref[...]                                        # (T*B, D0)
        xw1f[...] = jnp.dot(x, w1f_ref[...],
                            preferred_element_type=jnp.float32) + b1f_ref[...]
        xw1b[...] = jnp.dot(x, w1b_ref[...],
                            preferred_element_type=jnp.float32) + b1b_ref[...]
        u1f = u1f_ref[...]
        u1b = u1b_ref[...]

        def step1(t, carry):
            h_f, c_f, h_b, c_b = carry
            tf = pl.multiple_of(t * B, B)
            tb = pl.multiple_of((T - 1 - t) * B, B)
            h_f, c_f = cell(xw1f[pl.ds(tf, B), :], h_f, c_f, u1f, H1)
            h_b, c_b = cell(xw1b[pl.ds(tb, B), :], h_b, c_b, u1b, H1)
            # inter-layer ReLU fused into the store (raw h never needed)
            a1f[pl.ds(tf, B), :] = jnp.maximum(h_f, 0.0)
            a1b[pl.ds(tb, B), :] = jnp.maximum(h_b, 0.0)
            return h_f, c_f, h_b, c_b

        z1 = jnp.zeros((B, H1), jnp.float32)
        lax.fori_loop(0, T, step1, (z1, z1, z1, z1), unroll=True)

        # ------------------------- layer 2 (bi) -------------------------
        # Input is concat([fwd, bwd], -1); keep halves separate and split the
        # rows of W2 instead of concatenating activations (no lane shuffles).
        xf = a1f[...]
        xb = a1b[...]
        w2f = w2f_ref[...]
        w2b = w2b_ref[...]
        xw2f[...] = (jnp.dot(xf, w2f[:H1, :], preferred_element_type=jnp.float32)
                     + jnp.dot(xb, w2f[H1:, :], preferred_element_type=jnp.float32)
                     + b2f_ref[...])
        xw2b[...] = (jnp.dot(xf, w2b[:H1, :], preferred_element_type=jnp.float32)
                     + jnp.dot(xb, w2b[H1:, :], preferred_element_type=jnp.float32)
                     + b2b_ref[...])
        u2f = u2f_ref[...]
        u2b = u2b_ref[...]

        def step2(t, carry):
            h_f, c_f, h_b, c_b = carry
            tf = pl.multiple_of(t * B, B)
            tb = pl.multiple_of((T - 1 - t) * B, B)
            h_f, c_f = cell(xw2f[pl.ds(tf, B), :], h_f, c_f, u2f, H2)
            h_b, c_b = cell(xw2b[pl.ds(tb, B), :], h_b, c_b, u2b, H2)
            a2f[pl.ds(tf, B), :] = jnp.maximum(h_f, 0.0)
            a2b[pl.ds(tb, B), :] = jnp.maximum(h_b, 0.0)
            return h_f, c_f, h_b, c_b

        z2 = jnp.zeros((B, H2), jnp.float32)
        lax.fori_loop(0, T, step2, (z2, z2, z2, z2), unroll=True)

        # -------- layer 3: only the backward direction is consumed --------
        xf = a2f[...]
        xb = a2b[...]
        w3b = w3b_ref[...]
        xw3b[...] = (jnp.dot(xf, w3b[:H2, :], preferred_element_type=jnp.float32)
                     + jnp.dot(xb, w3b[H2:, :], preferred_element_type=jnp.float32)
                     + b3b_ref[...])
        u3b = u3b_ref[...]

        def step3(t, carry):
            h_b, c_b = carry
            tb = pl.multiple_of((T - 1 - t) * B, B)
            return cell(xw3b[pl.ds(tb, B), :], h_b, c_b, u3b, H3)

        z3 = jnp.zeros((B, H3), jnp.float32)
        h_last, _ = lax.fori_loop(0, T, step3, (z3, z3), unroll=True)
        out_ref[...] = h_last          # backward final hidden == torch h[-1]

    return kernel


def lstm_forward(x2d, flat_params, *, T, B):
    """x2d: (T*B, D0) time-major flattened batch. Returns (B, H3)."""
    D0 = x2d.shape[-1]
    vmem = pl.BlockSpec(memory_space=pltpu.MemorySpace.VMEM)
    return pl.pallas_call(
        make_kernel(T, B, D0),
        out_shape=jax.ShapeDtypeStruct((B, H3), jnp.float32),
        in_specs=[vmem] * (1 + len(flat_params)),
        out_specs=vmem,
        scratch_shapes=[
            pltpu.VMEM((T * B, 4 * H1), jnp.float32),   # xw1f
            pltpu.VMEM((T * B, 4 * H1), jnp.float32),   # xw1b
            pltpu.VMEM((T * B, H1), jnp.float32),       # a1f (ReLU'd layer-1 out)
            pltpu.VMEM((T * B, H1), jnp.float32),       # a1b
            pltpu.VMEM((T * B, 4 * H2), jnp.float32),   # xw2f
            pltpu.VMEM((T * B, 4 * H2), jnp.float32),   # xw2b
            pltpu.VMEM((T * B, H2), jnp.float32),       # a2f (ReLU'd layer-2 out)
            pltpu.VMEM((T * B, H2), jnp.float32),       # a2b
            pltpu.VMEM((T * B, 4 * H3), jnp.float32),   # xw3b
        ],
    )(x2d, *flat_params)


@jax.jit
def quadruplet_lstm(seq1, seq2, seq3, seq4, params):
    """PyTorch-equivalent forward: returns h[-1] of lstm3 for each sequence."""
    B1, T, D0 = seq1.shape
    x = jnp.concatenate([seq1, seq2, seq3, seq4], axis=0)     # (4B, T, D)
    Bt = 4 * B1
    Bp = ((Bt + 7) // 8) * 8                                   # sublane-align
    if Bp != Bt:
        x = jnp.concatenate(
            [x, jnp.zeros((Bp - Bt, T, D0), x.dtype)], axis=0)
    x2d = jnp.transpose(x, (1, 0, 2)).reshape(T * Bp, D0)      # time-major flat
    out = lstm_forward(x2d, params, T=T, B=Bp)                 # (Bp, H3)
    out = out[:Bt]
    return tuple(out[i * B1:(i + 1) * B1] for i in range(4))


# ---------------------------------------------------------------------------
# Parameter init (mirrors torch.nn.LSTM's uniform(-1/sqrt(H), 1/sqrt(H));
# stored fused per direction: W (D,4H), U (H,4H), b=(b_ih+b_hh) (1,4H),
# fused-gate order (i, f, o, g)).
# ---------------------------------------------------------------------------
def init_dir_params(key, D, H):
    k1, k2, k3, k4 = jax.random.split(key, 4)
    s = 1.0 / float(H) ** 0.5
    w = jax.random.uniform(k1, (D, 4 * H), jnp.float32, -s, s)
    u = jax.random.uniform(k2, (H, 4 * H), jnp.float32, -s, s)
    b_ih = jax.random.uniform(k3, (1, 4 * H), jnp.float32, -s, s)
    b_hh = jax.random.uniform(k4, (1, 4 * H), jnp.float32, -s, s)
    return w, u, b_ih + b_hh


def init_params(key, embedding_dim):
    key, k1f, k1b, k2f, k2b, k3f, k3b = jax.random.split(key, 7)
    flat = []
    flat += list(init_dir_params(k1f, embedding_dim, H1))   # w1f, u1f, b1f
    flat += list(init_dir_params(k1b, embedding_dim, H1))   # w1b, u1b, b1b
    flat += list(init_dir_params(k2f, 2 * H1, H2))          # w2f, u2f, b2f
    flat += list(init_dir_params(k2b, 2 * H1, H2))          # w2b, u2b, b2b
    del k3f  # layer-3 forward direction is never consumed -> not materialized
    flat += list(init_dir_params(k3b, 2 * H2, H3))          # w3b, u3b, b3b
    return tuple(flat)


# ---------------------------------------------------------------------------
# Pure-JAX reference (lax.scan) used only for the in-script correctness check.
# ---------------------------------------------------------------------------
def _lstm_dir_ref(x, w, u, b, H, reverse):
    Bn = x.shape[0]
    xs = jnp.transpose(x, (1, 0, 2))                      # (T, B, D)
    if reverse:
        xs = xs[::-1]

    def step(carry, xt):
        h, c = carry
        pre = (jnp.dot(xt, w, precision=lax.Precision.HIGHEST) + b[0]
               + jnp.dot(h, u, precision=lax.Precision.HIGHEST))
        i = jax.nn.sigmoid(pre[:, :H])
        f = jax.nn.sigmoid(pre[:, H:2 * H])
        o = jax.nn.sigmoid(pre[:, 2 * H:3 * H])
        g = jnp.tanh(pre[:, 3 * H:])
        c = f * c + i * g
        h = o * jnp.tanh(c)
        return (h, c), h

    z = jnp.zeros((Bn, H), jnp.float32)
    (h_fin, _), ys = lax.scan(step, (z, z), xs)
    if reverse:
        ys = ys[::-1]
    return jnp.transpose(ys, (1, 0, 2)), h_fin


def _lstmnet_ref(x, params):
    (w1f, u1f, b1f, w1b, u1b, b1b,
     w2f, u2f, b2f, w2b, u2b, b2b,
     w3b, u3b, b3b) = params
    yf, _ = _lstm_dir_ref(x, w1f, u1f, b1f, H1, False)
    yb, _ = _lstm_dir_ref(x, w1b, u1b, b1b, H1, True)
    x = jax.nn.relu(jnp.concatenate([yf, yb], -1))
    yf, _ = _lstm_dir_ref(x, w2f, u2f, b2f, H2, False)
    yb, _ = _lstm_dir_ref(x, w2b, u2b, b2b, H2, True)
    x = jax.nn.relu(jnp.concatenate([yf, yb], -1))
    _, h = _lstm_dir_ref(x, w3b, u3b, b3b, H3, True)
    return h                                              # == torch h[-1]


if __name__ == "__main__":
    B, T, EMB = 2, 8, 8

    key = jax.random.PRNGKey(0)
    key, kp, k1, k2, k3, k4 = jax.random.split(key, 6)

    params = init_params(kp, EMB)
    seq1 = jax.random.normal(k1, (B, T, EMB), jnp.float32)
    seq2 = jax.random.normal(k2, (B, T, EMB), jnp.float32)
    seq3 = jax.random.normal(k3, (B, T, EMB), jnp.float32)
    seq4 = jax.random.normal(k4, (B, T, EMB), jnp.float32)

    outs = quadruplet_lstm(seq1, seq2, seq3, seq4, params)
    outs = jax.block_until_ready(outs)

    assert all(o.shape == (B, H3) for o in outs)
    assert all(bool(jnp.all(jnp.isfinite(o))) for o in outs)

    # Correctness check against the pure-JAX reference (loose tolerance to
    # absorb MXU f32 multi-pass vs HIGHEST-precision XLA matmul differences).
    refs = [jax.jit(_lstmnet_ref)(s, params) for s in (seq1, seq2, seq3, seq4)]
    refs = jax.block_until_ready(refs)
    max_err = max(float(jnp.max(jnp.abs(o - r))) for o, r in zip(outs, refs))
    assert max_err < 3e-2, f"kernel/reference mismatch: max|diff|={max_err}"

    print("KERNEL_OK")
</pallas_src>

<mosaic_0001>
module attributes {stable_mosaic.version = 11 : i64} {
  func.func @kernel(%arg0: memref<64x8xf32, #tpu.memory_space<vmem>>, %arg1: memref<8x192xf32, #tpu.memory_space<vmem>>, %arg2: memref<48x192xf32, #tpu.memory_space<vmem>>, %arg3: memref<1x192xf32, #tpu.memory_space<vmem>>, %arg4: memref<8x192xf32, #tpu.memory_space<vmem>>, %arg5: memref<48x192xf32, #tpu.memory_space<vmem>>, %arg6: memref<1x192xf32, #tpu.memory_space<vmem>>, %arg7: memref<96x128xf32, #tpu.memory_space<vmem>>, %arg8: memref<32x128xf32, #tpu.memory_space<vmem>>, %arg9: memref<1x128xf32, #tpu.memory_space<vmem>>, %arg10: memref<96x128xf32, #tpu.memory_space<vmem>>, %arg11: memref<32x128xf32, #tpu.memory_space<vmem>>, %arg12: memref<1x128xf32, #tpu.memory_space<vmem>>, %arg13: memref<64x64xf32, #tpu.memory_space<vmem>>, %arg14: memref<16x64xf32, #tpu.memory_space<vmem>>, %arg15: memref<1x64xf32, #tpu.memory_space<vmem>>, %arg16: memref<8x16xf32, #tpu.memory_space<vmem>>, %arg17: memref<64x192xf32, #tpu.memory_space<vmem>>, %arg18: memref<64x192xf32, #tpu.memory_space<vmem>>, %arg19: memref<64x48xf32, #tpu.memory_space<vmem>>, %arg20: memref<64x48xf32, #tpu.memory_space<vmem>>, %arg21: memref<64x128xf32, #tpu.memory_space<vmem>>, %arg22: memref<64x128xf32, #tpu.memory_space<vmem>>, %arg23: memref<64x32xf32, #tpu.memory_space<vmem>>, %arg24: memref<64x32xf32, #tpu.memory_space<vmem>>, %arg25: memref<64x64xf32, #tpu.memory_space<vmem>>) attributes {dimension_semantics = [], scalar_prefetch = 0 : i64, scratch_operands = 9 : i64, tpu.core_type = #tpu.core_type<tc>} {
    %c0 = arith.constant 0 : index
    %c0_0 = arith.constant 0 : index
    %0 = vector.load %arg0[%c0, %c0_0] : memref<64x8xf32, #tpu.memory_space<vmem>>, vector<64x8xf32>
    %c0_1 = arith.constant 0 : index
    %c0_2 = arith.constant 0 : index
    %1 = vector.load %arg1[%c0_1, %c0_2] : memref<8x192xf32, #tpu.memory_space<vmem>>, vector<8x192xf32>
    %cst = arith.constant dense<0.000000e+00> : vector<64x192xf32>
    %2 = tpu.matmul %0, %1, %cst {dimension_numbers = #tpu.dot_dimension_numbers<[1], [0], [0], [1], [0, 0, 1, 1], [], []>} : vector<64x8xf32>, vector<8x192xf32>, vector<64x192xf32> -> vector<64x192xf32>
    %c0_3 = arith.constant 0 : index
    %c0_4 = arith.constant 0 : index
    %3 = vector.load %arg3[%c0_3, %c0_4] : memref<1x192xf32, #tpu.memory_space<vmem>>, vector<1x192xf32>
    %4 = vector.broadcast %3 : vector<1x192xf32> to vector<64x192xf32>
    %5 = arith.addf %2, %4 : vector<64x192xf32>
    %c0_5 = arith.constant 0 : index
    %c0_6 = arith.constant 0 : index
    %6 = vector.load %arg17[%c0_5, %c0_6] : memref<64x192xf32, #tpu.memory_space<vmem>>, vector<64x192xf32>
    tpu.vector_store %arg17[%c0_5, %c0_6], %5 {strides = array<i32>} : memref<64x192xf32, #tpu.memory_space<vmem>>, vector<64x192xf32>,
    %c0_7 = arith.constant 0 : index
    %c0_8 = arith.constant 0 : index
    %7 = vector.load %arg4[%c0_7, %c0_8] : memref<8x192xf32, #tpu.memory_space<vmem>>, vector<8x192xf32>
    %cst_9 = arith.constant dense<0.000000e+00> : vector<64x192xf32>
    %8 = tpu.matmul %0, %7, %cst_9 {dimension_numbers = #tpu.dot_dimension_numbers<[1], [0], [0], [1], [0, 0, 1, 1], [], []>} : vector<64x8xf32>, vector<8x192xf32>, vector<64x192xf32> -> vector<64x192xf32>
    %c0_10 = arith.constant 0 : index
    %c0_11 = arith.constant 0 : index
    %9 = vector.load %arg6[%c0_10, %c0_11] : memref<1x192xf32, #tpu.memory_space<vmem>>, vector<1x192xf32>
    %10 = vector.broadcast %9 : vector<1x192xf32> to vector<64x192xf32>
    %11 = arith.addf %8, %10 : vector<64x192xf32>
    %c0_12 = arith.constant 0 : index
    %c0_13 = arith.constant 0 : index
    %12 = vector.load %arg18[%c0_12, %c0_13] : memref<64x192xf32, #tpu.memory_space<vmem>>, vector<64x192xf32>
    tpu.vector_store %arg18[%c0_12, %c0_13], %11 {strides = array<i32>} : memref<64x192xf32, #tpu.memory_space<vmem>>, vector<64x192xf32>,
    %c0_14 = arith.constant 0 : index
    %c0_15 = arith.constant 0 : index
    %13 = vector.load %arg2[%c0_14, %c0_15] : memref<48x192xf32, #tpu.memory_space<vmem>>, vector<48x192xf32>
    %c0_16 = arith.constant 0 : index
    %c0_17 = arith.constant 0 : index
    %14 = vector.load %arg5[%c0_16, %c0_17] : memref<48x192xf32, #tpu.memory_space<vmem>>, vector<48x192xf32>
    %cst_18 = arith.constant 0.000000e+00 : f32
    %15 = vector.broadcast %cst_18 : f32 to vector<8x48xf32>
    %c0_i32 = arith.constant 0 : i32
    %c8_i32 = arith.constant 8 : i32
    %16 = arith.muli %c0_i32, %c8_i32 : i32
    %17 = tpu.assume_multiple %16, 8 : i32
    %c7_i32 = arith.constant 7 : i32
    %18 = arith.subi %c7_i32, %c0_i32 : i32
    %c8_i32_19 = arith.constant 8 : i32
    %19 = arith.muli %18, %c8_i32_19 : i32
    %20 = tpu.assume_multiple %19, 8 : i32
    %21 = arith.index_cast %17 : i32 to index
    %c0_20 = arith.constant 0 : index
    %22 = vector.load %arg17[%21, %c0_20] : memref<64x192xf32, #tpu.memory_space<vmem>>, vector<8x192xf32>
    %cst_21 = arith.constant dense<0.000000e+00> : vector<8x192xf32>
    %23 = tpu.matmul %15, %13, %cst_21 {dimension_numbers = #tpu.dot_dimension_numbers<[1], [0], [0], [1], [0, 0, 1, 1], [], []>} : vector<8x48xf32>, vector<48x192xf32>, vector<8x192xf32> -> vector<8x192xf32>
    %24 = arith.addf %22, %23 : vector<8x192xf32>
    %25 = vector.extract_strided_slice %24 {offsets = [0, 0], sizes = [8, 144], strides = [1, 1]} : vector<8x192xf32> to vector<8x144xf32>
    %26 = arith.negf %25 : vector<8x144xf32>
    %27 = math.exp %26 : vector<8x144xf32>
    %cst_22 = arith.constant 1.000000e+00 : f32
    %28 = vector.broadcast %cst_22 : f32 to vector<8x144xf32>
    %29 = arith.addf %28, %27 : vector<8x144xf32>
    %30 = arith.divf %28, %29 : vector<8x144xf32>
    %31 = vector.extract_strided_slice %30 {offsets = [0, 0], sizes = [8, 48], strides = [1, 1]} : vector<8x144xf32> to vector<8x48xf32>
    %32 = vector.extract_strided_slice %30 {offsets = [0, 48], sizes = [8, 48], strides = [1, 1]} : vector<8x144xf32> to vector<8x48xf32>
    %33 = vector.extract_strided_slice %30 {offsets = [0, 96], sizes = [8, 48], strides = [1, 1]} : vector<8x144xf32> to vector<8x48xf32>
    %34 = vector.extract_strided_slice %24 {offsets = [0, 144], sizes = [8, 48], strides = [1, 1]} : vector<8x192xf32> to vector<8x48xf32>
    %35 = math.tanh %34 : vector<8x48xf32>
    %36 = arith.mulf %32, %15 : vector<8x48xf32>
    %37 = arith.mulf %31, %35 : vector<8x48xf32>
    %38 = arith.addf %36, %37 : vector<8x48xf32>
    %39 = math.tanh %38 : vector<8x48xf32>
    %40 = arith.mulf %33, %39 : vector<8x48xf32>
    %41 = arith.index_cast %20 : i32 to index
    %c0_23 = arith.constant 0 : index
    %42 = vector.load %arg18[%41, %c0_23] : memref<64x192xf32, #tpu.memory_space<vmem>>, vector<8x192xf32>
    %cst_24 = arith.constant dense<0.000000e+00> : vector<8x192xf32>
    %43 = tpu.matmul %15, %14, %cst_24 {dimension_numbers = #tpu.dot_dimension_numbers<[1], [0], [0], [1], [0, 0, 1, 1], [], []>} : vector<8x48xf32>, vector<48x192xf32>, vector<8x192xf32> -> vector<8x192xf32>
    %44 = arith.addf %42, %43 : vector<8x192xf32>
    %45 = vector.extract_strided_slice %44 {offsets = [0, 0], sizes = [8, 144], strides = [1, 1]} : vector<8x192xf32> to vector<8x144xf32>
    %46 = arith.negf %45 : vector<8x144xf32>
    %47 = math.exp %46 : vector<8x144xf32>
    %cst_25 = arith.constant 1.000000e+00 : f32
    %48 = vector.broadcast %cst_25 : f32 to vector<8x144xf32>
    %49 = arith.addf %48, %47 : vector<8x144xf32>
    %50 = arith.divf %48, %49 : vector<8x144xf32>
    %51 = vector.extract_strided_slice %50 {offsets = [0, 0], sizes = [8, 48], strides = [1, 1]} : vector<8x144xf32> to vector<8x48xf32>
    %52 = vector.extract_strided_slice %50 {offsets = [0, 48], sizes = [8, 48], strides = [1, 1]} : vector<8x144xf32> to vector<8x48xf32>
    %53 = vector.extract_strided_slice %50 {offsets = [0, 96], sizes = [8, 48], strides = [1, 1]} : vector<8x144xf32> to vector<8x48xf32>
    %54 = vector.extract_strided_slice %44 {offsets = [0, 144], sizes = [8, 48], strides = [1, 1]} : vector<8x192xf32> to vector<8x48xf32>
    %55 = math.tanh %54 : vector<8x48xf32>
    %56 = arith.mulf %52, %15 : vector<8x48xf32>
    %57 = arith.mulf %51, %55 : vector<8x48xf32>
    %58 = arith.addf %56, %57 : vector<8x48xf32>
    %59 = math.tanh %58 : vector<8x48xf32>
    %60 = arith.mulf %53, %59 : vector<8x48xf32>
    %cst_26 = arith.constant 0.000000e+00 : f32
    %61 = vector.broadcast %cst_26 : f32 to vector<8x48xf32>
    %62 = arith.maximumf %40, %61 : vector<8x48xf32>
    %63 = arith.index_cast %17 : i32 to index
    %c0_27 = arith.constant 0 : index
    %64 = vector.load %arg19[%63, %c0_27] : memref<64x48xf32, #tpu.memory_space<vmem>>, vector<8x48xf32>
    tpu.vector_store %arg19[%63, %c0_27], %62 {strides = array<i32>} : memref<64x48xf32, #tpu.memory_space<vmem>>, vector<8x48xf32>,
    %cst_28 = arith.constant 0.000000e+00 : f32
    %65 = vector.broadcast %cst_28 : f32 to vector<8x48xf32>
    %66 = arith.maximumf %60, %65 : vector<8x48xf32>
    %67 = arith.index_cast %20 : i32 to index
    %c0_29 = arith.constant 0 : index
    %68 = vector.load %arg20[%67, %c0_29] : memref<64x48xf32, #tpu.memory_space<vmem>>, vector<8x48xf32>
    tpu.vector_store %arg20[%67, %c0_29], %66 {strides = array<i32>} : memref<64x48xf32, #tpu.memory_space<vmem>>, vector<8x48xf32>,
    %c1_i32 = arith.constant 1 : i32
    %c8_i32_30 = arith.constant 8 : i32
    %69 = arith.muli %c1_i32, %c8_i32_30 : i32
    %70 = tpu.assume_multiple %69, 8 : i32
    %c7_i32_31 = arith.constant 7 : i32
    %71 = arith.subi %c7_i32_31, %c1_i32 : i32
    %c8_i32_32 = arith.constant 8 : i32
    %72 = arith.muli %71, %c8_i32_32 : i32
    %73 = tpu.assume_multiple %72, 8 : i32
    %74 = arith.index_cast %70 : i32 to index
    %c0_33 = arith.constant 0 : index
    %75 = vector.load %arg17[%74, %c0_33] : memref<64x192xf32, #tpu.memory_space<vmem>>, vector<8x192xf32>
    %cst_34 = arith.constant dense<0.000000e+00> : vector<8x192xf32>
    %76 = tpu.matmul %40, %13, %cst_34 {dimension_numbers = #tpu.dot_dimension_numbers<[1], [0], [0], [1], [0, 0, 1, 1], [], []>} : vector<8x48xf32>, vector<48x192xf32>, vector<8x192xf32> -> vector<8x192xf32>
    %77 = arith.addf %75, %76 : vector<8x192xf32>
    %78 = vector.extract_strided_slice %77 {offsets = [0, 0], sizes = [8, 144], strides = [1, 1]} : vector<8x192xf32> to vector<8x144xf32>
    %79 = arith.negf %78 : vector<8x144xf32>
    %80 = math.exp %79 : vector<8x144xf32>
    %cst_35 = arith.constant 1.000000e+00 : f32
    %81 = vector.broadcast %cst_35 : f32 to vector<8x144xf32>
    %82 = arith.addf %81, %80 : vector<8x144xf32>
    %83 = arith.divf %81, %82 : vector<8x144xf32>
    %84 = vector.extract_strided_slice %83 {offsets = [0, 0], sizes = [8, 48], strides = [1, 1]} : vector<8x144xf32> to vector<8x48xf32>
    %85 = vector.extract_strided_slice %83 {offsets = [0, 48], sizes = [8, 48], strides = [1, 1]} : vector<8x144xf32> to vector<8x48xf32>
    %86 = vector.extract_strided_slice %83 {offsets = [0, 96], sizes = [8, 48], strides = [1, 1]} : vector<8x144xf32> to vector<8x48xf32>
    %87 = vector.extract_strided_slice %77 {offsets = [0, 144], sizes = [8, 48], strides = [1, 1]} : vector<8x192xf32> to vector<8x48xf32>
    %88 = math.tanh %87 : vector<8x48xf32>
    %89 = arith.mulf %85, %38 : vector<8x48xf32>
    %90 = arith.mulf %84, %88 : vector<8x48xf32>
    %91 = arith.addf %89, %90 : vector<8x48xf32>
    %92 = math.tanh %91 : vector<8x48xf32>
    %93 = arith.mulf %86, %92 : vector<8x48xf32>
    %94 = arith.index_cast %73 : i32 to index
    %c0_36 = arith.constant 0 : index
    %95 = vector.load %arg18[%94, %c0_36] : memref<64x192xf32, #tpu.memory_space<vmem>>, vector<8x192xf32>
    %cst_37 = arith.constant dense<0.000000e+00> : vector<8x192xf32>
    %96 = tpu.matmul %60, %14, %cst_37 {dimension_numbers = #tpu.dot_dimension_numbers<[1], [0], [0], [1], [0, 0, 1, 1], [], []>} : vector<8x48xf32>, vector<48x192xf32>, vector<8x192xf32> -> vector<8x192xf32>
    %97 = arith.addf %95, %96 : vector<8x192xf32>
    %98 = vector.extract_strided_slice %97 {offsets = [0, 0], sizes = [8, 144], strides = [1, 1]} : vector<8x192xf32> to vector<8x144xf32>
    %99 = arith.negf %98 : vector<8x144xf32>
    %100 = math.exp %99 : vector<8x144xf32>
    %cst_38 = arith.constant 1.000000e+00 : f32
    %101 = vector.broadcast %cst_38 : f32 to vector<8x144xf32>
    %102 = arith.addf %101, %100 : vector<8x144xf32>
    %103 = arith.divf %101, %102 : vector<8x144xf32>
    %104 = vector.extract_strided_slice %103 {offsets = [0, 0], sizes = [8, 48], strides = [1, 1]} : vector<8x144xf32> to vector<8x48xf32>
    %105 = vector.extract_strided_slice %103 {offsets = [0, 48], sizes = [8, 48], strides = [1, 1]} : vector<8x144xf32> to vector<8x48xf32>
    %106 = vector.extract_strided_slice %103 {offsets = [0, 96], sizes = [8, 48], strides = [1, 1]} : vector<8x144xf32> to vector<8x48xf32>
    %107 = vector.extract_strided_slice %97 {offsets = [0, 144], sizes = [8, 48], strides = [1, 1]} : vector<8x192xf32> to vector<8x48xf32>
    %108 = math.tanh %107 : vector<8x48xf32>
    %109 = arith.mulf %105, %58 : vector<8x48xf32>
    %110 = arith.mulf %104, %108 : vector<8x48xf32>
    %111 = arith.addf %109, %110 : vector<8x48xf32>
    %112 = math.tanh %111 : vector<8x48xf32>
    %113 = arith.mulf %106, %112 : vector<8x48xf32>
    %cst_39 = arith.constant 0.000000e+00 : f32
    %114 = vector.broadcast %cst_39 : f32 to vector<8x48xf32>
    %115 = arith.maximumf %93, %114 : vector<8x48xf32>
    %116 = arith.index_cast %70 : i32 to index
    %c0_40 = arith.constant 0 : index
    %117 = vector.load %arg19[%116, %c0_40] : memref<64x48xf32, #tpu.memory_space<vmem>>, vector<8x48xf32>
    tpu.vector_store %arg19[%116, %c0_40], %115 {strides = array<i32>} : memref<64x48xf32, #tpu.memory_space<vmem>>, vector<8x48xf32>,
    %cst_41 = arith.constant 0.000000e+00 : f32
    %118 = vector.broadcast %cst_41 : f32 to vector<8x48xf32>
    %119 = arith.maximumf %113, %118 : vector<8x48xf32>
    %120 = arith.index_cast %73 : i32 to index
    %c0_42 = arith.constant 0 : index
    %121 = vector.load %arg20[%120, %c0_42] : memref<64x48xf32, #tpu.memory_space<vmem>>, vector<8x48xf32>
    tpu.vector_store %arg20[%120, %c0_42], %119 {strides = array<i32>} : memref<64x48xf32, #tpu.memory_space<vmem>>, vector<8x48xf32>,
    %c2_i32 = arith.constant 2 : i32
    %c8_i32_43 = arith.constant 8 : i32
    %122 = arith.muli %c2_i32, %c8_i32_43 : i32
    %123 = tpu.assume_multiple %122, 8 : i32
    %c7_i32_44 = arith.constant 7 : i32
    %124 = arith.subi %c7_i32_44, %c2_i32 : i32
    %c8_i32_45 = arith.constant 8 : i32
    %125 = arith.muli %124, %c8_i32_45 : i32
    %126 = tpu.assume_multiple %125, 8 : i32
    %127 = arith.index_cast %123 : i32 to index
    %c0_46 = arith.constant 0 : index
    %128 = vector.load %arg17[%127, %c0_46] : memref<64x192xf32, #tpu.memory_space<vmem>>, vector<8x192xf32>
    %cst_47 = arith.constant dense<0.000000e+00> : vector<8x192xf32>
    %129 = tpu.matmul %93, %13, %cst_47 {dimension_numbers = #tpu.dot_dimension_numbers<[1], [0], [0], [1], [0, 0, 1, 1], [], []>} : vector<8x48xf32>, vector<48x192xf32>, vector<8x192xf32> -> vector<8x192xf32>
    %130 = arith.addf %128, %129 : vector<8x192xf32>
    %131 = vector.extract_strided_slice %130 {offsets = [0, 0], sizes = [8, 144], strides = [1, 1]} : vector<8x192xf32> to vector<8x144xf32>
    %132 = arith.negf %131 : vector<8x144xf32>
    %133 = math.exp %132 : vector<8x144xf32>
    %cst_48 = arith.constant 1.000000e+00 : f32
    %134 = vector.broadcast %cst_48 : f32 to vector<8x144xf32>
    %135 = arith.addf %134, %133 : vector<8x144xf32>
    %136 = arith.divf %134, %135 : vector<8x144xf32>
    %137 = vector.extract_strided_slice %136 {offsets = [0, 0], sizes = [8, 48], strides = [1, 1]} : vector<8x144xf32> to vector<8x48xf32>
    %138 = vector.extract_strided_slice %136 {offsets = [0, 48], sizes = [8, 48], strides = [1, 1]} : vector<8x144xf32> to vector<8x48xf32>
    %139 = vector.extract_strided_slice %136 {offsets = [0, 96], sizes = [8, 48], strides = [1, 1]} : vector<8x144xf32> to vector<8x48xf32>
    %140 = vector.extract_strided_slice %130 {offsets = [0, 144], sizes = [8, 48], strides = [1, 1]} : vector<8x192xf32> to vector<8x48xf32>
    %141 = math.tanh %140 : vector<8x48xf32>
    %142 = arith.mulf %138, %91 : vector<8x48xf32>
    %143 = arith.mulf %137, %141 : vector<8x48xf32>
    %144 = arith.addf %142, %143 : vector<8x48xf32>
    %145 = math.tanh %144 : vector<8x48xf32>
    %146 = arith.mulf %139, %145 : vector<8x48xf32>
    %147 = arith.index_cast %126 : i32 to index
    %c0_49 = arith.constant 0 : index
    %148 = vector.load %arg18[%147, %c0_49] : memref<64x192xf32, #tpu.memory_space<vmem>>, vector<8x192xf32>
    %cst_50 = arith.constant dense<0.000000e+00> : vector<8x192xf32>
    %149 = tpu.matmul %113, %14, %cst_50 {dimension_numbers = #tpu.dot_dimension_numbers<[1], [0], [0], [1], [0, 0, 1, 1], [], []>} : vector<8x48xf32>, vector<48x192xf32>, vector<8x192xf32> -> vector<8x192xf32>
    %150 = arith.addf %148, %149 : vector<8x192xf32>
    %151 = vector.extract_strided_slice %150 {offsets = [0, 0], sizes = [8, 144], strides = [1, 1]} : vector<8x192xf32> to vector<8x144xf32>
    %152 = arith.negf %151 : vector<8x144xf32>
    %153 = math.exp %152 : vector<8x144xf32>
    %cst_51 = arith.constant 1.000000e+00 : f32
    %154 = vector.broadcast %cst_51 : f32 to vector<8x144xf32>
    %155 = arith.addf %154, %153 : vector<8x144xf32>
    %156 = arith.divf %154, %155 : vector<8x144xf32>
    %157 = vector.extract_strided_slice %156 {offsets = [0, 0], sizes = [8, 48], strides = [1, 1]} : vector<8x144xf32> to vector<8x48xf32>
    %158 = vector.extract_strided_slice %156 {offsets = [0, 48], sizes = [8, 48], strides = [1, 1]} : vector<8x144xf32> to vector<8x48xf32>
    %159 = vector.extract_strided_slice %156 {offsets = [0, 96], sizes = [8, 48], strides = [1, 1]} : vector<8x144xf32> to vector<8x48xf32>
    %160 = vector.extract_strided_slice %150 {offsets = [0, 144], sizes = [8, 48], strides = [1, 1]} : vector<8x192xf32> to vector<8x48xf32>
    %161 = math.tanh %160 : vector<8x48xf32>
    %162 = arith.mulf %158, %111 : vector<8x48xf32>
    %163 = arith.mulf %157, %161 : vector<8x48xf32>
    %164 = arith.addf %162, %163 : vector<8x48xf32>
    %165 = math.tanh %164 : vector<8x48xf32>
    %166 = arith.mulf %159, %165 : vector<8x48xf32>
    %cst_52 = arith.constant 0.000000e+00 : f32
    %167 = vector.broadcast %cst_52 : f32 to vector<8x48xf32>
    %168 = arith.maximumf %146, %167 : vector<8x48xf32>
    %169 = arith.index_cast %123 : i32 to index
    %c0_53 = arith.constant 0 : index
    %170 = vector.load %arg19[%169, %c0_53] : memref<64x48xf32, #tpu.memory_space<vmem>>, vector<8x48xf32>
    tpu.vector_store %arg19[%169, %c0_53], %168 {strides = array<i32>} : memref<64x48xf32, #tpu.memory_space<vmem>>, vector<8x48xf32>,
    %cst_54 = arith.constant 0.000000e+00 : f32
    %171 = vector.broadcast %cst_54 : f32 to vector<8x48xf32>
    %172 = arith.maximumf %166, %171 : vector<8x48xf32>
    %173 = arith.index_cast %126 : i32 to index
    %c0_55 = arith.constant 0 : index
    %174 = vector.load %arg20[%173, %c0_55] : memref<64x48xf32, #tpu.memory_space<vmem>>, vector<8x48xf32>
    tpu.vector_store %arg20[%173, %c0_55], %172 {strides = array<i32>} : memref<64x48xf32, #tpu.memory_space<vmem>>, vector<8x48xf32>,
    %c3_i32 = arith.constant 3 : i32
    %c8_i32_56 = arith.constant 8 : i32
    %175 = arith.muli %c3_i32, %c8_i32_56 : i32
    %176 = tpu.assume_multiple %175, 8 : i32
    %c7_i32_57 = arith.constant 7 : i32
    %177 = arith.subi %c7_i32_57, %c3_i32 : i32
    %c8_i32_58 = arith.constant 8 : i32
    %178 = arith.muli %177, %c8_i32_58 : i32
    %179 = tpu.assume_multiple %178, 8 : i32
    %180 = arith.index_cast %176 : i32 to index
    %c0_59 = arith.constant 0 : index
    %181 = vector.load %arg17[%180, %c0_59] : memref<64x192xf32, #tpu.memory_space<vmem>>, vector<8x192xf32>
    %cst_60 = arith.constant dense<0.000000e+00> : vector<8x192xf32>
    %182 = tpu.matmul %146, %13, %cst_60 {dimension_numbers = #tpu.dot_dimension_numbers<[1], [0], [0], [1], [0, 0, 1, 1], [], []>} : vector<8x48xf32>, vector<48x192xf32>, vector<8x192xf32> -> vector<8x192xf32>
    %183 = arith.addf %181, %182 : vector<8x192xf32>
    %184 = vector.extract_strided_slice %183 {offsets = [0, 0], sizes = [8, 144], strides = [1, 1]} : vector<8x192xf32> to vector<8x144xf32>
    %185 = arith.negf %184 : vector<8x144xf32>
    %186 = math.exp %185 : vector<8x144xf32>
    %cst_61 = arith.constant 1.000000e+00 : f32
    %187 = vector.broadcast %cst_61 : f32 to vector<8x144xf32>
    %188 = arith.addf %187, %186 : vector<8x144xf32>
    %189 = arith.divf %187, %188 : vector<8x144xf32>
    %190 = vector.extract_strided_slice %189 {offsets = [0, 0], sizes = [8, 48], strides = [1, 1]} : vector<8x144xf32> to vector<8x48xf32>
    %191 = vector.extract_strided_slice %189 {offsets = [0, 48], sizes = [8, 48], strides = [1, 1]} : vector<8x144xf32> to vector<8x48xf32>
    %192 = vector.extract_strided_slice %189 {offsets = [0, 96], sizes = [8, 48], strides = [1, 1]} : vector<8x144xf32> to vector<8x48xf32>
    %193 = vector.extract_strided_slice %183 {offsets = [0, 144], sizes = [8, 48], strides = [1, 1]} : vector<8x192xf32> to vector<8x48xf32>
    %194 = math.tanh %193 : vector<8x48xf32>
    %195 = arith.mulf %191, %144 : vector<8x48xf32>
    %196 = arith.mulf %190, %194 : vector<8x48xf32>
    %197 = arith.addf %195, %196 : vector<8x48xf32>
    %198 = math.tanh %197 : vector<8x48xf32>
    %199 = arith.mulf %192, %198 : vector<8x48xf32>
    %200 = arith.index_cast %179 : i32 to index
    %c0_62 = arith.constant 0 : index
    %201 = vector.load %arg18[%200, %c0_62] : memref<64x192xf32, #tpu.memory_space<vmem>>, vector<8x192xf32>
    %cst_63 = arith.constant dense<0.000000e+00> : vector<8x192xf32>
    %202 = tpu.matmul %166, %14, %cst_63 {dimension_numbers = #tpu.dot_dimension_numbers<[1], [0], [0], [1], [0, 0, 1, 1], [], []>} : vector<8x48xf32>, vector<48x192xf32>, vector<8x192xf32> -> vector<8x192xf32>
    %203 = arith.addf %201, %202 : vector<8x192xf32>
    %204 = vector.extract_strided_slice %203 {offsets = [0, 0], sizes = [8, 144], strides = [1, 1]} : vector<8x192xf32> to vector<8x144xf32>
    %205 = arith.negf %204 : vector<8x144xf32>
    %206 = math.exp %205 : vector<8x144xf32>
    %cst_64 = arith.constant 1.000000e+00 : f32
    %207 = vector.broadcast %cst_64 : f32 to vector<8x144xf32>
    %208 = arith.addf %207, %206 : vector<8x144xf32>
    %209 = arith.divf %207, %208 : vector<8x144xf32>
    %210 = vector.extract_strided_slice %209 {offsets = [0, 0], sizes = [8, 48], strides = [1, 1]} : vector<8x144xf32> to vector<8x48xf32>
    %211 = vector.extract_strided_slice %209 {offsets = [0, 48], sizes = [8, 48], strides = [1, 1]} : vector<8x144xf32> to vector<8x48xf32>
    %212 = vector.extract_strided_slice %209 {offsets = [0, 96], sizes = [8, 48], strides = [1, 1]} : vector<8x144xf32> to vector<8x48xf32>
    %213 = vector.extract_strided_slice %203 {offsets = [0, 144], sizes = [8, 48], strides = [1, 1]} : vector<8x192xf32> to vector<8x48xf32>
    %214 = math.tanh %213 : vector<8x48xf32>
    %215 = arith.mulf %211, %164 : vector<8x48xf32>
    %216 = arith.mulf %210, %214 : vector<8x48xf32>
    %217 = arith.addf %215, %216 : vector<8x48xf32>
    %218 = math.tanh %217 : vector<8x48xf32>
    %219 = arith.mulf %212, %218 : vector<8x48xf32>
    %cst_65 = arith.constant 0.000000e+00 : f32
    %220 = vector.broadcast %cst_65 : f32 to vector<8x48xf32>
    %221 = arith.maximumf %199, %220 : vector<8x48xf32>
    %222 = arith.index_cast %176 : i32 to index
    %c0_66 = arith.constant 0 : index
    %223 = vector.load %arg19[%222, %c0_66] : memref<64x48xf32, #tpu.memory_space<vmem>>, vector<8x48xf32>
    tpu.vector_store %arg19[%222, %c0_66], %221 {strides = array<i32>} : memref<64x48xf32, #tpu.memory_space<vmem>>, vector<8x48xf32>,
    %cst_67 = arith.constant 0.000000e+00 : f32
    %224 = vector.broadcast %cst_67 : f32 to vector<8x48xf32>
    %225 = arith.maximumf %219, %224 : vector<8x48xf32>
    %226 = arith.index_cast %179 : i32 to index
    %c0_68 = arith.constant 0 : index
    %227 = vector.load %arg20[%226, %c0_68] : memref<64x48xf32, #tpu.memory_space<vmem>>, vector<8x48xf32>
    tpu.vector_store %arg20[%226, %c0_68], %225 {strides = array<i32>} : memref<64x48xf32, #tpu.memory_space<vmem>>, vector<8x48xf32>,
    %c4_i32 = arith.constant 4 : i32
    %c8_i32_69 = arith.constant 8 : i32
    %228 = arith.muli %c4_i32, %c8_i32_69 : i32
    %229 = tpu.assume_multiple %228, 8 : i32
    %c7_i32_70 = arith.constant 7 : i32
    %230 = arith.subi %c7_i32_70, %c4_i32 : i32
    %c8_i32_71 = arith.constant 8 : i32
    %231 = arith.muli %230, %c8_i32_71 : i32
    %232 = tpu.assume_multiple %231, 8 : i32
    %233 = arith.index_cast %229 : i32 to index
    %c0_72 = arith.constant 0 : index
    %234 = vector.load %arg17[%233, %c0_72] : memref<64x192xf32, #tpu.memory_space<vmem>>, vector<8x192xf32>
    %cst_73 = arith.constant dense<0.000000e+00> : vector<8x192xf32>
    %235 = tpu.matmul %199, %13, %cst_73 {dimension_numbers = #tpu.dot_dimension_numbers<[1], [0], [0], [1], [0, 0, 1, 1], [], []>} : vector<8x48xf32>, vector<48x192xf32>, vector<8x192xf32> -> vector<8x192xf32>
    %236 = arith.addf %234, %235 : vector<8x192xf32>
    %237 = vector.extract_strided_slice %236 {offsets = [0, 0], sizes = [8, 144], strides = [1, 1]} : vector<8x192xf32> to vector<8x144xf32>
    %238 = arith.negf %237 : vector<8x144xf32>
    %239 = math.exp %238 : vector<8x144xf32>
    %cst_74 = arith.constant 1.000000e+00 : f32
    %240 = vector.broadcast %cst_74 : f32 to vector<8x144xf32>
    %241 = arith.addf %240, %239 : vector<8x144xf32>
    %242 = arith.divf %240, %241 : vector<8x144xf32>
    %243 = vector.extract_strided_slice %242 {offsets = [0, 0], sizes = [8, 48], strides = [1, 1]} : vector<8x144xf32> to vector<8x48xf32>
    %244 = vector.extract_strided_slice %242 {offsets = [0, 48], sizes = [8, 48], strides = [1, 1]} : vector<8x144xf32> to vector<8x48xf32>
    %245 = vector.extract_strided_slice %242 {offsets = [0, 96], sizes = [8, 48], strides = [1, 1]} : vector<8x144xf32> to vector<8x48xf32>
    %246 = vector.extract_strided_slice %236 {offsets = [0, 144], sizes = [8, 48], strides = [1, 1]} : vector<8x192xf32> to vector<8x48xf32>
    %247 = math.tanh %246 : vector<8x48xf32>
    %248 = arith.mulf %244, %197 : vector<8x48xf32>
    %249 = arith.mulf %243, %247 : vector<8x48xf32>
    %250 = arith.addf %248, %249 : vector<8x48xf32>
    %251 = math.tanh %250 : vector<8x48xf32>
    %252 = arith.mulf %245, %251 : vector<8x48xf32>
    %253 = arith.index_cast %232 : i32 to index
    %c0_75 = arith.constant 0 : index
    %254 = vector.load %arg18[%253, %c0_75] : memref<64x192xf32, #tpu.memory_space<vmem>>, vector<8x192xf32>
    %cst_76 = arith.constant dense<0.000000e+00> : vector<8x192xf32>
    %255 = tpu.matmul %219, %14, %cst_76 {dimension_numbers = #tpu.dot_dimension_numbers<[1], [0], [0], [1], [0, 0, 1, 1], [], []>} : vector<8x48xf32>, vector<48x192xf32>, vector<8x192xf32> -> vector<8x192xf32>
    %256 = arith.addf %254, %255 : vector<8x192xf32>
    %257 = vector.extract_strided_slice %256 {offsets = [0, 0], sizes = [8, 144], strides = [1, 1]} : vector<8x192xf32> to vector<8x144xf32>
    %258 = arith.negf %257 : vector<8x144xf32>
    %259 = math.exp %258 : vector<8x144xf32>
    %cst_77 = arith.constant 1.000000e+00 : f32
    %260 = vector.broadcast %cst_77 : f32 to vector<8x144xf32>
    %261 = arith.addf %260, %259 : vector<8x144xf32>
    %262 = arith.divf %260, %261 : vector<8x144xf32>
    %263 = vector.extract_strided_slice %262 {offsets = [0, 0], sizes = [8, 48], strides = [1, 1]} : vector<8x144xf32> to vector<8x48xf32>
    %264 = vector.extract_strided_slice %262 {offsets = [0, 48], sizes = [8, 48], strides = [1, 1]} : vector<8x144xf32> to vector<8x48xf32>
    %265 = vector.extract_strided_slice %262 {offsets = [0, 96], sizes = [8, 48], strides = [1, 1]} : vector<8x144xf32> to vector<8x48xf32>
    %266 = vector.extract_strided_slice %256 {offsets = [0, 144], sizes = [8, 48], strides = [1, 1]} : vector<8x192xf32> to vector<8x48xf32>
    %267 = math.tanh %266 : vector<8x48xf32>
    %268 = arith.mulf %264, %217 : vector<8x48xf32>
    %269 = arith.mulf %263, %267 : vector<8x48xf32>
    %270 = arith.addf %268, %269 : vector<8x48xf32>
    %271 = math.tanh %270 : vector<8x48xf32>
    %272 = arith.mulf %265, %271 : vector<8x48xf32>
    %cst_78 = arith.constant 0.000000e+00 : f32
    %273 = vector.broadcast %cst_78 : f32 to vector<8x48xf32>
    %274 = arith.maximumf %252, %273 : vector<8x48xf32>
    %275 = arith.index_cast %229 : i32 to index
    %c0_79 = arith.constant 0 : index
    %276 = vector.load %arg19[%275, %c0_79] : memref<64x48xf32, #tpu.memory_space<vmem>>, vector<8x48xf32>
    tpu.vector_store %arg19[%275, %c0_79], %274 {strides = array<i32>} : memref<64x48xf32, #tpu.memory_space<vmem>>, vector<8x48xf32>,
    %cst_80 = arith.constant 0.000000e+00 : f32
    %277 = vector.broadcast %cst_80 : f32 to vector<8x48xf32>
    %278 = arith.maximumf %272, %277 : vector<8x48xf32>
    %279 = arith.index_cast %232 : i32 to index
    %c0_81 = arith.constant 0 : index
    %280 = vector.load %arg20[%279, %c0_81] : memref<64x48xf32, #tpu.memory_space<vmem>>, vector<8x48xf32>
    tpu.vector_store %arg20[%279, %c0_81], %278 {strides = array<i32>} : memref<64x48xf32, #tpu.memory_space<vmem>>, vector<8x48xf32>,
    %c5_i32 = arith.constant 5 : i32
    %c8_i32_82 = arith.constant 8 : i32
    %281 = arith.muli %c5_i32, %c8_i32_82 : i32
    %282 = tpu.assume_multiple %281, 8 : i32
    %c7_i32_83 = arith.constant 7 : i32
    %283 = arith.subi %c7_i32_83, %c5_i32 : i32
    %c8_i32_84 = arith.constant 8 : i32
    %284 = arith.muli %283, %c8_i32_84 : i32
    %285 = tpu.assume_multiple %284, 8 : i32
    %286 = arith.index_cast %282 : i32 to index
    %c0_85 = arith.constant 0 : index
    %287 = vector.load %arg17[%286, %c0_85] : memref<64x192xf32, #tpu.memory_space<vmem>>, vector<8x192xf32>
    %cst_86 = arith.constant dense<0.000000e+00> : vector<8x192xf32>
    %288 = tpu.matmul %252, %13, %cst_86 {dimension_numbers = #tpu.dot_dimension_numbers<[1], [0], [0], [1], [0, 0, 1, 1], [], []>} : vector<8x48xf32>, vector<48x192xf32>, vector<8x192xf32> -> vector<8x192xf32>
    %289 = arith.addf %287, %288 : vector<8x192xf32>
    %290 = vector.extract_strided_slice %289 {offsets = [0, 0], sizes = [8, 144], strides = [1, 1]} : vector<8x192xf32> to vector<8x144xf32>
    %291 = arith.negf %290 : vector<8x144xf32>
    %292 = math.exp %291 : vector<8x144xf32>
    %cst_87 = arith.constant 1.000000e+00 : f32
    %293 = vector.broadcast %cst_87 : f32 to vector<8x144xf32>
    %294 = arith.addf %293, %292 : vector<8x144xf32>
    %295 = arith.divf %293, %294 : vector<8x144xf32>
    %296 = vector.extract_strided_slice %295 {offsets = [0, 0], sizes = [8, 48], strides = [1, 1]} : vector<8x144xf32> to vector<8x48xf32>
    %297 = vector.extract_strided_slice %295 {offsets = [0, 48], sizes = [8, 48], strides = [1, 1]} : vector<8x144xf32> to vector<8x48xf32>
    %298 = vector.extract_strided_slice %295 {offsets = [0, 96], sizes = [8, 48], strides = [1, 1]} : vector<8x144xf32> to vector<8x48xf32>
    %299 = vector.extract_strided_slice %289 {offsets = [0, 144], sizes = [8, 48], strides = [1, 1]} : vector<8x192xf32> to vector<8x48xf32>
    %300 = math.tanh %299 : vector<8x48xf32>
    %301 = arith.mulf %297, %250 : vector<8x48xf32>
    %302 = arith.mulf %296, %300 : vector<8x48xf32>
    %303 = arith.addf %301, %302 : vector<8x48xf32>
    %304 = math.tanh %303 : vector<8x48xf32>
    %305 = arith.mulf %298, %304 : vector<8x48xf32>
    %306 = arith.index_cast %285 : i32 to index
    %c0_88 = arith.constant 0 : index
    %307 = vector.load %arg18[%306, %c0_88] : memref<64x192xf32, #tpu.memory_space<vmem>>, vector<8x192xf32>
    %cst_89 = arith.constant dense<0.000000e+00> : vector<8x192xf32>
    %308 = tpu.matmul %272, %14, %cst_89 {dimension_numbers = #tpu.dot_dimension_numbers<[1], [0], [0], [1], [0, 0, 1, 1], [], []>} : vector<8x48xf32>, vector<48x192xf32>, vector<8x192xf32> -> vector<8x192xf32>
    %309 = arith.addf %307, %308 : vector<8x192xf32>
    %310 = vector.extract_strided_slice %309 {offsets = [0, 0], sizes = [8, 144], strides = [1, 1]} : vector<8x192xf32> to vector<8x144xf32>
    %311 = arith.negf %310 : vector<8x144xf32>
    %312 = math.exp %311 : vector<8x144xf32>
    %cst_90 = arith.constant 1.000000e+00 : f32
    %313 = vector.broadcast %cst_90 : f32 to vector<8x144xf32>
    %314 = arith.addf %313, %312 : vector<8x144xf32>
    %315 = arith.divf %313, %314 : vector<8x144xf32>
    %316 = vector.extract_strided_slice %315 {offsets = [0, 0], sizes = [8, 48], strides = [1, 1]} : vector<8x144xf32> to vector<8x48xf32>
    %317 = vector.extract_strided_slice %315 {offsets = [0, 48], sizes = [8, 48], strides = [1, 1]} : vector<8x144xf32> to vector<8x48xf32>
    %318 = vector.extract_strided_slice %315 {offsets = [0, 96], sizes = [8, 48], strides = [1, 1]} : vector<8x144xf32> to vector<8x48xf32>
    %319 = vector.extract_strided_slice %309 {offsets = [0, 144], sizes = [8, 48], strides = [1, 1]} : vector<8x192xf32> to vector<8x48xf32>
    %320 = math.tanh %319 : vector<8x48xf32>
    %321 = arith.mulf %317, %270 : vector<8x48xf32>
    %322 = arith.mulf %316, %320 : vector<8x48xf32>
    %323 = arith.addf %321, %322 : vector<8x48xf32>
    %324 = math.tanh %323 : vector<8x48xf32>
    %325 = arith.mulf %318, %324 : vector<8x48xf32>
    %cst_91 = arith.constant 0.000000e+00 : f32
    %326 = vector.broadcast %cst_91 : f32 to vector<8x48xf32>
    %327 = arith.maximumf %305, %326 : vector<8x48xf32>
    %328 = arith.index_cast %282 : i32 to index
    %c0_92 = arith.constant 0 : index
    %329 = vector.load %arg19[%328, %c0_92] : memref<64x48xf32, #tpu.memory_space<vmem>>, vector<8x48xf32>
    tpu.vector_store %arg19[%328, %c0_92], %327 {strides = array<i32>} : memref<64x48xf32, #tpu.memory_space<vmem>>, vector<8x48xf32>,
    %cst_93 = arith.constant 0.000000e+00 : f32
    %330 = vector.broadcast %cst_93 : f32 to vector<8x48xf32>
    %331 = arith.maximumf %325, %330 : vector<8x48xf32>
    %332 = arith.index_cast %285 : i32 to index
    %c0_94 = arith.constant 0 : index
    %333 = vector.load %arg20[%332, %c0_94] : memref<64x48xf32, #tpu.memory_space<vmem>>, vector<8x48xf32>
    tpu.vector_store %arg20[%332, %c0_94], %331 {strides = array<i32>} : memref<64x48xf32, #tpu.memory_space<vmem>>, vector<8x48xf32>,
    %c6_i32 = arith.constant 6 : i32
    %c8_i32_95 = arith.constant 8 : i32
    %334 = arith.muli %c6_i32, %c8_i32_95 : i32
    %335 = tpu.assume_multiple %334, 8 : i32
    %c7_i32_96 = arith.constant 7 : i32
    %336 = arith.subi %c7_i32_96, %c6_i32 : i32
    %c8_i32_97 = arith.constant 8 : i32
    %337 = arith.muli %336, %c8_i32_97 : i32
    %338 = tpu.assume_multiple %337, 8 : i32
    %339 = arith.index_cast %335 : i32 to index
    %c0_98 = arith.constant 0 : index
    %340 = vector.load %arg17[%339, %c0_98] : memref<64x192xf32, #tpu.memory_space<vmem>>, vector<8x192xf32>
    %cst_99 = arith.constant dense<0.000000e+00> : vector<8x192xf32>
    %341 = tpu.matmul %305, %13, %cst_99 {dimension_numbers = #tpu.dot_dimension_numbers<[1], [0], [0], [1], [0, 0, 1, 1], [], []>} : vector<8x48xf32>, vector<48x192xf32>, vector<8x192xf32> -> vector<8x192xf32>
    %342 = arith.addf %340, %341 : vector<8x192xf32>
    %343 = vector.extract_strided_slice %342 {offsets = [0, 0], sizes = [8, 144], strides = [1, 1]} : vector<8x192xf32> to vector<8x144xf32>
    %344 = arith.negf %343 : vector<8x144xf32>
    %345 = math.exp %344 : vector<8x144xf32>
    %cst_100 = arith.constant 1.000000e+00 : f32
    %346 = vector.broadcast %cst_100 : f32 to vector<8x144xf32>
    %347 = arith.addf %346, %345 : vector<8x144xf32>
    %348 = arith.divf %346, %347 : vector<8x144xf32>
    %349 = vector.extract_strided_slice %348 {offsets = [0, 0], sizes = [8, 48], strides = [1, 1]} : vector<8x144xf32> to vector<8x48xf32>
    %350 = vector.extract_strided_slice %348 {offsets = [0, 48], sizes = [8, 48], strides = [1, 1]} : vector<8x144xf32> to vector<8x48xf32>
    %351 = vector.extract_strided_slice %348 {offsets = [0, 96], sizes = [8, 48], strides = [1, 1]} : vector<8x144xf32> to vector<8x48xf32>
    %352 = vector.extract_strided_slice %342 {offsets = [0, 144], sizes = [8, 48], strides = [1, 1]} : vector<8x192xf32> to vector<8x48xf32>
    %353 = math.tanh %352 : vector<8x48xf32>
    %354 = arith.mulf %350, %303 : vector<8x48xf32>
    %355 = arith.mulf %349, %353 : vector<8x48xf32>
    %356 = arith.addf %354, %355 : vector<8x48xf32>
    %357 = math.tanh %356 : vector<8x48xf32>
    %358 = arith.mulf %351, %357 : vector<8x48xf32>
    %359 = arith.index_cast %338 : i32 to index
    %c0_101 = arith.constant 0 : index
    %360 = vector.load %arg18[%359, %c0_101] : memref<64x192xf32, #tpu.memory_space<vmem>>, vector<8x192xf32>
    %cst_102 = arith.constant dense<0.000000e+00> : vector<8x192xf32>
    %361 = tpu.matmul %325, %14, %cst_102 {dimension_numbers = #tpu.dot_dimension_numbers<[1], [0], [0], [1], [0, 0, 1, 1], [], []>} : vector<8x48xf32>, vector<48x192xf32>, vector<8x192xf32> -> vector<8x192xf32>
    %362 = arith.addf %360, %361 : vector<8x192xf32>
    %363 = vector.extract_strided_slice %362 {offsets = [0, 0], sizes = [8, 144], strides = [1, 1]} : vector<8x192xf32> to vector<8x144xf32>
    %364 = arith.negf %363 : vector<8x144xf32>
    %365 = math.exp %364 : vector<8x144xf32>
    %cst_103 = arith.constant 1.000000e+00 : f32
    %366 = vector.broadcast %cst_103 : f32 to vector<8x144xf32>
    %367 = arith.addf %366, %365 : vector<8x144xf32>
    %368 = arith.divf %366, %367 : vector<8x144xf32>
    %369 = vector.extract_strided_slice %368 {offsets = [0, 0], sizes = [8, 48], strides = [1, 1]} : vector<8x144xf32> to vector<8x48xf32>
    %370 = vector.extract_strided_slice %368 {offsets = [0, 48], sizes = [8, 48], strides = [1, 1]} : vector<8x144xf32> to vector<8x48xf32>
    %371 = vector.extract_strided_slice %368 {offsets = [0, 96], sizes = [8, 48], strides = [1, 1]} : vector<8x144xf32> to vector<8x48xf32>
    %372 = vector.extract_strided_slice %362 {offsets = [0, 144], sizes = [8, 48], strides = [1, 1]} : vector<8x192xf32> to vector<8x48xf32>
    %373 = math.tanh %372 : vector<8x48xf32>
    %374 = arith.mulf %370, %323 : vector<8x48xf32>
    %375 = arith.mulf %369, %373 : vector<8x48xf32>
    %376 = arith.addf %374, %375 : vector<8x48xf32>
    %377 = math.tanh %376 : vector<8x48xf32>
    %378 = arith.mulf %371, %377 : vector<8x48xf32>
    %cst_104 = arith.constant 0.000000e+00 : f32
    %379 = vector.broadcast %cst_104 : f32 to vector<8x48xf32>
    %380 = arith.maximumf %358, %379 : vector<8x48xf32>
    %381 = arith.index_cast %335 : i32 to index
    %c0_105 = arith.constant 0 : index
    %382 = vector.load %arg19[%381, %c0_105] : memref<64x48xf32, #tpu.memory_space<vmem>>, vector<8x48xf32>
    tpu.vector_store %arg19[%381, %c0_105], %380 {strides = array<i32>} : memref<64x48xf32, #tpu.memory_space<vmem>>, vector<8x48xf32>,
    %cst_106 = arith.constant 0.000000e+00 : f32
    %383 = vector.broadcast %cst_106 : f32 to vector<8x48xf32>
    %384 = arith.maximumf %378, %383 : vector<8x48xf32>
    %385 = arith.index_cast %338 : i32 to index
    %c0_107 = arith.constant 0 : index
    %386 = vector.load %arg20[%385, %c0_107] : memref<64x48xf32, #tpu.memory_space<vmem>>, vector<8x48xf32>
    tpu.vector_store %arg20[%385, %c0_107], %384 {strides = array<i32>} : memref<64x48xf32, #tpu.memory_space<vmem>>, vector<8x48xf32>,
    %c7_i32_108 = arith.constant 7 : i32
    %c8_i32_109 = arith.constant 8 : i32
    %387 = arith.muli %c7_i32_108, %c8_i32_109 : i32
    %388 = tpu.assume_multiple %387, 8 : i32
    %c7_i32_110 = arith.constant 7 : i32
    %389 = arith.subi %c7_i32_110, %c7_i32_108 : i32
    %c8_i32_111 = arith.constant 8 : i32
    %390 = arith.muli %389, %c8_i32_111 : i32
    %391 = tpu.assume_multiple %390, 8 : i32
    %392 = arith.index_cast %388 : i32 to index
    %c0_112 = arith.constant 0 : index
    %393 = vector.load %arg17[%392, %c0_112] : memref<64x192xf32, #tpu.memory_space<vmem>>, vector<8x192xf32>
    %cst_113 = arith.constant dense<0.000000e+00> : vector<8x192xf32>
    %394 = tpu.matmul %358, %13, %cst_113 {dimension_numbers = #tpu.dot_dimension_numbers<[1], [0], [0], [1], [0, 0, 1, 1], [], []>} : vector<8x48xf32>, vector<48x192xf32>, vector<8x192xf32> -> vector<8x192xf32>
    %395 = arith.addf %393, %394 : vector<8x192xf32>
    %396 = vector.extract_strided_slice %395 {offsets = [0, 0], sizes = [8, 144], strides = [1, 1]} : vector<8x192xf32> to vector<8x144xf32>
    %397 = arith.negf %396 : vector<8x144xf32>
    %398 = math.exp %397 : vector<8x144xf32>
    %cst_114 = arith.constant 1.000000e+00 : f32
    %399 = vector.broadcast %cst_114 : f32 to vector<8x144xf32>
    %400 = arith.addf %399, %398 : vector<8x144xf32>
    %401 = arith.divf %399, %400 : vector<8x144xf32>
    %402 = vector.extract_strided_slice %401 {offsets = [0, 0], sizes = [8, 48], strides = [1, 1]} : vector<8x144xf32> to vector<8x48xf32>
    %403 = vector.extract_strided_slice %401 {offsets = [0, 48], sizes = [8, 48], strides = [1, 1]} : vector<8x144xf32> to vector<8x48xf32>
    %404 = vector.extract_strided_slice %401 {offsets = [0, 96], sizes = [8, 48], strides = [1, 1]} : vector<8x144xf32> to vector<8x48xf32>
    %405 = vector.extract_strided_slice %395 {offsets = [0, 144], sizes = [8, 48], strides = [1, 1]} : vector<8x192xf32> to vector<8x48xf32>
    %406 = math.tanh %405 : vector<8x48xf32>
    %407 = arith.mulf %403, %356 : vector<8x48xf32>
    %408 = arith.mulf %402, %406 : vector<8x48xf32>
    %409 = arith.addf %407, %408 : vector<8x48xf32>
    %410 = math.tanh %409 : vector<8x48xf32>
    %411 = arith.mulf %404, %410 : vector<8x48xf32>
    %412 = arith.index_cast %391 : i32 to index
    %c0_115 = arith.constant 0 : index
    %413 = vector.load %arg18[%412, %c0_115] : memref<64x192xf32, #tpu.memory_space<vmem>>, vector<8x192xf32>
    %cst_116 = arith.constant dense<0.000000e+00> : vector<8x192xf32>
    %414 = tpu.matmul %378, %14, %cst_116 {dimension_numbers = #tpu.dot_dimension_numbers<[1], [0], [0], [1], [0, 0, 1, 1], [], []>} : vector<8x48xf32>, vector<48x192xf32>, vector<8x192xf32> -> vector<8x192xf32>
    %415 = arith.addf %413, %414 : vector<8x192xf32>
    %416 = vector.extract_strided_slice %415 {offsets = [0, 0], sizes = [8, 144], strides = [1, 1]} : vector<8x192xf32> to vector<8x144xf32>
    %417 = arith.negf %416 : vector<8x144xf32>
    %418 = math.exp %417 : vector<8x144xf32>
    %cst_117 = arith.constant 1.000000e+00 : f32
    %419 = vector.broadcast %cst_117 : f32 to vector<8x144xf32>
    %420 = arith.addf %419, %418 : vector<8x144xf32>
    %421 = arith.divf %419, %420 : vector<8x144xf32>
    %422 = vector.extract_strided_slice %421 {offsets = [0, 0], sizes = [8, 48], strides = [1, 1]} : vector<8x144xf32> to vector<8x48xf32>
    %423 = vector.extract_strided_slice %421 {offsets = [0, 48], sizes = [8, 48], strides = [1, 1]} : vector<8x144xf32> to vector<8x48xf32>
    %424 = vector.extract_strided_slice %421 {offsets = [0, 96], sizes = [8, 48], strides = [1, 1]} : vector<8x144xf32> to vector<8x48xf32>
    %425 = vector.extract_strided_slice %415 {offsets = [0, 144], sizes = [8, 48], strides = [1, 1]} : vector<8x192xf32> to vector<8x48xf32>
    %426 = math.tanh %425 : vector<8x48xf32>
    %427 = arith.mulf %423, %376 : vector<8x48xf32>
    %428 = arith.mulf %422, %426 : vector<8x48xf32>
    %429 = arith.addf %427, %428 : vector<8x48xf32>
    %430 = math.tanh %429 : vector<8x48xf32>
    %431 = arith.mulf %424, %430 : vector<8x48xf32>
    %cst_118 = arith.constant 0.000000e+00 : f32
    %432 = vector.broadcast %cst_118 : f32 to vector<8x48xf32>
    %433 = arith.maximumf %411, %432 : vector<8x48xf32>
    %434 = arith.index_cast %388 : i32 to index
    %c0_119 = arith.constant 0 : index
    %435 = vector.load %arg19[%434, %c0_119] : memref<64x48xf32, #tpu.memory_space<vmem>>, vector<8x48xf32>
    tpu.vector_store %arg19[%434, %c0_119], %433 {strides = array<i32>} : memref<64x48xf32, #tpu.memory_space<vmem>>, vector<8x48xf32>,
    %cst_120 = arith.constant 0.000000e+00 : f32
    %436 = vector.broadcast %cst_120 : f32 to vector<8x48xf32>
    %437 = arith.maximumf %431, %436 : vector<8x48xf32>
    %438 = arith.index_cast %391 : i32 to index
    %c0_121 = arith.constant 0 : index
    %439 = vector.load %arg20[%438, %c0_121] : memref<64x48xf32, #tpu.memory_space<vmem>>, vector<8x48xf32>
    tpu.vector_store %arg20[%438, %c0_121], %437 {strides = array<i32>} : memref<64x48xf32, #tpu.memory_space<vmem>>, vector<8x48xf32>,
    %c8_i32_122 = arith.constant 8 : i32
    %c0_123 = arith.constant 0 : index
    %c0_124 = arith.constant 0 : index
    %440 = vector.load %arg19[%c0_123, %c0_124] : memref<64x48xf32, #tpu.memory_space<vmem>>, vector<64x48xf32>
    %c0_125 = arith.constant 0 : index
    %c0_126 = arith.constant 0 : index
    %441 = vector.load %arg20[%c0_125, %c0_126] : memref<64x48xf32, #tpu.memory_space<vmem>>, vector<64x48xf32>
    %c0_127 = arith.constant 0 : index
    %c0_128 = arith.constant 0 : index
    %442 = vector.load %arg7[%c0_127, %c0_128] : memref<96x128xf32, #tpu.memory_space<vmem>>, vector<96x128xf32>
    %c0_129 = arith.constant 0 : index
    %c0_130 = arith.constant 0 : index
    %443 = vector.load %arg10[%c0_129, %c0_130] : memref<96x128xf32, #tpu.memory_space<vmem>>, vector<96x128xf32>
    %444 = vector.extract_strided_slice %442 {offsets = [0, 0], sizes = [48, 128], strides = [1, 1]} : vector<96x128xf32> to vector<48x128xf32>
    %cst_131 = arith.constant dense<0.000000e+00> : vector<64x128xf32>
    %445 = tpu.matmul %440, %444, %cst_131 {dimension_numbers = #tpu.dot_dimension_numbers<[1], [0], [0], [1], [0, 0, 1, 1], [], []>} : vector<64x48xf32>, vector<48x128xf32>, vector<64x128xf32> -> vector<64x128xf32>
    %446 = vector.extract_strided_slice %442 {offsets = [48, 0], sizes = [48, 128], strides = [1, 1]} : vector<96x128xf32> to vector<48x128xf32>
    %cst_132 = arith.constant dense<0.000000e+00> : vector<64x128xf32>
    %447 = tpu.matmul %441, %446, %cst_132 {dimension_numbers = #tpu.dot_dimension_numbers<[1], [0], [0], [1], [0, 0, 1, 1], [], []>} : vector<64x48xf32>, vector<48x128xf32>, vector<64x128xf32> -> vector<64x128xf32>
    %448 = arith.addf %445, %447 : vector<64x128xf32>
    %c0_133 = arith.constant 0 : index
    %c0_134 = arith.constant 0 : index
    %449 = vector.load %arg9[%c0_133, %c0_134] : memref<1x128xf32, #tpu.memory_space<vmem>>, vector<1x128xf32>
    %450 = vector.broadcast %449 : vector<1x128xf32> to vector<64x128xf32>
    %451 = arith.addf %448, %450 : vector<64x128xf32>
    %c0_135 = arith.constant 0 : index
    %c0_136 = arith.constant 0 : index
    %452 = vector.load %arg21[%c0_135, %c0_136] : memref<64x128xf32, #tpu.memory_space<vmem>>, vector<64x128xf32>
    tpu.vector_store %arg21[%c0_135, %c0_136], %451 {strides = array<i32>} : memref<64x128xf32, #tpu.memory_space<vmem>>, vector<64x128xf32>,
    %453 = vector.extract_strided_slice %443 {offsets = [0, 0], sizes = [48, 128], strides = [1, 1]} : vector<96x128xf32> to vector<48x128xf32>
    %cst_137 = arith.constant dense<0.000000e+00> : vector<64x128xf32>
    %454 = tpu.matmul %440, %453, %cst_137 {dimension_numbers = #tpu.dot_dimension_numbers<[1], [0], [0], [1], [0, 0, 1, 1], [], []>} : vector<64x48xf32>, vector<48x128xf32>, vector<64x128xf32> -> vector<64x128xf32>
    %455 = vector.extract_strided_slice %443 {offsets = [48, 0], sizes = [48, 128], strides = [1, 1]} : vector<96x128xf32> to vector<48x128xf32>
    %cst_138 = arith.constant dense<0.000000e+00> : vector<64x128xf32>
    %456 = tpu.matmul %441, %455, %cst_138 {dimension_numbers = #tpu.dot_dimension_numbers<[1], [0], [0], [1], [0, 0, 1, 1], [], []>} : vector<64x48xf32>, vector<48x128xf32>, vector<64x128xf32> -> vector<64x128xf32>
    %457 = arith.addf %454, %456 : vector<64x128xf32>
    %c0_139 = arith.constant 0 : index
    %c0_140 = arith.constant 0 : index
    %458 = vector.load %arg12[%c0_139, %c0_140] : memref<1x128xf32, #tpu.memory_space<vmem>>, vector<1x128xf32>
    %459 = vector.broadcast %458 : vector<1x128xf32> to vector<64x128xf32>
    %460 = arith.addf %457, %459 : vector<64x128xf32>
    %c0_141 = arith.constant 0 : index
    %c0_142 = arith.constant 0 : index
    %461 = vector.load %arg22[%c0_141, %c0_142] : memref<64x128xf32, #tpu.memory_space<vmem>>, vector<64x128xf32>
    tpu.vector_store %arg22[%c0_141, %c0_142], %460 {strides = array<i32>} : memref<64x128xf32, #tpu.memory_space<vmem>>, vector<64x128xf32>,
    %c0_143 = arith.constant 0 : index
    %c0_144 = arith.constant 0 : index
    %462 = vector.load %arg8[%c0_143, %c0_144] : memref<32x128xf32, #tpu.memory_space<vmem>>, vector<32x128xf32>
    %c0_145 = arith.constant 0 : index
    %c0_146 = arith.constant 0 : index
    %463 = vector.load %arg11[%c0_145, %c0_146] : memref<32x128xf32, #tpu.memory_space<vmem>>, vector<32x128xf32>
    %cst_147 = arith.constant 0.000000e+00 : f32
    %464 = vector.broadcast %cst_147 : f32 to vector<8x32xf32>
    %c0_i32_148 = arith.constant 0 : i32
    %c8_i32_149 = arith.constant 8 : i32
    %465 = arith.muli %c0_i32_148, %c8_i32_149 : i32
    %466 = tpu.assume_multiple %465, 8 : i32
    %c7_i32_150 = arith.constant 7 : i32
    %467 = arith.subi %c7_i32_150, %c0_i32_148 : i32
    %c8_i32_151 = arith.constant 8 : i32
    %468 = arith.muli %467, %c8_i32_151 : i32
    %469 = tpu.assume_multiple %468, 8 : i32
    %470 = arith.index_cast %466 : i32 to index
    %c0_152 = arith.constant 0 : index
    %471 = vector.load %arg21[%470, %c0_152] : memref<64x128xf32, #tpu.memory_space<vmem>>, vector<8x128xf32>
    %cst_153 = arith.constant dense<0.000000e+00> : vector<8x128xf32>
    %472 = tpu.matmul %464, %462, %cst_153 {dimension_numbers = #tpu.dot_dimension_numbers<[1], [0], [0], [1], [0, 0, 1, 1], [], []>} : vector<8x32xf32>, vector<32x128xf32>, vector<8x128xf32> -> vector<8x128xf32>
    %473 = arith.addf %471, %472 : vector<8x128xf32>
    %474 = vector.extract_strided_slice %473 {offsets = [0, 0], sizes = [8, 96], strides = [1, 1]} : vector<8x128xf32> to vector<8x96xf32>
    %475 = arith.negf %474 : vector<8x96xf32>
    %476 = math.exp %475 : vector<8x96xf32>
    %cst_154 = arith.constant 1.000000e+00 : f32
    %477 = vector.broadcast %cst_154 : f32 to vector<8x96xf32>
    %478 = arith.addf %477, %476 : vector<8x96xf32>
    %479 = arith.divf %477, %478 : vector<8x96xf32>
    %480 = vector.extract_strided_slice %479 {offsets = [0, 0], sizes = [8, 32], strides = [1, 1]} : vector<8x96xf32> to vector<8x32xf32>
    %481 = vector.extract_strided_slice %479 {offsets = [0, 32], sizes = [8, 32], strides = [1, 1]} : vector<8x96xf32> to vector<8x32xf32>
    %482 = vector.extract_strided_slice %479 {offsets = [0, 64], sizes = [8, 32], strides = [1, 1]} : vector<8x96xf32> to vector<8x32xf32>
    %483 = vector.extract_strided_slice %473 {offsets = [0, 96], sizes = [8, 32], strides = [1, 1]} : vector<8x128xf32> to vector<8x32xf32>
    %484 = math.tanh %483 : vector<8x32xf32>
    %485 = arith.mulf %481, %464 : vector<8x32xf32>
    %486 = arith.mulf %480, %484 : vector<8x32xf32>
    %487 = arith.addf %485, %486 : vector<8x32xf32>
    %488 = math.tanh %487 : vector<8x32xf32>
    %489 = arith.mulf %482, %488 : vector<8x32xf32>
    %490 = arith.index_cast %469 : i32 to index
    %c0_155 = arith.constant 0 : index
    %491 = vector.load %arg22[%490, %c0_155] : memref<64x128xf32, #tpu.memory_space<vmem>>, vector<8x128xf32>
    %cst_156 = arith.constant dense<0.000000e+00> : vector<8x128xf32>
    %492 = tpu.matmul %464, %463, %cst_156 {dimension_numbers = #tpu.dot_dimension_numbers<[1], [0], [0], [1], [0, 0, 1, 1], [], []>} : vector<8x32xf32>, vector<32x128xf32>, vector<8x128xf32> -> vector<8x128xf32>
    %493 = arith.addf %491, %492 : vector<8x128xf32>
    %494 = vector.extract_strided_slice %493 {offsets = [0, 0], sizes = [8, 96], strides = [1, 1]} : vector<8x128xf32> to vector<8x96xf32>
    %495 = arith.negf %494 : vector<8x96xf32>
    %496 = math.exp %495 : vector<8x96xf32>
    %cst_157 = arith.constant 1.000000e+00 : f32
    %497 = vector.broadcast %cst_157 : f32 to vector<8x96xf32>
    %498 = arith.addf %497, %496 : vector<8x96xf32>
    %499 = arith.divf %497, %498 : vector<8x96xf32>
    %500 = vector.extract_strided_slice %499 {offsets = [0, 0], sizes = [8, 32], strides = [1, 1]} : vector<8x96xf32> to vector<8x32xf32>
    %501 = vector.extract_strided_slice %499 {offsets = [0, 32], sizes = [8, 32], strides = [1, 1]} : vector<8x96xf32> to vector<8x32xf32>
    %502 = vector.extract_strided_slice %499 {offsets = [0, 64], sizes = [8, 32], strides = [1, 1]} : vector<8x96xf32> to vector<8x32xf32>
    %503 = vector.extract_strided_slice %493 {offsets = [0, 96], sizes = [8, 32], strides = [1, 1]} : vector<8x128xf32> to vector<8x32xf32>
    %504 = math.tanh %503 : vector<8x32xf32>
    %505 = arith.mulf %501, %464 : vector<8x32xf32>
    %506 = arith.mulf %500, %504 : vector<8x32xf32>
    %507 = arith.addf %505, %506 : vector<8x32xf32>
    %508 = math.tanh %507 : vector<8x32xf32>
    %509 = arith.mulf %502, %508 : vector<8x32xf32>
    %cst_158 = arith.constant 0.000000e+00 : f32
    %510 = vector.broadcast %cst_158 : f32 to vector<8x32xf32>
    %511 = arith.maximumf %489, %510 : vector<8x32xf32>
    %512 = arith.index_cast %466 : i32 to index
    %c0_159 = arith.constant 0 : index
    %513 = vector.load %arg23[%512, %c0_159] : memref<64x32xf32, #tpu.memory_space<vmem>>, vector<8x32xf32>
    tpu.vector_store %arg23[%512, %c0_159], %511 {strides = array<i32>} : memref<64x32xf32, #tpu.memory_space<vmem>>, vector<8x32xf32>,
    %cst_160 = arith.constant 0.000000e+00 : f32
    %514 = vector.broadcast %cst_160 : f32 to vector<8x32xf32>
    %515 = arith.maximumf %509, %514 : vector<8x32xf32>
    %516 = arith.index_cast %469 : i32 to index
    %c0_161 = arith.constant 0 : index
    %517 = vector.load %arg24[%516, %c0_161] : memref<64x32xf32, #tpu.memory_space<vmem>>, vector<8x32xf32>
    tpu.vector_store %arg24[%516, %c0_161], %515 {strides = array<i32>} : memref<64x32xf32, #tpu.memory_space<vmem>>, vector<8x32xf32>,
    %c1_i32_162 = arith.constant 1 : i32
    %c8_i32_163 = arith.constant 8 : i32
    %518 = arith.muli %c1_i32_162, %c8_i32_163 : i32
    %519 = tpu.assume_multiple %518, 8 : i32
    %c7_i32_164 = arith.constant 7 : i32
    %520 = arith.subi %c7_i32_164, %c1_i32_162 : i32
    %c8_i32_165 = arith.constant 8 : i32
    %521 = arith.muli %520, %c8_i32_165 : i32
    %522 = tpu.assume_multiple %521, 8 : i32
    %523 = arith.index_cast %519 : i32 to index
    %c0_166 = arith.constant 0 : index
    %524 = vector.load %arg21[%523, %c0_166] : memref<64x128xf32, #tpu.memory_space<vmem>>, vector<8x128xf32>
    %cst_167 = arith.constant dense<0.000000e+00> : vector<8x128xf32>
    %525 = tpu.matmul %489, %462, %cst_167 {dimension_numbers = #tpu.dot_dimension_numbers<[1], [0], [0], [1], [0, 0, 1, 1], [], []>} : vector<8x32xf32>, vector<32x128xf32>, vector<8x128xf32> -> vector<8x128xf32>
    %526 = arith.addf %524, %525 : vector<8x128xf32>
    %527 = vector.extract_strided_slice %526 {offsets = [0, 0], sizes = [8, 96], strides = [1, 1]} : vector<8x128xf32> to vector<8x96xf32>
    %528 = arith.negf %527 : vector<8x96xf32>
    %529 = math.exp %528 : vector<8x96xf32>
    %cst_168 = arith.constant 1.000000e+00 : f32
    %530 = vector.broadcast %cst_168 : f32 to vector<8x96xf32>
    %531 = arith.addf %530, %529 : vector<8x96xf32>
    %532 = arith.divf %530, %531 : vector<8x96xf32>
    %533 = vector.extract_strided_slice %532 {offsets = [0, 0], sizes = [8, 32], strides = [1, 1]} : vector<8x96xf32> to vector<8x32xf32>
    %534 = vector.extract_strided_slice %532 {offsets = [0, 32], sizes = [8, 32], strides = [1, 1]} : vector<8x96xf32> to vector<8x32xf32>
    %535 = vector.extract_strided_slice %532 {offsets = [0, 64], sizes = [8, 32], strides = [1, 1]} : vector<8x96xf32> to vector<8x32xf32>
    %536 = vector.extract_strided_slice %526 {offsets = [0, 96], sizes = [8, 32], strides = [1, 1]} : vector<8x128xf32> to vector<8x32xf32>
    %537 = math.tanh %536 : vector<8x32xf32>
    %538 = arith.mulf %534, %487 : vector<8x32xf32>
    %539 = arith.mulf %533, %537 : vector<8x32xf32>
    %540 = arith.addf %538, %539 : vector<8x32xf32>
    %541 = math.tanh %540 : vector<8x32xf32>
    %542 = arith.mulf %535, %541 : vector<8x32xf32>
    %543 = arith.index_cast %522 : i32 to index
    %c0_169 = arith.constant 0 : index
    %544 = vector.load %arg22[%543, %c0_169] : memref<64x128xf32, #tpu.memory_space<vmem>>, vector<8x128xf32>
    %cst_170 = arith.constant dense<0.000000e+00> : vector<8x128xf32>
    %545 = tpu.matmul %509, %463, %cst_170 {dimension_numbers = #tpu.dot_dimension_numbers<[1], [0], [0], [1], [0, 0, 1, 1], [], []>} : vector<8x32xf32>, vector<32x128xf32>, vector<8x128xf32> -> vector<8x128xf32>
    %546 = arith.addf %544, %545 : vector<8x128xf32>
    %547 = vector.extract_strided_slice %546 {offsets = [0, 0], sizes = [8, 96], strides = [1, 1]} : vector<8x128xf32> to vector<8x96xf32>
    %548 = arith.negf %547 : vector<8x96xf32>
    %549 = math.exp %548 : vector<8x96xf32>
    %cst_171 = arith.constant 1.000000e+00 : f32
    %550 = vector.broadcast %cst_171 : f32 to vector<8x96xf32>
    %551 = arith.addf %550, %549 : vector<8x96xf32>
    %552 = arith.divf %550, %551 : vector<8x96xf32>
    %553 = vector.extract_strided_slice %552 {offsets = [0, 0], sizes = [8, 32], strides = [1, 1]} : vector<8x96xf32> to vector<8x32xf32>
    %554 = vector.extract_strided_slice %552 {offsets = [0, 32], sizes = [8, 32], strides = [1, 1]} : vector<8x96xf32> to vector<8x32xf32>
    %555 = vector.extract_strided_slice %552 {offsets = [0, 64], sizes = [8, 32], strides = [1, 1]} : vector<8x96xf32> to vector<8x32xf32>
    %556 = vector.extract_strided_slice %546 {offsets = [0, 96], sizes = [8, 32], strides = [1, 1]} : vector<8x128xf32> to vector<8x32xf32>
    %557 = math.tanh %556 : vector<8x32xf32>
    %558 = arith.mulf %554, %507 : vector<8x32xf32>
    %559 = arith.mulf %553, %557 : vector<8x32xf32>
    %560 = arith.addf %558, %559 : vector<8x32xf32>
    %561 = math.tanh %560 : vector<8x32xf32>
    %562 = arith.mulf %555, %561 : vector<8x32xf32>
    %cst_172 = arith.constant 0.000000e+00 : f32
    %563 = vector.broadcast %cst_172 : f32 to vector<8x32xf32>
    %564 = arith.maximumf %542, %563 : vector<8x32xf32>
    %565 = arith.index_cast %519 : i32 to index
    %c0_173 = arith.constant 0 : index
    %566 = vector.load %arg23[%565, %c0_173] : memref<64x32xf32, #tpu.memory_space<vmem>>, vector<8x32xf32>
    tpu.vector_store %arg23[%565, %c0_173], %564 {strides = array<i32>} : memref<64x32xf32, #tpu.memory_space<vmem>>, vector<8x32xf32>,
    %cst_174 = arith.constant 0.000000e+00 : f32
    %567 = vector.broadcast %cst_174 : f32 to vector<8x32xf32>
    %568 = arith.maximumf %562, %567 : vector<8x32xf32>
    %569 = arith.index_cast %522 : i32 to index
    %c0_175 = arith.constant 0 : index
    %570 = vector.load %arg24[%569, %c0_175] : memref<64x32xf32, #tpu.memory_space<vmem>>, vector<8x32xf32>
    tpu.vector_store %arg24[%569, %c0_175], %568 {strides = array<i32>} : memref<64x32xf32, #tpu.memory_space<vmem>>, vector<8x32xf32>,
    %c2_i32_176 = arith.constant 2 : i32
    %c8_i32_177 = arith.constant 8 : i32
    %571 = arith.muli %c2_i32_176, %c8_i32_177 : i32
    %572 = tpu.assume_multiple %571, 8 : i32
    %c7_i32_178 = arith.constant 7 : i32
    %573 = arith.subi %c7_i32_178, %c2_i32_176 : i32
    %c8_i32_179 = arith.constant 8 : i32
    %574 = arith.muli %573, %c8_i32_179 : i32
    %575 = tpu.assume_multiple %574, 8 : i32
    %576 = arith.index_cast %572 : i32 to index
    %c0_180 = arith.constant 0 : index
    %577 = vector.load %arg21[%576, %c0_180] : memref<64x128xf32, #tpu.memory_space<vmem>>, vector<8x128xf32>
    %cst_181 = arith.constant dense<0.000000e+00> : vector<8x128xf32>
    %578 = tpu.matmul %542, %462, %cst_181 {dimension_numbers = #tpu.dot_dimension_numbers<[1], [0], [0], [1], [0, 0, 1, 1], [], []>} : vector<8x32xf32>, vector<32x128xf32>, vector<8x128xf32> -> vector<8x128xf32>
    %579 = arith.addf %577, %578 : vector<8x128xf32>
    %580 = vector.extract_strided_slice %579 {offsets = [0, 0], sizes = [8, 96], strides = [1, 1]} : vector<8x128xf32> to vector<8x96xf32>
    %581 = arith.negf %580 : vector<8x96xf32>
    %582 = math.exp %581 : vector<8x96xf32>
    %cst_182 = arith.constant 1.000000e+00 : f32
    %583 = vector.broadcast %cst_182 : f32 to vector<8x96xf32>
    %584 = arith.addf %583, %582 : vector<8x96xf32>
    %585 = arith.divf %583, %584 : vector<8x96xf32>
    %586 = vector.extract_strided_slice %585 {offsets = [0, 0], sizes = [8, 32], strides = [1, 1]} : vector<8x96xf32> to vector<8x32xf32>
    %587 = vector.extract_strided_slice %585 {offsets = [0, 32], sizes = [8, 32], strides = [1, 1]} : vector<8x96xf32> to vector<8x32xf32>
    %588 = vector.extract_strided_slice %585 {offsets = [0, 64], sizes = [8, 32], strides = [1, 1]} : vector<8x96xf32> to vector<8x32xf32>
    %589 = vector.extract_strided_slice %579 {offsets = [0, 96], sizes = [8, 32], strides = [1, 1]} : vector<8x128xf32> to vector<8x32xf32>
    %590 = math.tanh %589 : vector<8x32xf32>
    %591 = arith.mulf %587, %540 : vector<8x32xf32>
    %592 = arith.mulf %586, %590 : vector<8x32xf32>
    %593 = arith.addf %591, %592 : vector<8x32xf32>
    %594 = math.tanh %593 : vector<8x32xf32>
    %595 = arith.mulf %588, %594 : vector<8x32xf32>
    %596 = arith.index_cast %575 : i32 to index
    %c0_183 = arith.constant 0 : index
    %597 = vector.load %arg22[%596, %c0_183] : memref<64x128xf32, #tpu.memory_space<vmem>>, vector<8x128xf32>
    %cst_184 = arith.constant dense<0.000000e+00> : vector<8x128xf32>
    %598 = tpu.matmul %562, %463, %cst_184 {dimension_numbers = #tpu.dot_dimension_numbers<[1], [0], [0], [1], [0, 0, 1, 1], [], []>} : vector<8x32xf32>, vector<32x128xf32>, vector<8x128xf32> -> vector<8x128xf32>
    %599 = arith.addf %597, %598 : vector<8x128xf32>
    %600 = vector.extract_strided_slice %599 {offsets = [0, 0], sizes = [8, 96], strides = [1, 1]} : vector<8x128xf32> to vector<8x96xf32>
    %601 = arith.negf %600 : vector<8x96xf32>
    %602 = math.exp %601 : vector<8x96xf32>
    %cst_185 = arith.constant 1.000000e+00 : f32
    %603 = vector.broadcast %cst_185 : f32 to vector<8x96xf32>
    %604 = arith.addf %603, %602 : vector<8x96xf32>
    %605 = arith.divf %603, %604 : vector<8x96xf32>
    %606 = vector.extract_strided_slice %605 {offsets = [0, 0], sizes = [8, 32], strides = [1, 1]} : vector<8x96xf32> to vector<8x32xf32>
    %607 = vector.extract_strided_slice %605 {offsets = [0, 32], sizes = [8, 32], strides = [1, 1]} : vector<8x96xf32> to vector<8x32xf32>
    %608 = vector.extract_strided_slice %605 {offsets = [0, 64], sizes = [8, 32], strides = [1, 1]} : vector<8x96xf32> to vector<8x32xf32>
    %609 = vector.extract_strided_slice %599 {offsets = [0, 96], sizes = [8, 32], strides = [1, 1]} : vector<8x128xf32> to vector<8x32xf32>
    %610 = math.tanh %609 : vector<8x32xf32>
    %611 = arith.mulf %607, %560 : vector<8x32xf32>
    %612 = arith.mulf %606, %610 : vector<8x32xf32>
    %613 = arith.addf %611, %612 : vector<8x32xf32>
    %614 = math.tanh %613 : vector<8x32xf32>
    %615 = arith.mulf %608, %614 : vector<8x32xf32>
    %cst_186 = arith.constant 0.000000e+00 : f32
    %616 = vector.broadcast %cst_186 : f32 to vector<8x32xf32>
    %617 = arith.maximumf %595, %616 : vector<8x32xf32>
    %618 = arith.index_cast %572 : i32 to index
    %c0_187 = arith.constant 0 : index
    %619 = vector.load %arg23[%618, %c0_187] : memref<64x32xf32, #tpu.memory_space<vmem>>, vector<8x32xf32>
    tpu.vector_store %arg23[%618, %c0_187], %617 {strides = array<i32>} : memref<64x32xf32, #tpu.memory_space<vmem>>, vector<8x32xf32>,
    %cst_188 = arith.constant 0.000000e+00 : f32
    %620 = vector.broadcast %cst_188 : f32 to vector<8x32xf32>
    %621 = arith.maximumf %615, %620 : vector<8x32xf32>
    %622 = arith.index_cast %575 : i32 to index
    %c0_189 = arith.constant 0 : index
    %623 = vector.load %arg24[%622, %c0_189] : memref<64x32xf32, #tpu.memory_space<vmem>>, vector<8x32xf32>
    tpu.vector_store %arg24[%622, %c0_189], %621 {strides = array<i32>} : memref<64x32xf32, #tpu.memory_space<vmem>>, vector<8x32xf32>,
    %c3_i32_190 = arith.constant 3 : i32
    %c8_i32_191 = arith.constant 8 : i32
    %624 = arith.muli %c3_i32_190, %c8_i32_191 : i32
    %625 = tpu.assume_multiple %624, 8 : i32
    %c7_i32_192 = arith.constant 7 : i32
    %626 = arith.subi %c7_i32_192, %c3_i32_190 : i32
    %c8_i32_193 = arith.constant 8 : i32
    %627 = arith.muli %626, %c8_i32_193 : i32
    %628 = tpu.assume_multiple %627, 8 : i32
    %629 = arith.index_cast %625 : i32 to index
    %c0_194 = arith.constant 0 : index
    %630 = vector.load %arg21[%629, %c0_194] : memref<64x128xf32, #tpu.memory_space<vmem>>, vector<8x128xf32>
    %cst_195 = arith.constant dense<0.000000e+00> : vector<8x128xf32>
    %631 = tpu.matmul %595, %462, %cst_195 {dimension_numbers = #tpu.dot_dimension_numbers<[1], [0], [0], [1], [0, 0, 1, 1], [], []>} : vector<8x32xf32>, vector<32x128xf32>, vector<8x128xf32> -> vector<8x128xf32>
    %632 = arith.addf %630, %631 : vector<8x128xf32>
    %633 = vector.extract_strided_slice %632 {offsets = [0, 0], sizes = [8, 96], strides = [1, 1]} : vector<8x128xf32> to vector<8x96xf32>
    %634 = arith.negf %633 : vector<8x96xf32>
    %635 = math.exp %634 : vector<8x96xf32>
    %cst_196 = arith.constant 1.000000e+00 : f32
    %636 = vector.broadcast %cst_196 : f32 to vector<8x96xf32>
    %637 = arith.addf %636, %635 : vector<8x96xf32>
    %638 = arith.divf %636, %637 : vector<8x96xf32>
    %639 = vector.extract_strided_slice %638 {offsets = [0, 0], sizes = [8, 32], strides = [1, 1]} : vector<8x96xf32> to vector<8x32xf32>
    %640 = vector.extract_strided_slice %638 {offsets = [0, 32], sizes = [8, 32], strides = [1, 1]} : vector<8x96xf32> to vector<8x32xf32>
    %641 = vector.extract_strided_slice %638 {offsets = [0, 64], sizes = [8, 32], strides = [1, 1]} : vector<8x96xf32> to vector<8x32xf32>
    %642 = vector.extract_strided_slice %632 {offsets = [0, 96], sizes = [8, 32], strides = [1, 1]} : vector<8x128xf32> to vector<8x32xf32>
    %643 = math.tanh %642 : vector<8x32xf32>
    %644 = arith.mulf %640, %593 : vector<8x32xf32>
    %645 = arith.mulf %639, %643 : vector<8x32xf32>
    %646 = arith.addf %644, %645 : vector<8x32xf32>
    %647 = math.tanh %646 : vector<8x32xf32>
    %648 = arith.mulf %641, %647 : vector<8x32xf32>
    %649 = arith.index_cast %628 : i32 to index
    %c0_197 = arith.constant 0 : index
    %650 = vector.load %arg22[%649, %c0_197] : memref<64x128xf32, #tpu.memory_space<vmem>>, vector<8x128xf32>
    %cst_198 = arith.constant dense<0.000000e+00> : vector<8x128xf32>
    %651 = tpu.matmul %615, %463, %cst_198 {dimension_numbers = #tpu.dot_dimension_numbers<[1], [0], [0], [1], [0, 0, 1, 1], [], []>} : vector<8x32xf32>, vector<32x128xf32>, vector<8x128xf32> -> vector<8x128xf32>
    %652 = arith.addf %650, %651 : vector<8x128xf32>
    %653 = vector.extract_strided_slice %652 {offsets = [0, 0], sizes = [8, 96], strides = [1, 1]} : vector<8x128xf32> to vector<8x96xf32>
    %654 = arith.negf %653 : vector<8x96xf32>
    %655 = math.exp %654 : vector<8x96xf32>
    %cst_199 = arith.constant 1.000000e+00 : f32
    %656 = vector.broadcast %cst_199 : f32 to vector<8x96xf32>
    %657 = arith.addf %656, %655 : vector<8x96xf32>
    %658 = arith.divf %656, %657 : vector<8x96xf32>
    %659 = vector.extract_strided_slice %658 {offsets = [0, 0], sizes = [8, 32], strides = [1, 1]} : vector<8x96xf32> to vector<8x32xf32>
    %660 = vector.extract_strided_slice %658 {offsets = [0, 32], sizes = [8, 32], strides = [1, 1]} : vector<8x96xf32> to vector<8x32xf32>
    %661 = vector.extract_strided_slice %658 {offsets = [0, 64], sizes = [8, 32], strides = [1, 1]} : vector<8x96xf32> to vector<8x32xf32>
    %662 = vector.extract_strided_slice %652 {offsets = [0, 96], sizes = [8, 32], strides = [1, 1]} : vector<8x128xf32> to vector<8x32xf32>
    %663 = math.tanh %662 : vector<8x32xf32>
    %664 = arith.mulf %660, %613 : vector<8x32xf32>
    %665 = arith.mulf %659, %663 : vector<8x32xf32>
    %666 = arith.addf %664, %665 : vector<8x32xf32>
    %667 = math.tanh %666 : vector<8x32xf32>
    %668 = arith.mulf %661, %667 : vector<8x32xf32>
    %cst_200 = arith.constant 0.000000e+00 : f32
    %669 = vector.broadcast %cst_200 : f32 to vector<8x32xf32>
    %670 = arith.maximumf %648, %669 : vector<8x32xf32>
    %671 = arith.index_cast %625 : i32 to index
    %c0_201 = arith.constant 0 : index
    %672 = vector.load %arg23[%671, %c0_201] : memref<64x32xf32, #tpu.memory_space<vmem>>, vector<8x32xf32>
    tpu.vector_store %arg23[%671, %c0_201], %670 {strides = array<i32>} : memref<64x32xf32, #tpu.memory_space<vmem>>, vector<8x32xf32>,
    %cst_202 = arith.constant 0.000000e+00 : f32
    %673 = vector.broadcast %cst_202 : f32 to vector<8x32xf32>
    %674 = arith.maximumf %668, %673 : vector<8x32xf32>
    %675 = arith.index_cast %628 : i32 to index
    %c0_203 = arith.constant 0 : index
    %676 = vector.load %arg24[%675, %c0_203] : memref<64x32xf32, #tpu.memory_space<vmem>>, vector<8x32xf32>
    tpu.vector_store %arg24[%675, %c0_203], %674 {strides = array<i32>} : memref<64x32xf32, #tpu.memory_space<vmem>>, vector<8x32xf32>,
    %c4_i32_204 = arith.constant 4 : i32
    %c8_i32_205 = arith.constant 8 : i32
    %677 = arith.muli %c4_i32_204, %c8_i32_205 : i32
    %678 = tpu.assume_multiple %677, 8 : i32
    %c7_i32_206 = arith.constant 7 : i32
    %679 = arith.subi %c7_i32_206, %c4_i32_204 : i32
    %c8_i32_207 = arith.constant 8 : i32
    %680 = arith.muli %679, %c8_i32_207 : i32
    %681 = tpu.assume_multiple %680, 8 : i32
    %682 = arith.index_cast %678 : i32 to index
    %c0_208 = arith.constant 0 : index
    %683 = vector.load %arg21[%682, %c0_208] : memref<64x128xf32, #tpu.memory_space<vmem>>, vector<8x128xf32>
    %cst_209 = arith.constant dense<0.000000e+00> : vector<8x128xf32>
    %684 = tpu.matmul %648, %462, %cst_209 {dimension_numbers = #tpu.dot_dimension_numbers<[1], [0], [0], [1], [0, 0, 1, 1], [], []>} : vector<8x32xf32>, vector<32x128xf32>, vector<8x128xf32> -> vector<8x128xf32>
    %685 = arith.addf %683, %684 : vector<8x128xf32>
    %686 = vector.extract_strided_slice %685 {offsets = [0, 0], sizes = [8, 96], strides = [1, 1]} : vector<8x128xf32> to vector<8x96xf32>
    %687 = arith.negf %686 : vector<8x96xf32>
    %688 = math.exp %687 : vector<8x96xf32>
    %cst_210 = arith.constant 1.000000e+00 : f32
    %689 = vector.broadcast %cst_210 : f32 to vector<8x96xf32>
    %690 = arith.addf %689, %688 : vector<8x96xf32>
    %691 = arith.divf %689, %690 : vector<8x96xf32>
    %692 = vector.extract_strided_slice %691 {offsets = [0, 0], sizes = [8, 32], strides = [1, 1]} : vector<8x96xf32> to vector<8x32xf32>
    %693 = vector.extract_strided_slice %691 {offsets = [0, 32], sizes = [8, 32], strides = [1, 1]} : vector<8x96xf32> to vector<8x32xf32>
    %694 = vector.extract_strided_slice %691 {offsets = [0, 64], sizes = [8, 32], strides = [1, 1]} : vector<8x96xf32> to vector<8x32xf32>
    %695 = vector.extract_strided_slice %685 {offsets = [0, 96], sizes = [8, 32], strides = [1, 1]} : vector<8x128xf32> to vector<8x32xf32>
    %696 = math.tanh %695 : vector<8x32xf32>
    %697 = arith.mulf %693, %646 : vector<8x32xf32>
    %698 = arith.mulf %692, %696 : vector<8x32xf32>
    %699 = arith.addf %697, %698 : vector<8x32xf32>
    %700 = math.tanh %699 : vector<8x32xf32>
    %701 = arith.mulf %694, %700 : vector<8x32xf32>
    %702 = arith.index_cast %681 : i32 to index
    %c0_211 = arith.constant 0 : index
    %703 = vector.load %arg22[%702, %c0_211] : memref<64x128xf32, #tpu.memory_space<vmem>>, vector<8x128xf32>
    %cst_212 = arith.constant dense<0.000000e+00> : vector<8x128xf32>
    %704 = tpu.matmul %668, %463, %cst_212 {dimension_numbers = #tpu.dot_dimension_numbers<[1], [0], [0], [1], [0, 0, 1, 1], [], []>} : vector<8x32xf32>, vector<32x128xf32>, vector<8x128xf32> -> vector<8x128xf32>
    %705 = arith.addf %703, %704 : vector<8x128xf32>
    %706 = vector.extract_strided_slice %705 {offsets = [0, 0], sizes = [8, 96], strides = [1, 1]} : vector<8x128xf32> to vector<8x96xf32>
    %707 = arith.negf %706 : vector<8x96xf32>
    %708 = math.exp %707 : vector<8x96xf32>
    %cst_213 = arith.constant 1.000000e+00 : f32
    %709 = vector.broadcast %cst_213 : f32 to vector<8x96xf32>
    %710 = arith.addf %709, %708 : vector<8x96xf32>
    %711 = arith.divf %709, %710 : vector<8x96xf32>
    %712 = vector.extract_strided_slice %711 {offsets = [0, 0], sizes = [8, 32], strides = [1, 1]} : vector<8x96xf32> to vector<8x32xf32>
    %713 = vector.extract_strided_slice %711 {offsets = [0, 32], sizes = [8, 32], strides = [1, 1]} : vector<8x96xf32> to vector<8x32xf32>
    %714 = vector.extract_strided_slice %711 {offsets = [0, 64], sizes = [8, 32], strides = [1, 1]} : vector<8x96xf32> to vector<8x32xf32>
    %715 = vector.extract_strided_slice %705 {offsets = [0, 96], sizes = [8, 32], strides = [1, 1]} : vector<8x128xf32> to vector<8x32xf32>
    %716 = math.tanh %715 : vector<8x32xf32>
    %717 = arith.mulf %713, %666 : vector<8x32xf32>
    %718 = arith.mulf %712, %716 : vector<8x32xf32>
    %719 = arith.addf %717, %718 : vector<8x32xf32>
    %720 = math.tanh %719 : vector<8x32xf32>
    %721 = arith.mulf %714, %720 : vector<8x32xf32>
    %cst_214 = arith.constant 0.000000e+00 : f32
    %722 = vector.broadcast %cst_214 : f32 to vector<8x32xf32>
    %723 = arith.maximumf %701, %722 : vector<8x32xf32>
    %724 = arith.index_cast %678 : i32 to index
    %c0_215 = arith.constant 0 : index
    %725 = vector.load %arg23[%724, %c0_215] : memref<64x32xf32, #tpu.memory_space<vmem>>, vector<8x32xf32>
    tpu.vector_store %arg23[%724, %c0_215], %723 {strides = array<i32>} : memref<64x32xf32, #tpu.memory_space<vmem>>, vector<8x32xf32>,
    %cst_216 = arith.constant 0.000000e+00 : f32
    %726 = vector.broadcast %cst_216 : f32 to vector<8x32xf32>
    %727 = arith.maximumf %721, %726 : vector<8x32xf32>
    %728 = arith.index_cast %681 : i32 to index
    %c0_217 = arith.constant 0 : index
    %729 = vector.load %arg24[%728, %c0_217] : memref<64x32xf32, #tpu.memory_space<vmem>>, vector<8x32xf32>
    tpu.vector_store %arg24[%728, %c0_217], %727 {strides = array<i32>} : memref<64x32xf32, #tpu.memory_space<vmem>>, vector<8x32xf32>,
    %c5_i32_218 = arith.constant 5 : i32
    %c8_i32_219 = arith.constant 8 : i32
    %730 = arith.muli %c5_i32_218, %c8_i32_219 : i32
    %731 = tpu.assume_multiple %730, 8 : i32
    %c7_i32_220 = arith.constant 7 : i32
    %732 = arith.subi %c7_i32_220, %c5_i32_218 : i32
    %c8_i32_221 = arith.constant 8 : i32
    %733 = arith.muli %732, %c8_i32_221 : i32
    %734 = tpu.assume_multiple %733, 8 : i32
    %735 = arith.index_cast %731 : i32 to index
    %c0_222 = arith.constant 0 : index
    %736 = vector.load %arg21[%735, %c0_222] : memref<64x128xf32, #tpu.memory_space<vmem>>, vector<8x128xf32>
    %cst_223 = arith.constant dense<0.000000e+00> : vector<8x128xf32>
    %737 = tpu.matmul %701, %462, %cst_223 {dimension_numbers = #tpu.dot_dimension_numbers<[1], [0], [0], [1], [0, 0, 1, 1], [], []>} : vector<8x32xf32>, vector<32x128xf32>, vector<8x128xf32> -> vector<8x128xf32>
    %738 = arith.addf %736, %737 : vector<8x128xf32>
    %739 = vector.extract_strided_slice %738 {offsets = [0, 0], sizes = [8, 96], strides = [1, 1]} : vector<8x128xf32> to vector<8x96xf32>
    %740 = arith.negf %739 : vector<8x96xf32>
    %741 = math.exp %740 : vector<8x96xf32>
    %cst_224 = arith.constant 1.000000e+00 : f32
    %742 = vector.broadcast %cst_224 : f32 to vector<8x96xf32>
    %743 = arith.addf %742, %741 : vector<8x96xf32>
    %744 = arith.divf %742, %743 : vector<8x96xf32>
    %745 = vector.extract_strided_slice %744 {offsets = [0, 0], sizes = [8, 32], strides = [1, 1]} : vector<8x96xf32> to vector<8x32xf32>
    %746 = vector.extract_strided_slice %744 {offsets = [0, 32], sizes = [8, 32], strides = [1, 1]} : vector<8x96xf32> to vector<8x32xf32>
    %747 = vector.extract_strided_slice %744 {offsets = [0, 64], sizes = [8, 32], strides = [1, 1]} : vector<8x96xf32> to vector<8x32xf32>
    %748 = vector.extract_strided_slice %738 {offsets = [0, 96], sizes = [8, 32], strides = [1, 1]} : vector<8x128xf32> to vector<8x32xf32>
    %749 = math.tanh %748 : vector<8x32xf32>
    %750 = arith.mulf %746, %699 : vector<8x32xf32>
    %751 = arith.mulf %745, %749 : vector<8x32xf32>
    %752 = arith.addf %750, %751 : vector<8x32xf32>
    %753 = math.tanh %752 : vector<8x32xf32>
    %754 = arith.mulf %747, %753 : vector<8x32xf32>
    %755 = arith.index_cast %734 : i32 to index
    %c0_225 = arith.constant 0 : index
    %756 = vector.load %arg22[%755, %c0_225] : memref<64x128xf32, #tpu.memory_space<vmem>>, vector<8x128xf32>
    %cst_226 = arith.constant dense<0.000000e+00> : vector<8x128xf32>
    %757 = tpu.matmul %721, %463, %cst_226 {dimension_numbers = #tpu.dot_dimension_numbers<[1], [0], [0], [1], [0, 0, 1, 1], [], []>} : vector<8x32xf32>, vector<32x128xf32>, vector<8x128xf32> -> vector<8x128xf32>
    %758 = arith.addf %756, %757 : vector<8x128xf32>
    %759 = vector.extract_strided_slice %758 {offsets = [0, 0], sizes = [8, 96], strides = [1, 1]} : vector<8x128xf32> to vector<8x96xf32>
    %760 = arith.negf %759 : vector<8x96xf32>
    %761 = math.exp %760 : vector<8x96xf32>
    %cst_227 = arith.constant 1.000000e+00 : f32
    %762 = vector.broadcast %cst_227 : f32 to vector<8x96xf32>
    %763 = arith.addf %762, %761 : vector<8x96xf32>
    %764 = arith.divf %762, %763 : vector<8x96xf32>
    %765 = vector.extract_strided_slice %764 {offsets = [0, 0], sizes = [8, 32], strides = [1, 1]} : vector<8x96xf32> to vector<8x32xf32>
    %766 = vector.extract_strided_slice %764 {offsets = [0, 32], sizes = [8, 32], strides = [1, 1]} : vector<8x96xf32> to vector<8x32xf32>
    %767 = vector.extract_strided_slice %764 {offsets = [0, 64], sizes = [8, 32], strides = [1, 1]} : vector<8x96xf32> to vector<8x32xf32>
    %768 = vector.extract_strided_slice %758 {offsets = [0, 96], sizes = [8, 32], strides = [1, 1]} : vector<8x128xf32> to vector<8x32xf32>
    %769 = math.tanh %768 : vector<8x32xf32>
    %770 = arith.mulf %766, %719 : vector<8x32xf32>
    %771 = arith.mulf %765, %769 : vector<8x32xf32>
    %772 = arith.addf %770, %771 : vector<8x32xf32>
    %773 = math.tanh %772 : vector<8x32xf32>
    %774 = arith.mulf %767, %773 : vector<8x32xf32>
    %cst_228 = arith.constant 0.000000e+00 : f32
    %775 = vector.broadcast %cst_228 : f32 to vector<8x32xf32>
    %776 = arith.maximumf %754, %775 : vector<8x32xf32>
    %777 = arith.index_cast %731 : i32 to index
    %c0_229 = arith.constant 0 : index
    %778 = vector.load %arg23[%777, %c0_229] : memref<64x32xf32, #tpu.memory_space<vmem>>, vector<8x32xf32>
    tpu.vector_store %arg23[%777, %c0_229], %776 {strides = array<i32>} : memref<64x32xf32, #tpu.memory_space<vmem>>, vector<8x32xf32>,
    %cst_230 = arith.constant 0.000000e+00 : f32
    %779 = vector.broadcast %cst_230 : f32 to vector<8x32xf32>
    %780 = arith.maximumf %774, %779 : vector<8x32xf32>
    %781 = arith.index_cast %734 : i32 to index
    %c0_231 = arith.constant 0 : index
    %782 = vector.load %arg24[%781, %c0_231] : memref<64x32xf32, #tpu.memory_space<vmem>>, vector<8x32xf32>
    tpu.vector_store %arg24[%781, %c0_231], %780 {strides = array<i32>} : memref<64x32xf32, #tpu.memory_space<vmem>>, vector<8x32xf32>,
    %c6_i32_232 = arith.constant 6 : i32
    %c8_i32_233 = arith.constant 8 : i32
    %783 = arith.muli %c6_i32_232, %c8_i32_233 : i32
    %784 = tpu.assume_multiple %783, 8 : i32
    %c7_i32_234 = arith.constant 7 : i32
    %785 = arith.subi %c7_i32_234, %c6_i32_232 : i32
    %c8_i32_235 = arith.constant 8 : i32
    %786 = arith.muli %785, %c8_i32_235 : i32
    %787 = tpu.assume_multiple %786, 8 : i32
    %788 = arith.index_cast %784 : i32 to index
    %c0_236 = arith.constant 0 : index
    %789 = vector.load %arg21[%788, %c0_236] : memref<64x128xf32, #tpu.memory_space<vmem>>, vector<8x128xf32>
    %cst_237 = arith.constant dense<0.000000e+00> : vector<8x128xf32>
    %790 = tpu.matmul %754, %462, %cst_237 {dimension_numbers = #tpu.dot_dimension_numbers<[1], [0], [0], [1], [0, 0, 1, 1], [], []>} : vector<8x32xf32>, vector<32x128xf32>, vector<8x128xf32> -> vector<8x128xf32>
    %791 = arith.addf %789, %790 : vector<8x128xf32>
    %792 = vector.extract_strided_slice %791 {offsets = [0, 0], sizes = [8, 96], strides = [1, 1]} : vector<8x128xf32> to vector<8x96xf32>
    %793 = arith.negf %792 : vector<8x96xf32>
    %794 = math.exp %793 : vector<8x96xf32>
    %cst_238 = arith.constant 1.000000e+00 : f32
    %795 = vector.broadcast %cst_238 : f32 to vector<8x96xf32>
    %796 = arith.addf %795, %794 : vector<8x96xf32>
    %797 = arith.divf %795, %796 : vector<8x96xf32>
    %798 = vector.extract_strided_slice %797 {offsets = [0, 0], sizes = [8, 32], strides = [1, 1]} : vector<8x96xf32> to vector<8x32xf32>
    %799 = vector.extract_strided_slice %797 {offsets = [0, 32], sizes = [8, 32], strides = [1, 1]} : vector<8x96xf32> to vector<8x32xf32>
    %800 = vector.extract_strided_slice %797 {offsets = [0, 64], sizes = [8, 32], strides = [1, 1]} : vector<8x96xf32> to vector<8x32xf32>
    %801 = vector.extract_strided_slice %791 {offsets = [0, 96], sizes = [8, 32], strides = [1, 1]} : vector<8x128xf32> to vector<8x32xf32>
    %802 = math.tanh %801 : vector<8x32xf32>
    %803 = arith.mulf %799, %752 : vector<8x32xf32>
    %804 = arith.mulf %798, %802 : vector<8x32xf32>
    %805 = arith.addf %803, %804 : vector<8x32xf32>
    %806 = math.tanh %805 : vector<8x32xf32>
    %807 = arith.mulf %800, %806 : vector<8x32xf32>
    %808 = arith.index_cast %787 : i32 to index
    %c0_239 = arith.constant 0 : index
    %809 = vector.load %arg22[%808, %c0_239] : memref<64x128xf32, #tpu.memory_space<vmem>>, vector<8x128xf32>
    %cst_240 = arith.constant dense<0.000000e+00> : vector<8x128xf32>
    %810 = tpu.matmul %774, %463, %cst_240 {dimension_numbers = #tpu.dot_dimension_numbers<[1], [0], [0], [1], [0, 0, 1, 1], [], []>} : vector<8x32xf32>, vector<32x128xf32>, vector<8x128xf32> -> vector<8x128xf32>
    %811 = arith.addf %809, %810 : vector<8x128xf32>
    %812 = vector.extract_strided_slice %811 {offsets = [0, 0], sizes = [8, 96], strides = [1, 1]} : vector<8x128xf32> to vector<8x96xf32>
    %813 = arith.negf %812 : vector<8x96xf32>
    %814 = math.exp %813 : vector<8x96xf32>
    %cst_241 = arith.constant 1.000000e+00 : f32
    %815 = vector.broadcast %cst_241 : f32 to vector<8x96xf32>
    %816 = arith.addf %815, %814 : vector<8x96xf32>
    %817 = arith.divf %815, %816 : vector<8x96xf32>
    %818 = vector.extract_strided_slice %817 {offsets = [0, 0], sizes = [8, 32], strides = [1, 1]} : vector<8x96xf32> to vector<8x32xf32>
    %819 = vector.extract_strided_slice %817 {offsets = [0, 32], sizes = [8, 32], strides = [1, 1]} : vector<8x96xf32> to vector<8x32xf32>
    %820 = vector.extract_strided_slice %817 {offsets = [0, 64], sizes = [8, 32], strides = [1, 1]} : vector<8x96xf32> to vector<8x32xf32>
    %821 = vector.extract_strided_slice %811 {offsets = [0, 96], sizes = [8, 32], strides = [1, 1]} : vector<8x128xf32> to vector<8x32xf32>
    %822 = math.tanh %821 : vector<8x32xf32>
    %823 = arith.mulf %819, %772 : vector<8x32xf32>
    %824 = arith.mulf %818, %822 : vector<8x32xf32>
    %825 = arith.addf %823, %824 : vector<8x32xf32>
    %826 = math.tanh %825 : vector<8x32xf32>
    %827 = arith.mulf %820, %826 : vector<8x32xf32>
    %cst_242 = arith.constant 0.000000e+00 : f32
    %828 = vector.broadcast %cst_242 : f32 to vector<8x32xf32>
    %829 = arith.maximumf %807, %828 : vector<8x32xf32>
    %830 = arith.index_cast %784 : i32 to index
    %c0_243 = arith.constant 0 : index
    %831 = vector.load %arg23[%830, %c0_243] : memref<64x32xf32, #tpu.memory_space<vmem>>, vector<8x32xf32>
    tpu.vector_store %arg23[%830, %c0_243], %829 {strides = array<i32>} : memref<64x32xf32, #tpu.memory_space<vmem>>, vector<8x32xf32>,
    %cst_244 = arith.constant 0.000000e+00 : f32
    %832 = vector.broadcast %cst_244 : f32 to vector<8x32xf32>
    %833 = arith.maximumf %827, %832 : vector<8x32xf32>
    %834 = arith.index_cast %787 : i32 to index
    %c0_245 = arith.constant 0 : index
    %835 = vector.load %arg24[%834, %c0_245] : memref<64x32xf32, #tpu.memory_space<vmem>>, vector<8x32xf32>
    tpu.vector_store %arg24[%834, %c0_245], %833 {strides = array<i32>} : memref<64x32xf32, #tpu.memory_space<vmem>>, vector<8x32xf32>,
    %c7_i32_246 = arith.constant 7 : i32
    %c8_i32_247 = arith.constant 8 : i32
    %836 = arith.muli %c7_i32_246, %c8_i32_247 : i32
    %837 = tpu.assume_multiple %836, 8 : i32
    %c7_i32_248 = arith.constant 7 : i32
    %838 = arith.subi %c7_i32_248, %c7_i32_246 : i32
    %c8_i32_249 = arith.constant 8 : i32
    %839 = arith.muli %838, %c8_i32_249 : i32
    %840 = tpu.assume_multiple %839, 8 : i32
    %841 = arith.index_cast %837 : i32 to index
    %c0_250 = arith.constant 0 : index
    %842 = vector.load %arg21[%841, %c0_250] : memref<64x128xf32, #tpu.memory_space<vmem>>, vector<8x128xf32>
    %cst_251 = arith.constant dense<0.000000e+00> : vector<8x128xf32>
    %843 = tpu.matmul %807, %462, %cst_251 {dimension_numbers = #tpu.dot_dimension_numbers<[1], [0], [0], [1], [0, 0, 1, 1], [], []>} : vector<8x32xf32>, vector<32x128xf32>, vector<8x128xf32> -> vector<8x128xf32>
    %844 = arith.addf %842, %843 : vector<8x128xf32>
    %845 = vector.extract_strided_slice %844 {offsets = [0, 0], sizes = [8, 96], strides = [1, 1]} : vector<8x128xf32> to vector<8x96xf32>
    %846 = arith.negf %845 : vector<8x96xf32>
    %847 = math.exp %846 : vector<8x96xf32>
    %cst_252 = arith.constant 1.000000e+00 : f32
    %848 = vector.broadcast %cst_252 : f32 to vector<8x96xf32>
    %849 = arith.addf %848, %847 : vector<8x96xf32>
    %850 = arith.divf %848, %849 : vector<8x96xf32>
    %851 = vector.extract_strided_slice %850 {offsets = [0, 0], sizes = [8, 32], strides = [1, 1]} : vector<8x96xf32> to vector<8x32xf32>
    %852 = vector.extract_strided_slice %850 {offsets = [0, 32], sizes = [8, 32], strides = [1, 1]} : vector<8x96xf32> to vector<8x32xf32>
    %853 = vector.extract_strided_slice %850 {offsets = [0, 64], sizes = [8, 32], strides = [1, 1]} : vector<8x96xf32> to vector<8x32xf32>
    %854 = vector.extract_strided_slice %844 {offsets = [0, 96], sizes = [8, 32], strides = [1, 1]} : vector<8x128xf32> to vector<8x32xf32>
    %855 = math.tanh %854 : vector<8x32xf32>
    %856 = arith.mulf %852, %805 : vector<8x32xf32>
    %857 = arith.mulf %851, %855 : vector<8x32xf32>
    %858 = arith.addf %856, %857 : vector<8x32xf32>
    %859 = math.tanh %858 : vector<8x32xf32>
    %860 = arith.mulf %853, %859 : vector<8x32xf32>
    %861 = arith.index_cast %840 : i32 to index
    %c0_253 = arith.constant 0 : index
    %862 = vector.load %arg22[%861, %c0_253] : memref<64x128xf32, #tpu.memory_space<vmem>>, vector<8x128xf32>
    %cst_254 = arith.constant dense<0.000000e+00> : vector<8x128xf32>
    %863 = tpu.matmul %827, %463, %cst_254 {dimension_numbers = #tpu.dot_dimension_numbers<[1], [0], [0], [1], [0, 0, 1, 1], [], []>} : vector<8x32xf32>, vector<32x128xf32>, vector<8x128xf32> -> vector<8x128xf32>
    %864 = arith.addf %862, %863 : vector<8x128xf32>
    %865 = vector.extract_strided_slice %864 {offsets = [0, 0], sizes = [8, 96], strides = [1, 1]} : vector<8x128xf32> to vector<8x96xf32>
    %866 = arith.negf %865 : vector<8x96xf32>
    %867 = math.exp %866 : vector<8x96xf32>
    %cst_255 = arith.constant 1.000000e+00 : f32
    %868 = vector.broadcast %cst_255 : f32 to vector<8x96xf32>
    %869 = arith.addf %868, %867 : vector<8x96xf32>
    %870 = arith.divf %868, %869 : vector<8x96xf32>
    %871 = vector.extract_strided_slice %870 {offsets = [0, 0], sizes = [8, 32], strides = [1, 1]} : vector<8x96xf32> to vector<8x32xf32>
    %872 = vector.extract_strided_slice %870 {offsets = [0, 32], sizes = [8, 32], strides = [1, 1]} : vector<8x96xf32> to vector<8x32xf32>
    %873 = vector.extract_strided_slice %870 {offsets = [0, 64], sizes = [8, 32], strides = [1, 1]} : vector<8x96xf32> to vector<8x32xf32>
    %874 = vector.extract_strided_slice %864 {offsets = [0, 96], sizes = [8, 32], strides = [1, 1]} : vector<8x128xf32> to vector<8x32xf32>
    %875 = math.tanh %874 : vector<8x32xf32>
    %876 = arith.mulf %872, %825 : vector<8x32xf32>
    %877 = arith.mulf %871, %875 : vector<8x32xf32>
    %878 = arith.addf %876, %877 : vector<8x32xf32>
    %879 = math.tanh %878 : vector<8x32xf32>
    %880 = arith.mulf %873, %879 : vector<8x32xf32>
    %cst_256 = arith.constant 0.000000e+00 : f32
    %881 = vector.broadcast %cst_256 : f32 to vector<8x32xf32>
    %882 = arith.maximumf %860, %881 : vector<8x32xf32>
    %883 = arith.index_cast %837 : i32 to index
    %c0_257 = arith.constant 0 : index
    %884 = vector.load %arg23[%883, %c0_257] : memref<64x32xf32, #tpu.memory_space<vmem>>, vector<8x32xf32>
    tpu.vector_store %arg23[%883, %c0_257], %882 {strides = array<i32>} : memref<64x32xf32, #tpu.memory_space<vmem>>, vector<8x32xf32>,
    %cst_258 = arith.constant 0.000000e+00 : f32
    %885 = vector.broadcast %cst_258 : f32 to vector<8x32xf32>
    %886 = arith.maximumf %880, %885 : vector<8x32xf32>
    %887 = arith.index_cast %840 : i32 to index
    %c0_259 = arith.constant 0 : index
    %888 = vector.load %arg24[%887, %c0_259] : memref<64x32xf32, #tpu.memory_space<vmem>>, vector<8x32xf32>
    tpu.vector_store %arg24[%887, %c0_259], %886 {strides = array<i32>} : memref<64x32xf32, #tpu.memory_space<vmem>>, vector<8x32xf32>,
    %c8_i32_260 = arith.constant 8 : i32
    %c0_261 = arith.constant 0 : index
    %c0_262 = arith.constant 0 : index
    %889 = vector.load %arg23[%c0_261, %c0_262] : memref<64x32xf32, #tpu.memory_space<vmem>>, vector<64x32xf32>
    %c0_263 = arith.constant 0 : index
    %c0_264 = arith.constant 0 : index
    %890 = vector.load %arg24[%c0_263, %c0_264] : memref<64x32xf32, #tpu.memory_space<vmem>>, vector<64x32xf32>
    %c0_265 = arith.constant 0 : index
    %c0_266 = arith.constant 0 : index
    %891 = vector.load %arg13[%c0_265, %c0_266] : memref<64x64xf32, #tpu.memory_space<vmem>>, vector<64x64xf32>
    %892 = vector.extract_strided_slice %891 {offsets = [0, 0], sizes = [32, 64], strides = [1, 1]} : vector<64x64xf32> to vector<32x64xf32>
    %cst_267 = arith.constant dense<0.000000e+00> : vector<64x64xf32>
    %893 = tpu.matmul %889, %892, %cst_267 {dimension_numbers = #tpu.dot_dimension_numbers<[1], [0], [0], [1], [0, 0, 1, 1], [], []>} : vector<64x32xf32>, vector<32x64xf32>, vector<64x64xf32> -> vector<64x64xf32>
    %894 = vector.extract_strided_slice %891 {offsets = [32, 0], sizes = [32, 64], strides = [1, 1]} : vector<64x64xf32> to vector<32x64xf32>
    %cst_268 = arith.constant dense<0.000000e+00> : vector<64x64xf32>
    %895 = tpu.matmul %890, %894, %cst_268 {dimension_numbers = #tpu.dot_dimension_numbers<[1], [0], [0], [1], [0, 0, 1, 1], [], []>} : vector<64x32xf32>, vector<32x64xf32>, vector<64x64xf32> -> vector<64x64xf32>
    %896 = arith.addf %893, %895 : vector<64x64xf32>
    %c0_269 = arith.constant 0 : index
    %c0_270 = arith.constant 0 : index
    %897 = vector.load %arg15[%c0_269, %c0_270] : memref<1x64xf32, #tpu.memory_space<vmem>>, vector<1x64xf32>
    %898 = vector.broadcast %897 : vector<1x64xf32> to vector<64x64xf32>
    %899 = arith.addf %896, %898 : vector<64x64xf32>
    %c0_271 = arith.constant 0 : index
    %c0_272 = arith.constant 0 : index
    %900 = vector.load %arg25[%c0_271, %c0_272] : memref<64x64xf32, #tpu.memory_space<vmem>>, vector<64x64xf32>
    tpu.vector_store %arg25[%c0_271, %c0_272], %899 {strides = array<i32>} : memref<64x64xf32, #tpu.memory_space<vmem>>, vector<64x64xf32>,
    %c0_273 = arith.constant 0 : index
    %c0_274 = arith.constant 0 : index
    %901 = vector.load %arg14[%c0_273, %c0_274] : memref<16x64xf32, #tpu.memory_space<vmem>>, vector<16x64xf32>
    %cst_275 = arith.constant 0.000000e+00 : f32
    %902 = vector.broadcast %cst_275 : f32 to vector<8x16xf32>
    %c0_i32_276 = arith.constant 0 : i32
    %c7_i32_277 = arith.constant 7 : i32
    %903 = arith.subi %c7_i32_277, %c0_i32_276 : i32
    %c8_i32_278 = arith.constant 8 : i32
    %904 = arith.muli %903, %c8_i32_278 : i32
    %905 = tpu.assume_multiple %904, 8 : i32
    %906 = arith.index_cast %905 : i32 to index
    %c0_279 = arith.constant 0 : index
    %907 = vector.load %arg25[%906, %c0_279] : memref<64x64xf32, #tpu.memory_space<vmem>>, vector<8x64xf32>
    %cst_280 = arith.constant dense<0.000000e+00> : vector<8x64xf32>
    %908 = tpu.matmul %902, %901, %cst_280 {dimension_numbers = #tpu.dot_dimension_numbers<[1], [0], [0], [1], [0, 0, 1, 1], [], []>} : vector<8x16xf32>, vector<16x64xf32>, vector<8x64xf32> -> vector<8x64xf32>
    %909 = arith.addf %907, %908 : vector<8x64xf32>
    %910 = vector.extract_strided_slice %909 {offsets = [0, 0], sizes = [8, 48], strides = [1, 1]} : vector<8x64xf32> to vector<8x48xf32>
    %911 = arith.negf %910 : vector<8x48xf32>
    %912 = math.exp %911 : vector<8x48xf32>
    %cst_281 = arith.constant 1.000000e+00 : f32
    %913 = vector.broadcast %cst_281 : f32 to vector<8x48xf32>
    %914 = arith.addf %913, %912 : vector<8x48xf32>
    %915 = arith.divf %913, %914 : vector<8x48xf32>
    %916 = vector.extract_strided_slice %915 {offsets = [0, 0], sizes = [8, 16], strides = [1, 1]} : vector<8x48xf32> to vector<8x16xf32>
    %917 = vector.extract_strided_slice %915 {offsets = [0, 16], sizes = [8, 16], strides = [1, 1]} : vector<8x48xf32> to vector<8x16xf32>
    %918 = vector.extract_strided_slice %915 {offsets = [0, 32], sizes = [8, 16], strides = [1, 1]} : vector<8x48xf32> to vector<8x16xf32>
    %919 = vector.extract_strided_slice %909 {offsets = [0, 48], sizes = [8, 16], strides = [1, 1]} : vector<8x64xf32> to vector<8x16xf32>
    %920 = math.tanh %919 : vector<8x16xf32>
    %921 = arith.mulf %917, %902 : vector<8x16xf32>
    %922 = arith.mulf %916, %920 : vector<8x16xf32>
    %923 = arith.addf %921, %922 : vector<8x16xf32>
    %924 = math.tanh %923 : vector<8x16xf32>
    %925 = arith.mulf %918, %924 : vector<8x16xf32>
    %c1_i32_282 = arith.constant 1 : i32
    %c7_i32_283 = arith.constant 7 : i32
    %926 = arith.subi %c7_i32_283, %c1_i32_282 : i32
    %c8_i32_284 = arith.constant 8 : i32
    %927 = arith.muli %926, %c8_i32_284 : i32
    %928 = tpu.assume_multiple %927, 8 : i32
    %929 = arith.index_cast %928 : i32 to index
    %c0_285 = arith.constant 0 : index
    %930 = vector.load %arg25[%929, %c0_285] : memref<64x64xf32, #tpu.memory_space<vmem>>, vector<8x64xf32>
    %cst_286 = arith.constant dense<0.000000e+00> : vector<8x64xf32>
    %931 = tpu.matmul %925, %901, %cst_286 {dimension_numbers = #tpu.dot_dimension_numbers<[1], [0], [0], [1], [0, 0, 1, 1], [], []>} : vector<8x16xf32>, vector<16x64xf32>, vector<8x64xf32> -> vector<8x64xf32>
    %932 = arith.addf %930, %931 : vector<8x64xf32>
    %933 = vector.extract_strided_slice %932 {offsets = [0, 0], sizes = [8, 48], strides = [1, 1]} : vector<8x64xf32> to vector<8x48xf32>
    %934 = arith.negf %933 : vector<8x48xf32>
    %935 = math.exp %934 : vector<8x48xf32>
    %cst_287 = arith.constant 1.000000e+00 : f32
    %936 = vector.broadcast %cst_287 : f32 to vector<8x48xf32>
    %937 = arith.addf %936, %935 : vector<8x48xf32>
    %938 = arith.divf %936, %937 : vector<8x48xf32>
    %939 = vector.extract_strided_slice %938 {offsets = [0, 0], sizes = [8, 16], strides = [1, 1]} : vector<8x48xf32> to vector<8x16xf32>
    %940 = vector.extract_strided_slice %938 {offsets = [0, 16], sizes = [8, 16], strides = [1, 1]} : vector<8x48xf32> to vector<8x16xf32>
    %941 = vector.extract_strided_slice %938 {offsets = [0, 32], sizes = [8, 16], strides = [1, 1]} : vector<8x48xf32> to vector<8x16xf32>
    %942 = vector.extract_strided_slice %932 {offsets = [0, 48], sizes = [8, 16], strides = [1, 1]} : vector<8x64xf32> to vector<8x16xf32>
    %943 = math.tanh %942 : vector<8x16xf32>
    %944 = arith.mulf %940, %923 : vector<8x16xf32>
    %945 = arith.mulf %939, %943 : vector<8x16xf32>
    %946 = arith.addf %944, %945 : vector<8x16xf32>
    %947 = math.tanh %946 : vector<8x16xf32>
    %948 = arith.mulf %941, %947 : vector<8x16xf32>
    %c2_i32_288 = arith.constant 2 : i32
    %c7_i32_289 = arith.constant 7 : i32
    %949 = arith.subi %c7_i32_289, %c2_i32_288 : i32
    %c8_i32_290 = arith.constant 8 : i32
    %950 = arith.muli %949, %c8_i32_290 : i32
    %951 = tpu.assume_multiple %950, 8 : i32
    %952 = arith.index_cast %951 : i32 to index
    %c0_291 = arith.constant 0 : index
    %953 = vector.load %arg25[%952, %c0_291] : memref<64x64xf32, #tpu.memory_space<vmem>>, vector<8x64xf32>
    %cst_292 = arith.constant dense<0.000000e+00> : vector<8x64xf32>
    %954 = tpu.matmul %948, %901, %cst_292 {dimension_numbers = #tpu.dot_dimension_numbers<[1], [0], [0], [1], [0, 0, 1, 1], [], []>} : vector<8x16xf32>, vector<16x64xf32>, vector<8x64xf32> -> vector<8x64xf32>
    %955 = arith.addf %953, %954 : vector<8x64xf32>
    %956 = vector.extract_strided_slice %955 {offsets = [0, 0], sizes = [8, 48], strides = [1, 1]} : vector<8x64xf32> to vector<8x48xf32>
    %957 = arith.negf %956 : vector<8x48xf32>
    %958 = math.exp %957 : vector<8x48xf32>
    %cst_293 = arith.constant 1.000000e+00 : f32
    %959 = vector.broadcast %cst_293 : f32 to vector<8x48xf32>
    %960 = arith.addf %959, %958 : vector<8x48xf32>
    %961 = arith.divf %959, %960 : vector<8x48xf32>
    %962 = vector.extract_strided_slice %961 {offsets = [0, 0], sizes = [8, 16], strides = [1, 1]} : vector<8x48xf32> to vector<8x16xf32>
    %963 = vector.extract_strided_slice %961 {offsets = [0, 16], sizes = [8, 16], strides = [1, 1]} : vector<8x48xf32> to vector<8x16xf32>
    %964 = vector.extract_strided_slice %961 {offsets = [0, 32], sizes = [8, 16], strides = [1, 1]} : vector<8x48xf32> to vector<8x16xf32>
    %965 = vector.extract_strided_slice %955 {offsets = [0, 48], sizes = [8, 16], strides = [1, 1]} : vector<8x64xf32> to vector<8x16xf32>
    %966 = math.tanh %965 : vector<8x16xf32>
    %967 = arith.mulf %963, %946 : vector<8x16xf32>
    %968 = arith.mulf %962, %966 : vector<8x16xf32>
    %969 = arith.addf %967, %968 : vector<8x16xf32>
    %970 = math.tanh %969 : vector<8x16xf32>
    %971 = arith.mulf %964, %970 : vector<8x16xf32>
    %c3_i32_294 = arith.constant 3 : i32
    %c7_i32_295 = arith.constant 7 : i32
    %972 = arith.subi %c7_i32_295, %c3_i32_294 : i32
    %c8_i32_296 = arith.constant 8 : i32
    %973 = arith.muli %972, %c8_i32_296 : i32
    %974 = tpu.assume_multiple %973, 8 : i32
    %975 = arith.index_cast %974 : i32 to index
    %c0_297 = arith.constant 0 : index
    %976 = vector.load %arg25[%975, %c0_297] : memref<64x64xf32, #tpu.memory_space<vmem>>, vector<8x64xf32>
    %cst_298 = arith.constant dense<0.000000e+00> : vector<8x64xf32>
    %977 = tpu.matmul %971, %901, %cst_298 {dimension_numbers = #tpu.dot_dimension_numbers<[1], [0], [0], [1], [0, 0, 1, 1], [], []>} : vector<8x16xf32>, vector<16x64xf32>, vector<8x64xf32> -> vector<8x64xf32>
    %978 = arith.addf %976, %977 : vector<8x64xf32>
    %979 = vector.extract_strided_slice %978 {offsets = [0, 0], sizes = [8, 48], strides = [1, 1]} : vector<8x64xf32> to vector<8x48xf32>
    %980 = arith.negf %979 : vector<8x48xf32>
    %981 = math.exp %980 : vector<8x48xf32>
    %cst_299 = arith.constant 1.000000e+00 : f32
    %982 = vector.broadcast %cst_299 : f32 to vector<8x48xf32>
    %983 = arith.addf %982, %981 : vector<8x48xf32>
    %984 = arith.divf %982, %983 : vector<8x48xf32>
    %985 = vector.extract_strided_slice %984 {offsets = [0, 0], sizes = [8, 16], strides = [1, 1]} : vector<8x48xf32> to vector<8x16xf32>
    %986 = vector.extract_strided_slice %984 {offsets = [0, 16], sizes = [8, 16], strides = [1, 1]} : vector<8x48xf32> to vector<8x16xf32>
    %987 = vector.extract_strided_slice %984 {offsets = [0, 32], sizes = [8, 16], strides = [1, 1]} : vector<8x48xf32> to vector<8x16xf32>
    %988 = vector.extract_strided_slice %978 {offsets = [0, 48], sizes = [8, 16], strides = [1, 1]} : vector<8x64xf32> to vector<8x16xf32>
    %989 = math.tanh %988 : vector<8x16xf32>
    %990 = arith.mulf %986, %969 : vector<8x16xf32>
    %991 = arith.mulf %985, %989 : vector<8x16xf32>
    %992 = arith.addf %990, %991 : vector<8x16xf32>
    %993 = math.tanh %992 : vector<8x16xf32>
    %994 = arith.mulf %987, %993 : vector<8x16xf32>
    %c4_i32_300 = arith.constant 4 : i32
    %c7_i32_301 = arith.constant 7 : i32
    %995 = arith.subi %c7_i32_301, %c4_i32_300 : i32
    %c8_i32_302 = arith.constant 8 : i32
    %996 = arith.muli %995, %c8_i32_302 : i32
    %997 = tpu.assume_multiple %996, 8 : i32
    %998 = arith.index_cast %997 : i32 to index
    %c0_303 = arith.constant 0 : index
    %999 = vector.load %arg25[%998, %c0_303] : memref<64x64xf32, #tpu.memory_space<vmem>>, vector<8x64xf32>
    %cst_304 = arith.constant dense<0.000000e+00> : vector<8x64xf32>
    %1000 = tpu.matmul %994, %901, %cst_304 {dimension_numbers = #tpu.dot_dimension_numbers<[1], [0], [0], [1], [0, 0, 1, 1], [], []>} : vector<8x16xf32>, vector<16x64xf32>, vector<8x64xf32> -> vector<8x64xf32>
    %1001 = arith.addf %999, %1000 : vector<8x64xf32>
    %1002 = vector.extract_strided_slice %1001 {offsets = [0, 0], sizes = [8, 48], strides = [1, 1]} : vector<8x64xf32> to vector<8x48xf32>
    %1003 = arith.negf %1002 : vector<8x48xf32>
    %1004 = math.exp %1003 : vector<8x48xf32>
    %cst_305 = arith.constant 1.000000e+00 : f32
    %1005 = vector.broadcast %cst_305 : f32 to vector<8x48xf32>
    %1006 = arith.addf %1005, %1004 : vector<8x48xf32>
    %1007 = arith.divf %1005, %1006 : vector<8x48xf32>
    %1008 = vector.extract_strided_slice %1007 {offsets = [0, 0], sizes = [8, 16], strides = [1, 1]} : vector<8x48xf32> to vector<8x16xf32>
    %1009 = vector.extract_strided_slice %1007 {offsets = [0, 16], sizes = [8, 16], strides = [1, 1]} : vector<8x48xf32> to vector<8x16xf32>
    %1010 = vector.extract_strided_slice %1007 {offsets = [0, 32], sizes = [8, 16], strides = [1, 1]} : vector<8x48xf32> to vector<8x16xf32>
    %1011 = vector.extract_strided_slice %1001 {offsets = [0, 48], sizes = [8, 16], strides = [1, 1]} : vector<8x64xf32> to vector<8x16xf32>
    %1012 = math.tanh %1011 : vector<8x16xf32>
    %1013 = arith.mulf %1009, %992 : vector<8x16xf32>
    %1014 = arith.mulf %1008, %1012 : vector<8x16xf32>
    %1015 = arith.addf %1013, %1014 : vector<8x16xf32>
    %1016 = math.tanh %1015 : vector<8x16xf32>
    %1017 = arith.mulf %1010, %1016 : vector<8x16xf32>
    %c5_i32_306 = arith.constant 5 : i32
    %c7_i32_307 = arith.constant 7 : i32
    %1018 = arith.subi %c7_i32_307, %c5_i32_306 : i32
    %c8_i32_308 = arith.constant 8 : i32
    %1019 = arith.muli %1018, %c8_i32_308 : i32
    %1020 = tpu.assume_multiple %1019, 8 : i32
    %1021 = arith.index_cast %1020 : i32 to index
    %c0_309 = arith.constant 0 : index
    %1022 = vector.load %arg25[%1021, %c0_309] : memref<64x64xf32, #tpu.memory_space<vmem>>, vector<8x64xf32>
    %cst_310 = arith.constant dense<0.000000e+00> : vector<8x64xf32>
    %1023 = tpu.matmul %1017, %901, %cst_310 {dimension_numbers = #tpu.dot_dimension_numbers<[1], [0], [0], [1], [0, 0, 1, 1], [], []>} : vector<8x16xf32>, vector<16x64xf32>, vector<8x64xf32> -> vector<8x64xf32>
    %1024 = arith.addf %1022, %1023 : vector<8x64xf32>
    %1025 = vector.extract_strided_slice %1024 {offsets = [0, 0], sizes = [8, 48], strides = [1, 1]} : vector<8x64xf32> to vector<8x48xf32>
    %1026 = arith.negf %1025 : vector<8x48xf32>
    %1027 = math.exp %1026 : vector<8x48xf32>
    %cst_311 = arith.constant 1.000000e+00 : f32
    %1028 = vector.broadcast %cst_311 : f32 to vector<8x48xf32>
    %1029 = arith.addf %1028, %1027 : vector<8x48xf32>
    %1030 = arith.divf %1028, %1029 : vector<8x48xf32>
    %1031 = vector.extract_strided_slice %1030 {offsets = [0, 0], sizes = [8, 16], strides = [1, 1]} : vector<8x48xf32> to vector<8x16xf32>
    %1032 = vector.extract_strided_slice %1030 {offsets = [0, 16], sizes = [8, 16], strides = [1, 1]} : vector<8x48xf32> to vector<8x16xf32>
    %1033 = vector.extract_strided_slice %1030 {offsets = [0, 32], sizes = [8, 16], strides = [1, 1]} : vector<8x48xf32> to vector<8x16xf32>
    %1034 = vector.extract_strided_slice %1024 {offsets = [0, 48], sizes = [8, 16], strides = [1, 1]} : vector<8x64xf32> to vector<8x16xf32>
    %1035 = math.tanh %1034 : vector<8x16xf32>
    %1036 = arith.mulf %1032, %1015 : vector<8x16xf32>
    %1037 = arith.mulf %1031, %1035 : vector<8x16xf32>
    %1038 = arith.addf %1036, %1037 : vector<8x16xf32>
    %1039 = math.tanh %1038 : vector<8x16xf32>
    %1040 = arith.mulf %1033, %1039 : vector<8x16xf32>
    %c6_i32_312 = arith.constant 6 : i32
    %c7_i32_313 = arith.constant 7 : i32
    %1041 = arith.subi %c7_i32_313, %c6_i32_312 : i32
    %c8_i32_314 = arith.constant 8 : i32
    %1042 = arith.muli %1041, %c8_i32_314 : i32
    %1043 = tpu.assume_multiple %1042, 8 : i32
    %1044 = arith.index_cast %1043 : i32 to index
    %c0_315 = arith.constant 0 : index
    %1045 = vector.load %arg25[%1044, %c0_315] : memref<64x64xf32, #tpu.memory_space<vmem>>, vector<8x64xf32>
    %cst_316 = arith.constant dense<0.000000e+00> : vector<8x64xf32>
    %1046 = tpu.matmul %1040, %901, %cst_316 {dimension_numbers = #tpu.dot_dimension_numbers<[1], [0], [0], [1], [0, 0, 1, 1], [], []>} : vector<8x16xf32>, vector<16x64xf32>, vector<8x64xf32> -> vector<8x64xf32>
    %1047 = arith.addf %1045, %1046 : vector<8x64xf32>
    %1048 = vector.extract_strided_slice %1047 {offsets = [0, 0], sizes = [8, 48], strides = [1, 1]} : vector<8x64xf32> to vector<8x48xf32>
    %1049 = arith.negf %1048 : vector<8x48xf32>
    %1050 = math.exp %1049 : vector<8x48xf32>
    %cst_317 = arith.constant 1.000000e+00 : f32
    %1051 = vector.broadcast %cst_317 : f32 to vector<8x48xf32>
    %1052 = arith.addf %1051, %1050 : vector<8x48xf32>
    %1053 = arith.divf %1051, %1052 : vector<8x48xf32>
    %1054 = vector.extract_strided_slice %1053 {offsets = [0, 0], sizes = [8, 16], strides = [1, 1]} : vector<8x48xf32> to vector<8x16xf32>
    %1055 = vector.extract_strided_slice %1053 {offsets = [0, 16], sizes = [8, 16], strides = [1, 1]} : vector<8x48xf32> to vector<8x16xf32>
    %1056 = vector.extract_strided_slice %1053 {offsets = [0, 32], sizes = [8, 16], strides = [1, 1]} : vector<8x48xf32> to vector<8x16xf32>
    %1057 = vector.extract_strided_slice %1047 {offsets = [0, 48], sizes = [8, 16], strides = [1, 1]} : vector<8x64xf32> to vector<8x16xf32>
    %1058 = math.tanh %1057 : vector<8x16xf32>
    %1059 = arith.mulf %1055, %1038 : vector<8x16xf32>
    %1060 = arith.mulf %1054, %1058 : vector<8x16xf32>
    %1061 = arith.addf %1059, %1060 : vector<8x16xf32>
    %1062 = math.tanh %1061 : vector<8x16xf32>
    %1063 = arith.mulf %1056, %1062 : vector<8x16xf32>
    %c7_i32_318 = arith.constant 7 : i32
    %c7_i32_319 = arith.constant 7 : i32
    %1064 = arith.subi %c7_i32_319, %c7_i32_318 : i32
    %c8_i32_320 = arith.constant 8 : i32
    %1065 = arith.muli %1064, %c8_i32_320 : i32
    %1066 = tpu.assume_multiple %1065, 8 : i32
    %1067 = arith.index_cast %1066 : i32 to index
    %c0_321 = arith.constant 0 : index
    %1068 = vector.load %arg25[%1067, %c0_321] : memref<64x64xf32, #tpu.memory_space<vmem>>, vector<8x64xf32>
    %cst_322 = arith.constant dense<0.000000e+00> : vector<8x64xf32>
    %1069 = tpu.matmul %1063, %901, %cst_322 {dimension_numbers = #tpu.dot_dimension_numbers<[1], [0], [0], [1], [0, 0, 1, 1], [], []>} : vector<8x16xf32>, vector<16x64xf32>, vector<8x64xf32> -> vector<8x64xf32>
    %1070 = arith.addf %1068, %1069 : vector<8x64xf32>
    %1071 = vector.extract_strided_slice %1070 {offsets = [0, 0], sizes = [8, 48], strides = [1, 1]} : vector<8x64xf32> to vector<8x48xf32>
    %1072 = arith.negf %1071 : vector<8x48xf32>
    %1073 = math.exp %1072 : vector<8x48xf32>
    %cst_323 = arith.constant 1.000000e+00 : f32
    %1074 = vector.broadcast %cst_323 : f32 to vector<8x48xf32>
    %1075 = arith.addf %1074, %1073 : vector<8x48xf32>
    %1076 = arith.divf %1074, %1075 : vector<8x48xf32>
    %1077 = vector.extract_strided_slice %1076 {offsets = [0, 0], sizes = [8, 16], strides = [1, 1]} : vector<8x48xf32> to vector<8x16xf32>
    %1078 = vector.extract_strided_slice %1076 {offsets = [0, 16], sizes = [8, 16], strides = [1, 1]} : vector<8x48xf32> to vector<8x16xf32>
    %1079 = vector.extract_strided_slice %1076 {offsets = [0, 32], sizes = [8, 16], strides = [1, 1]} : vector<8x48xf32> to vector<8x16xf32>
    %1080 = vector.extract_strided_slice %1070 {offsets = [0, 48], sizes = [8, 16], strides = [1, 1]} : vector<8x64xf32> to vector<8x16xf32>
    %1081 = math.tanh %1080 : vector<8x16xf32>
    %1082 = arith.mulf %1078, %1061 : vector<8x16xf32>
    %1083 = arith.mulf %1077, %1081 : vector<8x16xf32>
    %1084 = arith.addf %1082, %1083 : vector<8x16xf32>
    %1085 = math.tanh %1084 : vector<8x16xf32>
    %1086 = arith.mulf %1079, %1085 : vector<8x16xf32>
    %c8_i32_324 = arith.constant 8 : i32
    %c0_325 = arith.constant 0 : index
    %c0_326 = arith.constant 0 : index
    %1087 = vector.load %arg16[%c0_325, %c0_326] : memref<8x16xf32, #tpu.memory_space<vmem>>, vector<8x16xf32>
    tpu.vector_store %arg16[%c0_325, %c0_326], %1086 {strides = array<i32>} : memref<8x16xf32, #tpu.memory_space<vmem>>, vector<8x16xf32>,
    return
  }
}

</mosaic_0001>

<llo_original>
// kernel: quadruplet_lstm.1
$region0: #{quadruplet_lstm.1}
  #allocation0 [shape = 'u32[]', space=smem, size = 0x4, offset = 0x4, fixed_abs, tag = 'smem constant byte address 0x4 - core index']
  #allocation1 [shape = 'u32[144,128]{1,0:T(1,128)}', space=vmem, size = 0x12000, scoped, tag = 'internal scratch']
  #allocation2 [shape = 'f32[64,192]{1,0:T(8,128)}', space=vmem, size = 0x10000, scoped, tag = 'scratch operand']
  #allocation3 [shape = 'f32[64,192]{1,0:T(8,128)}', space=vmem, size = 0x10000, scoped, tag = 'scratch operand']
  #allocation4 [shape = 'f32[64,48]{1,0:T(8,128)}', space=vmem, size = 0x8000, scoped, tag = 'scratch operand']
  #allocation5 [shape = 'f32[64,48]{1,0:T(8,128)}', space=vmem, size = 0x8000, scoped, tag = 'scratch operand']
  #allocation6 [shape = 'f32[64,128]{1,0:T(8,128)}', space=vmem, size = 0x8000, scoped, tag = 'scratch operand']
  #allocation7 [shape = 'f32[64,128]{1,0:T(8,128)}', space=vmem, size = 0x8000, scoped, tag = 'scratch operand']
  #allocation8 [shape = 'f32[64,32]{1,0:T(8,128)}', space=vmem, size = 0x8000, scoped, tag = 'scratch operand']
  #allocation9 [shape = 'f32[64,32]{1,0:T(8,128)}', space=vmem, size = 0x8000, scoped, tag = 'scratch operand']
  #allocation10 [shape = 'f32[64,64]{1,0:T(8,128)}', space=vmem, size = 0x8000, scoped, tag = 'scratch operand']
  %s0 = inlined_call_operand.vmem [shape: f32[64,8], index: 0, kind: input, shape index: {}]
  %s1 = inlined_call_operand.hbm [shape: f32[8,192], index: 1, kind: input, shape index: {}]
  %s2 = inlined_call_operand.vmem [shape: f32[48,192], index: 2, kind: input, shape index: {}]
  %s3 = inlined_call_operand.hbm [shape: f32[1,192], index: 3, kind: input, shape index: {}]
  %s4 = inlined_call_operand.hbm [shape: f32[8,192], index: 4, kind: input, shape index: {}]
  %s5 = inlined_call_operand.vmem [shape: f32[48,192], index: 5, kind: input, shape index: {}]
  %s6 = inlined_call_operand.hbm [shape: f32[1,192], index: 6, kind: input, shape index: {}]
  %s7 = inlined_call_operand.vmem [shape: f32[96,128], index: 7, kind: input, shape index: {}]
  %s8 = inlined_call_operand.hbm [shape: f32[32,128], index: 8, kind: input, shape index: {}]
  %s9 = inlined_call_operand.vmem [shape: f32[1,128], index: 9, kind: input, shape index: {}]
  %s10 = inlined_call_operand.hbm [shape: f32[96,128], index: 10, kind: input, shape index: {}]
  %s11 = inlined_call_operand.hbm [shape: f32[32,128], index: 11, kind: input, shape index: {}]
  %s12 = inlined_call_operand.vmem [shape: f32[1,128], index: 12, kind: input, shape index: {}]
  %s13 = inlined_call_operand.hbm [shape: f32[64,64], index: 13, kind: input, shape index: {}]
  %s14 = inlined_call_operand.vmem [shape: f32[16,64], index: 14, kind: input, shape index: {}]
  %s15 = inlined_call_operand.vmem [shape: f32[1,64], index: 15, kind: input, shape index: {}]
  %s16 = inlined_call_operand.vmem [shape: f32[8,16], index: 16, kind: output, shape index: {}]
  %s17 = sld [smem:[#allocation0]]
  $region106: #{quadruplet_lstm.1} parent=0
    _
  %s19 = ssub.s32 1, %s17
  %s20 = scalar_select 0, %s19, %s17
  $region1: #{quadruplet_lstm.1} parent=0
    #allocation11 [shape = 'u8[8192]{0}', space=vmem, size = 0x2000, scoped, tag = 'input window, operand 1, single buffered']
    #allocation12 [shape = 's32[1]{0}', space=sflag, size = 0x4, scoped, tag = 'scoped memory for quadruplet_lstm.1']
    #allocation13 [shape = 'u8[1024]{0}', space=vmem, size = 0x400, scoped, tag = 'input window, operand 3, single buffered']
    #allocation14 [shape = 's32[1]{0}', space=sflag, size = 0x4, scoped, tag = 'scoped memory for quadruplet_lstm.1']
    #allocation15 [shape = 'u8[8192]{0}', space=vmem, size = 0x2000, scoped, tag = 'input window, operand 4, single buffered']
    #allocation16 [shape = 'u8[1024]{0}', space=vmem, size = 0x400, scoped, tag = 'input window, operand 6, single buffered']
    #allocation17 [shape = 's32[1]{0}', space=sflag, size = 0x4, scoped, tag = 'scoped memory for quadruplet_lstm.1']
    #allocation18 [shape = 'u8[16384]{0}', space=vmem, size = 0x4000, scoped, tag = 'input window, operand 8, single buffered']
    #allocation19 [shape = 'u8[49152]{0}', space=vmem, size = 0xc000, scoped, tag = 'input window, operand 10, single buffered']
    #allocation20 [shape = 's32[1]{0}', space=sflag, size = 0x4, scoped, tag = 'scoped memory for quadruplet_lstm.1']
    #allocation21 [shape = 'u8[16384]{0}', space=vmem, size = 0x4000, scoped, tag = 'input window, operand 11, single buffered']
    #allocation22 [shape = 'u8[32768]{0}', space=vmem, size = 0x8000, scoped, tag = 'input window, operand 13, single buffered']
    #allocation23 [shape = 's32[1]{0}', space=sflag, size = 0x4, scoped, tag = 'scoped memory for quadruplet_lstm.1']
    %21 = vsyncpa [#allocation12], 0
    %22 = vsyncpa [#allocation14], 0
    %23 = vsyncpa [#allocation17], 0
    %24 = vsyncpa [#allocation20], 0
    %25 = vsyncpa [#allocation23], 0
    // Predicated region
    $region2: #{quadruplet_lstm.1} parent=1 // pred_check
      _
    $region3: #{quadruplet_lstm.1} parent=1 // pred_check_branch
      %27 = sbr.rel (0) target = $region5
    $region4: #{quadruplet_lstm.1} parent=1 // pred_region
      _
    $region5: #{quadruplet_lstm.1} parent=1 // pred_fallthru
      _
    // Predicated region
    $region6: #{quadruplet_lstm.1} parent=1 // pred_check
      _
    $region7: #{quadruplet_lstm.1} parent=1 // pred_check_branch
      %29 = sbr.rel (0) target = $region9
    $region8: #{quadruplet_lstm.1} parent=1 // pred_region
      %s31 = ssub.s32 256, 256
      %32 = vsyncadd [#allocation12], %s31
      %s34 = sshll.u32 [#allocation11], 4
      %s35 = int_to_ptr.vmem [resolvable:$true] %s34
      %37 = dma.hbm_to_vmem [thread:$0]  %s1, 256, %s35, [#allocation12]
    $region9: #{quadruplet_lstm.1} parent=1 // pred_fallthru
      _
    // Predicated region
    $region10: #{quadruplet_lstm.1} parent=1 // pred_check
      _
    $region11: #{quadruplet_lstm.1} parent=1 // pred_check_branch
      %39 = sbr.rel (0) target = $region13
    $region12: #{quadruplet_lstm.1} parent=1 // pred_region
      _
    $region13: #{quadruplet_lstm.1} parent=1 // pred_fallthru
      _
    // Predicated region
    $region14: #{quadruplet_lstm.1} parent=1 // pred_check
      _
    $region15: #{quadruplet_lstm.1} parent=1 // pred_check_branch
      %41 = sbr.rel (0) target = $region17
    $region16: #{quadruplet_lstm.1} parent=1 // pred_region
      %s43 = ssub.s32 32, 32
      %44 = vsyncadd [#allocation14], %s43
      %s46 = sshll.u32 [#allocation13], 4
      %s47 = int_to_ptr.vmem [resolvable:$true] %s46
      %49 = dma.hbm_to_vmem [thread:$0]  %s3, 32, %s47, [#allocation14]
    $region17: #{quadruplet_lstm.1} parent=1 // pred_fallthru
      _
    // Predicated region
    $region18: #{quadruplet_lstm.1} parent=1 // pred_check
      _
    $region19: #{quadruplet_lstm.1} parent=1 // pred_check_branch
      %51 = sbr.rel (0) target = $region21
    $region20: #{quadruplet_lstm.1} parent=1 // pred_region
      %s53 = ssub.s32 256, 256
      %54 = vsyncadd [#allocation14], %s53
      %s56 = sshll.u32 [#allocation15], 4
      %s57 = int_to_ptr.vmem [resolvable:$true] %s56
      %59 = dma.hbm_to_vmem [thread:$0]  %s4, 256, %s57, [#allocation14]
    $region21: #{quadruplet_lstm.1} parent=1 // pred_fallthru
      _
    // Predicated region
    $region22: #{quadruplet_lstm.1} parent=1 // pred_check
      _
    $region23: #{quadruplet_lstm.1} parent=1 // pred_check_branch
      %61 = sbr.rel (0) target = $region25
    $region24: #{quadruplet_lstm.1} parent=1 // pred_region
      _
    $region25: #{quadruplet_lstm.1} parent=1 // pred_fallthru
      _
    // Predicated region
    $region26: #{quadruplet_lstm.1} parent=1 // pred_check
      _
    $region27: #{quadruplet_lstm.1} parent=1 // pred_check_branch
      %63 = sbr.rel (0) target = $region29
    $region28: #{quadruplet_lstm.1} parent=1 // pred_region
      %s65 = ssub.s32 32, 32
      %66 = vsyncadd [#allocation17], %s65
      %s68 = sshll.u32 [#allocation16], 4
      %s69 = int_to_ptr.vmem [resolvable:$true] %s68
      %71 = dma.hbm_to_vmem [thread:$0]  %s6, 32, %s69, [#allocation17]
    $region29: #{quadruplet_lstm.1} parent=1 // pred_fallthru
      _
    // Predicated region
    $region30: #{quadruplet_lstm.1} parent=1 // pred_check
      _
    $region31: #{quadruplet_lstm.1} parent=1 // pred_check_branch
      %73 = sbr.rel (0) target = $region33
    $region32: #{quadruplet_lstm.1} parent=1 // pred_region
      _
    $region33: #{quadruplet_lstm.1} parent=1 // pred_fallthru
      _
    // Predicated region
    $region34: #{quadruplet_lstm.1} parent=1 // pred_check
      _
    $region35: #{quadruplet_lstm.1} parent=1 // pred_check_branch
      %75 = sbr.rel (0) target = $region37
    $region36: #{quadruplet_lstm.1} parent=1 // pred_region
      %s77 = ssub.s32 512, 512
      %78 = vsyncadd [#allocation17], %s77
      %s79 = sshll.u32 [#allocation18], 4
      %s80 = int_to_ptr.vmem [resolvable:$true] %s79
      %85 = dma.hbm_to_vmem [thread:$0]  %s8, 512, %s80, [#allocation17], 128, 128, 8
    $region37: #{quadruplet_lstm.1} parent=1 // pred_fallthru
      _
    // Predicated region
    $region38: #{quadruplet_lstm.1} parent=1 // pred_check
      _
    $region39: #{quadruplet_lstm.1} parent=1 // pred_check_branch
      %87 = sbr.rel (0) target = $region41
    $region40: #{quadruplet_lstm.1} parent=1 // pred_region
      _
    $region41: #{quadruplet_lstm.1} parent=1 // pred_fallthru
      _
    // Predicated region
    $region42: #{quadruplet_lstm.1} parent=1 // pred_check
      _
    $region43: #{quadruplet_lstm.1} parent=1 // pred_check_branch
      %89 = sbr.rel (0) target = $region45
    $region44: #{quadruplet_lstm.1} parent=1 // pred_region
      %s91 = ssub.s32 1536, 1536
      %92 = vsyncadd [#allocation20], %s91
      %s93 = sshll.u32 [#allocation19], 4
      %s94 = int_to_ptr.vmem [resolvable:$true] %s93
      %99 = dma.hbm_to_vmem [thread:$0]  %s10, 1536, %s94, [#allocation20], 128, 128, 8
    $region45: #{quadruplet_lstm.1} parent=1 // pred_fallthru
      _
    // Predicated region
    $region46: #{quadruplet_lstm.1} parent=1 // pred_check
      _
    $region47: #{quadruplet_lstm.1} parent=1 // pred_check_branch
      %101 = sbr.rel (0) target = $region49
    $region48: #{quadruplet_lstm.1} parent=1 // pred_region
      %s103 = ssub.s32 512, 512
      %104 = vsyncadd [#allocation20], %s103
      %s105 = sshll.u32 [#allocation21], 4
      %s106 = int_to_ptr.vmem [resolvable:$true] %s105
      %111 = dma.hbm_to_vmem [thread:$0]  %s11, 512, %s106, [#allocation20], 128, 128, 8
    $region49: #{quadruplet_lstm.1} parent=1 // pred_fallthru
      _
    // Predicated region
    $region50: #{quadruplet_lstm.1} parent=1 // pred_check
      _
    $region51: #{quadruplet_lstm.1} parent=1 // pred_check_branch
      %113 = sbr.rel (0) target = $region53
    $region52: #{quadruplet_lstm.1} parent=1 // pred_region
      _
    $region53: #{quadruplet_lstm.1} parent=1 // pred_fallthru
      _
    // Predicated region
    $region54: #{quadruplet_lstm.1} parent=1 // pred_check
      _
    $region55: #{quadruplet_lstm.1} parent=1 // pred_check_branch
      %115 = sbr.rel (0) target = $region57
    $region56: #{quadruplet_lstm.1} parent=1 // pred_region
      %s117 = ssub.s32 1024, 1024
      %118 = vsyncadd [#allocation23], %s117
      %s119 = sshll.u32 [#allocation22], 4
      %s120 = int_to_ptr.vmem [resolvable:$true] %s119
      %125 = dma.hbm_to_vmem [thread:$0]  %s13, 1024, %s120, [#allocation23], 128, 128, 8
    $region57: #{quadruplet_lstm.1} parent=1 // pred_fallthru
      _
    // Predicated region
    $region58: #{quadruplet_lstm.1} parent=1 // pred_check
      _
    $region59: #{quadruplet_lstm.1} parent=1 // pred_check_branch
      %127 = sbr.rel (0) target = $region61
    $region60: #{quadruplet_lstm.1} parent=1 // pred_region
      _
    $region61: #{quadruplet_lstm.1} parent=1 // pred_fallthru
      _
    // Predicated region
    $region62: #{quadruplet_lstm.1} parent=1 // pred_check
      _
    $region63: #{quadruplet_lstm.1} parent=1 // pred_check_branch
      %129 = sbr.rel (0) target = $region65
    $region64: #{quadruplet_lstm.1} parent=1 // pred_region
      _
    $region65: #{quadruplet_lstm.1} parent=1 // pred_fallthru
      _
    // Predicated region
    $region66: #{quadruplet_lstm.1} parent=1 // pred_check
      _
    $region67: #{quadruplet_lstm.1} parent=1 // pred_check_branch
      %131 = sbr.rel (0) target = $region69
    $region68: #{quadruplet_lstm.1} parent=1 // pred_region
      %132 = dma.done [#allocation12], 256
    $region69: #{quadruplet_lstm.1} parent=1 // pred_fallthru
      _
    // Predicated region
    $region70: #{quadruplet_lstm.1} parent=1 // pred_check
      _
    $region71: #{quadruplet_lstm.1} parent=1 // pred_check_branch
      %134 = sbr.rel (0) target = $region73
    $region72: #{quadruplet_lstm.1} parent=1 // pred_region
      %135 = dma.done [#allocation14], 32
    $region73: #{quadruplet_lstm.1} parent=1 // pred_fallthru
      _
    // Predicated region
    $region74: #{quadruplet_lstm.1} parent=1 // pred_check
      _
    $region75: #{quadruplet_lstm.1} parent=1 // pred_check_branch
      %137 = sbr.rel (0) target = $region77
    $region76: #{quadruplet_lstm.1} parent=1 // pred_region
      %138 = dma.done [#allocation14], 256
    $region77: #{quadruplet_lstm.1} parent=1 // pred_fallthru
      _
    // Predicated region
    $region78: #{quadruplet_lstm.1} parent=1 // pred_check
      _
    $region79: #{quadruplet_lstm.1} parent=1 // pred_check_branch
      %140 = sbr.rel (0) target = $region81
    $region80: #{quadruplet_lstm.1} parent=1 // pred_region
      %141 = dma.done [#allocation17], 32
    $region81: #{quadruplet_lstm.1} parent=1 // pred_fallthru
      _
    // Predicated region
    $region82: #{quadruplet_lstm.1} parent=1 // pred_check
      _
    $region83: #{quadruplet_lstm.1} parent=1 // pred_check_branch
      %143 = sbr.rel (0) target = $region85
    $region84: #{quadruplet_lstm.1} parent=1 // pred_region
      %144 = dma.done [#allocation17], 512
    $region85: #{quadruplet_lstm.1} parent=1 // pred_fallthru
      _
    // Predicated region
    $region86: #{quadruplet_lstm.1} parent=1 // pred_check
      _
    $region87: #{quadruplet_lstm.1} parent=1 // pred_check_branch
      %146 = sbr.rel (0) target = $region89
    $region88: #{quadruplet_lstm.1} parent=1 // pred_region
      %147 = dma.done [#allocation20], 1536
    $region89: #{quadruplet_lstm.1} parent=1 // pred_fallthru
      _
    // Predicated region
    $region90: #{quadruplet_lstm.1} parent=1 // pred_check
      _
    $region91: #{quadruplet_lstm.1} parent=1 // pred_check_branch
      %149 = sbr.rel (0) target = $region93
    $region92: #{quadruplet_lstm.1} parent=1 // pred_region
      %150 = dma.done [#allocation20], 512
    $region93: #{quadruplet_lstm.1} parent=1 // pred_fallthru
      _
    // Predicated region
    $region94: #{quadruplet_lstm.1} parent=1 // pred_check
      _
    $region95: #{quadruplet_lstm.1} parent=1 // pred_check_branch
      %152 = sbr.rel (0) target = $region97
    $region96: #{quadruplet_lstm.1} parent=1 // pred_region
      %153 = dma.done [#allocation23], 1024
    $region97: #{quadruplet_lstm.1} parent=1 // pred_fallthru
      _
    %v154 = vld [vmem:[%s0] sm:$0xff]
    %v155 = vld [vmem:[%s0 + $0x8] sm:$0xff]
    %v156 = vld [vmem:[%s0 + $0x10] sm:$0xff]
    %v157 = vld [vmem:[%s0 + $0x18] sm:$0xff]
    %v158 = vld [vmem:[%s0 + $0x20] sm:$0xff]
    %v159 = vld [vmem:[%s0 + $0x28] sm:$0xff]
    %v160 = vld [vmem:[%s0 + $0x30] sm:$0xff]
    %v161 = vld [vmem:[%s0 + $0x38] sm:$0xff]
    %v162 = vld [vmem:[#allocation11] sm:$0xff]
    %v163 = vld [vmem:[#allocation11 + $0x8] sm:$0xff]
    %v164 = vld [vmem:[#allocation13] sm:$0x3]
    %v166 = vlaneseq
    %v167 = vshrl.u32 %v166, 7
    %v168 = vsub.s32 0, %v167
    %v169 = vrot.slane %v164, %v168
    %v170 = vlaneseq
    %v171 = vshrl.u32 %v170, 7
    %v172 = vsub.s32 1, %v171
    %v173 = vrot.slane %v164, %v172
    %vm176 = vcmask 64512
    %v178 = vsel %vm176, %v154, 0
    %v181 = vsel %vm176, %v155, 0
    %v184 = vsel %vm176, %v156, 0
    %v187 = vsel %vm176, %v157, 0
    %v190 = vsel %vm176, %v158, 0
    %v193 = vsel %vm176, %v159, 0
    %v196 = vsel %vm176, %v160, 0
    %v199 = vsel %vm176, %v161, 0
    %201 = vmatprep.subr.mxu0 %v163
    %202 = vmatpush1.msra.mxu0 %v162
    %203 = vmatprep.subr.mxu0 0.0
    %204 = vmatpush1.msra.mxu0 0.0
    %205 = vmatprep.subr.mxu0 0.0
    %206 = vmatpush1.msra.mxu0 0.0
    %207 = vmatprep.subr.mxu0 0.0
    %208 = vmatpush1.msra.mxu0 0.0
    %209 = vmatprep.subr.mxu0 0.0
    %210 = vmatpush1.msra.mxu0 0.0
    %211 = vmatprep.subr.mxu0 0.0
    %212 = vmatpush1.msra.mxu0 0.0
    %213 = vmatprep.subr.mxu0 0.0
    %214 = vmatpush1.msra.mxu0 0.0
    %215 = vmatprep.subr.mxu0 0.0
    %216 = vmatpush1.msra.mxu0 0.0
    %217 = vmatprep.subr.mxu0 0.0
    %218 = vmatpush1.msra.mxu0 0.0
    %219 = vmatprep.subr.mxu0 0.0
    %220 = vmatpush1.msra.mxu0 0.0
    %221 = vmatprep.subr.mxu0 0.0
    %222 = vmatpush1.msra.mxu0 0.0
    %223 = vmatprep.subr.mxu0 0.0
    %224 = vmatpush1.msra.mxu0 0.0
    %225 = vmatprep.subr.mxu0 0.0
    %226 = vmatpush1.msra.mxu0 0.0
    %227 = vmatprep.subr.mxu0 0.0
    %228 = vmatpush1.msra.mxu0 0.0
    %229 = vmatprep.subr.mxu0 0.0
    %230 = vmatpush1.msra.mxu0 0.0
    %231 = vmatprep.subr.mxu0 0.0
    %232 = vmatpush1.msra.mxu0 0.0
    %233 = vmatprep.subr.mxu0 0.0
    %234 = vmatpush1.msra.mxu0 0.0
    %235 = vmatprep.subr.mxu0 0.0
    %236 = vmatpush1.msra.mxu0 0.0
    %237 = vmatprep.subr.mxu0 0.0
    %238 = vmatpush1.msra.mxu0 0.0
    %239 = vmatprep.subr.mxu0 0.0
    %240 = vmatpush1.msra.mxu0 0.0
    %241 = vmatprep.subr.mxu0 0.0
    %242 = vmatpush1.msra.mxu0 0.0
    %243 = vmatprep.subr.mxu0 0.0
    %244 = vmatpush1.msra.mxu0 0.0
    %245 = vmatprep.subr.mxu0 0.0
    %246 = vmatpush1.msra.mxu0 0.0
    %247 = vmatprep.subr.mxu0 0.0
    %248 = vmatpush1.msra.mxu0 0.0
    %249 = vmatprep.subr.mxu0 0.0
    %250 = vmatpush1.msra.mxu0 0.0
    %251 = vmatprep.subr.mxu0 0.0
    %252 = vmatpush1.msra.mxu0 0.0
    %253 = vmatprep.subr.mxu0 0.0
    %254 = vmatpush1.msra.mxu0 0.0
    %255 = vmatprep.subr.mxu0 0.0
    %256 = vmatpush1.msra.mxu0 0.0
    %257 = vmatprep.subr.mxu0 0.0
    %258 = vmatpush1.msra.mxu0 0.0
    %259 = vmatprep.subr.mxu0 0.0
    %260 = vmatpush1.msra.mxu0 0.0
    %261 = vmatprep.subr.mxu0 0.0
    %262 = vmatpush1.msra.mxu0 0.0
    %263 = vmatprep.subr.mxu0 0.0
    %264 = vmatpush1.msra.mxu0 0.0
    %265 = vmatprep.mubr.f32.mxu0 0.0
    %266 = vmatmul.mubr.f32.gmra.mrb[0].mxu0 %v178
    %v267 = vpop.f32.mrb[0].mxu0
    %v268 = vadd.f32 %v169, %v267
    %v269 = vpop.f32.mrb[0].mxu0
    %v270 = vadd.f32 %v173, %v269
    %271 = vmatprep.mubr.f32.mxu0 0.0
    %272 = vmatmul.mubr.f32.gmra.mrb[0].mxu0 %v181
    %v273 = vpop.f32.mrb[0].mxu0
    %v274 = vadd.f32 %v169, %v273
    %v275 = vpop.f32.mrb[0].mxu0
    %v276 = vadd.f32 %v173, %v275
    %277 = vmatprep.mubr.f32.mxu0 0.0
    %278 = vmatmul.mubr.f32.gmra.mrb[0].mxu0 %v184
    %v279 = vpop.f32.mrb[0].mxu0
    %v280 = vadd.f32 %v169, %v279
    %v281 = vpop.f32.mrb[0].mxu0
    %v282 = vadd.f32 %v173, %v281
    %283 = vmatprep.mubr.f32.mxu0 0.0
    %284 = vmatmul.mubr.f32.gmra.mrb[0].mxu0 %v187
    %v285 = vpop.f32.mrb[0].mxu0
    %v286 = vadd.f32 %v169, %v285
    %v287 = vpop.f32.mrb[0].mxu0
    %v288 = vadd.f32 %v173, %v287
    %289 = vmatprep.mubr.f32.mxu0 0.0
    %290 = vmatmul.mubr.f32.gmra.mrb[0].mxu0 %v190
    %v291 = vpop.f32.mrb[0].mxu0
    %v292 = vadd.f32 %v169, %v291
    %v293 = vpop.f32.mrb[0].mxu0
    %v294 = vadd.f32 %v173, %v293
    %295 = vmatprep.mubr.f32.mxu0 0.0
    %296 = vmatmul.mubr.f32.gmra.mrb[0].mxu0 %v193
    %v297 = vpop.f32.mrb[0].mxu0
    %v298 = vadd.f32 %v169, %v297
    %v299 = vpop.f32.mrb[0].mxu0
    %v300 = vadd.f32 %v173, %v299
    %301 = vmatprep.mubr.f32.mxu0 0.0
    %302 = vmatmul.mubr.f32.gmra.mrb[0].mxu0 %v196
    %v303 = vpop.f32.mrb[0].mxu0
    %v304 = vadd.f32 %v169, %v303
    %v305 = vpop.f32.mrb[0].mxu0
    %v306 = vadd.f32 %v173, %v305
    %307 = vmatprep.mubr.f32.mxu0 0.0
    %308 = vmatmul.mubr.f32.gmra.mrb[0].mxu0 %v199
    %v309 = vpop.f32.mrb[0].mxu0
    %v310 = vadd.f32 %v169, %v309
    %v311 = vpop.f32.mrb[0].mxu0
    %v312 = vadd.f32 %v173, %v311
    %313 = vdwg.mxu0
    %314 = vst [vmem:[#allocation2] sm:$0xff] %v268
    %vm315 = vcmask 523264
    %316 = vst.msk [vmem:[#allocation2 + $0x8] sm:$0xff] %vm315, %v270
    %317 = vst [vmem:[#allocation2 + $0x10] sm:$0xff] %v274
    %318 = vst.msk [vmem:[#allocation2 + $0x18] sm:$0xff] %vm315, %v276
    %319 = vst [vmem:[#allocation2 + $0x20] sm:$0xff] %v280
    %320 = vst.msk [vmem:[#allocation2 + $0x28] sm:$0xff] %vm315, %v282
    %321 = vst [vmem:[#allocation2 + $0x30] sm:$0xff] %v286
    %322 = vst.msk [vmem:[#allocation2 + $0x38] sm:$0xff] %vm315, %v288
    %323 = vst [vmem:[#allocation2 + $0x40] sm:$0xff] %v292
    %324 = vst.msk [vmem:[#allocation2 + $0x48] sm:$0xff] %vm315, %v294
    %325 = vst [vmem:[#allocation2 + $0x50] sm:$0xff] %v298
    %326 = vst.msk [vmem:[#allocation2 + $0x58] sm:$0xff] %vm315, %v300
    %327 = vst [vmem:[#allocation2 + $0x60] sm:$0xff] %v304
    %328 = vst.msk [vmem:[#allocation2 + $0x68] sm:$0xff] %vm315, %v306
    %329 = vst [vmem:[#allocation2 + $0x70] sm:$0xff] %v310
    %330 = vst.msk [vmem:[#allocation2 + $0x78] sm:$0xff] %vm315, %v312
    %v331 = vld [vmem:[#allocation15] sm:$0xff]
    %v332 = vld [vmem:[#allocation15 + $0x8] sm:$0xff]
    %v333 = vld [vmem:[#allocation16] sm:$0x3]
    %v335 = vlaneseq
    %v336 = vshrl.u32 %v335, 7
    %v337 = vsub.s32 0, %v336
    %v338 = vrot.slane %v333, %v337
    %v339 = vlaneseq
    %v340 = vshrl.u32 %v339, 7
    %v341 = vsub.s32 1, %v340
    %v342 = vrot.slane %v333, %v341
    %345 = vmatprep.subr.mxu0 %v332
    %346 = vmatpush1.msra.mxu0 %v331
    %347 = vmatprep.subr.mxu0 0.0
    %348 = vmatpush1.msra.mxu0 0.0
    %349 = vmatprep.subr.mxu0 0.0
    %350 = vmatpush1.msra.mxu0 0.0
    %351 = vmatprep.subr.mxu0 0.0
    %352 = vmatpush1.msra.mxu0 0.0
    %353 = vmatprep.subr.mxu0 0.0
    %354 = vmatpush1.msra.mxu0 0.0
    %355 = vmatprep.subr.mxu0 0.0
    %356 = vmatpush1.msra.mxu0 0.0
    %357 = vmatprep.subr.mxu0 0.0
    %358 = vmatpush1.msra.mxu0 0.0
    %359 = vmatprep.subr.mxu0 0.0
    %360 = vmatpush1.msra.mxu0 0.0
    %361 = vmatprep.subr.mxu0 0.0
    %362 = vmatpush1.msra.mxu0 0.0
    %363 = vmatprep.subr.mxu0 0.0
    %364 = vmatpush1.msra.mxu0 0.0
    %365 = vmatprep.subr.mxu0 0.0
    %366 = vmatpush1.msra.mxu0 0.0
    %367 = vmatprep.subr.mxu0 0.0
    %368 = vmatpush1.msra.mxu0 0.0
    %369 = vmatprep.subr.mxu0 0.0
    %370 = vmatpush1.msra.mxu0 0.0
    %371 = vmatprep.subr.mxu0 0.0
    %372 = vmatpush1.msra.mxu0 0.0
    %373 = vmatprep.subr.mxu0 0.0
    %374 = vmatpush1.msra.mxu0 0.0
    %375 = vmatprep.subr.mxu0 0.0
    %376 = vmatpush1.msra.mxu0 0.0
    %377 = vmatprep.subr.mxu0 0.0
    %378 = vmatpush1.msra.mxu0 0.0
    %379 = vmatprep.subr.mxu0 0.0
    %380 = vmatpush1.msra.mxu0 0.0
    %381 = vmatprep.subr.mxu0 0.0
    %382 = vmatpush1.msra.mxu0 0.0
    %383 = vmatprep.subr.mxu0 0.0
    %384 = vmatpush1.msra.mxu0 0.0
    %385 = vmatprep.subr.mxu0 0.0
    %386 = vmatpush1.msra.mxu0 0.0
    %387 = vmatprep.subr.mxu0 0.0
    %388 = vmatpush1.msra.mxu0 0.0
    %389 = vmatprep.subr.mxu0 0.0
    %390 = vmatpush1.msra.mxu0 0.0
    %391 = vmatprep.subr.mxu0 0.0
    %392 = vmatpush1.msra.mxu0 0.0
    %393 = vmatprep.subr.mxu0 0.0
    %394 = vmatpush1.msra.mxu0 0.0
    %395 = vmatprep.subr.mxu0 0.0
    %396 = vmatpush1.msra.mxu0 0.0
    %397 = vmatprep.subr.mxu0 0.0
    %398 = vmatpush1.msra.mxu0 0.0
    %399 = vmatprep.subr.mxu0 0.0
    %400 = vmatpush1.msra.mxu0 0.0
    %401 = vmatprep.subr.mxu0 0.0
    %402 = vmatpush1.msra.mxu0 0.0
    %403 = vmatprep.subr.mxu0 0.0
    %404 = vmatpush1.msra.mxu0 0.0
    %405 = vmatprep.subr.mxu0 0.0
    %406 = vmatpush1.msra.mxu0 0.0
    %407 = vmatprep.subr.mxu0 0.0
    %408 = vmatpush1.msra.mxu0 0.0
    %409 = vmatprep.mubr.f32.mxu0 0.0
    %410 = vmatmul.mubr.f32.gmra.mrb[0].mxu0 %v178
    %v411 = vpop.f32.mrb[0].mxu0
    %v412 = vadd.f32 %v338, %v411
    %v413 = vpop.f32.mrb[0].mxu0
    %v414 = vadd.f32 %v342, %v413
    %415 = vmatprep.mubr.f32.mxu0 0.0
    %416 = vmatmul.mubr.f32.gmra.mrb[0].mxu0 %v181
    %v417 = vpop.f32.mrb[0].mxu0
    %v418 = vadd.f32 %v338, %v417
    %v419 = vpop.f32.mrb[0].mxu0
    %v420 = vadd.f32 %v342, %v419
    %421 = vmatprep.mubr.f32.mxu0 0.0
    %422 = vmatmul.mubr.f32.gmra.mrb[0].mxu0 %v184
    %v423 = vpop.f32.mrb[0].mxu0
    %v424 = vadd.f32 %v338, %v423
    %v425 = vpop.f32.mrb[0].mxu0
    %v426 = vadd.f32 %v342, %v425
    %427 = vmatprep.mubr.f32.mxu0 0.0
    %428 = vmatmul.mubr.f32.gmra.mrb[0].mxu0 %v187
    %v429 = vpop.f32.mrb[0].mxu0
    %v430 = vadd.f32 %v338, %v429
    %v431 = vpop.f32.mrb[0].mxu0
    %v432 = vadd.f32 %v342, %v431
    %433 = vmatprep.mubr.f32.mxu0 0.0
    %434 = vmatmul.mubr.f32.gmra.mrb[0].mxu0 %v190
    %v435 = vpop.f32.mrb[0].mxu0
    %v436 = vadd.f32 %v338, %v435
    %v437 = vpop.f32.mrb[0].mxu0
    %v438 = vadd.f32 %v342, %v437
    %439 = vmatprep.mubr.f32.mxu0 0.0
    %440 = vmatmul.mubr.f32.gmra.mrb[0].mxu0 %v193
    %v441 = vpop.f32.mrb[0].mxu0
    %v442 = vadd.f32 %v338, %v441
    %v443 = vpop.f32.mrb[0].mxu0
    %v444 = vadd.f32 %v342, %v443
    %445 = vmatprep.mubr.f32.mxu0 0.0
    %446 = vmatmul.mubr.f32.gmra.mrb[0].mxu0 %v196
    %v447 = vpop.f32.mrb[0].mxu0
    %v448 = vadd.f32 %v338, %v447
    %v449 = vpop.f32.mrb[0].mxu0
    %v450 = vadd.f32 %v342, %v449
    %451 = vmatprep.mubr.f32.mxu0 0.0
    %452 = vmatmul.mubr.f32.gmra.mrb[0].mxu0 %v199
    %v453 = vpop.f32.mrb[0].mxu0
    %v454 = vadd.f32 %v338, %v453
    %v455 = vpop.f32.mrb[0].mxu0
    %v456 = vadd.f32 %v342, %v455
    %457 = vdwg.mxu0
    %458 = vst [vmem:[#allocation3] sm:$0xff] %v412
    %459 = vst.msk [vmem:[#allocation3 + $0x8] sm:$0xff] %vm315, %v414
    %460 = vst [vmem:[#allocation3 + $0x10] sm:$0xff] %v418
    %461 = vst.msk [vmem:[#allocation3 + $0x18] sm:$0xff] %vm315, %v420
    %462 = vst [vmem:[#allocation3 + $0x20] sm:$0xff] %v424
    %463 = vst.msk [vmem:[#allocation3 + $0x28] sm:$0xff] %vm315, %v426
    %464 = vst [vmem:[#allocation3 + $0x30] sm:$0xff] %v430
    %465 = vst.msk [vmem:[#allocation3 + $0x38] sm:$0xff] %vm315, %v432
    %466 = vst [vmem:[#allocation3 + $0x40] sm:$0xff] %v436
    %467 = vst.msk [vmem:[#allocation3 + $0x48] sm:$0xff] %vm315, %v438
    %468 = vst [vmem:[#allocation3 + $0x50] sm:$0xff] %v442
    %469 = vst.msk [vmem:[#allocation3 + $0x58] sm:$0xff] %vm315, %v444
    %470 = vst [vmem:[#allocation3 + $0x60] sm:$0xff] %v448
    %471 = vst.msk [vmem:[#allocation3 + $0x68] sm:$0xff] %vm315, %v450
    %472 = vst [vmem:[#allocation3 + $0x70] sm:$0xff] %v454
    %473 = vst.msk [vmem:[#allocation3 + $0x78] sm:$0xff] %vm315, %v456
    %v474 = vld [vmem:[%s2] sm:$0xff]
    %v475 = vld [vmem:[%s2 + $0x8] sm:$0xff]
    %v476 = vld [vmem:[%s2 + $0x10] sm:$0xff]
    %v477 = vld [vmem:[%s2 + $0x18] sm:$0xff]
    %v478 = vld [vmem:[%s2 + $0x20] sm:$0xff]
    %v479 = vld [vmem:[%s2 + $0x28] sm:$0xff]
    %v480 = vld [vmem:[%s2 + $0x30] sm:$0xff]
    %v481 = vld [vmem:[%s2 + $0x38] sm:$0xff]
    %v482 = vld [vmem:[%s2 + $0x40] sm:$0xff]
    %v483 = vld [vmem:[%s2 + $0x48] sm:$0xff]
    %v484 = vld [vmem:[%s2 + $0x50] sm:$0xff]
    %v485 = vld [vmem:[%s2 + $0x58] sm:$0xff]
    %v486 = vld [vmem:[%s5] sm:$0xff]
    %v487 = vld [vmem:[%s5 + $0x8] sm:$0xff]
    %v488 = vld [vmem:[%s5 + $0x10] sm:$0xff]
    %v489 = vld [vmem:[%s5 + $0x18] sm:$0xff]
    %v490 = vld [vmem:[%s5 + $0x20] sm:$0xff]
    %v491 = vld [vmem:[%s5 + $0x28] sm:$0xff]
    %v492 = vld [vmem:[%s5 + $0x30] sm:$0xff]
    %v493 = vld [vmem:[%s5 + $0x38] sm:$0xff]
    %v494 = vld [vmem:[%s5 + $0x40] sm:$0xff]
    %v495 = vld [vmem:[%s5 + $0x48] sm:$0xff]
    %v496 = vld [vmem:[%s5 + $0x50] sm:$0xff]
    %v497 = vld [vmem:[%s5 + $0x58] sm:$0xff]
    %s498 = smul.u32 0, 2
    %s499 = smul.addr %s498, 8
    %s500 = scalar_lea.vmem [#allocation2], %s499
    %v501 = vld [vmem:[%s500] sm:$0xff]
    %v502 = vld [vmem:[%s500 + $0x8] sm:$0xff]
    %vm503 = vcmask 392192
    %v505 = vsel %vm503, 0.0, 0
    %507 = vmatprep.subr.mxu0 %v475
    %508 = vmatpush1.msra.mxu0 %v474
    %509 = vmatprep.subr.mxu0 %v477
    %510 = vmatpush1.msra.mxu0 %v476
    %511 = vmatprep.subr.mxu0 %v479
    %512 = vmatpush1.msra.mxu0 %v478
    %513 = vmatprep.subr.mxu0 %v481
    %514 = vmatpush1.msra.mxu0 %v480
    %515 = vmatprep.subr.mxu0 %v483
    %516 = vmatpush1.msra.mxu0 %v482
    %517 = vmatprep.subr.mxu0 %v485
    %518 = vmatpush1.msra.mxu0 %v484
    %519 = vmatprep.subr.mxu0 0.0
    %520 = vmatpush1.msra.mxu0 0.0
    %521 = vmatprep.subr.mxu0 0.0
    %522 = vmatpush1.msra.mxu0 0.0
    %523 = vmatprep.subr.mxu0 0.0
    %524 = vmatpush1.msra.mxu0 0.0
    %525 = vmatprep.subr.mxu0 0.0
    %526 = vmatpush1.msra.mxu0 0.0
    %527 = vmatprep.subr.mxu0 0.0
    %528 = vmatpush1.msra.mxu0 0.0
    %529 = vmatprep.subr.mxu0 0.0
    %530 = vmatpush1.msra.mxu0 0.0
    %531 = vmatprep.subr.mxu0 0.0
    %532 = vmatpush1.msra.mxu0 0.0
    %533 = vmatprep.subr.mxu0 0.0
    %534 = vmatpush1.msra.mxu0 0.0
    %535 = vmatprep.subr.mxu0 0.0
    %536 = vmatpush1.msra.mxu0 0.0
    %537 = vmatprep.subr.mxu0 0.0
    %538 = vmatpush1.msra.mxu0 0.0
    %539 = vmatprep.subr.mxu0 0.0
    %540 = vmatpush1.msra.mxu0 0.0
    %541 = vmatprep.subr.mxu0 0.0
    %542 = vmatpush1.msra.mxu0 0.0
    %543 = vmatprep.subr.mxu0 0.0
    %544 = vmatpush1.msra.mxu0 0.0
    %545 = vmatprep.subr.mxu0 0.0
    %546 = vmatpush1.msra.mxu0 0.0
    %547 = vmatprep.subr.mxu0 0.0
    %548 = vmatpush1.msra.mxu0 0.0
    %549 = vmatprep.subr.mxu0 0.0
    %550 = vmatpush1.msra.mxu0 0.0
    %551 = vmatprep.subr.mxu0 0.0
    %552 = vmatpush1.msra.mxu0 0.0
    %553 = vmatprep.subr.mxu0 0.0
    %554 = vmatpush1.msra.mxu0 0.0
    %555 = vmatprep.subr.mxu0 0.0
    %556 = vmatpush1.msra.mxu0 0.0
    %557 = vmatprep.subr.mxu0 0.0
    %558 = vmatpush1.msra.mxu0 0.0
    %559 = vmatprep.subr.mxu0 0.0
    %560 = vmatpush1.msra.mxu0 0.0
    %561 = vmatprep.subr.mxu0 0.0
    %562 = vmatpush1.msra.mxu0 0.0
    %563 = vmatprep.subr.mxu0 0.0
    %564 = vmatpush1.msra.mxu0 0.0
    %565 = vmatprep.subr.mxu0 0.0
    %566 = vmatpush1.msra.mxu0 0.0
    %567 = vmatprep.subr.mxu0 0.0
    %568 = vmatpush1.msra.mxu0 0.0
    %569 = vmatprep.subr.mxu0 0.0
    %570 = vmatpush1.msra.mxu0 0.0
    %571 = vmatprep.mubr.f32.mxu0 0.0
    %572 = vmatmul.mubr.f32.gmra.mrb[0].mxu0 %v505
    %v573 = vpop.f32.mrb[0].mxu0
    %v574 = vadd.f32 0.0, %v573
    %v575 = vpop.f32.mrb[0].mxu0
    %v576 = vadd.f32 0.0, %v575
    %577 = vdwg.mxu0
    %v578 = vadd.f32 %v501, %v574
    %v579 = vadd.f32 %v502, %v576
    %v580 = vxor.u32 %v578, 2147483648
    %v581 = vxor.u32 %v579, 2147483648
    %v582 = vmul.f32 %v580, 1.442695
    %v583 = vpow.pop %v582
    %v584 = vmul.f32 %v581, 1.442695
    %v585 = vpow.pop %v584
    %v586 = vadd.f32 %v583, 1.0
    %v587 = vadd.f32 %v585, 1.0
    %v588 = vrcp.pop %v586
    %v589 = vmul.f32 1.0, %v588
    %v590 = vrcp.pop %v587
    %v591 = vmul.f32 1.0, %v590
    %v592 = vtanh.pop %v579
    %v593 = vmul.f32 %v589, 0.0
    %595 = vrot.lane.b32.xlu0 %v592, 112
    %v596 = vpop.permute.xlu0 %595
    %v598 = vmul.f32 %v589, %v596
    %600 = vrot.lane.b32.xlu0 %v598, 48
    %v601 = vpop.permute.xlu0 %600
    %v603 = vadd.f32 %v593, %v601
    %v604 = vtanh.pop %v603
    %606 = vrot.lane.b32.xlu0 %v604, 48
    %v607 = vpop.permute.xlu0 %606
    %v609 = vmul.f32 %v589, %v607
    %v610 = vmul.f32 %v591, %v607
    %s611 = smul.u32 7, 2
    %s612 = smul.addr %s611, 8
    %s613 = scalar_lea.vmem [#allocation3], %s612
    %v614 = vld [vmem:[%s613] sm:$0xff]
    %v615 = vld [vmem:[%s613 + $0x8] sm:$0xff]
    %616 = vmatprep.subr.mxu0 %v487
    %617 = vmatpush1.msra.mxu0 %v486
    %618 = vmatprep.subr.mxu0 %v489
    %619 = vmatpush1.msra.mxu0 %v488
    %620 = vmatprep.subr.mxu0 %v491
    %621 = vmatpush1.msra.mxu0 %v490
    %622 = vmatprep.subr.mxu0 %v493
    %623 = vmatpush1.msra.mxu0 %v492
    %624 = vmatprep.subr.mxu0 %v495
    %625 = vmatpush1.msra.mxu0 %v494
    %626 = vmatprep.subr.mxu0 %v497
    %627 = vmatpush1.msra.mxu0 %v496
    %628 = vmatprep.subr.mxu0 0.0
    %629 = vmatpush1.msra.mxu0 0.0
    %630 = vmatprep.subr.mxu0 0.0
    %631 = vmatpush1.msra.mxu0 0.0
    %632 = vmatprep.subr.mxu0 0.0
    %633 = vmatpush1.msra.mxu0 0.0
    %634 = vmatprep.subr.mxu0 0.0
    %635 = vmatpush1.msra.mxu0 0.0
    %636 = vmatprep.subr.mxu0 0.0
    %637 = vmatpush1.msra.mxu0 0.0
    %638 = vmatprep.subr.mxu0 0.0
    %639 = vmatpush1.msra.mxu0 0.0
    %640 = vmatprep.subr.mxu0 0.0
    %641 = vmatpush1.msra.mxu0 0.0
    %642 = vmatprep.subr.mxu0 0.0
    %643 = vmatpush1.msra.mxu0 0.0
    %644 = vmatprep.subr.mxu0 0.0
    %645 = vmatpush1.msra.mxu0 0.0
    %646 = vmatprep.subr.mxu0 0.0
    %647 = vmatpush1.msra.mxu0 0.0
    %648 = vmatprep.subr.mxu0 0.0
    %649 = vmatpush1.msra.mxu0 0.0
    %650 = vmatprep.subr.mxu0 0.0
    %651 = vmatpush1.msra.mxu0 0.0
    %652 = vmatprep.subr.mxu0 0.0
    %653 = vmatpush1.msra.mxu0 0.0
    %654 = vmatprep.subr.mxu0 0.0
    %655 = vmatpush1.msra.mxu0 0.0
    %656 = vmatprep.subr.mxu0 0.0
    %657 = vmatpush1.msra.mxu0 0.0
    %658 = vmatprep.subr.mxu0 0.0
    %659 = vmatpush1.msra.mxu0 0.0
    %660 = vmatprep.subr.mxu0 0.0
    %661 = vmatpush1.msra.mxu0 0.0
    %662 = vmatprep.subr.mxu0 0.0
    %663 = vmatpush1.msra.mxu0 0.0
    %664 = vmatprep.subr.mxu0 0.0
    %665 = vmatpush1.msra.mxu0 0.0
    %666 = vmatprep.subr.mxu0 0.0
    %667 = vmatpush1.msra.mxu0 0.0
    %668 = vmatprep.subr.mxu0 0.0
    %669 = vmatpush1.msra.mxu0 0.0
    %670 = vmatprep.subr.mxu0 0.0
    %671 = vmatpush1.msra.mxu0 0.0
    %672 = vmatprep.subr.mxu0 0.0
    %673 = vmatpush1.msra.mxu0 0.0
    %674 = vmatprep.subr.mxu0 0.0
    %675 = vmatpush1.msra.mxu0 0.0
    %676 = vmatprep.subr.mxu0 0.0
    %677 = vmatpush1.msra.mxu0 0.0
    %678 = vmatprep.subr.mxu0 0.0
    %679 = vmatpush1.msra.mxu0 0.0
    %680 = vmatprep.mubr.f32.mxu0 0.0
    %681 = vmatmul.mubr.f32.gmra.mrb[0].mxu0 %v505
    %v682 = vpop.f32.mrb[0].mxu0
    %v683 = vadd.f32 0.0, %v682
    %v684 = vpop.f32.mrb[0].mxu0
    %v685 = vadd.f32 0.0, %v684
    %686 = vdwg.mxu0
    %v687 = vadd.f32 %v614, %v683
    %v688 = vadd.f32 %v615, %v685
    %v689 = vxor.u32 %v687, 2147483648
    %v690 = vxor.u32 %v688, 2147483648
    %v691 = vmul.f32 %v689, 1.442695
    %v692 = vpow.pop %v691
    %v693 = vmul.f32 %v690, 1.442695
    %v694 = vpow.pop %v693
    %v695 = vadd.f32 %v692, 1.0
    %v696 = vadd.f32 %v694, 1.0
    %v697 = vrcp.pop %v695
    %v698 = vmul.f32 1.0, %v697
    %v699 = vrcp.pop %v696
    %v700 = vmul.f32 1.0, %v699
    %v701 = vtanh.pop %v688
    %v702 = vmul.f32 %v698, 0.0
    %704 = vrot.lane.b32.xlu0 %v701, 112
    %v705 = vpop.permute.xlu0 %704
    %v707 = vmul.f32 %v698, %v705
    %709 = vrot.lane.b32.xlu0 %v707, 48
    %v710 = vpop.permute.xlu0 %709
    %v712 = vadd.f32 %v702, %v710
    %v713 = vtanh.pop %v712
    %715 = vrot.lane.b32.xlu0 %v713, 48
    %v716 = vpop.permute.xlu0 %715
    %v718 = vmul.f32 %v698, %v716
    %v719 = vmul.f32 %v700, %v716
    %v720 = vmax.f32 %v609, 0.0
    %v721 = vmax.f32 %v610, 0.0
    %724 = vrot.lane.b32.xlu0 %v720, 32
    %v725 = vpop.permute.xlu0 %724
    %726 = vrot.lane.b32.xlu0 %v721, 32
    %v727 = vpop.permute.xlu0 %726
    %vm728 = vcmask 261120
    %v729 = vsel %vm728, %v725, %v727
    %731 = vst.msk [vmem:[#allocation4] sm:$0xff] %vm503, %v729
    %v732 = vmax.f32 %v718, 0.0
    %v733 = vmax.f32 %v719, 0.0
    %736 = vrot.lane.b32.xlu0 %v732, 32
    %v737 = vpop.permute.xlu0 %736
    %738 = vrot.lane.b32.xlu0 %v733, 32
    %v739 = vpop.permute.xlu0 %738
    %v740 = vsel %vm728, %v737, %v739
    %s742 = scalar_lea.vmem [#allocation5], 56
    %743 = vst.msk [vmem:[%s742] sm:$0xff] %vm503, %v740
    %s744 = smul.u32 1, 2
    %s745 = smul.addr %s744, 8
    %s746 = scalar_lea.vmem [#allocation2], %s745
    %v747 = vld [vmem:[%s746] sm:$0xff]
    %v748 = vld [vmem:[%s746 + $0x8] sm:$0xff]
    %751 = vrot.lane.b32.xlu0 %v609, 32
    %v752 = vpop.permute.xlu0 %751
    %753 = vrot.lane.b32.xlu0 %v610, 32
    %v754 = vpop.permute.xlu0 %753
    %v755 = vsel %vm728, %v752, %v754
    %v756 = vsel %vm503, %v755, 0
    %758 = vmatprep.subr.mxu0 %v475
    %759 = vmatpush1.msra.mxu0 %v474
    %760 = vmatprep.subr.mxu0 %v477
    %761 = vmatpush1.msra.mxu0 %v476
    %762 = vmatprep.subr.mxu0 %v479
    %763 = vmatpush1.msra.mxu0 %v478
    %764 = vmatprep.subr.mxu0 %v481
    %765 = vmatpush1.msra.mxu0 %v480
    %766 = vmatprep.subr.mxu0 %v483
    %767 = vmatpush1.msra.mxu0 %v482
    %768 = vmatprep.subr.mxu0 %v485
    %769 = vmatpush1.msra.mxu0 %v484
    %770 = vmatprep.subr.mxu0 0.0
    %771 = vmatpush1.msra.mxu0 0.0
    %772 = vmatprep.subr.mxu0 0.0
    %773 = vmatpush1.msra.mxu0 0.0
    %774 = vmatprep.subr.mxu0 0.0
    %775 = vmatpush1.msra.mxu0 0.0
    %776 = vmatprep.subr.mxu0 0.0
    %777 = vmatpush1.msra.mxu0 0.0
    %778 = vmatprep.subr.mxu0 0.0
    %779 = vmatpush1.msra.mxu0 0.0
    %780 = vmatprep.subr.mxu0 0.0
    %781 = vmatpush1.msra.mxu0 0.0
    %782 = vmatprep.subr.mxu0 0.0
    %783 = vmatpush1.msra.mxu0 0.0
    %784 = vmatprep.subr.mxu0 0.0
    %785 = vmatpush1.msra.mxu0 0.0
    %786 = vmatprep.subr.mxu0 0.0
    %787 = vmatpush1.msra.mxu0 0.0
    %788 = vmatprep.subr.mxu0 0.0
    %789 = vmatpush1.msra.mxu0 0.0
    %790 = vmatprep.subr.mxu0 0.0
    %791 = vmatpush1.msra.mxu0 0.0
    %792 = vmatprep.subr.mxu0 0.0
    %793 = vmatpush1.msra.mxu0 0.0
    %794 = vmatprep.subr.mxu0 0.0
    %795 = vmatpush1.msra.mxu0 0.0
    %796 = vmatprep.subr.mxu0 0.0
    %797 = vmatpush1.msra.mxu0 0.0
    %798 = vmatprep.subr.mxu0 0.0
    %799 = vmatpush1.msra.mxu0 0.0
    %800 = vmatprep.subr.mxu0 0.0
    %801 = vmatpush1.msra.mxu0 0.0
    %802 = vmatprep.subr.mxu0 0.0
    %803 = vmatpush1.msra.mxu0 0.0
    %804 = vmatprep.subr.mxu0 0.0
    %805 = vmatpush1.msra.mxu0 0.0
    %806 = vmatprep.subr.mxu0 0.0
    %807 = vmatpush1.msra.mxu0 0.0
    %808 = vmatprep.subr.mxu0 0.0
    %809 = vmatpush1.msra.mxu0 0.0
    %810 = vmatprep.subr.mxu0 0.0
    %811 = vmatpush1.msra.mxu0 0.0
    %812 = vmatprep.subr.mxu0 0.0
    %813 = vmatpush1.msra.mxu0 0.0
    %814 = vmatprep.subr.mxu0 0.0
    %815 = vmatpush1.msra.mxu0 0.0
    %816 = vmatprep.subr.mxu0 0.0
    %817 = vmatpush1.msra.mxu0 0.0
    %818 = vmatprep.subr.mxu0 0.0
    %819 = vmatpush1.msra.mxu0 0.0
    %820 = vmatprep.subr.mxu0 0.0
    %821 = vmatpush1.msra.mxu0 0.0
    %822 = vmatprep.mubr.f32.mxu0 0.0
    %823 = vmatmul.mubr.f32.gmra.mrb[0].mxu0 %v756
    %v824 = vpop.f32.mrb[0].mxu0
    %v825 = vadd.f32 0.0, %v824
    %v826 = vpop.f32.mrb[0].mxu0
    %v827 = vadd.f32 0.0, %v826
    %828 = vdwg.mxu0
    %v829 = vadd.f32 %v747, %v825
    %v830 = vadd.f32 %v748, %v827
    %v831 = vxor.u32 %v829, 2147483648
    %v832 = vxor.u32 %v830, 2147483648
    %v833 = vmul.f32 %v831, 1.442695
    %v834 = vpow.pop %v833
    %v835 = vmul.f32 %v832, 1.442695
    %v836 = vpow.pop %v835
    %v837 = vadd.f32 %v834, 1.0
    %v838 = vadd.f32 %v836, 1.0
    %v839 = vrcp.pop %v837
    %v840 = vmul.f32 1.0, %v839
    %v841 = vrcp.pop %v838
    %v842 = vmul.f32 1.0, %v841
    %v843 = vtanh.pop %v830
    %v844 = vmul.f32 %v840, %v603
    %846 = vrot.lane.b32.xlu0 %v843, 112
    %v847 = vpop.permute.xlu0 %846
    %v849 = vmul.f32 %v840, %v847
    %851 = vrot.lane.b32.xlu0 %v849, 48
    %v852 = vpop.permute.xlu0 %851
    %v854 = vadd.f32 %v844, %v852
    %v855 = vtanh.pop %v854
    %857 = vrot.lane.b32.xlu0 %v855, 48
    %v858 = vpop.permute.xlu0 %857
    %v860 = vmul.f32 %v840, %v858
    %v861 = vmul.f32 %v842, %v858
    %s862 = smul.u32 6, 2
    %s863 = smul.addr %s862, 8
    %s864 = scalar_lea.vmem [#allocation3], %s863
    %v865 = vld [vmem:[%s864] sm:$0xff]
    %v866 = vld [vmem:[%s864 + $0x8] sm:$0xff]
    %869 = vrot.lane.b32.xlu0 %v718, 32
    %v870 = vpop.permute.xlu0 %869
    %871 = vrot.lane.b32.xlu0 %v719, 32
    %v872 = vpop.permute.xlu0 %871
    %v873 = vsel %vm728, %v870, %v872
    %v874 = vsel %vm503, %v873, 0
    %876 = vmatprep.subr.mxu0 %v487
    %877 = vmatpush1.msra.mxu0 %v486
    %878 = vmatprep.subr.mxu0 %v489
    %879 = vmatpush1.msra.mxu0 %v488
    %880 = vmatprep.subr.mxu0 %v491
    %881 = vmatpush1.msra.mxu0 %v490
    %882 = vmatprep.subr.mxu0 %v493
    %883 = vmatpush1.msra.mxu0 %v492
    %884 = vmatprep.subr.mxu0 %v495
    %885 = vmatpush1.msra.mxu0 %v494
    %886 = vmatprep.subr.mxu0 %v497
    %887 = vmatpush1.msra.mxu0 %v496
    %888 = vmatprep.subr.mxu0 0.0
    %889 = vmatpush1.msra.mxu0 0.0
    %890 = vmatprep.subr.mxu0 0.0
    %891 = vmatpush1.msra.mxu0 0.0
    %892 = vmatprep.subr.mxu0 0.0
    %893 = vmatpush1.msra.mxu0 0.0
    %894 = vmatprep.subr.mxu0 0.0
    %895 = vmatpush1.msra.mxu0 0.0
    %896 = vmatprep.subr.mxu0 0.0
    %897 = vmatpush1.msra.mxu0 0.0
    %898 = vmatprep.subr.mxu0 0.0
    %899 = vmatpush1.msra.mxu0 0.0
    %900 = vmatprep.subr.mxu0 0.0
    %901 = vmatpush1.msra.mxu0 0.0
    %902 = vmatprep.subr.mxu0 0.0
    %903 = vmatpush1.msra.mxu0 0.0
    %904 = vmatprep.subr.mxu0 0.0
    %905 = vmatpush1.msra.mxu0 0.0
    %906 = vmatprep.subr.mxu0 0.0
    %907 = vmatpush1.msra.mxu0 0.0
    %908 = vmatprep.subr.mxu0 0.0
    %909 = vmatpush1.msra.mxu0 0.0
    %910 = vmatprep.subr.mxu0 0.0
    %911 = vmatpush1.msra.mxu0 0.0
    %912 = vmatprep.subr.mxu0 0.0
    %913 = vmatpush1.msra.mxu0 0.0
    %914 = vmatprep.subr.mxu0 0.0
    %915 = vmatpush1.msra.mxu0 0.0
    %916 = vmatprep.subr.mxu0 0.0
    %917 = vmatpush1.msra.mxu0 0.0
    %918 = vmatprep.subr.mxu0 0.0
    %919 = vmatpush1.msra.mxu0 0.0
    %920 = vmatprep.subr.mxu0 0.0
    %921 = vmatpush1.msra.mxu0 0.0
    %922 = vmatprep.subr.mxu0 0.0
    %923 = vmatpush1.msra.mxu0 0.0
    %924 = vmatprep.subr.mxu0 0.0
    %925 = vmatpush1.msra.mxu0 0.0
    %926 = vmatprep.subr.mxu0 0.0
    %927 = vmatpush1.msra.mxu0 0.0
    %928 = vmatprep.subr.mxu0 0.0
    %929 = vmatpush1.msra.mxu0 0.0
    %930 = vmatprep.subr.mxu0 0.0
    %931 = vmatpush1.msra.mxu0 0.0
    %932 = vmatprep.subr.mxu0 0.0
    %933 = vmatpush1.msra.mxu0 0.0
    %934 = vmatprep.subr.mxu0 0.0
    %935 = vmatpush1.msra.mxu0 0.0
    %936 = vmatprep.subr.mxu0 0.0
    %937 = vmatpush1.msra.mxu0 0.0
    %938 = vmatprep.subr.mxu0 0.0
    %939 = vmatpush1.msra.mxu0 0.0
    %940 = vmatprep.mubr.f32.mxu0 0.0
    %941 = vmatmul.mubr.f32.gmra.mrb[0].mxu0 %v874
    %v942 = vpop.f32.mrb[0].mxu0
    %v943 = vadd.f32 0.0, %v942
    %v944 = vpop.f32.mrb[0].mxu0
    %v945 = vadd.f32 0.0, %v944
    %946 = vdwg.mxu0
    %v947 = vadd.f32 %v865, %v943
    %v948 = vadd.f32 %v866, %v945
    %v949 = vxor.u32 %v947, 2147483648
    %v950 = vxor.u32 %v948, 2147483648
    %v951 = vmul.f32 %v949, 1.442695
    %v952 = vpow.pop %v951
    %v953 = vmul.f32 %v950, 1.442695
    %v954 = vpow.pop %v953
    %v955 = vadd.f32 %v952, 1.0
    %v956 = vadd.f32 %v954, 1.0
    %v957 = vrcp.pop %v955
    %v958 = vmul.f32 1.0, %v957
    %v959 = vrcp.pop %v956
    %v960 = vmul.f32 1.0, %v959
    %v961 = vtanh.pop %v948
    %v962 = vmul.f32 %v958, %v712
    %964 = vrot.lane.b32.xlu0 %v961, 112
    %v965 = vpop.permute.xlu0 %964
    %v967 = vmul.f32 %v958, %v965
    %969 = vrot.lane.b32.xlu0 %v967, 48
    %v970 = vpop.permute.xlu0 %969
    %v972 = vadd.f32 %v962, %v970
    %v973 = vtanh.pop %v972
    %975 = vrot.lane.b32.xlu0 %v973, 48
    %v976 = vpop.permute.xlu0 %975
    %v978 = vmul.f32 %v958, %v976
    %v979 = vmul.f32 %v960, %v976
    %v980 = vmax.f32 %v860, 0.0
    %v981 = vmax.f32 %v861, 0.0
    %984 = vrot.lane.b32.xlu0 %v980, 32
    %v985 = vpop.permute.xlu0 %984
    %986 = vrot.lane.b32.xlu0 %v981, 32
    %v987 = vpop.permute.xlu0 %986
    %v988 = vsel %vm728, %v985, %v987
    %s990 = scalar_lea.vmem [#allocation4], 8
    %991 = vst.msk [vmem:[%s990] sm:$0xff] %vm503, %v988
    %v992 = vmax.f32 %v978, 0.0
    %v993 = vmax.f32 %v979, 0.0
    %996 = vrot.lane.b32.xlu0 %v992, 32
    %v997 = vpop.permute.xlu0 %996
    %998 = vrot.lane.b32.xlu0 %v993, 32
    %v999 = vpop.permute.xlu0 %998
    %v1000 = vsel %vm728, %v997, %v999
    %s1002 = scalar_lea.vmem [#allocation5], 48
    %1003 = vst.msk [vmem:[%s1002] sm:$0xff] %vm503, %v1000
    %s1004 = smul.u32 2, 2
    %s1005 = smul.addr %s1004, 8
    %s1006 = scalar_lea.vmem [#allocation2], %s1005
    %v1007 = vld [vmem:[%s1006] sm:$0xff]
    %v1008 = vld [vmem:[%s1006 + $0x8] sm:$0xff]
    %1011 = vrot.lane.b32.xlu0 %v860, 32
    %v1012 = vpop.permute.xlu0 %1011
    %1013 = vrot.lane.b32.xlu0 %v861, 32
    %v1014 = vpop.permute.xlu0 %1013
    %v1015 = vsel %vm728, %v1012, %v1014
    %v1016 = vsel %vm503, %v1015, 0
    %1018 = vmatprep.subr.mxu0 %v475
    %1019 = vmatpush1.msra.mxu0 %v474
    %1020 = vmatprep.subr.mxu0 %v477
    %1021 = vmatpush1.msra.mxu0 %v476
    %1022 = vmatprep.subr.mxu0 %v479
    %1023 = vmatpush1.msra.mxu0 %v478
    %1024 = vmatprep.subr.mxu0 %v481
    %1025 = vmatpush1.msra.mxu0 %v480
    %1026 = vmatprep.subr.mxu0 %v483
    %1027 = vmatpush1.msra.mxu0 %v482
    %1028 = vmatprep.subr.mxu0 %v485
    %1029 = vmatpush1.msra.mxu0 %v484
    %1030 = vmatprep.subr.mxu0 0.0
    %1031 = vmatpush1.msra.mxu0 0.0
    %1032 = vmatprep.subr.mxu0 0.0
    %1033 = vmatpush1.msra.mxu0 0.0
    %1034 = vmatprep.subr.mxu0 0.0
    %1035 = vmatpush1.msra.mxu0 0.0
    %1036 = vmatprep.subr.mxu0 0.0
    %1037 = vmatpush1.msra.mxu0 0.0
    %1038 = vmatprep.subr.mxu0 0.0
    %1039 = vmatpush1.msra.mxu0 0.0
    %1040 = vmatprep.subr.mxu0 0.0
    %1041 = vmatpush1.msra.mxu0 0.0
    %1042 = vmatprep.subr.mxu0 0.0
    %1043 = vmatpush1.msra.mxu0 0.0
    %1044 = vmatprep.subr.mxu0 0.0
    %1045 = vmatpush1.msra.mxu0 0.0
    %1046 = vmatprep.subr.mxu0 0.0
    %1047 = vmatpush1.msra.mxu0 0.0
    %1048 = vmatprep.subr.mxu0 0.0
    %1049 = vmatpush1.msra.mxu0 0.0
    %1050 = vmatprep.subr.mxu0 0.0
    %1051 = vmatpush1.msra.mxu0 0.0
    %1052 = vmatprep.subr.mxu0 0.0
    %1053 = vmatpush1.msra.mxu0 0.0
    %1054 = vmatprep.subr.mxu0 0.0
    %1055 = vmatpush1.msra.mxu0 0.0
    %1056 = vmatprep.subr.mxu0 0.0
    %1057 = vmatpush1.msra.mxu0 0.0
    %1058 = vmatprep.subr.mxu0 0.0
    %1059 = vmatpush1.msra.mxu0 0.0
    %1060 = vmatprep.subr.mxu0 0.0
    %1061 = vmatpush1.msra.mxu0 0.0
    %1062 = vmatprep.subr.mxu0 0.0
    %1063 = vmatpush1.msra.mxu0 0.0
    %1064 = vmatprep.subr.mxu0 0.0
    %1065 = vmatpush1.msra.mxu0 0.0
    %1066 = vmatprep.subr.mxu0 0.0
    %1067 = vmatpush1.msra.mxu0 0.0
    %1068 = vmatprep.subr.mxu0 0.0
    %1069 = vmatpush1.msra.mxu0 0.0
    %1070 = vmatprep.subr.mxu0 0.0
    %1071 = vmatpush1.msra.mxu0 0.0
    %1072 = vmatprep.subr.mxu0 0.0
    %1073 = vmatpush1.msra.mxu0 0.0
    %1074 = vmatprep.subr.mxu0 0.0
    %1075 = vmatpush1.msra.mxu0 0.0
    %1076 = vmatprep.subr.mxu0 0.0
    %1077 = vmatpush1.msra.mxu0 0.0
    %1078 = vmatprep.subr.mxu0 0.0
    %1079 = vmatpush1.msra.mxu0 0.0
    %1080 = vmatprep.subr.mxu0 0.0
    %1081 = vmatpush1.msra.mxu0 0.0
    %1082 = vmatprep.mubr.f32.mxu0 0.0
    %1083 = vmatmul.mubr.f32.gmra.mrb[0].mxu0 %v1016
    %v1084 = vpop.f32.mrb[0].mxu0
    %v1085 = vadd.f32 0.0, %v1084
    %v1086 = vpop.f32.mrb[0].mxu0
    %v1087 = vadd.f32 0.0, %v1086
    %1088 = vdwg.mxu0
    %v1089 = vadd.f32 %v1007, %v1085
    %v1090 = vadd.f32 %v1008, %v1087
    %v1091 = vxor.u32 %v1089, 2147483648
    %v1092 = vxor.u32 %v1090, 2147483648
    %v1093 = vmul.f32 %v1091, 1.442695
    %v1094 = vpow.pop %v1093
    %v1095 = vmul.f32 %v1092, 1.442695
    %v1096 = vpow.pop %v1095
    %v1097 = vadd.f32 %v1094, 1.0
    %v1098 = vadd.f32 %v1096, 1.0
    %v1099 = vrcp.pop %v1097
    %v1100 = vmul.f32 1.0, %v1099
    %v1101 = vrcp.pop %v1098
    %v1102 = vmul.f32 1.0, %v1101
    %v1103 = vtanh.pop %v1090
    %v1104 = vmul.f32 %v1100, %v854
    %1106 = vrot.lane.b32.xlu0 %v1103, 112
    %v1107 = vpop.permute.xlu0 %1106
    %v1109 = vmul.f32 %v1100, %v1107
    %1111 = vrot.lane.b32.xlu0 %v1109, 48
    %v1112 = vpop.permute.xlu0 %1111
    %v1114 = vadd.f32 %v1104, %v1112
    %v1115 = vtanh.pop %v1114
    %1117 = vrot.lane.b32.xlu0 %v1115, 48
    %v1118 = vpop.permute.xlu0 %1117
    %v1120 = vmul.f32 %v1100, %v1118
    %v1121 = vmul.f32 %v1102, %v1118
    %s1122 = smul.u32 5, 2
    %s1123 = smul.addr %s1122, 8
    %s1124 = scalar_lea.vmem [#allocation3], %s1123
    %v1125 = vld [vmem:[%s1124] sm:$0xff]
    %v1126 = vld [vmem:[%s1124 + $0x8] sm:$0xff]
    %1129 = vrot.lane.b32.xlu0 %v978, 32
    %v1130 = vpop.permute.xlu0 %1129
    %1131 = vrot.lane.b32.xlu0 %v979, 32
    %v1132 = vpop.permute.xlu0 %1131
    %v1133 = vsel %vm728, %v1130, %v1132
    %v1134 = vsel %vm503, %v1133, 0
    %1136 = vmatprep.subr.mxu0 %v487
    %1137 = vmatpush1.msra.mxu0 %v486
    %1138 = vmatprep.subr.mxu0 %v489
    %1139 = vmatpush1.msra.mxu0 %v488
    %1140 = vmatprep.subr.mxu0 %v491
    %1141 = vmatpush1.msra.mxu0 %v490
    %1142 = vmatprep.subr.mxu0 %v493
    %1143 = vmatpush1.msra.mxu0 %v492
    %1144 = vmatprep.subr.mxu0 %v495
    %1145 = vmatpush1.msra.mxu0 %v494
    %1146 = vmatprep.subr.mxu0 %v497
    %1147 = vmatpush1.msra.mxu0 %v496
    %1148 = vmatprep.subr.mxu0 0.0
    %1149 = vmatpush1.msra.mxu0 0.0
    %1150 = vmatprep.subr.mxu0 0.0
    %1151 = vmatpush1.msra.mxu0 0.0
    %1152 = vmatprep.subr.mxu0 0.0
    %1153 = vmatpush1.msra.mxu0 0.0
    %1154 = vmatprep.subr.mxu0 0.0
    %1155 = vmatpush1.msra.mxu0 0.0
    %1156 = vmatprep.subr.mxu0 0.0
    %1157 = vmatpush1.msra.mxu0 0.0
    %1158 = vmatprep.subr.mxu0 0.0
    %1159 = vmatpush1.msra.mxu0 0.0
    %1160 = vmatprep.subr.mxu0 0.0
    %1161 = vmatpush1.msra.mxu0 0.0
    %1162 = vmatprep.subr.mxu0 0.0
    %1163 = vmatpush1.msra.mxu0 0.0
    %1164 = vmatprep.subr.mxu0 0.0
    %1165 = vmatpush1.msra.mxu0 0.0
    %1166 = vmatprep.subr.mxu0 0.0
    %1167 = vmatpush1.msra.mxu0 0.0
    %1168 = vmatprep.subr.mxu0 0.0
    %1169 = vmatpush1.msra.mxu0 0.0
    %1170 = vmatprep.subr.mxu0 0.0
    %1171 = vmatpush1.msra.mxu0 0.0
    %1172 = vmatprep.subr.mxu0 0.0
    %1173 = vmatpush1.msra.mxu0 0.0
    %1174 = vmatprep.subr.mxu0 0.0
    %1175 = vmatpush1.msra.mxu0 0.0
    %1176 = vmatprep.subr.mxu0 0.0
    %1177 = vmatpush1.msra.mxu0 0.0
    %1178 = vmatprep.subr.mxu0 0.0
    %1179 = vmatpush1.msra.mxu0 0.0
    %1180 = vmatprep.subr.mxu0 0.0
    %1181 = vmatpush1.msra.mxu0 0.0
    %1182 = vmatprep.subr.mxu0 0.0
    %1183 = vmatpush1.msra.mxu0 0.0
    %1184 = vmatprep.subr.mxu0 0.0
    %1185 = vmatpush1.msra.mxu0 0.0
    %1186 = vmatprep.subr.mxu0 0.0
    %1187 = vmatpush1.msra.mxu0 0.0
    %1188 = vmatprep.subr.mxu0 0.0
    %1189 = vmatpush1.msra.mxu0 0.0
    %1190 = vmatprep.subr.mxu0 0.0
    %1191 = vmatpush1.msra.mxu0 0.0
    %1192 = vmatprep.subr.mxu0 0.0
    %1193 = vmatpush1.msra.mxu0 0.0
    %1194 = vmatprep.subr.mxu0 0.0
    %1195 = vmatpush1.msra.mxu0 0.0
    %1196 = vmatprep.subr.mxu0 0.0
    %1197 = vmatpush1.msra.mxu0 0.0
    %1198 = vmatprep.subr.mxu0 0.0
    %1199 = vmatpush1.msra.mxu0 0.0
    %1200 = vmatprep.mubr.f32.mxu0 0.0
    %1201 = vmatmul.mubr.f32.gmra.mrb[0].mxu0 %v1134
    %v1202 = vpop.f32.mrb[0].mxu0
    %v1203 = vadd.f32 0.0, %v1202
    %v1204 = vpop.f32.mrb[0].mxu0
    %v1205 = vadd.f32 0.0, %v1204
    %1206 = vdwg.mxu0
    %v1207 = vadd.f32 %v1125, %v1203
    %v1208 = vadd.f32 %v1126, %v1205
    %v1209 = vxor.u32 %v1207, 2147483648
    %v1210 = vxor.u32 %v1208, 2147483648
    %v1211 = vmul.f32 %v1209, 1.442695
    %v1212 = vpow.pop %v1211
    %v1213 = vmul.f32 %v1210, 1.442695
    %v1214 = vpow.pop %v1213
    %v1215 = vadd.f32 %v1212, 1.0
    %v1216 = vadd.f32 %v1214, 1.0
    %v1217 = vrcp.pop %v1215
    %v1218 = vmul.f32 1.0, %v1217
    %v1219 = vrcp.pop %v1216
    %v1220 = vmul.f32 1.0, %v1219
    %v1221 = vtanh.pop %v1208
    %v1222 = vmul.f32 %v1218, %v972
    %1224 = vrot.lane.b32.xlu0 %v1221, 112
    %v1225 = vpop.permute.xlu0 %1224
    %v1227 = vmul.f32 %v1218, %v1225
    %1229 = vrot.lane.b32.xlu0 %v1227, 48
    %v1230 = vpop.permute.xlu0 %1229
    %v1232 = vadd.f32 %v1222, %v1230
    %v1233 = vtanh.pop %v1232
    %1235 = vrot.lane.b32.xlu0 %v1233, 48
    %v1236 = vpop.permute.xlu0 %1235
    %v1238 = vmul.f32 %v1218, %v1236
    %v1239 = vmul.f32 %v1220, %v1236
    %v1240 = vmax.f32 %v1120, 0.0
    %v1241 = vmax.f32 %v1121, 0.0
    %1244 = vrot.lane.b32.xlu0 %v1240, 32
    %v1245 = vpop.permute.xlu0 %1244
    %1246 = vrot.lane.b32.xlu0 %v1241, 32
    %v1247 = vpop.permute.xlu0 %1246
    %v1248 = vsel %vm728, %v1245, %v1247
    %s1250 = scalar_lea.vmem [#allocation4], 16
    %1251 = vst.msk [vmem:[%s1250] sm:$0xff] %vm503, %v1248
    %v1252 = vmax.f32 %v1238, 0.0
    %v1253 = vmax.f32 %v1239, 0.0
    %1256 = vrot.lane.b32.xlu0 %v1252, 32
    %v1257 = vpop.permute.xlu0 %1256
    %1258 = vrot.lane.b32.xlu0 %v1253, 32
    %v1259 = vpop.permute.xlu0 %1258
    %v1260 = vsel %vm728, %v1257, %v1259
    %s1262 = scalar_lea.vmem [#allocation5], 40
    %1263 = vst.msk [vmem:[%s1262] sm:$0xff] %vm503, %v1260
    %s1264 = smul.u32 3, 2
    %s1265 = smul.addr %s1264, 8
    %s1266 = scalar_lea.vmem [#allocation2], %s1265
    %v1267 = vld [vmem:[%s1266] sm:$0xff]
    %v1268 = vld [vmem:[%s1266 + $0x8] sm:$0xff]
    %1271 = vrot.lane.b32.xlu0 %v1120, 32
    %v1272 = vpop.permute.xlu0 %1271
    %1273 = vrot.lane.b32.xlu0 %v1121, 32
    %v1274 = vpop.permute.xlu0 %1273
    %v1275 = vsel %vm728, %v1272, %v1274
    %v1276 = vsel %vm503, %v1275, 0
    %1278 = vmatprep.subr.mxu0 %v475
    %1279 = vmatpush1.msra.mxu0 %v474
    %1280 = vmatprep.subr.mxu0 %v477
    %1281 = vmatpush1.msra.mxu0 %v476
    %1282 = vmatprep.subr.mxu0 %v479
    %1283 = vmatpush1.msra.mxu0 %v478
    %1284 = vmatprep.subr.mxu0 %v481
    %1285 = vmatpush1.msra.mxu0 %v480
    %1286 = vmatprep.subr.mxu0 %v483
    %1287 = vmatpush1.msra.mxu0 %v482
    %1288 = vmatprep.subr.mxu0 %v485
    %1289 = vmatpush1.msra.mxu0 %v484
    %1290 = vmatprep.subr.mxu0 0.0
    %1291 = vmatpush1.msra.mxu0 0.0
    %1292 = vmatprep.subr.mxu0 0.0
    %1293 = vmatpush1.msra.mxu0 0.0
    %1294 = vmatprep.subr.mxu0 0.0
    %1295 = vmatpush1.msra.mxu0 0.0
    %1296 = vmatprep.subr.mxu0 0.0
    %1297 = vmatpush1.msra.mxu0 0.0
    %1298 = vmatprep.subr.mxu0 0.0
    %1299 = vmatpush1.msra.mxu0 0.0
    %1300 = vmatprep.subr.mxu0 0.0
    %1301 = vmatpush1.msra.mxu0 0.0
    %1302 = vmatprep.subr.mxu0 0.0
    %1303 = vmatpush1.msra.mxu0 0.0
    %1304 = vmatprep.subr.mxu0 0.0
    %1305 = vmatpush1.msra.mxu0 0.0
    %1306 = vmatprep.subr.mxu0 0.0
    %1307 = vmatpush1.msra.mxu0 0.0
    %1308 = vmatprep.subr.mxu0 0.0
    %1309 = vmatpush1.msra.mxu0 0.0
    %1310 = vmatprep.subr.mxu0 0.0
    %1311 = vmatpush1.msra.mxu0 0.0
    %1312 = vmatprep.subr.mxu0 0.0
    %1313 = vmatpush1.msra.mxu0 0.0
    %1314 = vmatprep.subr.mxu0 0.0
    %1315 = vmatpush1.msra.mxu0 0.0
    %1316 = vmatprep.subr.mxu0 0.0
    %1317 = vmatpush1.msra.mxu0 0.0
    %1318 = vmatprep.subr.mxu0 0.0
    %1319 = vmatpush1.msra.mxu0 0.0
    %1320 = vmatprep.subr.mxu0 0.0
    %1321 = vmatpush1.msra.mxu0 0.0
    %1322 = vmatprep.subr.mxu0 0.0
    %1323 = vmatpush1.msra.mxu0 0.0
    %1324 = vmatprep.subr.mxu0 0.0
    %1325 = vmatpush1.msra.mxu0 0.0
    %1326 = vmatprep.subr.mxu0 0.0
    %1327 = vmatpush1.msra.mxu0 0.0
    %1328 = vmatprep.subr.mxu0 0.0
    %1329 = vmatpush1.msra.mxu0 0.0
    %1330 = vmatprep.subr.mxu0 0.0
    %1331 = vmatpush1.msra.mxu0 0.0
    %1332 = vmatprep.subr.mxu0 0.0
    %1333 = vmatpush1.msra.mxu0 0.0
    %1334 = vmatprep.subr.mxu0 0.0
    %1335 = vmatpush1.msra.mxu0 0.0
    %1336 = vmatprep.subr.mxu0 0.0
    %1337 = vmatpush1.msra.mxu0 0.0
    %1338 = vmatprep.subr.mxu0 0.0
    %1339 = vmatpush1.msra.mxu0 0.0
    %1340 = vmatprep.subr.mxu0 0.0
    %1341 = vmatpush1.msra.mxu0 0.0
    %1342 = vmatprep.mubr.f32.mxu0 0.0
    %1343 = vmatmul.mubr.f32.gmra.mrb[0].mxu0 %v1276
    %v1344 = vpop.f32.mrb[0].mxu0
    %v1345 = vadd.f32 0.0, %v1344
    %v1346 = vpop.f32.mrb[0].mxu0
    %v1347 = vadd.f32 0.0, %v1346
    %1348 = vdwg.mxu0
    %v1349 = vadd.f32 %v1267, %v1345
    %v1350 = vadd.f32 %v1268, %v1347
    %v1351 = vxor.u32 %v1349, 2147483648
    %v1352 = vxor.u32 %v1350, 2147483648
    %v1353 = vmul.f32 %v1351, 1.442695
    %v1354 = vpow.pop %v1353
    %v1355 = vmul.f32 %v1352, 1.442695
    %v1356 = vpow.pop %v1355
    %v1357 = vadd.f32 %v1354, 1.0
    %v1358 = vadd.f32 %v1356, 1.0
    %v1359 = vrcp.pop %v1357
    %v1360 = vmul.f32 1.0, %v1359
    %v1361 = vrcp.pop %v1358
    %v1362 = vmul.f32 1.0, %v1361
    %v1363 = vtanh.pop %v1350
    %v1364 = vmul.f32 %v1360, %v1114
    %1366 = vrot.lane.b32.xlu0 %v1363, 112
    %v1367 = vpop.permute.xlu0 %1366
    %v1369 = vmul.f32 %v1360, %v1367
    %1371 = vrot.lane.b32.xlu0 %v1369, 48
    %v1372 = vpop.permute.xlu0 %1371
    %v1374 = vadd.f32 %v1364, %v1372
    %v1375 = vtanh.pop %v1374
    %1377 = vrot.lane.b32.xlu0 %v1375, 48
    %v1378 = vpop.permute.xlu0 %1377
    %v1380 = vmul.f32 %v1360, %v1378
    %v1381 = vmul.f32 %v1362, %v1378
    %s1382 = smul.u32 4, 2
    %s1383 = smul.addr %s1382, 8
    %s1384 = scalar_lea.vmem [#allocation3], %s1383
    %v1385 = vld [vmem:[%s1384] sm:$0xff]
    %v1386 = vld [vmem:[%s1384 + $0x8] sm:$0xff]
    %1389 = vrot.lane.b32.xlu0 %v1238, 32
    %v1390 = vpop.permute.xlu0 %1389
    %1391 = vrot.lane.b32.xlu0 %v1239, 32
    %v1392 = vpop.permute.xlu0 %1391
    %v1393 = vsel %vm728, %v1390, %v1392
    %v1394 = vsel %vm503, %v1393, 0
    %1396 = vmatprep.subr.mxu0 %v487
    %1397 = vmatpush1.msra.mxu0 %v486
    %1398 = vmatprep.subr.mxu0 %v489
    %1399 = vmatpush1.msra.mxu0 %v488
    %1400 = vmatprep.subr.mxu0 %v491
    %1401 = vmatpush1.msra.mxu0 %v490
    %1402 = vmatprep.subr.mxu0 %v493
    %1403 = vmatpush1.msra.mxu0 %v492
    %1404 = vmatprep.subr.mxu0 %v495
    %1405 = vmatpush1.msra.mxu0 %v494
    %1406 = vmatprep.subr.mxu0 %v497
    %1407 = vmatpush1.msra.mxu0 %v496
    %1408 = vmatprep.subr.mxu0 0.0
    %1409 = vmatpush1.msra.mxu0 0.0
    %1410 = vmatprep.subr.mxu0 0.0
    %1411 = vmatpush1.msra.mxu0 0.0
    %1412 = vmatprep.subr.mxu0 0.0
    %1413 = vmatpush1.msra.mxu0 0.0
    %1414 = vmatprep.subr.mxu0 0.0
    %1415 = vmatpush1.msra.mxu0 0.0
    %1416 = vmatprep.subr.mxu0 0.0
    %1417 = vmatpush1.msra.mxu0 0.0
    %1418 = vmatprep.subr.mxu0 0.0
    %1419 = vmatpush1.msra.mxu0 0.0
    %1420 = vmatprep.subr.mxu0 0.0
    %1421 = vmatpush1.msra.mxu0 0.0
    %1422 = vmatprep.subr.mxu0 0.0
    %1423 = vmatpush1.msra.mxu0 0.0
    %1424 = vmatprep.subr.mxu0 0.0
    %1425 = vmatpush1.msra.mxu0 0.0
    %1426 = vmatprep.subr.mxu0 0.0
    %1427 = vmatpush1.msra.mxu0 0.0
    %1428 = vmatprep.subr.mxu0 0.0
    %1429 = vmatpush1.msra.mxu0 0.0
    %1430 = vmatprep.subr.mxu0 0.0
    %1431 = vmatpush1.msra.mxu0 0.0
    %1432 = vmatprep.subr.mxu0 0.0
    %1433 = vmatpush1.msra.mxu0 0.0
    %1434 = vmatprep.subr.mxu0 0.0
    %1435 = vmatpush1.msra.mxu0 0.0
    %1436 = vmatprep.subr.mxu0 0.0
    %1437 = vmatpush1.msra.mxu0 0.0
    %1438 = vmatprep.subr.mxu0 0.0
    %1439 = vmatpush1.msra.mxu0 0.0
    %1440 = vmatprep.subr.mxu0 0.0
    %1441 = vmatpush1.msra.mxu0 0.0
    %1442 = vmatprep.subr.mxu0 0.0
    %1443 = vmatpush1.msra.mxu0 0.0
    %1444 = vmatprep.subr.mxu0 0.0
    %1445 = vmatpush1.msra.mxu0 0.0
    %1446 = vmatprep.subr.mxu0 0.0
    %1447 = vmatpush1.msra.mxu0 0.0
    %1448 = vmatprep.subr.mxu0 0.0
    %1449 = vmatpush1.msra.mxu0 0.0
    %1450 = vmatprep.subr.mxu0 0.0
    %1451 = vmatpush1.msra.mxu0 0.0
    %1452 = vmatprep.subr.mxu0 0.0
    %1453 = vmatpush1.msra.mxu0 0.0
    %1454 = vmatprep.subr.mxu0 0.0
    %1455 = vmatpush1.msra.mxu0 0.0
    %1456 = vmatprep.subr.mxu0 0.0
    %1457 = vmatpush1.msra.mxu0 0.0
    %1458 = vmatprep.subr.mxu0 0.0
    %1459 = vmatpush1.msra.mxu0 0.0
    %1460 = vmatprep.mubr.f32.mxu0 0.0
    %1461 = vmatmul.mubr.f32.gmra.mrb[0].mxu0 %v1394
    %v1462 = vpop.f32.mrb[0].mxu0
    %v1463 = vadd.f32 0.0, %v1462
    %v1464 = vpop.f32.mrb[0].mxu0
    %v1465 = vadd.f32 0.0, %v1464
    %1466 = vdwg.mxu0
    %v1467 = vadd.f32 %v1385, %v1463
    %v1468 = vadd.f32 %v1386, %v1465
    %v1469 = vxor.u32 %v1467, 2147483648
    %v1470 = vxor.u32 %v1468, 2147483648
    %v1471 = vmul.f32 %v1469, 1.442695
    %v1472 = vpow.pop %v1471
    %v1473 = vmul.f32 %v1470, 1.442695
    %v1474 = vpow.pop %v1473
    %v1475 = vadd.f32 %v1472, 1.0
    %v1476 = vadd.f32 %v1474, 1.0
    %v1477 = vrcp.pop %v1475
    %v1478 = vmul.f32 1.0, %v1477
    %v1479 = vrcp.pop %v1476
    %v1480 = vmul.f32 1.0, %v1479
    %v1481 = vtanh.pop %v1468
    %v1482 = vmul.f32 %v1478, %v1232
    %1484 = vrot.lane.b32.xlu0 %v1481, 112
    %v1485 = vpop.permute.xlu0 %1484
    %v1487 = vmul.f32 %v1478, %v1485
    %1489 = vrot.lane.b32.xlu0 %v1487, 48
    %v1490 = vpop.permute.xlu0 %1489
    %v1492 = vadd.f32 %v1482, %v1490
    %v1493 = vtanh.pop %v1492
    %1495 = vrot.lane.b32.xlu0 %v1493, 48
    %v1496 = vpop.permute.xlu0 %1495
    %v1498 = vmul.f32 %v1478, %v1496
    %v1499 = vmul.f32 %v1480, %v1496
    %v1500 = vmax.f32 %v1380, 0.0
    %v1501 = vmax.f32 %v1381, 0.0
    %1504 = vrot.lane.b32.xlu0 %v1500, 32
    %v1505 = vpop.permute.xlu0 %1504
    %1506 = vrot.lane.b32.xlu0 %v1501, 32
    %v1507 = vpop.permute.xlu0 %1506
    %v1508 = vsel %vm728, %v1505, %v1507
    %s1510 = scalar_lea.vmem [#allocation4], 24
    %1511 = vst.msk [vmem:[%s1510] sm:$0xff] %vm503, %v1508
    %v1512 = vmax.f32 %v1498, 0.0
    %v1513 = vmax.f32 %v1499, 0.0
    %1516 = vrot.lane.b32.xlu0 %v1512, 32
    %v1517 = vpop.permute.xlu0 %1516
    %1518 = vrot.lane.b32.xlu0 %v1513, 32
    %v1519 = vpop.permute.xlu0 %1518
    %v1520 = vsel %vm728, %v1517, %v1519
    %s1522 = scalar_lea.vmem [#allocation5], 32
    %1523 = vst.msk [vmem:[%s1522] sm:$0xff] %vm503, %v1520
    %s1524 = smul.addr %s1382, 8
    %s1525 = scalar_lea.vmem [#allocation2], %s1524
    %v1526 = vld [vmem:[%s1525] sm:$0xff]
    %v1527 = vld [vmem:[%s1525 + $0x8] sm:$0xff]
    %1530 = vrot.lane.b32.xlu0 %v1380, 32
    %v1531 = vpop.permute.xlu0 %1530
    %1532 = vrot.lane.b32.xlu0 %v1381, 32
    %v1533 = vpop.permute.xlu0 %1532
    %v1534 = vsel %vm728, %v1531, %v1533
    %v1535 = vsel %vm503, %v1534, 0
    %1537 = vmatprep.subr.mxu0 %v475
    %1538 = vmatpush1.msra.mxu0 %v474
    %1539 = vmatprep.subr.mxu0 %v477
    %1540 = vmatpush1.msra.mxu0 %v476
    %1541 = vmatprep.subr.mxu0 %v479
    %1542 = vmatpush1.msra.mxu0 %v478
    %1543 = vmatprep.subr.mxu0 %v481
    %1544 = vmatpush1.msra.mxu0 %v480
    %1545 = vmatprep.subr.mxu0 %v483
    %1546 = vmatpush1.msra.mxu0 %v482
    %1547 = vmatprep.subr.mxu0 %v485
    %1548 = vmatpush1.msra.mxu0 %v484
    %1549 = vmatprep.subr.mxu0 0.0
    %1550 = vmatpush1.msra.mxu0 0.0
    %1551 = vmatprep.subr.mxu0 0.0
    %1552 = vmatpush1.msra.mxu0 0.0
    %1553 = vmatprep.subr.mxu0 0.0
    %1554 = vmatpush1.msra.mxu0 0.0
    %1555 = vmatprep.subr.mxu0 0.0
    %1556 = vmatpush1.msra.mxu0 0.0
    %1557 = vmatprep.subr.mxu0 0.0
    %1558 = vmatpush1.msra.mxu0 0.0
    %1559 = vmatprep.subr.mxu0 0.0
    %1560 = vmatpush1.msra.mxu0 0.0
    %1561 = vmatprep.subr.mxu0 0.0
    %1562 = vmatpush1.msra.mxu0 0.0
    %1563 = vmatprep.subr.mxu0 0.0
    %1564 = vmatpush1.msra.mxu0 0.0
    %1565 = vmatprep.subr.mxu0 0.0
    %1566 = vmatpush1.msra.mxu0 0.0
    %1567 = vmatprep.subr.mxu0 0.0
    %1568 = vmatpush1.msra.mxu0 0.0
    %1569 = vmatprep.subr.mxu0 0.0
    %1570 = vmatpush1.msra.mxu0 0.0
    %1571 = vmatprep.subr.mxu0 0.0
    %1572 = vmatpush1.msra.mxu0 0.0
    %1573 = vmatprep.subr.mxu0 0.0
    %1574 = vmatpush1.msra.mxu0 0.0
    %1575 = vmatprep.subr.mxu0 0.0
    %1576 = vmatpush1.msra.mxu0 0.0
    %1577 = vmatprep.subr.mxu0 0.0
    %1578 = vmatpush1.msra.mxu0 0.0
    %1579 = vmatprep.subr.mxu0 0.0
    %1580 = vmatpush1.msra.mxu0 0.0
    %1581 = vmatprep.subr.mxu0 0.0
    %1582 = vmatpush1.msra.mxu0 0.0
    %1583 = vmatprep.subr.mxu0 0.0
    %1584 = vmatpush1.msra.mxu0 0.0
    %1585 = vmatprep.subr.mxu0 0.0
    %1586 = vmatpush1.msra.mxu0 0.0
    %1587 = vmatprep.subr.mxu0 0.0
    %1588 = vmatpush1.msra.mxu0 0.0
    %1589 = vmatprep.subr.mxu0 0.0
    %1590 = vmatpush1.msra.mxu0 0.0
    %1591 = vmatprep.subr.mxu0 0.0
    %1592 = vmatpush1.msra.mxu0 0.0
    %1593 = vmatprep.subr.mxu0 0.0
    %1594 = vmatpush1.msra.mxu0 0.0
    %1595 = vmatprep.subr.mxu0 0.0
    %1596 = vmatpush1.msra.mxu0 0.0
    %1597 = vmatprep.subr.mxu0 0.0
    %1598 = vmatpush1.msra.mxu0 0.0
    %1599 = vmatprep.subr.mxu0 0.0
    %1600 = vmatpush1.msra.mxu0 0.0
    %1601 = vmatprep.mubr.f32.mxu0 0.0
    %1602 = vmatmul.mubr.f32.gmra.mrb[0].mxu0 %v1535
    %v1603 = vpop.f32.mrb[0].mxu0
    %v1604 = vadd.f32 0.0, %v1603
    %v1605 = vpop.f32.mrb[0].mxu0
    %v1606 = vadd.f32 0.0, %v1605
    %1607 = vdwg.mxu0
    %v1608 = vadd.f32 %v1526, %v1604
    %v1609 = vadd.f32 %v1527, %v1606
    %v1610 = vxor.u32 %v1608, 2147483648
    %v1611 = vxor.u32 %v1609, 2147483648
    %v1612 = vmul.f32 %v1610, 1.442695
    %v1613 = vpow.pop %v1612
    %v1614 = vmul.f32 %v1611, 1.442695
    %v1615 = vpow.pop %v1614
    %v1616 = vadd.f32 %v1613, 1.0
    %v1617 = vadd.f32 %v1615, 1.0
    %v1618 = vrcp.pop %v1616
    %v1619 = vmul.f32 1.0, %v1618
    %v1620 = vrcp.pop %v1617
    %v1621 = vmul.f32 1.0, %v1620
    %v1622 = vtanh.pop %v1609
    %v1623 = vmul.f32 %v1619, %v1374
    %1625 = vrot.lane.b32.xlu0 %v1622, 112
    %v1626 = vpop.permute.xlu0 %1625
    %v1628 = vmul.f32 %v1619, %v1626
    %1630 = vrot.lane.b32.xlu0 %v1628, 48
    %v1631 = vpop.permute.xlu0 %1630
    %v1633 = vadd.f32 %v1623, %v1631
    %v1634 = vtanh.pop %v1633
    %1636 = vrot.lane.b32.xlu0 %v1634, 48
    %v1637 = vpop.permute.xlu0 %1636
    %v1639 = vmul.f32 %v1619, %v1637
    %v1640 = vmul.f32 %v1621, %v1637
    %s1641 = smul.addr %s1264, 8
    %s1642 = scalar_lea.vmem [#allocation3], %s1641
    %v1643 = vld [vmem:[%s1642] sm:$0xff]
    %v1644 = vld [vmem:[%s1642 + $0x8] sm:$0xff]
    %1647 = vrot.lane.b32.xlu0 %v1498, 32
    %v1648 = vpop.permute.xlu0 %1647
    %1649 = vrot.lane.b32.xlu0 %v1499, 32
    %v1650 = vpop.permute.xlu0 %1649
    %v1651 = vsel %vm728, %v1648, %v1650
    %v1652 = vsel %vm503, %v1651, 0
    %1654 = vmatprep.subr.mxu0 %v487
    %1655 = vmatpush1.msra.mxu0 %v486
    %1656 = vmatprep.subr.mxu0 %v489
    %1657 = vmatpush1.msra.mxu0 %v488
    %1658 = vmatprep.subr.mxu0 %v491
    %1659 = vmatpush1.msra.mxu0 %v490
    %1660 = vmatprep.subr.mxu0 %v493
    %1661 = vmatpush1.msra.mxu0 %v492
    %1662 = vmatprep.subr.mxu0 %v495
    %1663 = vmatpush1.msra.mxu0 %v494
    %1664 = vmatprep.subr.mxu0 %v497
    %1665 = vmatpush1.msra.mxu0 %v496
    %1666 = vmatprep.subr.mxu0 0.0
    %1667 = vmatpush1.msra.mxu0 0.0
    %1668 = vmatprep.subr.mxu0 0.0
    %1669 = vmatpush1.msra.mxu0 0.0
    %1670 = vmatprep.subr.mxu0 0.0
    %1671 = vmatpush1.msra.mxu0 0.0
    %1672 = vmatprep.subr.mxu0 0.0
    %1673 = vmatpush1.msra.mxu0 0.0
    %1674 = vmatprep.subr.mxu0 0.0
    %1675 = vmatpush1.msra.mxu0 0.0
    %1676 = vmatprep.subr.mxu0 0.0
    %1677 = vmatpush1.msra.mxu0 0.0
    %1678 = vmatprep.subr.mxu0 0.0
    %1679 = vmatpush1.msra.mxu0 0.0
    %1680 = vmatprep.subr.mxu0 0.0
    %1681 = vmatpush1.msra.mxu0 0.0
    %1682 = vmatprep.subr.mxu0 0.0
    %1683 = vmatpush1.msra.mxu0 0.0
    %1684 = vmatprep.subr.mxu0 0.0
    %1685 = vmatpush1.msra.mxu0 0.0
    %1686 = vmatprep.subr.mxu0 0.0
    %1687 = vmatpush1.msra.mxu0 0.0
    %1688 = vmatprep.subr.mxu0 0.0
    %1689 = vmatpush1.msra.mxu0 0.0
    %1690 = vmatprep.subr.mxu0 0.0
    %1691 = vmatpush1.msra.mxu0 0.0
    %1692 = vmatprep.subr.mxu0 0.0
    %1693 = vmatpush1.msra.mxu0 0.0
    %1694 = vmatprep.subr.mxu0 0.0
    %1695 = vmatpush1.msra.mxu0 0.0
    %1696 = vmatprep.subr.mxu0 0.0
    %1697 = vmatpush1.msra.mxu0 0.0
    %1698 = vmatprep.subr.mxu0 0.0
    %1699 = vmatpush1.msra.mxu0 0.0
    %1700 = vmatprep.subr.mxu0 0.0
    %1701 = vmatpush1.msra.mxu0 0.0
    %1702 = vmatprep.subr.mxu0 0.0
    %1703 = vmatpush1.msra.mxu0 0.0
    %1704 = vmatprep.subr.mxu0 0.0
    %1705 = vmatpush1.msra.mxu0 0.0
    %1706 = vmatprep.subr.mxu0 0.0
    %1707 = vmatpush1.msra.mxu0 0.0
    %1708 = vmatprep.subr.mxu0 0.0
    %1709 = vmatpush1.msra.mxu0 0.0
    %1710 = vmatprep.subr.mxu0 0.0
    %1711 = vmatpush1.msra.mxu0 0.0
    %1712 = vmatprep.subr.mxu0 0.0
    %1713 = vmatpush1.msra.mxu0 0.0
    %1714 = vmatprep.subr.mxu0 0.0
    %1715 = vmatpush1.msra.mxu0 0.0
    %1716 = vmatprep.subr.mxu0 0.0
    %1717 = vmatpush1.msra.mxu0 0.0
    %1718 = vmatprep.mubr.f32.mxu0 0.0
    %1719 = vmatmul.mubr.f32.gmra.mrb[0].mxu0 %v1652
    %v1720 = vpop.f32.mrb[0].mxu0
    %v1721 = vadd.f32 0.0, %v1720
    %v1722 = vpop.f32.mrb[0].mxu0
    %v1723 = vadd.f32 0.0, %v1722
    %1724 = vdwg.mxu0
    %v1725 = vadd.f32 %v1643, %v1721
    %v1726 = vadd.f32 %v1644, %v1723
    %v1727 = vxor.u32 %v1725, 2147483648
    %v1728 = vxor.u32 %v1726, 2147483648
    %v1729 = vmul.f32 %v1727, 1.442695
    %v1730 = vpow.pop %v1729
    %v1731 = vmul.f32 %v1728, 1.442695
    %v1732 = vpow.pop %v1731
    %v1733 = vadd.f32 %v1730, 1.0
    %v1734 = vadd.f32 %v1732, 1.0
    %v1735 = vrcp.pop %v1733
    %v1736 = vmul.f32 1.0, %v1735
    %v1737 = vrcp.pop %v1734
    %v1738 = vmul.f32 1.0, %v1737
    %v1739 = vtanh.pop %v1726
    %v1740 = vmul.f32 %v1736, %v1492
    %1742 = vrot.lane.b32.xlu0 %v1739, 112
    %v1743 = vpop.permute.xlu0 %1742
    %v1745 = vmul.f32 %v1736, %v1743
    %1747 = vrot.lane.b32.xlu0 %v1745, 48
    %v1748 = vpop.permute.xlu0 %1747
    %v1750 = vadd.f32 %v1740, %v1748
    %v1751 = vtanh.pop %v1750
    %1753 = vrot.lane.b32.xlu0 %v1751, 48
    %v1754 = vpop.permute.xlu0 %1753
    %v1756 = vmul.f32 %v1736, %v1754
    %v1757 = vmul.f32 %v1738, %v1754
    %v1758 = vmax.f32 %v1639, 0.0
    %v1759 = vmax.f32 %v1640, 0.0
    %1762 = vrot.lane.b32.xlu0 %v1758, 32
    %v1763 = vpop.permute.xlu0 %1762
    %1764 = vrot.lane.b32.xlu0 %v1759, 32
    %v1765 = vpop.permute.xlu0 %1764
    %v1766 = vsel %vm728, %v1763, %v1765
    %s1768 = scalar_lea.vmem [#allocation4], 32
    %1769 = vst.msk [vmem:[%s1768] sm:$0xff] %vm503, %v1766
    %v1770 = vmax.f32 %v1756, 0.0
    %v1771 = vmax.f32 %v1757, 0.0
    %1774 = vrot.lane.b32.xlu0 %v1770, 32
    %v1775 = vpop.permute.xlu0 %1774
    %1776 = vrot.lane.b32.xlu0 %v1771, 32
    %v1777 = vpop.permute.xlu0 %1776
    %v1778 = vsel %vm728, %v1775, %v1777
    %s1780 = scalar_lea.vmem [#allocation5], 24
    %1781 = vst.msk [vmem:[%s1780] sm:$0xff] %vm503, %v1778
    %s1782 = smul.addr %s1122, 8
    %s1783 = scalar_lea.vmem [#allocation2], %s1782
    %v1784 = vld [vmem:[%s1783] sm:$0xff]
    %v1785 = vld [vmem:[%s1783 + $0x8] sm:$0xff]
    %1788 = vrot.lane.b32.xlu0 %v1639, 32
    %v1789 = vpop.permute.xlu0 %1788
    %1790 = vrot.lane.b32.xlu0 %v1640, 32
    %v1791 = vpop.permute.xlu0 %1790
    %v1792 = vsel %vm728, %v1789, %v1791
    %v1793 = vsel %vm503, %v1792, 0
    %1795 = vmatprep.subr.mxu0 %v475
    %1796 = vmatpush1.msra.mxu0 %v474
    %1797 = vmatprep.subr.mxu0 %v477
    %1798 = vmatpush1.msra.mxu0 %v476
    %1799 = vmatprep.subr.mxu0 %v479
    %1800 = vmatpush1.msra.mxu0 %v478
    %1801 = vmatprep.subr.mxu0 %v481
    %1802 = vmatpush1.msra.mxu0 %v480
    %1803 = vmatprep.subr.mxu0 %v483
    %1804 = vmatpush1.msra.mxu0 %v482
    %1805 = vmatprep.subr.mxu0 %v485
    %1806 = vmatpush1.msra.mxu0 %v484
    %1807 = vmatprep.subr.mxu0 0.0
    %1808 = vmatpush1.msra.mxu0 0.0
    %1809 = vmatprep.subr.mxu0 0.0
    %1810 = vmatpush1.msra.mxu0 0.0
    %1811 = vmatprep.subr.mxu0 0.0
    %1812 = vmatpush1.msra.mxu0 0.0
    %1813 = vmatprep.subr.mxu0 0.0
    %1814 = vmatpush1.msra.mxu0 0.0
    %1815 = vmatprep.subr.mxu0 0.0
    %1816 = vmatpush1.msra.mxu0 0.0
    %1817 = vmatprep.subr.mxu0 0.0
    %1818 = vmatpush1.msra.mxu0 0.0
    %1819 = vmatprep.subr.mxu0 0.0
    %1820 = vmatpush1.msra.mxu0 0.0
    %1821 = vmatprep.subr.mxu0 0.0
    %1822 = vmatpush1.msra.mxu0 0.0
    %1823 = vmatprep.subr.mxu0 0.0
    %1824 = vmatpush1.msra.mxu0 0.0
    %1825 = vmatprep.subr.mxu0 0.0
    %1826 = vmatpush1.msra.mxu0 0.0
    %1827 = vmatprep.subr.mxu0 0.0
    %1828 = vmatpush1.msra.mxu0 0.0
    %1829 = vmatprep.subr.mxu0 0.0
    %1830 = vmatpush1.msra.mxu0 0.0
    %1831 = vmatprep.subr.mxu0 0.0
    %1832 = vmatpush1.msra.mxu0 0.0
    %1833 = vmatprep.subr.mxu0 0.0
    %1834 = vmatpush1.msra.mxu0 0.0
    %1835 = vmatprep.subr.mxu0 0.0
    %1836 = vmatpush1.msra.mxu0 0.0
    %1837 = vmatprep.subr.mxu0 0.0
    %1838 = vmatpush1.msra.mxu0 0.0
    %1839 = vmatprep.subr.mxu0 0.0
    %1840 = vmatpush1.msra.mxu0 0.0
    %1841 = vmatprep.subr.mxu0 0.0
    %1842 = vmatpush1.msra.mxu0 0.0
    %1843 = vmatprep.subr.mxu0 0.0
    %1844 = vmatpush1.msra.mxu0 0.0
    %1845 = vmatprep.subr.mxu0 0.0
    %1846 = vmatpush1.msra.mxu0 0.0
    %1847 = vmatprep.subr.mxu0 0.0
    %1848 = vmatpush1.msra.mxu0 0.0
    %1849 = vmatprep.subr.mxu0 0.0
    %1850 = vmatpush1.msra.mxu0 0.0
    %1851 = vmatprep.subr.mxu0 0.0
    %1852 = vmatpush1.msra.mxu0 0.0
    %1853 = vmatprep.subr.mxu0 0.0
    %1854 = vmatpush1.msra.mxu0 0.0
    %1855 = vmatprep.subr.mxu0 0.0
    %1856 = vmatpush1.msra.mxu0 0.0
    %1857 = vmatprep.subr.mxu0 0.0
    %1858 = vmatpush1.msra.mxu0 0.0
    %1859 = vmatprep.mubr.f32.mxu0 0.0
    %1860 = vmatmul.mubr.f32.gmra.mrb[0].mxu0 %v1793
    %v1861 = vpop.f32.mrb[0].mxu0
    %v1862 = vadd.f32 0.0, %v1861
    %v1863 = vpop.f32.mrb[0].mxu0
    %v1864 = vadd.f32 0.0, %v1863
    %1865 = vdwg.mxu0
    %v1866 = vadd.f32 %v1784, %v1862
    %v1867 = vadd.f32 %v1785, %v1864
    %v1868 = vxor.u32 %v1866, 2147483648
    %v1869 = vxor.u32 %v1867, 2147483648
    %v1870 = vmul.f32 %v1868, 1.442695
    %v1871 = vpow.pop %v1870
    %v1872 = vmul.f32 %v1869, 1.442695
    %v1873 = vpow.pop %v1872
    %v1874 = vadd.f32 %v1871, 1.0
    %v1875 = vadd.f32 %v1873, 1.0
    %v1876 = vrcp.pop %v1874
    %v1877 = vmul.f32 1.0, %v1876
    %v1878 = vrcp.pop %v1875
    %v1879 = vmul.f32 1.0, %v1878
    %v1880 = vtanh.pop %v1867
    %v1881 = vmul.f32 %v1877, %v1633
    %1883 = vrot.lane.b32.xlu0 %v1880, 112
    %v1884 = vpop.permute.xlu0 %1883
    %v1886 = vmul.f32 %v1877, %v1884
    %1888 = vrot.lane.b32.xlu0 %v1886, 48
    %v1889 = vpop.permute.xlu0 %1888
    %v1891 = vadd.f32 %v1881, %v1889
    %v1892 = vtanh.pop %v1891
    %1894 = vrot.lane.b32.xlu0 %v1892, 48
    %v1895 = vpop.permute.xlu0 %1894
    %v1897 = vmul.f32 %v1877, %v1895
    %v1898 = vmul.f32 %v1879, %v1895
    %s1899 = smul.addr %s1004, 8
    %s1900 = scalar_lea.vmem [#allocation3], %s1899
    %v1901 = vld [vmem:[%s1900] sm:$0xff]
    %v1902 = vld [vmem:[%s1900 + $0x8] sm:$0xff]
    %1905 = vrot.lane.b32.xlu0 %v1756, 32
    %v1906 = vpop.permute.xlu0 %1905
    %1907 = vrot.lane.b32.xlu0 %v1757, 32
    %v1908 = vpop.permute.xlu0 %1907
    %v1909 = vsel %vm728, %v1906, %v1908
    %v1910 = vsel %vm503, %v1909, 0
    %1912 = vmatprep.subr.mxu0 %v487
    %1913 = vmatpush1.msra.mxu0 %v486
    %1914 = vmatprep.subr.mxu0 %v489
    %1915 = vmatpush1.msra.mxu0 %v488
    %1916 = vmatprep.subr.mxu0 %v491
    %1917 = vmatpush1.msra.mxu0 %v490
    %1918 = vmatprep.subr.mxu0 %v493
    %1919 = vmatpush1.msra.mxu0 %v492
    %1920 = vmatprep.subr.mxu0 %v495
    %1921 = vmatpush1.msra.mxu0 %v494
    %1922 = vmatprep.subr.mxu0 %v497
    %1923 = vmatpush1.msra.mxu0 %v496
    %1924 = vmatprep.subr.mxu0 0.0
    %1925 = vmatpush1.msra.mxu0 0.0
    %1926 = vmatprep.subr.mxu0 0.0
    %1927 = vmatpush1.msra.mxu0 0.0
    %1928 = vmatprep.subr.mxu0 0.0
    %1929 = vmatpush1.msra.mxu0 0.0
    %1930 = vmatprep.subr.mxu0 0.0
    %1931 = vmatpush1.msra.mxu0 0.0
    %1932 = vmatprep.subr.mxu0 0.0
    %1933 = vmatpush1.msra.mxu0 0.0
    %1934 = vmatprep.subr.mxu0 0.0
    %1935 = vmatpush1.msra.mxu0 0.0
    %1936 = vmatprep.subr.mxu0 0.0
    %1937 = vmatpush1.msra.mxu0 0.0
    %1938 = vmatprep.subr.mxu0 0.0
    %1939 = vmatpush1.msra.mxu0 0.0
    %1940 = vmatprep.subr.mxu0 0.0
    %1941 = vmatpush1.msra.mxu0 0.0
    %1942 = vmatprep.subr.mxu0 0.0
    %1943 = vmatpush1.msra.mxu0 0.0
    %1944 = vmatprep.subr.mxu0 0.0
    %1945 = vmatpush1.msra.mxu0 0.0
    %1946 = vmatprep.subr.mxu0 0.0
    %1947 = vmatpush1.msra.mxu0 0.0
    %1948 = vmatprep.subr.mxu0 0.0
    %1949 = vmatpush1.msra.mxu0 0.0
    %1950 = vmatprep.subr.mxu0 0.0
    %1951 = vmatpush1.msra.mxu0 0.0
    %1952 = vmatprep.subr.mxu0 0.0
    %1953 = vmatpush1.msra.mxu0 0.0
    %1954 = vmatprep.subr.mxu0 0.0
    %1955 = vmatpush1.msra.mxu0 0.0
    %1956 = vmatprep.subr.mxu0 0.0
    %1957 = vmatpush1.msra.mxu0 0.0
    %1958 = vmatprep.subr.mxu0 0.0
    %1959 = vmatpush1.msra.mxu0 0.0
    %1960 = vmatprep.subr.mxu0 0.0
    %1961 = vmatpush1.msra.mxu0 0.0
    %1962 = vmatprep.subr.mxu0 0.0
    %1963 = vmatpush1.msra.mxu0 0.0
    %1964 = vmatprep.subr.mxu0 0.0
    %1965 = vmatpush1.msra.mxu0 0.0
    %1966 = vmatprep.subr.mxu0 0.0
    %1967 = vmatpush1.msra.mxu0 0.0
    %1968 = vmatprep.subr.mxu0 0.0
    %1969 = vmatpush1.msra.mxu0 0.0
    %1970 = vmatprep.subr.mxu0 0.0
    %1971 = vmatpush1.msra.mxu0 0.0
    %1972 = vmatprep.subr.mxu0 0.0
    %1973 = vmatpush1.msra.mxu0 0.0
    %1974 = vmatprep.subr.mxu0 0.0
    %1975 = vmatpush1.msra.mxu0 0.0
    %1976 = vmatprep.mubr.f32.mxu0 0.0
    %1977 = vmatmul.mubr.f32.gmra.mrb[0].mxu0 %v1910
    %v1978 = vpop.f32.mrb[0].mxu0
    %v1979 = vadd.f32 0.0, %v1978
    %v1980 = vpop.f32.mrb[0].mxu0
    %v1981 = vadd.f32 0.0, %v1980
    %1982 = vdwg.mxu0
    %v1983 = vadd.f32 %v1901, %v1979
    %v1984 = vadd.f32 %v1902, %v1981
    %v1985 = vxor.u32 %v1983, 2147483648
    %v1986 = vxor.u32 %v1984, 2147483648
    %v1987 = vmul.f32 %v1985, 1.442695
    %v1988 = vpow.pop %v1987
    %v1989 = vmul.f32 %v1986, 1.442695
    %v1990 = vpow.pop %v1989
    %v1991 = vadd.f32 %v1988, 1.0
    %v1992 = vadd.f32 %v1990, 1.0
    %v1993 = vrcp.pop %v1991
    %v1994 = vmul.f32 1.0, %v1993
    %v1995 = vrcp.pop %v1992
    %v1996 = vmul.f32 1.0, %v1995
    %v1997 = vtanh.pop %v1984
    %v1998 = vmul.f32 %v1994, %v1750
    %2000 = vrot.lane.b32.xlu0 %v1997, 112
    %v2001 = vpop.permute.xlu0 %2000
    %v2003 = vmul.f32 %v1994, %v2001
    %2005 = vrot.lane.b32.xlu0 %v2003, 48
    %v2006 = vpop.permute.xlu0 %2005
    %v2008 = vadd.f32 %v1998, %v2006
    %v2009 = vtanh.pop %v2008
    %2011 = vrot.lane.b32.xlu0 %v2009, 48
    %v2012 = vpop.permute.xlu0 %2011
    %v2014 = vmul.f32 %v1994, %v2012
    %v2015 = vmul.f32 %v1996, %v2012
    %v2016 = vmax.f32 %v1897, 0.0
    %v2017 = vmax.f32 %v1898, 0.0
    %2020 = vrot.lane.b32.xlu0 %v2016, 32
    %v2021 = vpop.permute.xlu0 %2020
    %2022 = vrot.lane.b32.xlu0 %v2017, 32
    %v2023 = vpop.permute.xlu0 %2022
    %v2024 = vsel %vm728, %v2021, %v2023
    %s2026 = scalar_lea.vmem [#allocation4], 40
    %2027 = vst.msk [vmem:[%s2026] sm:$0xff] %vm503, %v2024
    %v2028 = vmax.f32 %v2014, 0.0
    %v2029 = vmax.f32 %v2015, 0.0
    %2032 = vrot.lane.b32.xlu0 %v2028, 32
    %v2033 = vpop.permute.xlu0 %2032
    %2034 = vrot.lane.b32.xlu0 %v2029, 32
    %v2035 = vpop.permute.xlu0 %2034
    %v2036 = vsel %vm728, %v2033, %v2035
    %s2038 = scalar_lea.vmem [#allocation5], 16
    %2039 = vst.msk [vmem:[%s2038] sm:$0xff] %vm503, %v2036
    %s2040 = smul.addr %s862, 8
    %s2041 = scalar_lea.vmem [#allocation2], %s2040
    %v2042 = vld [vmem:[%s2041] sm:$0xff]
    %v2043 = vld [vmem:[%s2041 + $0x8] sm:$0xff]
    %2046 = vrot.lane.b32.xlu0 %v1897, 32
    %v2047 = vpop.permute.xlu0 %2046
    %2048 = vrot.lane.b32.xlu0 %v1898, 32
    %v2049 = vpop.permute.xlu0 %2048
    %v2050 = vsel %vm728, %v2047, %v2049
    %v2051 = vsel %vm503, %v2050, 0
    %2053 = vmatprep.subr.mxu0 %v475
    %2054 = vmatpush1.msra.mxu0 %v474
    %2055 = vmatprep.subr.mxu0 %v477
    %2056 = vmatpush1.msra.mxu0 %v476
    %2057 = vmatprep.subr.mxu0 %v479
    %2058 = vmatpush1.msra.mxu0 %v478
    %2059 = vmatprep.subr.mxu0 %v481
    %2060 = vmatpush1.msra.mxu0 %v480
    %2061 = vmatprep.subr.mxu0 %v483
    %2062 = vmatpush1.msra.mxu0 %v482
    %2063 = vmatprep.subr.mxu0 %v485
    %2064 = vmatpush1.msra.mxu0 %v484
    %2065 = vmatprep.subr.mxu0 0.0
    %2066 = vmatpush1.msra.mxu0 0.0
    %2067 = vmatprep.subr.mxu0 0.0
    %2068 = vmatpush1.msra.mxu0 0.0
    %2069 = vmatprep.subr.mxu0 0.0
    %2070 = vmatpush1.msra.mxu0 0.0
    %2071 = vmatprep.subr.mxu0 0.0
    %2072 = vmatpush1.msra.mxu0 0.0
    %2073 = vmatprep.subr.mxu0 0.0
    %2074 = vmatpush1.msra.mxu0 0.0
    %2075 = vmatprep.subr.mxu0 0.0
    %2076 = vmatpush1.msra.mxu0 0.0
    %2077 = vmatprep.subr.mxu0 0.0
    %2078 = vmatpush1.msra.mxu0 0.0
    %2079 = vmatprep.subr.mxu0 0.0
    %2080 = vmatpush1.msra.mxu0 0.0
    %2081 = vmatprep.subr.mxu0 0.0
    %2082 = vmatpush1.msra.mxu0 0.0
    %2083 = vmatprep.subr.mxu0 0.0
    %2084 = vmatpush1.msra.mxu0 0.0
    %2085 = vmatprep.subr.mxu0 0.0
    %2086 = vmatpush1.msra.mxu0 0.0
    %2087 = vmatprep.subr.mxu0 0.0
    %2088 = vmatpush1.msra.mxu0 0.0
    %2089 = vmatprep.subr.mxu0 0.0
    %2090 = vmatpush1.msra.mxu0 0.0
    %2091 = vmatprep.subr.mxu0 0.0
    %2092 = vmatpush1.msra.mxu0 0.0
    %2093 = vmatprep.subr.mxu0 0.0
    %2094 = vmatpush1.msra.mxu0 0.0
    %2095 = vmatprep.subr.mxu0 0.0
    %2096 = vmatpush1.msra.mxu0 0.0
    %2097 = vmatprep.subr.mxu0 0.0
    %2098 = vmatpush1.msra.mxu0 0.0
    %2099 = vmatprep.subr.mxu0 0.0
    %2100 = vmatpush1.msra.mxu0 0.0
    %2101 = vmatprep.subr.mxu0 0.0
    %2102 = vmatpush1.msra.mxu0 0.0
    %2103 = vmatprep.subr.mxu0 0.0
    %2104 = vmatpush1.msra.mxu0 0.0
    %2105 = vmatprep.subr.mxu0 0.0
    %2106 = vmatpush1.msra.mxu0 0.0
    %2107 = vmatprep.subr.mxu0 0.0
    %2108 = vmatpush1.msra.mxu0 0.0
    %2109 = vmatprep.subr.mxu0 0.0
    %2110 = vmatpush1.msra.mxu0 0.0
    %2111 = vmatprep.subr.mxu0 0.0
    %2112 = vmatpush1.msra.mxu0 0.0
    %2113 = vmatprep.subr.mxu0 0.0
    %2114 = vmatpush1.msra.mxu0 0.0
    %2115 = vmatprep.subr.mxu0 0.0
    %2116 = vmatpush1.msra.mxu0 0.0
    %2117 = vmatprep.mubr.f32.mxu0 0.0
    %2118 = vmatmul.mubr.f32.gmra.mrb[0].mxu0 %v2051
    %v2119 = vpop.f32.mrb[0].mxu0
    %v2120 = vadd.f32 0.0, %v2119
    %v2121 = vpop.f32.mrb[0].mxu0
    %v2122 = vadd.f32 0.0, %v2121
    %2123 = vdwg.mxu0
    %v2124 = vadd.f32 %v2042, %v2120
    %v2125 = vadd.f32 %v2043, %v2122
    %v2126 = vxor.u32 %v2124, 2147483648
    %v2127 = vxor.u32 %v2125, 2147483648
    %v2128 = vmul.f32 %v2126, 1.442695
    %v2129 = vpow.pop %v2128
    %v2130 = vmul.f32 %v2127, 1.442695
    %v2131 = vpow.pop %v2130
    %v2132 = vadd.f32 %v2129, 1.0
    %v2133 = vadd.f32 %v2131, 1.0
    %v2134 = vrcp.pop %v2132
    %v2135 = vmul.f32 1.0, %v2134
    %v2136 = vrcp.pop %v2133
    %v2137 = vmul.f32 1.0, %v2136
    %v2138 = vtanh.pop %v2125
    %v2139 = vmul.f32 %v2135, %v1891
    %2141 = vrot.lane.b32.xlu0 %v2138, 112
    %v2142 = vpop.permute.xlu0 %2141
    %v2144 = vmul.f32 %v2135, %v2142
    %2146 = vrot.lane.b32.xlu0 %v2144, 48
    %v2147 = vpop.permute.xlu0 %2146
    %v2149 = vadd.f32 %v2139, %v2147
    %v2150 = vtanh.pop %v2149
    %2152 = vrot.lane.b32.xlu0 %v2150, 48
    %v2153 = vpop.permute.xlu0 %2152
    %v2155 = vmul.f32 %v2135, %v2153
    %v2156 = vmul.f32 %v2137, %v2153
    %s2157 = smul.addr %s744, 8
    %s2158 = scalar_lea.vmem [#allocation3], %s2157
    %v2159 = vld [vmem:[%s2158] sm:$0xff]
    %v2160 = vld [vmem:[%s2158 + $0x8] sm:$0xff]
    %2163 = vrot.lane.b32.xlu0 %v2014, 32
    %v2164 = vpop.permute.xlu0 %2163
    %2165 = vrot.lane.b32.xlu0 %v2015, 32
    %v2166 = vpop.permute.xlu0 %2165
    %v2167 = vsel %vm728, %v2164, %v2166
    %v2168 = vsel %vm503, %v2167, 0
    %2170 = vmatprep.subr.mxu0 %v487
    %2171 = vmatpush1.msra.mxu0 %v486
    %2172 = vmatprep.subr.mxu0 %v489
    %2173 = vmatpush1.msra.mxu0 %v488
    %2174 = vmatprep.subr.mxu0 %v491
    %2175 = vmatpush1.msra.mxu0 %v490
    %2176 = vmatprep.subr.mxu0 %v493
    %2177 = vmatpush1.msra.mxu0 %v492
    %2178 = vmatprep.subr.mxu0 %v495
    %2179 = vmatpush1.msra.mxu0 %v494
    %2180 = vmatprep.subr.mxu0 %v497
    %2181 = vmatpush1.msra.mxu0 %v496
    %2182 = vmatprep.subr.mxu0 0.0
    %2183 = vmatpush1.msra.mxu0 0.0
    %2184 = vmatprep.subr.mxu0 0.0
    %2185 = vmatpush1.msra.mxu0 0.0
    %2186 = vmatprep.subr.mxu0 0.0
    %2187 = vmatpush1.msra.mxu0 0.0
    %2188 = vmatprep.subr.mxu0 0.0
    %2189 = vmatpush1.msra.mxu0 0.0
    %2190 = vmatprep.subr.mxu0 0.0
    %2191 = vmatpush1.msra.mxu0 0.0
    %2192 = vmatprep.subr.mxu0 0.0
    %2193 = vmatpush1.msra.mxu0 0.0
    %2194 = vmatprep.subr.mxu0 0.0
    %2195 = vmatpush1.msra.mxu0 0.0
    %2196 = vmatprep.subr.mxu0 0.0
    %2197 = vmatpush1.msra.mxu0 0.0
    %2198 = vmatprep.subr.mxu0 0.0
    %2199 = vmatpush1.msra.mxu0 0.0
    %2200 = vmatprep.subr.mxu0 0.0
    %2201 = vmatpush1.msra.mxu0 0.0
    %2202 = vmatprep.subr.mxu0 0.0
    %2203 = vmatpush1.msra.mxu0 0.0
    %2204 = vmatprep.subr.mxu0 0.0
    %2205 = vmatpush1.msra.mxu0 0.0
    %2206 = vmatprep.subr.mxu0 0.0
    %2207 = vmatpush1.msra.mxu0 0.0
    %2208 = vmatprep.subr.mxu0 0.0
    %2209 = vmatpush1.msra.mxu0 0.0
    %2210 = vmatprep.subr.mxu0 0.0
    %2211 = vmatpush1.msra.mxu0 0.0
    %2212 = vmatprep.subr.mxu0 0.0
    %2213 = vmatpush1.msra.mxu0 0.0
    %2214 = vmatprep.subr.mxu0 0.0
    %2215 = vmatpush1.msra.mxu0 0.0
    %2216 = vmatprep.subr.mxu0 0.0
    %2217 = vmatpush1.msra.mxu0 0.0
    %2218 = vmatprep.subr.mxu0 0.0
    %2219 = vmatpush1.msra.mxu0 0.0
    %2220 = vmatprep.subr.mxu0 0.0
    %2221 = vmatpush1.msra.mxu0 0.0
    %2222 = vmatprep.subr.mxu0 0.0
    %2223 = vmatpush1.msra.mxu0 0.0
    %2224 = vmatprep.subr.mxu0 0.0
    %2225 = vmatpush1.msra.mxu0 0.0
    %2226 = vmatprep.subr.mxu0 0.0
    %2227 = vmatpush1.msra.mxu0 0.0
    %2228 = vmatprep.subr.mxu0 0.0
    %2229 = vmatpush1.msra.mxu0 0.0
    %2230 = vmatprep.subr.mxu0 0.0
    %2231 = vmatpush1.msra.mxu0 0.0
    %2232 = vmatprep.subr.mxu0 0.0
    %2233 = vmatpush1.msra.mxu0 0.0
    %2234 = vmatprep.mubr.f32.mxu0 0.0
    %2235 = vmatmul.mubr.f32.gmra.mrb[0].mxu0 %v2168
    %v2236 = vpop.f32.mrb[0].mxu0
    %v2237 = vadd.f32 0.0, %v2236
    %v2238 = vpop.f32.mrb[0].mxu0
    %v2239 = vadd.f32 0.0, %v2238
    %2240 = vdwg.mxu0
    %v2241 = vadd.f32 %v2159, %v2237
    %v2242 = vadd.f32 %v2160, %v2239
    %v2243 = vxor.u32 %v2241, 2147483648
    %v2244 = vxor.u32 %v2242, 2147483648
    %v2245 = vmul.f32 %v2243, 1.442695
    %v2246 = vpow.pop %v2245
    %v2247 = vmul.f32 %v2244, 1.442695
    %v2248 = vpow.pop %v2247
    %v2249 = vadd.f32 %v2246, 1.0
    %v2250 = vadd.f32 %v2248, 1.0
    %v2251 = vrcp.pop %v2249
    %v2252 = vmul.f32 1.0, %v2251
    %v2253 = vrcp.pop %v2250
    %v2254 = vmul.f32 1.0, %v2253
    %v2255 = vtanh.pop %v2242
    %v2256 = vmul.f32 %v2252, %v2008
    %2258 = vrot.lane.b32.xlu0 %v2255, 112
    %v2259 = vpop.permute.xlu0 %2258
    %v2261 = vmul.f32 %v2252, %v2259
    %2263 = vrot.lane.b32.xlu0 %v2261, 48
    %v2264 = vpop.permute.xlu0 %2263
    %v2266 = vadd.f32 %v2256, %v2264
    %v2267 = vtanh.pop %v2266
    %2269 = vrot.lane.b32.xlu0 %v2267, 48
    %v2270 = vpop.permute.xlu0 %2269
    %v2272 = vmul.f32 %v2252, %v2270
    %v2273 = vmul.f32 %v2254, %v2270
    %v2274 = vmax.f32 %v2155, 0.0
    %v2275 = vmax.f32 %v2156, 0.0
    %2278 = vrot.lane.b32.xlu0 %v2274, 32
    %v2279 = vpop.permute.xlu0 %2278
    %2280 = vrot.lane.b32.xlu0 %v2275, 32
    %v2281 = vpop.permute.xlu0 %2280
    %v2282 = vsel %vm728, %v2279, %v2281
    %s2284 = scalar_lea.vmem [#allocation4], 48
    %2285 = vst.msk [vmem:[%s2284] sm:$0xff] %vm503, %v2282
    %v2286 = vmax.f32 %v2272, 0.0
    %v2287 = vmax.f32 %v2273, 0.0
    %2290 = vrot.lane.b32.xlu0 %v2286, 32
    %v2291 = vpop.permute.xlu0 %2290
    %2292 = vrot.lane.b32.xlu0 %v2287, 32
    %v2293 = vpop.permute.xlu0 %2292
    %v2294 = vsel %vm728, %v2291, %v2293
    %s2296 = scalar_lea.vmem [#allocation5], 8
    %2297 = vst.msk [vmem:[%s2296] sm:$0xff] %vm503, %v2294
    %s2298 = smul.addr %s611, 8
    %s2299 = scalar_lea.vmem [#allocation2], %s2298
    %v2300 = vld [vmem:[%s2299] sm:$0xff]
    %v2301 = vld [vmem:[%s2299 + $0x8] sm:$0xff]
    %2304 = vrot.lane.b32.xlu0 %v2155, 32
    %v2305 = vpop.permute.xlu0 %2304
    %2306 = vrot.lane.b32.xlu0 %v2156, 32
    %v2307 = vpop.permute.xlu0 %2306
    %v2308 = vsel %vm728, %v2305, %v2307
    %v2309 = vsel %vm503, %v2308, 0
    %2311 = vmatprep.subr.mxu0 %v475
    %2312 = vmatpush1.msra.mxu0 %v474
    %2313 = vmatprep.subr.mxu0 %v477
    %2314 = vmatpush1.msra.mxu0 %v476
    %2315 = vmatprep.subr.mxu0 %v479
    %2316 = vmatpush1.msra.mxu0 %v478
    %2317 = vmatprep.subr.mxu0 %v481
    %2318 = vmatpush1.msra.mxu0 %v480
    %2319 = vmatprep.subr.mxu0 %v483
    %2320 = vmatpush1.msra.mxu0 %v482
    %2321 = vmatprep.subr.mxu0 %v485
    %2322 = vmatpush1.msra.mxu0 %v484
    %2323 = vmatprep.subr.mxu0 0.0
    %2324 = vmatpush1.msra.mxu0 0.0
    %2325 = vmatprep.subr.mxu0 0.0
    %2326 = vmatpush1.msra.mxu0 0.0
    %2327 = vmatprep.subr.mxu0 0.0
    %2328 = vmatpush1.msra.mxu0 0.0
    %2329 = vmatprep.subr.mxu0 0.0
    %2330 = vmatpush1.msra.mxu0 0.0
    %2331 = vmatprep.subr.mxu0 0.0
    %2332 = vmatpush1.msra.mxu0 0.0
    %2333 = vmatprep.subr.mxu0 0.0
    %2334 = vmatpush1.msra.mxu0 0.0
    %2335 = vmatprep.subr.mxu0 0.0
    %2336 = vmatpush1.msra.mxu0 0.0
    %2337 = vmatprep.subr.mxu0 0.0
    %2338 = vmatpush1.msra.mxu0 0.0
    %2339 = vmatprep.subr.mxu0 0.0
    %2340 = vmatpush1.msra.mxu0 0.0
    %2341 = vmatprep.subr.mxu0 0.0
    %2342 = vmatpush1.msra.mxu0 0.0
    %2343 = vmatprep.subr.mxu0 0.0
    %2344 = vmatpush1.msra.mxu0 0.0
    %2345 = vmatprep.subr.mxu0 0.0
    %2346 = vmatpush1.msra.mxu0 0.0
    %2347 = vmatprep.subr.mxu0 0.0
    %2348 = vmatpush1.msra.mxu0 0.0
    %2349 = vmatprep.subr.mxu0 0.0
    %2350 = vmatpush1.msra.mxu0 0.0
    %2351 = vmatprep.subr.mxu0 0.0
    %2352 = vmatpush1.msra.mxu0 0.0
    %2353 = vmatprep.subr.mxu0 0.0
    %2354 = vmatpush1.msra.mxu0 0.0
    %2355 = vmatprep.subr.mxu0 0.0
    %2356 = vmatpush1.msra.mxu0 0.0
    %2357 = vmatprep.subr.mxu0 0.0
    %2358 = vmatpush1.msra.mxu0 0.0
    %2359 = vmatprep.subr.mxu0 0.0
    %2360 = vmatpush1.msra.mxu0 0.0
    %2361 = vmatprep.subr.mxu0 0.0
    %2362 = vmatpush1.msra.mxu0 0.0
    %2363 = vmatprep.subr.mxu0 0.0
    %2364 = vmatpush1.msra.mxu0 0.0
    %2365 = vmatprep.subr.mxu0 0.0
    %2366 = vmatpush1.msra.mxu0 0.0
    %2367 = vmatprep.subr.mxu0 0.0
    %2368 = vmatpush1.msra.mxu0 0.0
    %2369 = vmatprep.subr.mxu0 0.0
    %2370 = vmatpush1.msra.mxu0 0.0
    %2371 = vmatprep.subr.mxu0 0.0
    %2372 = vmatpush1.msra.mxu0 0.0
    %2373 = vmatprep.subr.mxu0 0.0
    %2374 = vmatpush1.msra.mxu0 0.0
    %2375 = vmatprep.mubr.f32.mxu0 0.0
    %2376 = vmatmul.mubr.f32.gmra.mrb[0].mxu0 %v2309
    %v2377 = vpop.f32.mrb[0].mxu0
    %v2378 = vadd.f32 0.0, %v2377
    %v2379 = vpop.f32.mrb[0].mxu0
    %v2380 = vadd.f32 0.0, %v2379
    %2381 = vdwg.mxu0
    %v2382 = vadd.f32 %v2300, %v2378
    %v2383 = vadd.f32 %v2301, %v2380
    %v2384 = vxor.u32 %v2382, 2147483648
    %v2385 = vxor.u32 %v2383, 2147483648
    %v2386 = vmul.f32 %v2384, 1.442695
    %v2387 = vpow.pop %v2386
    %v2388 = vmul.f32 %v2385, 1.442695
    %v2389 = vpow.pop %v2388
    %v2390 = vadd.f32 %v2387, 1.0
    %v2391 = vadd.f32 %v2389, 1.0
    %v2392 = vrcp.pop %v2390
    %v2393 = vmul.f32 1.0, %v2392
    %v2394 = vrcp.pop %v2391
    %v2395 = vmul.f32 1.0, %v2394
    %v2396 = vtanh.pop %v2383
    %v2397 = vmul.f32 %v2393, %v2149
    %2399 = vrot.lane.b32.xlu0 %v2396, 112
    %v2400 = vpop.permute.xlu0 %2399
    %v2402 = vmul.f32 %v2393, %v2400
    %2404 = vrot.lane.b32.xlu0 %v2402, 48
    %v2405 = vpop.permute.xlu0 %2404
    %v2407 = vadd.f32 %v2397, %v2405
    %v2408 = vtanh.pop %v2407
    %2410 = vrot.lane.b32.xlu0 %v2408, 48
    %v2411 = vpop.permute.xlu0 %2410
    %v2413 = vmul.f32 %v2393, %v2411
    %v2414 = vmul.f32 %v2395, %v2411
    %s2415 = smul.addr %s498, 8
    %s2416 = scalar_lea.vmem [#allocation3], %s2415
    %v2417 = vld [vmem:[%s2416] sm:$0xff]
    %v2418 = vld [vmem:[%s2416 + $0x8] sm:$0xff]
    %2421 = vrot.lane.b32.xlu0 %v2272, 32
    %v2422 = vpop.permute.xlu0 %2421
    %2423 = vrot.lane.b32.xlu0 %v2273, 32
    %v2424 = vpop.permute.xlu0 %2423
    %v2425 = vsel %vm728, %v2422, %v2424
    %v2426 = vsel %vm503, %v2425, 0
    %2428 = vmatprep.subr.mxu0 %v487
    %2429 = vmatpush1.msra.mxu0 %v486
    %2430 = vmatprep.subr.mxu0 %v489
    %2431 = vmatpush1.msra.mxu0 %v488
    %2432 = vmatprep.subr.mxu0 %v491
    %2433 = vmatpush1.msra.mxu0 %v490
    %2434 = vmatprep.subr.mxu0 %v493
    %2435 = vmatpush1.msra.mxu0 %v492
    %2436 = vmatprep.subr.mxu0 %v495
    %2437 = vmatpush1.msra.mxu0 %v494
    %2438 = vmatprep.subr.mxu0 %v497
    %2439 = vmatpush1.msra.mxu0 %v496
    %2440 = vmatprep.subr.mxu0 0.0
    %2441 = vmatpush1.msra.mxu0 0.0
    %2442 = vmatprep.subr.mxu0 0.0
    %2443 = vmatpush1.msra.mxu0 0.0
    %2444 = vmatprep.subr.mxu0 0.0
    %2445 = vmatpush1.msra.mxu0 0.0
    %2446 = vmatprep.subr.mxu0 0.0
    %2447 = vmatpush1.msra.mxu0 0.0
    %2448 = vmatprep.subr.mxu0 0.0
    %2449 = vmatpush1.msra.mxu0 0.0
    %2450 = vmatprep.subr.mxu0 0.0
    %2451 = vmatpush1.msra.mxu0 0.0
    %2452 = vmatprep.subr.mxu0 0.0
    %2453 = vmatpush1.msra.mxu0 0.0
    %2454 = vmatprep.subr.mxu0 0.0
    %2455 = vmatpush1.msra.mxu0 0.0
    %2456 = vmatprep.subr.mxu0 0.0
    %2457 = vmatpush1.msra.mxu0 0.0
    %2458 = vmatprep.subr.mxu0 0.0
    %2459 = vmatpush1.msra.mxu0 0.0
    %2460 = vmatprep.subr.mxu0 0.0
    %2461 = vmatpush1.msra.mxu0 0.0
    %2462 = vmatprep.subr.mxu0 0.0
    %2463 = vmatpush1.msra.mxu0 0.0
    %2464 = vmatprep.subr.mxu0 0.0
    %2465 = vmatpush1.msra.mxu0 0.0
    %2466 = vmatprep.subr.mxu0 0.0
    %2467 = vmatpush1.msra.mxu0 0.0
    %2468 = vmatprep.subr.mxu0 0.0
    %2469 = vmatpush1.msra.mxu0 0.0
    %2470 = vmatprep.subr.mxu0 0.0
    %2471 = vmatpush1.msra.mxu0 0.0
    %2472 = vmatprep.subr.mxu0 0.0
    %2473 = vmatpush1.msra.mxu0 0.0
    %2474 = vmatprep.subr.mxu0 0.0
    %2475 = vmatpush1.msra.mxu0 0.0
    %2476 = vmatprep.subr.mxu0 0.0
    %2477 = vmatpush1.msra.mxu0 0.0
    %2478 = vmatprep.subr.mxu0 0.0
    %2479 = vmatpush1.msra.mxu0 0.0
    %2480 = vmatprep.subr.mxu0 0.0
    %2481 = vmatpush1.msra.mxu0 0.0
    %2482 = vmatprep.subr.mxu0 0.0
    %2483 = vmatpush1.msra.mxu0 0.0
    %2484 = vmatprep.subr.mxu0 0.0
    %2485 = vmatpush1.msra.mxu0 0.0
    %2486 = vmatprep.subr.mxu0 0.0
    %2487 = vmatpush1.msra.mxu0 0.0
    %2488 = vmatprep.subr.mxu0 0.0
    %2489 = vmatpush1.msra.mxu0 0.0
    %2490 = vmatprep.subr.mxu0 0.0
    %2491 = vmatpush1.msra.mxu0 0.0
    %2492 = vmatprep.mubr.f32.mxu0 0.0
    %2493 = vmatmul.mubr.f32.gmra.mrb[0].mxu0 %v2426
    %v2494 = vpop.f32.mrb[0].mxu0
    %v2495 = vadd.f32 0.0, %v2494
    %v2496 = vpop.f32.mrb[0].mxu0
    %v2497 = vadd.f32 0.0, %v2496
    %2498 = vdwg.mxu0
    %v2499 = vadd.f32 %v2417, %v2495
    %v2500 = vadd.f32 %v2418, %v2497
    %v2501 = vxor.u32 %v2499, 2147483648
    %v2502 = vxor.u32 %v2500, 2147483648
    %v2503 = vmul.f32 %v2501, 1.442695
    %v2504 = vpow.pop %v2503
    %v2505 = vmul.f32 %v2502, 1.442695
    %v2506 = vpow.pop %v2505
    %v2507 = vadd.f32 %v2504, 1.0
    %v2508 = vadd.f32 %v2506, 1.0
    %v2509 = vrcp.pop %v2507
    %v2510 = vmul.f32 1.0, %v2509
    %v2511 = vrcp.pop %v2508
    %v2512 = vmul.f32 1.0, %v2511
    %v2513 = vtanh.pop %v2500
    %v2514 = vmul.f32 %v2510, %v2266
    %2516 = vrot.lane.b32.xlu0 %v2513, 112
    %v2517 = vpop.permute.xlu0 %2516
    %v2519 = vmul.f32 %v2510, %v2517
    %2521 = vrot.lane.b32.xlu0 %v2519, 48
    %v2522 = vpop.permute.xlu0 %2521
    %v2524 = vadd.f32 %v2514, %v2522
    %v2525 = vtanh.pop %v2524
    %2527 = vrot.lane.b32.xlu0 %v2525, 48
    %v2528 = vpop.permute.xlu0 %2527
    %v2530 = vmul.f32 %v2510, %v2528
    %v2531 = vmul.f32 %v2512, %v2528
    %v2532 = vmax.f32 %v2413, 0.0
    %v2533 = vmax.f32 %v2414, 0.0
    %2536 = vrot.lane.b32.xlu0 %v2532, 32
    %v2537 = vpop.permute.xlu0 %2536
    %2538 = vrot.lane.b32.xlu0 %v2533, 32
    %v2539 = vpop.permute.xlu0 %2538
    %v2540 = vsel %vm728, %v2537, %v2539
    %s2542 = scalar_lea.vmem [#allocation4], 56
    %2543 = vst.msk [vmem:[%s2542] sm:$0xff] %vm503, %v2540
    %v2544 = vmax.f32 %v2530, 0.0
    %v2545 = vmax.f32 %v2531, 0.0
    %2548 = vrot.lane.b32.xlu0 %v2544, 32
    %v2549 = vpop.permute.xlu0 %2548
    %2550 = vrot.lane.b32.xlu0 %v2545, 32
    %v2551 = vpop.permute.xlu0 %2550
    %v2552 = vsel %vm728, %v2549, %v2551
    %2554 = vst.msk [vmem:[#allocation5] sm:$0xff] %vm503, %v2552
    %v2555 = vld [vmem:[#allocation4] sm:$0xff]
    %v2556 = vld [vmem:[#allocation4 + $0x8] sm:$0xff]
    %v2557 = vld [vmem:[#allocation4 + $0x10] sm:$0xff]
    %v2558 = vld [vmem:[#allocation4 + $0x18] sm:$0xff]
    %v2559 = vld [vmem:[#allocation4 + $0x20] sm:$0xff]
    %v2560 = vld [vmem:[#allocation4 + $0x28] sm:$0xff]
    %v2561 = vld [vmem:[#allocation4 + $0x30] sm:$0xff]
    %v2562 = vld [vmem:[#allocation4 + $0x38] sm:$0xff]
    %v2563 = vld [vmem:[#allocation5] sm:$0xff]
    %v2564 = vld [vmem:[#allocation5 + $0x8] sm:$0xff]
    %v2565 = vld [vmem:[#allocation5 + $0x10] sm:$0xff]
    %v2566 = vld [vmem:[#allocation5 + $0x18] sm:$0xff]
    %v2567 = vld [vmem:[#allocation5 + $0x20] sm:$0xff]
    %v2568 = vld [vmem:[#allocation5 + $0x28] sm:$0xff]
    %v2569 = vld [vmem:[#allocation5 + $0x30] sm:$0xff]
    %v2570 = vld [vmem:[#allocation5 + $0x38] sm:$0xff]
    %v2571 = vld [vmem:[%s7] sm:$0xff]
    %v2572 = vld [vmem:[%s7 + $0x8] sm:$0xff]
    %v2573 = vld [vmem:[%s7 + $0x10] sm:$0xff]
    %v2574 = vld [vmem:[%s7 + $0x18] sm:$0xff]
    %v2575 = vld [vmem:[%s7 + $0x20] sm:$0xff]
    %v2576 = vld [vmem:[%s7 + $0x28] sm:$0xff]
    %v2577 = vld [vmem:[%s7 + $0x30] sm:$0xff]
    %v2578 = vld [vmem:[%s7 + $0x38] sm:$0xff]
    %v2579 = vld [vmem:[%s7 + $0x40] sm:$0xff]
    %v2580 = vld [vmem:[%s7 + $0x48] sm:$0xff]
    %v2581 = vld [vmem:[%s7 + $0x50] sm:$0xff]
    %v2582 = vld [vmem:[%s7 + $0x58] sm:$0xff]
    %v2583 = vld [vmem:[#allocation19] sm:$0xff]
    %v2584 = vld [vmem:[#allocation19 + $0x8] sm:$0xff]
    %v2585 = vld [vmem:[#allocation19 + $0x10] sm:$0xff]
    %v2586 = vld [vmem:[#allocation19 + $0x18] sm:$0xff]
    %v2587 = vld [vmem:[#allocation19 + $0x20] sm:$0xff]
    %v2588 = vld [vmem:[#allocation19 + $0x28] sm:$0xff]
    %v2589 = vld [vmem:[#allocation19 + $0x30] sm:$0xff]
    %v2590 = vld [vmem:[#allocation19 + $0x38] sm:$0xff]
    %v2591 = vld [vmem:[#allocation19 + $0x40] sm:$0xff]
    %v2592 = vld [vmem:[#allocation19 + $0x48] sm:$0xff]
    %v2593 = vld [vmem:[#allocation19 + $0x50] sm:$0xff]
    %v2594 = vld [vmem:[#allocation19 + $0x58] sm:$0xff]
    %v2596 = vsel %vm503, %v2563, 0
    %v2599 = vsel %vm503, %v2564, 0
    %v2602 = vsel %vm503, %v2565, 0
    %v2605 = vsel %vm503, %v2566, 0
    %v2608 = vsel %vm503, %v2567, 0
    %v2611 = vsel %vm503, %v2568, 0
    %v2614 = vsel %vm503, %v2569, 0
    %v2617 = vsel %vm503, %v2570, 0
    %2619 = vmatprep.subr.mxu0 0.0
    %2620 = vmatpush1.msra.mxu0 %v2577
    %2621 = vmatprep.subr.mxu0 0.0
    %2622 = vmatpush1.msra.mxu0 %v2578
    %2623 = vmatprep.subr.mxu0 0.0
    %2624 = vmatpush1.msra.mxu0 %v2579
    %2625 = vmatprep.subr.mxu0 0.0
    %2626 = vmatpush1.msra.mxu0 %v2580
    %2627 = vmatprep.subr.mxu0 0.0
    %2628 = vmatpush1.msra.mxu0 %v2581
    %2629 = vmatprep.subr.mxu0 0.0
    %2630 = vmatpush1.msra.mxu0 %v2582
    %2631 = vmatprep.subr.mxu0 0.0
    %2632 = vmatpush1.msra.mxu0 0.0
    %2633 = vmatprep.subr.mxu0 0.0
    %2634 = vmatpush1.msra.mxu0 0.0
    %2635 = vmatprep.subr.mxu0 0.0
    %2636 = vmatpush1.msra.mxu0 0.0
    %2637 = vmatprep.subr.mxu0 0.0
    %2638 = vmatpush1.msra.mxu0 0.0
    %2639 = vmatprep.subr.mxu0 0.0
    %2640 = vmatpush1.msra.mxu0 0.0
    %2641 = vmatprep.subr.mxu0 0.0
    %2642 = vmatpush1.msra.mxu0 0.0
    %2643 = vmatprep.subr.mxu0 0.0
    %2644 = vmatpush1.msra.mxu0 0.0
    %2645 = vmatprep.subr.mxu0 0.0
    %2646 = vmatpush1.msra.mxu0 0.0
    %2647 = vmatprep.subr.mxu0 0.0
    %2648 = vmatpush1.msra.mxu0 0.0
    %2649 = vmatprep.subr.mxu0 0.0
    %2650 = vmatpush1.msra.mxu0 0.0
    %2651 = vmatprep.subr.mxu0 0.0
    %2652 = vmatpush1.msra.mxu0 0.0
    %2653 = vmatprep.subr.mxu0 0.0
    %2654 = vmatpush1.msra.mxu0 0.0
    %2655 = vmatprep.subr.mxu0 0.0
    %2656 = vmatpush1.msra.mxu0 0.0
    %2657 = vmatprep.subr.mxu0 0.0
    %2658 = vmatpush1.msra.mxu0 0.0
    %2659 = vmatprep.subr.mxu0 0.0
    %2660 = vmatpush1.msra.mxu0 0.0
    %2661 = vmatprep.subr.mxu0 0.0
    %2662 = vmatpush1.msra.mxu0 0.0
    %2663 = vmatprep.subr.mxu0 0.0
    %2664 = vmatpush1.msra.mxu0 0.0
    %2665 = vmatprep.subr.mxu0 0.0
    %2666 = vmatpush1.msra.mxu0 0.0
    %2667 = vmatprep.subr.mxu0 0.0
    %2668 = vmatpush1.msra.mxu0 0.0
    %2669 = vmatprep.subr.mxu0 0.0
    %2670 = vmatpush1.msra.mxu0 0.0
    %2671 = vmatprep.subr.mxu0 0.0
    %2672 = vmatpush1.msra.mxu0 0.0
    %2673 = vmatprep.subr.mxu0 0.0
    %2674 = vmatpush1.msra.mxu0 0.0
    %2675 = vmatprep.subr.mxu0 0.0
    %2676 = vmatpush1.msra.mxu0 0.0
    %2677 = vmatprep.subr.mxu0 0.0
    %2678 = vmatpush1.msra.mxu0 0.0
    %2679 = vmatprep.subr.mxu0 0.0
    %2680 = vmatpush1.msra.mxu0 0.0
    %2681 = vmatprep.subr.mxu0 0.0
    %2682 = vmatpush1.msra.mxu0 0.0
    %2683 = vmatprep.mubr.f32.mxu0 0.0
    %2684 = vmatmul.mubr.f32.gmra.mrb[0].mxu0 %v2596
    %v2685 = vpop.f32.mrb[0].mxu0
    %v2686 = vadd.f32 0.0, %v2685
    %v2687 = vpop.f32.mrb[0].mxu0
    %2688 = vmatprep.mubr.f32.mxu0 0.0
    %2689 = vmatmul.mubr.f32.gmra.mrb[0].mxu0 %v2599
    %v2690 = vpop.f32.mrb[0].mxu0
    %v2691 = vadd.f32 0.0, %v2690
    %v2692 = vpop.f32.mrb[0].mxu0
    %2693 = vmatprep.mubr.f32.mxu0 0.0
    %2694 = vmatmul.mubr.f32.gmra.mrb[0].mxu0 %v2602
    %v2695 = vpop.f32.mrb[0].mxu0
    %v2696 = vadd.f32 0.0, %v2695
    %v2697 = vpop.f32.mrb[0].mxu0
    %2698 = vmatprep.mubr.f32.mxu0 0.0
    %2699 = vmatmul.mubr.f32.gmra.mrb[0].mxu0 %v2605
    %v2700 = vpop.f32.mrb[0].mxu0
    %v2701 = vadd.f32 0.0, %v2700
    %v2702 = vpop.f32.mrb[0].mxu0
    %2703 = vmatprep.mubr.f32.mxu0 0.0
    %2704 = vmatmul.mubr.f32.gmra.mrb[0].mxu0 %v2608
    %v2705 = vpop.f32.mrb[0].mxu0
    %v2706 = vadd.f32 0.0, %v2705
    %v2707 = vpop.f32.mrb[0].mxu0
    %2708 = vmatprep.mubr.f32.mxu0 0.0
    %2709 = vmatmul.mubr.f32.gmra.mrb[0].mxu0 %v2611
    %v2710 = vpop.f32.mrb[0].mxu0
    %v2711 = vadd.f32 0.0, %v2710
    %v2712 = vpop.f32.mrb[0].mxu0
    %2713 = vmatprep.mubr.f32.mxu0 0.0
    %2714 = vmatmul.mubr.f32.gmra.mrb[0].mxu0 %v2614
    %v2715 = vpop.f32.mrb[0].mxu0
    %v2716 = vadd.f32 0.0, %v2715
    %v2717 = vpop.f32.mrb[0].mxu0
    %2718 = vmatprep.mubr.f32.mxu0 0.0
    %2719 = vmatmul.mubr.f32.gmra.mrb[0].mxu0 %v2617
    %v2720 = vpop.f32.mrb[0].mxu0
    %v2721 = vadd.f32 0.0, %v2720
    %v2722 = vpop.f32.mrb[0].mxu0
    %2723 = vdwg.mxu0
    %v2725 = vsel %vm503, %v2555, 0
    %v2728 = vsel %vm503, %v2556, 0
    %v2731 = vsel %vm503, %v2557, 0
    %v2734 = vsel %vm503, %v2558, 0
    %v2737 = vsel %vm503, %v2559, 0
    %v2740 = vsel %vm503, %v2560, 0
    %v2743 = vsel %vm503, %v2561, 0
    %v2746 = vsel %vm503, %v2562, 0
    %2748 = vmatprep.subr.mxu0 0.0
    %2749 = vmatpush1.msra.mxu0 %v2571
    %2750 = vmatprep.subr.mxu0 0.0
    %2751 = vmatpush1.msra.mxu0 %v2572
    %2752 = vmatprep.subr.mxu0 0.0
    %2753 = vmatpush1.msra.mxu0 %v2573
    %2754 = vmatprep.subr.mxu0 0.0
    %2755 = vmatpush1.msra.mxu0 %v2574
    %2756 = vmatprep.subr.mxu0 0.0
    %2757 = vmatpush1.msra.mxu0 %v2575
    %2758 = vmatprep.subr.mxu0 0.0
    %2759 = vmatpush1.msra.mxu0 %v2576
    %2760 = vmatprep.subr.mxu0 0.0
    %2761 = vmatpush1.msra.mxu0 0.0
    %2762 = vmatprep.subr.mxu0 0.0
    %2763 = vmatpush1.msra.mxu0 0.0
    %2764 = vmatprep.subr.mxu0 0.0
    %2765 = vmatpush1.msra.mxu0 0.0
    %2766 = vmatprep.subr.mxu0 0.0
    %2767 = vmatpush1.msra.mxu0 0.0
    %2768 = vmatprep.subr.mxu0 0.0
    %2769 = vmatpush1.msra.mxu0 0.0
    %2770 = vmatprep.subr.mxu0 0.0
    %2771 = vmatpush1.msra.mxu0 0.0
    %2772 = vmatprep.subr.mxu0 0.0
    %2773 = vmatpush1.msra.mxu0 0.0
    %2774 = vmatprep.subr.mxu0 0.0
    %2775 = vmatpush1.msra.mxu0 0.0
    %2776 = vmatprep.subr.mxu0 0.0
    %2777 = vmatpush1.msra.mxu0 0.0
    %2778 = vmatprep.subr.mxu0 0.0
    %2779 = vmatpush1.msra.mxu0 0.0
    %2780 = vmatprep.subr.mxu0 0.0
    %2781 = vmatpush1.msra.mxu0 0.0
    %2782 = vmatprep.subr.mxu0 0.0
    %2783 = vmatpush1.msra.mxu0 0.0
    %2784 = vmatprep.subr.mxu0 0.0
    %2785 = vmatpush1.msra.mxu0 0.0
    %2786 = vmatprep.subr.mxu0 0.0
    %2787 = vmatpush1.msra.mxu0 0.0
    %2788 = vmatprep.subr.mxu0 0.0
    %2789 = vmatpush1.msra.mxu0 0.0
    %2790 = vmatprep.subr.mxu0 0.0
    %2791 = vmatpush1.msra.mxu0 0.0
    %2792 = vmatprep.subr.mxu0 0.0
    %2793 = vmatpush1.msra.mxu0 0.0
    %2794 = vmatprep.subr.mxu0 0.0
    %2795 = vmatpush1.msra.mxu0 0.0
    %2796 = vmatprep.subr.mxu0 0.0
    %2797 = vmatpush1.msra.mxu0 0.0
    %2798 = vmatprep.subr.mxu0 0.0
    %2799 = vmatpush1.msra.mxu0 0.0
    %2800 = vmatprep.subr.mxu0 0.0
    %2801 = vmatpush1.msra.mxu0 0.0
    %2802 = vmatprep.subr.mxu0 0.0
    %2803 = vmatpush1.msra.mxu0 0.0
    %2804 = vmatprep.subr.mxu0 0.0
    %2805 = vmatpush1.msra.mxu0 0.0
    %2806 = vmatprep.subr.mxu0 0.0
    %2807 = vmatpush1.msra.mxu0 0.0
    %2808 = vmatprep.subr.mxu0 0.0
    %2809 = vmatpush1.msra.mxu0 0.0
    %2810 = vmatprep.subr.mxu0 0.0
    %2811 = vmatpush1.msra.mxu0 0.0
    %2812 = vmatprep.mubr.f32.mxu0 0.0
    %2813 = vmatmul.mubr.f32.gmra.mrb[0].mxu0 %v2725
    %v2814 = vpop.f32.mrb[0].mxu0
    %v2815 = vadd.f32 %v2686, %v2814
    %v2816 = vpop.f32.mrb[0].mxu0
    %2817 = vmatprep.mubr.f32.mxu0 0.0
    %2818 = vmatmul.mubr.f32.gmra.mrb[0].mxu0 %v2728
    %v2819 = vpop.f32.mrb[0].mxu0
    %v2820 = vadd.f32 %v2691, %v2819
    %v2821 = vpop.f32.mrb[0].mxu0
    %2822 = vmatprep.mubr.f32.mxu0 0.0
    %2823 = vmatmul.mubr.f32.gmra.mrb[0].mxu0 %v2731
    %v2824 = vpop.f32.mrb[0].mxu0
    %v2825 = vadd.f32 %v2696, %v2824
    %v2826 = vpop.f32.mrb[0].mxu0
    %2827 = vmatprep.mubr.f32.mxu0 0.0
    %2828 = vmatmul.mubr.f32.gmra.mrb[0].mxu0 %v2734
    %v2829 = vpop.f32.mrb[0].mxu0
    %v2830 = vadd.f32 %v2701, %v2829
    %v2831 = vpop.f32.mrb[0].mxu0
    %2832 = vmatprep.mubr.f32.mxu0 0.0
    %2833 = vmatmul.mubr.f32.gmra.mrb[0].mxu0 %v2737
    %v2834 = vpop.f32.mrb[0].mxu0
    %v2835 = vadd.f32 %v2706, %v2834
    %v2836 = vpop.f32.mrb[0].mxu0
    %2837 = vmatprep.mubr.f32.mxu0 0.0
    %2838 = vmatmul.mubr.f32.gmra.mrb[0].mxu0 %v2740
    %v2839 = vpop.f32.mrb[0].mxu0
    %v2840 = vadd.f32 %v2711, %v2839
    %v2841 = vpop.f32.mrb[0].mxu0
    %2842 = vmatprep.mubr.f32.mxu0 0.0
    %2843 = vmatmul.mubr.f32.gmra.mrb[0].mxu0 %v2743
    %v2844 = vpop.f32.mrb[0].mxu0
    %v2845 = vadd.f32 %v2716, %v2844
    %v2846 = vpop.f32.mrb[0].mxu0
    %2847 = vmatprep.mubr.f32.mxu0 0.0
    %2848 = vmatmul.mubr.f32.gmra.mrb[0].mxu0 %v2746
    %v2849 = vpop.f32.mrb[0].mxu0
    %v2850 = vadd.f32 %v2721, %v2849
    %v2851 = vpop.f32.mrb[0].mxu0
    %2852 = vdwg.mxu0
    %v2853 = vld [vmem:[%s9] sm:$0x1]
    %v2855 = vlaneseq
    %v2856 = vshrl.u32 %v2855, 7
    %v2857 = vsub.s32 0, %v2856
    %v2858 = vrot.slane %v2853, %v2857
    %v2860 = vadd.f32 %v2815, %v2858
    %v2861 = vadd.f32 %v2820, %v2858
    %v2862 = vadd.f32 %v2825, %v2858
    %v2863 = vadd.f32 %v2830, %v2858
    %v2864 = vadd.f32 %v2835, %v2858
    %v2865 = vadd.f32 %v2840, %v2858
    %v2866 = vadd.f32 %v2845, %v2858
    %v2867 = vadd.f32 %v2850, %v2858
    %2868 = vst [vmem:[#allocation6] sm:$0xff] %v2860
    %2869 = vst [vmem:[#allocation6 + $0x8] sm:$0xff] %v2861
    %2870 = vst [vmem:[#allocation6 + $0x10] sm:$0xff] %v2862
    %2871 = vst [vmem:[#allocation6 + $0x18] sm:$0xff] %v2863
    %2872 = vst [vmem:[#allocation6 + $0x20] sm:$0xff] %v2864
    %2873 = vst [vmem:[#allocation6 + $0x28] sm:$0xff] %v2865
    %2874 = vst [vmem:[#allocation6 + $0x30] sm:$0xff] %v2866
    %2875 = vst [vmem:[#allocation6 + $0x38] sm:$0xff] %v2867
    %2876 = vmatprep.subr.mxu0 0.0
    %2877 = vmatpush1.msra.mxu0 %v2589
    %2878 = vmatprep.subr.mxu0 0.0
    %2879 = vmatpush1.msra.mxu0 %v2590
    %2880 = vmatprep.subr.mxu0 0.0
    %2881 = vmatpush1.msra.mxu0 %v2591
    %2882 = vmatprep.subr.mxu0 0.0
    %2883 = vmatpush1.msra.mxu0 %v2592
    %2884 = vmatprep.subr.mxu0 0.0
    %2885 = vmatpush1.msra.mxu0 %v2593
    %2886 = vmatprep.subr.mxu0 0.0
    %2887 = vmatpush1.msra.mxu0 %v2594
    %2888 = vmatprep.subr.mxu0 0.0
    %2889 = vmatpush1.msra.mxu0 0.0
    %2890 = vmatprep.subr.mxu0 0.0
    %2891 = vmatpush1.msra.mxu0 0.0
    %2892 = vmatprep.subr.mxu0 0.0
    %2893 = vmatpush1.msra.mxu0 0.0
    %2894 = vmatprep.subr.mxu0 0.0
    %2895 = vmatpush1.msra.mxu0 0.0
    %2896 = vmatprep.subr.mxu0 0.0
    %2897 = vmatpush1.msra.mxu0 0.0
    %2898 = vmatprep.subr.mxu0 0.0
    %2899 = vmatpush1.msra.mxu0 0.0
    %2900 = vmatprep.subr.mxu0 0.0
    %2901 = vmatpush1.msra.mxu0 0.0
    %2902 = vmatprep.subr.mxu0 0.0
    %2903 = vmatpush1.msra.mxu0 0.0
    %2904 = vmatprep.subr.mxu0 0.0
    %2905 = vmatpush1.msra.mxu0 0.0
    %2906 = vmatprep.subr.mxu0 0.0
    %2907 = vmatpush1.msra.mxu0 0.0
    %2908 = vmatprep.subr.mxu0 0.0
    %2909 = vmatpush1.msra.mxu0 0.0
    %2910 = vmatprep.subr.mxu0 0.0
    %2911 = vmatpush1.msra.mxu0 0.0
    %2912 = vmatprep.subr.mxu0 0.0
    %2913 = vmatpush1.msra.mxu0 0.0
    %2914 = vmatprep.subr.mxu0 0.0
    %2915 = vmatpush1.msra.mxu0 0.0
    %2916 = vmatprep.subr.mxu0 0.0
    %2917 = vmatpush1.msra.mxu0 0.0
    %2918 = vmatprep.subr.mxu0 0.0
    %2919 = vmatpush1.msra.mxu0 0.0
    %2920 = vmatprep.subr.mxu0 0.0
    %2921 = vmatpush1.msra.mxu0 0.0
    %2922 = vmatprep.subr.mxu0 0.0
    %2923 = vmatpush1.msra.mxu0 0.0
    %2924 = vmatprep.subr.mxu0 0.0
    %2925 = vmatpush1.msra.mxu0 0.0
    %2926 = vmatprep.subr.mxu0 0.0
    %2927 = vmatpush1.msra.mxu0 0.0
    %2928 = vmatprep.subr.mxu0 0.0
    %2929 = vmatpush1.msra.mxu0 0.0
    %2930 = vmatprep.subr.mxu0 0.0
    %2931 = vmatpush1.msra.mxu0 0.0
    %2932 = vmatprep.subr.mxu0 0.0
    %2933 = vmatpush1.msra.mxu0 0.0
    %2934 = vmatprep.subr.mxu0 0.0
    %2935 = vmatpush1.msra.mxu0 0.0
    %2936 = vmatprep.subr.mxu0 0.0
    %2937 = vmatpush1.msra.mxu0 0.0
    %2938 = vmatprep.subr.mxu0 0.0
    %2939 = vmatpush1.msra.mxu0 0.0
    %2940 = vmatprep.mubr.f32.mxu0 0.0
    %2941 = vmatmul.mubr.f32.gmra.mrb[0].mxu0 %v2596
    %v2942 = vpop.f32.mrb[0].mxu0
    %v2943 = vadd.f32 0.0, %v2942
    %v2944 = vpop.f32.mrb[0].mxu0
    %2945 = vmatprep.mubr.f32.mxu0 0.0
    %2946 = vmatmul.mubr.f32.gmra.mrb[0].mxu0 %v2599
    %v2947 = vpop.f32.mrb[0].mxu0
    %v2948 = vadd.f32 0.0, %v2947
    %v2949 = vpop.f32.mrb[0].mxu0
    %2950 = vmatprep.mubr.f32.mxu0 0.0
    %2951 = vmatmul.mubr.f32.gmra.mrb[0].mxu0 %v2602
    %v2952 = vpop.f32.mrb[0].mxu0
    %v2953 = vadd.f32 0.0, %v2952
    %v2954 = vpop.f32.mrb[0].mxu0
    %2955 = vmatprep.mubr.f32.mxu0 0.0
    %2956 = vmatmul.mubr.f32.gmra.mrb[0].mxu0 %v2605
    %v2957 = vpop.f32.mrb[0].mxu0
    %v2958 = vadd.f32 0.0, %v2957
    %v2959 = vpop.f32.mrb[0].mxu0
    %2960 = vmatprep.mubr.f32.mxu0 0.0
    %2961 = vmatmul.mubr.f32.gmra.mrb[0].mxu0 %v2608
    %v2962 = vpop.f32.mrb[0].mxu0
    %v2963 = vadd.f32 0.0, %v2962
    %v2964 = vpop.f32.mrb[0].mxu0
    %2965 = vmatprep.mubr.f32.mxu0 0.0
    %2966 = vmatmul.mubr.f32.gmra.mrb[0].mxu0 %v2611
    %v2967 = vpop.f32.mrb[0].mxu0
    %v2968 = vadd.f32 0.0, %v2967
    %v2969 = vpop.f32.mrb[0].mxu0
    %2970 = vmatprep.mubr.f32.mxu0 0.0
    %2971 = vmatmul.mubr.f32.gmra.mrb[0].mxu0 %v2614
    %v2972 = vpop.f32.mrb[0].mxu0
    %v2973 = vadd.f32 0.0, %v2972
    %v2974 = vpop.f32.mrb[0].mxu0
    %2975 = vmatprep.mubr.f32.mxu0 0.0
    %2976 = vmatmul.mubr.f32.gmra.mrb[0].mxu0 %v2617
    %v2977 = vpop.f32.mrb[0].mxu0
    %v2978 = vadd.f32 0.0, %v2977
    %v2979 = vpop.f32.mrb[0].mxu0
    %2980 = vdwg.mxu0
    %2981 = vmatprep.subr.mxu0 0.0
    %2982 = vmatpush1.msra.mxu0 %v2583
    %2983 = vmatprep.subr.mxu0 0.0
    %2984 = vmatpush1.msra.mxu0 %v2584
    %2985 = vmatprep.subr.mxu0 0.0
    %2986 = vmatpush1.msra.mxu0 %v2585
    %2987 = vmatprep.subr.mxu0 0.0
    %2988 = vmatpush1.msra.mxu0 %v2586
    %2989 = vmatprep.subr.mxu0 0.0
    %2990 = vmatpush1.msra.mxu0 %v2587
    %2991 = vmatprep.subr.mxu0 0.0
    %2992 = vmatpush1.msra.mxu0 %v2588
    %2993 = vmatprep.subr.mxu0 0.0
    %2994 = vmatpush1.msra.mxu0 0.0
    %2995 = vmatprep.subr.mxu0 0.0
    %2996 = vmatpush1.msra.mxu0 0.0
    %2997 = vmatprep.subr.mxu0 0.0
    %2998 = vmatpush1.msra.mxu0 0.0
    %2999 = vmatprep.subr.mxu0 0.0
    %3000 = vmatpush1.msra.mxu0 0.0
    %3001 = vmatprep.subr.mxu0 0.0
    %3002 = vmatpush1.msra.mxu0 0.0
    %3003 = vmatprep.subr.mxu0 0.0
    %3004 = vmatpush1.msra.mxu0 0.0
    %3005 = vmatprep.subr.mxu0 0.0
    %3006 = vmatpush1.msra.mxu0 0.0
    %3007 = vmatprep.subr.mxu0 0.0
    %3008 = vmatpush1.msra.mxu0 0.0
    %3009 = vmatprep.subr.mxu0 0.0
    %3010 = vmatpush1.msra.mxu0 0.0
    %3011 = vmatprep.subr.mxu0 0.0
    %3012 = vmatpush1.msra.mxu0 0.0
    %3013 = vmatprep.subr.mxu0 0.0
    %3014 = vmatpush1.msra.mxu0 0.0
    %3015 = vmatprep.subr.mxu0 0.0
    %3016 = vmatpush1.msra.mxu0 0.0
    %3017 = vmatprep.subr.mxu0 0.0
    %3018 = vmatpush1.msra.mxu0 0.0
    %3019 = vmatprep.subr.mxu0 0.0
    %3020 = vmatpush1.msra.mxu0 0.0
    %3021 = vmatprep.subr.mxu0 0.0
    %3022 = vmatpush1.msra.mxu0 0.0
    %3023 = vmatprep.subr.mxu0 0.0
    %3024 = vmatpush1.msra.mxu0 0.0
    %3025 = vmatprep.subr.mxu0 0.0
    %3026 = vmatpush1.msra.mxu0 0.0
    %3027 = vmatprep.subr.mxu0 0.0
    %3028 = vmatpush1.msra.mxu0 0.0
    %3029 = vmatprep.subr.mxu0 0.0
    %3030 = vmatpush1.msra.mxu0 0.0
    %3031 = vmatprep.subr.mxu0 0.0
    %3032 = vmatpush1.msra.mxu0 0.0
    %3033 = vmatprep.subr.mxu0 0.0
    %3034 = vmatpush1.msra.mxu0 0.0
    %3035 = vmatprep.subr.mxu0 0.0
    %3036 = vmatpush1.msra.mxu0 0.0
    %3037 = vmatprep.subr.mxu0 0.0
    %3038 = vmatpush1.msra.mxu0 0.0
    %3039 = vmatprep.subr.mxu0 0.0
    %3040 = vmatpush1.msra.mxu0 0.0
    %3041 = vmatprep.subr.mxu0 0.0
    %3042 = vmatpush1.msra.mxu0 0.0
    %3043 = vmatprep.subr.mxu0 0.0
    %3044 = vmatpush1.msra.mxu0 0.0
    %3045 = vmatprep.mubr.f32.mxu0 0.0
    %3046 = vmatmul.mubr.f32.gmra.mrb[0].mxu0 %v2725
    %v3047 = vpop.f32.mrb[0].mxu0
    %v3048 = vadd.f32 %v2943, %v3047
    %v3049 = vpop.f32.mrb[0].mxu0
    %3050 = vmatprep.mubr.f32.mxu0 0.0
    %3051 = vmatmul.mubr.f32.gmra.mrb[0].mxu0 %v2728
    %v3052 = vpop.f32.mrb[0].mxu0
    %v3053 = vadd.f32 %v2948, %v3052
    %v3054 = vpop.f32.mrb[0].mxu0
    %3055 = vmatprep.mubr.f32.mxu0 0.0
    %3056 = vmatmul.mubr.f32.gmra.mrb[0].mxu0 %v2731
    %v3057 = vpop.f32.mrb[0].mxu0
    %v3058 = vadd.f32 %v2953, %v3057
    %v3059 = vpop.f32.mrb[0].mxu0
    %3060 = vmatprep.mubr.f32.mxu0 0.0
    %3061 = vmatmul.mubr.f32.gmra.mrb[0].mxu0 %v2734
    %v3062 = vpop.f32.mrb[0].mxu0
    %v3063 = vadd.f32 %v2958, %v3062
    %v3064 = vpop.f32.mrb[0].mxu0
    %3065 = vmatprep.mubr.f32.mxu0 0.0
    %3066 = vmatmul.mubr.f32.gmra.mrb[0].mxu0 %v2737
    %v3067 = vpop.f32.mrb[0].mxu0
    %v3068 = vadd.f32 %v2963, %v3067
    %v3069 = vpop.f32.mrb[0].mxu0
    %3070 = vmatprep.mubr.f32.mxu0 0.0
    %3071 = vmatmul.mubr.f32.gmra.mrb[0].mxu0 %v2740
    %v3072 = vpop.f32.mrb[0].mxu0
    %v3073 = vadd.f32 %v2968, %v3072
    %v3074 = vpop.f32.mrb[0].mxu0
    %3075 = vmatprep.mubr.f32.mxu0 0.0
    %3076 = vmatmul.mubr.f32.gmra.mrb[0].mxu0 %v2743
    %v3077 = vpop.f32.mrb[0].mxu0
    %v3078 = vadd.f32 %v2973, %v3077
    %v3079 = vpop.f32.mrb[0].mxu0
    %3080 = vmatprep.mubr.f32.mxu0 0.0
    %3081 = vmatmul.mubr.f32.gmra.mrb[0].mxu0 %v2746
    %v3082 = vpop.f32.mrb[0].mxu0
    %v3083 = vadd.f32 %v2978, %v3082
    %v3084 = vpop.f32.mrb[0].mxu0
    %3085 = vdwg.mxu0
    %v3086 = vld [vmem:[%s12] sm:$0x1]
    %v3088 = vlaneseq
    %v3089 = vshrl.u32 %v3088, 7
    %v3090 = vsub.s32 0, %v3089
    %v3091 = vrot.slane %v3086, %v3090
    %v3093 = vadd.f32 %v3048, %v3091
    %v3094 = vadd.f32 %v3053, %v3091
    %v3095 = vadd.f32 %v3058, %v3091
    %v3096 = vadd.f32 %v3063, %v3091
    %v3097 = vadd.f32 %v3068, %v3091
    %v3098 = vadd.f32 %v3073, %v3091
    %v3099 = vadd.f32 %v3078, %v3091
    %v3100 = vadd.f32 %v3083, %v3091
    %3101 = vst [vmem:[#allocation7] sm:$0xff] %v3093
    %3102 = vst [vmem:[#allocation7 + $0x8] sm:$0xff] %v3094
    %3103 = vst [vmem:[#allocation7 + $0x10] sm:$0xff] %v3095
    %3104 = vst [vmem:[#allocation7 + $0x18] sm:$0xff] %v3096
    %3105 = vst [vmem:[#allocation7 + $0x20] sm:$0xff] %v3097
    %3106 = vst [vmem:[#allocation7 + $0x28] sm:$0xff] %v3098
    %3107 = vst [vmem:[#allocation7 + $0x30] sm:$0xff] %v3099
    %3108 = vst [vmem:[#allocation7 + $0x38] sm:$0xff] %v3100
    %v3109 = vld [vmem:[#allocation18] sm:$0xff]
    %v3110 = vld [vmem:[#allocation18 + $0x8] sm:$0xff]
    %v3111 = vld [vmem:[#allocation18 + $0x10] sm:$0xff]
    %v3112 = vld [vmem:[#allocation18 + $0x18] sm:$0xff]
    %v3113 = vld [vmem:[#allocation21] sm:$0xff]
    %v3114 = vld [vmem:[#allocation21 + $0x8] sm:$0xff]
    %v3115 = vld [vmem:[#allocation21 + $0x10] sm:$0xff]
    %v3116 = vld [vmem:[#allocation21 + $0x18] sm:$0xff]
    %v3117 = vld [vmem:[#allocation6] sm:$0xff]
    %v3118 = vsel %vm728, 0.0, 0
    %3120 = vmatprep.subr.mxu0 0.0
    %3121 = vmatpush1.msra.mxu0 %v3109
    %3122 = vmatprep.subr.mxu0 0.0
    %3123 = vmatpush1.msra.mxu0 %v3110
    %3124 = vmatprep.subr.mxu0 0.0
    %3125 = vmatpush1.msra.mxu0 %v3111
    %3126 = vmatprep.subr.mxu0 0.0
    %3127 = vmatpush1.msra.mxu0 %v3112
    %3128 = vmatprep.subr.mxu0 0.0
    %3129 = vmatpush1.msra.mxu0 0.0
    %3130 = vmatprep.subr.mxu0 0.0
    %3131 = vmatpush1.msra.mxu0 0.0
    %3132 = vmatprep.subr.mxu0 0.0
    %3133 = vmatpush1.msra.mxu0 0.0
    %3134 = vmatprep.subr.mxu0 0.0
    %3135 = vmatpush1.msra.mxu0 0.0
    %3136 = vmatprep.subr.mxu0 0.0
    %3137 = vmatpush1.msra.mxu0 0.0
    %3138 = vmatprep.subr.mxu0 0.0
    %3139 = vmatpush1.msra.mxu0 0.0
    %3140 = vmatprep.subr.mxu0 0.0
    %3141 = vmatpush1.msra.mxu0 0.0
    %3142 = vmatprep.subr.mxu0 0.0
    %3143 = vmatpush1.msra.mxu0 0.0
    %3144 = vmatprep.subr.mxu0 0.0
    %3145 = vmatpush1.msra.mxu0 0.0
    %3146 = vmatprep.subr.mxu0 0.0
    %3147 = vmatpush1.msra.mxu0 0.0
    %3148 = vmatprep.subr.mxu0 0.0
    %3149 = vmatpush1.msra.mxu0 0.0
    %3150 = vmatprep.subr.mxu0 0.0
    %3151 = vmatpush1.msra.mxu0 0.0
    %3152 = vmatprep.subr.mxu0 0.0
    %3153 = vmatpush1.msra.mxu0 0.0
    %3154 = vmatprep.subr.mxu0 0.0
    %3155 = vmatpush1.msra.mxu0 0.0
    %3156 = vmatprep.subr.mxu0 0.0
    %3157 = vmatpush1.msra.mxu0 0.0
    %3158 = vmatprep.subr.mxu0 0.0
    %3159 = vmatpush1.msra.mxu0 0.0
    %3160 = vmatprep.subr.mxu0 0.0
    %3161 = vmatpush1.msra.mxu0 0.0
    %3162 = vmatprep.subr.mxu0 0.0
    %3163 = vmatpush1.msra.mxu0 0.0
    %3164 = vmatprep.subr.mxu0 0.0
    %3165 = vmatpush1.msra.mxu0 0.0
    %3166 = vmatprep.subr.mxu0 0.0
    %3167 = vmatpush1.msra.mxu0 0.0
    %3168 = vmatprep.subr.mxu0 0.0
    %3169 = vmatpush1.msra.mxu0 0.0
    %3170 = vmatprep.subr.mxu0 0.0
    %3171 = vmatpush1.msra.mxu0 0.0
    %3172 = vmatprep.subr.mxu0 0.0
    %3173 = vmatpush1.msra.mxu0 0.0
    %3174 = vmatprep.subr.mxu0 0.0
    %3175 = vmatpush1.msra.mxu0 0.0
    %3176 = vmatprep.subr.mxu0 0.0
    %3177 = vmatpush1.msra.mxu0 0.0
    %3178 = vmatprep.subr.mxu0 0.0
    %3179 = vmatpush1.msra.mxu0 0.0
    %3180 = vmatprep.subr.mxu0 0.0
    %3181 = vmatpush1.msra.mxu0 0.0
    %3182 = vmatprep.subr.mxu0 0.0
    %3183 = vmatpush1.msra.mxu0 0.0
    %3184 = vmatprep.mubr.f32.mxu0 0.0
    %3185 = vmatmul.mubr.f32.gmra.mrb[0].mxu0 %v3118
    %v3186 = vpop.f32.mrb[0].mxu0
    %v3187 = vadd.f32 0.0, %v3186
    %v3188 = vpop.f32.mrb[0].mxu0
    %3189 = vdwg.mxu0
    %v3190 = vadd.f32 %v3117, %v3187
    %v3191 = vxor.u32 %v3190, 2147483648
    %v3192 = vmul.f32 %v3191, 1.442695
    %v3193 = vpow.pop %v3192
    %v3194 = vadd.f32 %v3193, 1.0
    %v3195 = vrcp.pop %v3194
    %v3196 = vmul.f32 1.0, %v3195
    %v3197 = vtanh.pop %v3190
    %v3198 = vmul.f32 %v3196, 0.0
    %3200 = vrot.lane.b32.xlu0 %v3197, 32
    %v3201 = vpop.permute.xlu0 %3200
    %v3203 = vmul.f32 %v3196, %v3201
    %3205 = vrot.lane.b32.xlu0 %v3203, 32
    %v3206 = vpop.permute.xlu0 %3205
    %v3208 = vadd.f32 %v3198, %v3206
    %v3209 = vtanh.pop %v3208
    %3211 = vrot.lane.b32.xlu0 %v3209, 32
    %v3212 = vpop.permute.xlu0 %3211
    %v3214 = vmul.f32 %v3196, %v3212
    %s3215 = scalar_lea.vmem [#allocation7], 56
    %v3216 = vld [vmem:[%s3215] sm:$0xff]
    %3217 = vmatprep.subr.mxu0 0.0
    %3218 = vmatpush1.msra.mxu0 %v3113
    %3219 = vmatprep.subr.mxu0 0.0
    %3220 = vmatpush1.msra.mxu0 %v3114
    %3221 = vmatprep.subr.mxu0 0.0
    %3222 = vmatpush1.msra.mxu0 %v3115
    %3223 = vmatprep.subr.mxu0 0.0
    %3224 = vmatpush1.msra.mxu0 %v3116
    %3225 = vmatprep.subr.mxu0 0.0
    %3226 = vmatpush1.msra.mxu0 0.0
    %3227 = vmatprep.subr.mxu0 0.0
    %3228 = vmatpush1.msra.mxu0 0.0
    %3229 = vmatprep.subr.mxu0 0.0
    %3230 = vmatpush1.msra.mxu0 0.0
    %3231 = vmatprep.subr.mxu0 0.0
    %3232 = vmatpush1.msra.mxu0 0.0
    %3233 = vmatprep.subr.mxu0 0.0
    %3234 = vmatpush1.msra.mxu0 0.0
    %3235 = vmatprep.subr.mxu0 0.0
    %3236 = vmatpush1.msra.mxu0 0.0
    %3237 = vmatprep.subr.mxu0 0.0
    %3238 = vmatpush1.msra.mxu0 0.0
    %3239 = vmatprep.subr.mxu0 0.0
    %3240 = vmatpush1.msra.mxu0 0.0
    %3241 = vmatprep.subr.mxu0 0.0
    %3242 = vmatpush1.msra.mxu0 0.0
    %3243 = vmatprep.subr.mxu0 0.0
    %3244 = vmatpush1.msra.mxu0 0.0
    %3245 = vmatprep.subr.mxu0 0.0
    %3246 = vmatpush1.msra.mxu0 0.0
    %3247 = vmatprep.subr.mxu0 0.0
    %3248 = vmatpush1.msra.mxu0 0.0
    %3249 = vmatprep.subr.mxu0 0.0
    %3250 = vmatpush1.msra.mxu0 0.0
    %3251 = vmatprep.subr.mxu0 0.0
    %3252 = vmatpush1.msra.mxu0 0.0
    %3253 = vmatprep.subr.mxu0 0.0
    %3254 = vmatpush1.msra.mxu0 0.0
    %3255 = vmatprep.subr.mxu0 0.0
    %3256 = vmatpush1.msra.mxu0 0.0
    %3257 = vmatprep.subr.mxu0 0.0
    %3258 = vmatpush1.msra.mxu0 0.0
    %3259 = vmatprep.subr.mxu0 0.0
    %3260 = vmatpush1.msra.mxu0 0.0
    %3261 = vmatprep.subr.mxu0 0.0
    %3262 = vmatpush1.msra.mxu0 0.0
    %3263 = vmatprep.subr.mxu0 0.0
    %3264 = vmatpush1.msra.mxu0 0.0
    %3265 = vmatprep.subr.mxu0 0.0
    %3266 = vmatpush1.msra.mxu0 0.0
    %3267 = vmatprep.subr.mxu0 0.0
    %3268 = vmatpush1.msra.mxu0 0.0
    %3269 = vmatprep.subr.mxu0 0.0
    %3270 = vmatpush1.msra.mxu0 0.0
    %3271 = vmatprep.subr.mxu0 0.0
    %3272 = vmatpush1.msra.mxu0 0.0
    %3273 = vmatprep.subr.mxu0 0.0
    %3274 = vmatpush1.msra.mxu0 0.0
    %3275 = vmatprep.subr.mxu0 0.0
    %3276 = vmatpush1.msra.mxu0 0.0
    %3277 = vmatprep.subr.mxu0 0.0
    %3278 = vmatpush1.msra.mxu0 0.0
    %3279 = vmatprep.subr.mxu0 0.0
    %3280 = vmatpush1.msra.mxu0 0.0
    %3281 = vmatprep.mubr.f32.mxu0 0.0
    %3282 = vmatmul.mubr.f32.gmra.mrb[0].mxu0 %v3118
    %v3283 = vpop.f32.mrb[0].mxu0
    %v3284 = vadd.f32 0.0, %v3283
    %v3285 = vpop.f32.mrb[0].mxu0
    %3286 = vdwg.mxu0
    %v3287 = vadd.f32 %v3216, %v3284
    %v3288 = vxor.u32 %v3287, 2147483648
    %v3289 = vmul.f32 %v3288, 1.442695
    %v3290 = vpow.pop %v3289
    %v3291 = vadd.f32 %v3290, 1.0
    %v3292 = vrcp.pop %v3291
    %v3293 = vmul.f32 1.0, %v3292
    %v3294 = vtanh.pop %v3287
    %v3295 = vmul.f32 %v3293, 0.0
    %3297 = vrot.lane.b32.xlu0 %v3294, 32
    %v3298 = vpop.permute.xlu0 %3297
    %v3300 = vmul.f32 %v3293, %v3298
    %3302 = vrot.lane.b32.xlu0 %v3300, 32
    %v3303 = vpop.permute.xlu0 %3302
    %v3305 = vadd.f32 %v3295, %v3303
    %v3306 = vtanh.pop %v3305
    %3308 = vrot.lane.b32.xlu0 %v3306, 32
    %v3309 = vpop.permute.xlu0 %3308
    %v3311 = vmul.f32 %v3293, %v3309
    %v3312 = vmax.f32 %v3214, 0.0
    %3314 = vrot.lane.b32.xlu0 %v3312, 64
    %v3315 = vpop.permute.xlu0 %3314
    %3317 = vst.msk [vmem:[#allocation8] sm:$0xff] %vm728, %v3315
    %v3318 = vmax.f32 %v3311, 0.0
    %3320 = vrot.lane.b32.xlu0 %v3318, 64
    %v3321 = vpop.permute.xlu0 %3320
    %s3323 = scalar_lea.vmem [#allocation9], 56
    %3324 = vst.msk [vmem:[%s3323] sm:$0xff] %vm728, %v3321
    %s3325 = scalar_lea.vmem [#allocation6], 8
    %v3326 = vld [vmem:[%s3325] sm:$0xff]
    %3328 = vrot.lane.b32.xlu0 %v3214, 64
    %v3329 = vpop.permute.xlu0 %3328
    %v3330 = vsel %vm728, %v3329, 0
    %3332 = vmatprep.subr.mxu0 0.0
    %3333 = vmatpush1.msra.mxu0 %v3109
    %3334 = vmatprep.subr.mxu0 0.0
    %3335 = vmatpush1.msra.mxu0 %v3110
    %3336 = vmatprep.subr.mxu0 0.0
    %3337 = vmatpush1.msra.mxu0 %v3111
    %3338 = vmatprep.subr.mxu0 0.0
    %3339 = vmatpush1.msra.mxu0 %v3112
    %3340 = vmatprep.subr.mxu0 0.0
    %3341 = vmatpush1.msra.mxu0 0.0
    %3342 = vmatprep.subr.mxu0 0.0
    %3343 = vmatpush1.msra.mxu0 0.0
    %3344 = vmatprep.subr.mxu0 0.0
    %3345 = vmatpush1.msra.mxu0 0.0
    %3346 = vmatprep.subr.mxu0 0.0
    %3347 = vmatpush1.msra.mxu0 0.0
    %3348 = vmatprep.subr.mxu0 0.0
    %3349 = vmatpush1.msra.mxu0 0.0
    %3350 = vmatprep.subr.mxu0 0.0
    %3351 = vmatpush1.msra.mxu0 0.0
    %3352 = vmatprep.subr.mxu0 0.0
    %3353 = vmatpush1.msra.mxu0 0.0
    %3354 = vmatprep.subr.mxu0 0.0
    %3355 = vmatpush1.msra.mxu0 0.0
    %3356 = vmatprep.subr.mxu0 0.0
    %3357 = vmatpush1.msra.mxu0 0.0
    %3358 = vmatprep.subr.mxu0 0.0
    %3359 = vmatpush1.msra.mxu0 0.0
    %3360 = vmatprep.subr.mxu0 0.0
    %3361 = vmatpush1.msra.mxu0 0.0
    %3362 = vmatprep.subr.mxu0 0.0
    %3363 = vmatpush1.msra.mxu0 0.0
    %3364 = vmatprep.subr.mxu0 0.0
    %3365 = vmatpush1.msra.mxu0 0.0
    %3366 = vmatprep.subr.mxu0 0.0
    %3367 = vmatpush1.msra.mxu0 0.0
    %3368 = vmatprep.subr.mxu0 0.0
    %3369 = vmatpush1.msra.mxu0 0.0
    %3370 = vmatprep.subr.mxu0 0.0
    %3371 = vmatpush1.msra.mxu0 0.0
    %3372 = vmatprep.subr.mxu0 0.0
    %3373 = vmatpush1.msra.mxu0 0.0
    %3374 = vmatprep.subr.mxu0 0.0
    %3375 = vmatpush1.msra.mxu0 0.0
    %3376 = vmatprep.subr.mxu0 0.0
    %3377 = vmatpush1.msra.mxu0 0.0
    %3378 = vmatprep.subr.mxu0 0.0
    %3379 = vmatpush1.msra.mxu0 0.0
    %3380 = vmatprep.subr.mxu0 0.0
    %3381 = vmatpush1.msra.mxu0 0.0
    %3382 = vmatprep.subr.mxu0 0.0
    %3383 = vmatpush1.msra.mxu0 0.0
    %3384 = vmatprep.subr.mxu0 0.0
    %3385 = vmatpush1.msra.mxu0 0.0
    %3386 = vmatprep.subr.mxu0 0.0
    %3387 = vmatpush1.msra.mxu0 0.0
    %3388 = vmatprep.subr.mxu0 0.0
    %3389 = vmatpush1.msra.mxu0 0.0
    %3390 = vmatprep.subr.mxu0 0.0
    %3391 = vmatpush1.msra.mxu0 0.0
    %3392 = vmatprep.subr.mxu0 0.0
    %3393 = vmatpush1.msra.mxu0 0.0
    %3394 = vmatprep.subr.mxu0 0.0
    %3395 = vmatpush1.msra.mxu0 0.0
    %3396 = vmatprep.mubr.f32.mxu0 0.0
    %3397 = vmatmul.mubr.f32.gmra.mrb[0].mxu0 %v3330
    %v3398 = vpop.f32.mrb[0].mxu0
    %v3399 = vadd.f32 0.0, %v3398
    %v3400 = vpop.f32.mrb[0].mxu0
    %3401 = vdwg.mxu0
    %v3402 = vadd.f32 %v3326, %v3399
    %v3403 = vxor.u32 %v3402, 2147483648
    %v3404 = vmul.f32 %v3403, 1.442695
    %v3405 = vpow.pop %v3404
    %v3406 = vadd.f32 %v3405, 1.0
    %v3407 = vrcp.pop %v3406
    %v3408 = vmul.f32 1.0, %v3407
    %v3409 = vtanh.pop %v3402
    %v3410 = vmul.f32 %v3408, %v3208
    %3412 = vrot.lane.b32.xlu0 %v3409, 32
    %v3413 = vpop.permute.xlu0 %3412
    %v3415 = vmul.f32 %v3408, %v3413
    %3417 = vrot.lane.b32.xlu0 %v3415, 32
    %v3418 = vpop.permute.xlu0 %3417
    %v3420 = vadd.f32 %v3410, %v3418
    %v3421 = vtanh.pop %v3420
    %3423 = vrot.lane.b32.xlu0 %v3421, 32
    %v3424 = vpop.permute.xlu0 %3423
    %v3426 = vmul.f32 %v3408, %v3424
    %s3427 = scalar_lea.vmem [#allocation7], 48
    %v3428 = vld [vmem:[%s3427] sm:$0xff]
    %3430 = vrot.lane.b32.xlu0 %v3311, 64
    %v3431 = vpop.permute.xlu0 %3430
    %v3432 = vsel %vm728, %v3431, 0
    %3434 = vmatprep.subr.mxu0 0.0
    %3435 = vmatpush1.msra.mxu0 %v3113
    %3436 = vmatprep.subr.mxu0 0.0
    %3437 = vmatpush1.msra.mxu0 %v3114
    %3438 = vmatprep.subr.mxu0 0.0
    %3439 = vmatpush1.msra.mxu0 %v3115
    %3440 = vmatprep.subr.mxu0 0.0
    %3441 = vmatpush1.msra.mxu0 %v3116
    %3442 = vmatprep.subr.mxu0 0.0
    %3443 = vmatpush1.msra.mxu0 0.0
    %3444 = vmatprep.subr.mxu0 0.0
    %3445 = vmatpush1.msra.mxu0 0.0
    %3446 = vmatprep.subr.mxu0 0.0
    %3447 = vmatpush1.msra.mxu0 0.0
    %3448 = vmatprep.subr.mxu0 0.0
    %3449 = vmatpush1.msra.mxu0 0.0
    %3450 = vmatprep.subr.mxu0 0.0
    %3451 = vmatpush1.msra.mxu0 0.0
    %3452 = vmatprep.subr.mxu0 0.0
    %3453 = vmatpush1.msra.mxu0 0.0
    %3454 = vmatprep.subr.mxu0 0.0
    %3455 = vmatpush1.msra.mxu0 0.0
    %3456 = vmatprep.subr.mxu0 0.0
    %3457 = vmatpush1.msra.mxu0 0.0
    %3458 = vmatprep.subr.mxu0 0.0
    %3459 = vmatpush1.msra.mxu0 0.0
    %3460 = vmatprep.subr.mxu0 0.0
    %3461 = vmatpush1.msra.mxu0 0.0
    %3462 = vmatprep.subr.mxu0 0.0
    %3463 = vmatpush1.msra.mxu0 0.0
    %3464 = vmatprep.subr.mxu0 0.0
    %3465 = vmatpush1.msra.mxu0 0.0
    %3466 = vmatprep.subr.mxu0 0.0
    %3467 = vmatpush1.msra.mxu0 0.0
    %3468 = vmatprep.subr.mxu0 0.0
    %3469 = vmatpush1.msra.mxu0 0.0
    %3470 = vmatprep.subr.mxu0 0.0
    %3471 = vmatpush1.msra.mxu0 0.0
    %3472 = vmatprep.subr.mxu0 0.0
    %3473 = vmatpush1.msra.mxu0 0.0
    %3474 = vmatprep.subr.mxu0 0.0
    %3475 = vmatpush1.msra.mxu0 0.0
    %3476 = vmatprep.subr.mxu0 0.0
    %3477 = vmatpush1.msra.mxu0 0.0
    %3478 = vmatprep.subr.mxu0 0.0
    %3479 = vmatpush1.msra.mxu0 0.0
    %3480 = vmatprep.subr.mxu0 0.0
    %3481 = vmatpush1.msra.mxu0 0.0
    %3482 = vmatprep.subr.mxu0 0.0
    %3483 = vmatpush1.msra.mxu0 0.0
    %3484 = vmatprep.subr.mxu0 0.0
    %3485 = vmatpush1.msra.mxu0 0.0
    %3486 = vmatprep.subr.mxu0 0.0
    %3487 = vmatpush1.msra.mxu0 0.0
    %3488 = vmatprep.subr.mxu0 0.0
    %3489 = vmatpush1.msra.mxu0 0.0
    %3490 = vmatprep.subr.mxu0 0.0
    %3491 = vmatpush1.msra.mxu0 0.0
    %3492 = vmatprep.subr.mxu0 0.0
    %3493 = vmatpush1.msra.mxu0 0.0
    %3494 = vmatprep.subr.mxu0 0.0
    %3495 = vmatpush1.msra.mxu0 0.0
    %3496 = vmatprep.subr.mxu0 0.0
    %3497 = vmatpush1.msra.mxu0 0.0
    %3498 = vmatprep.mubr.f32.mxu0 0.0
    %3499 = vmatmul.mubr.f32.gmra.mrb[0].mxu0 %v3432
    %v3500 = vpop.f32.mrb[0].mxu0
    %v3501 = vadd.f32 0.0, %v3500
    %v3502 = vpop.f32.mrb[0].mxu0
    %3503 = vdwg.mxu0
    %v3504 = vadd.f32 %v3428, %v3501
    %v3505 = vxor.u32 %v3504, 2147483648
    %v3506 = vmul.f32 %v3505, 1.442695
    %v3507 = vpow.pop %v3506
    %v3508 = vadd.f32 %v3507, 1.0
    %v3509 = vrcp.pop %v3508
    %v3510 = vmul.f32 1.0, %v3509
    %v3511 = vtanh.pop %v3504
    %v3512 = vmul.f32 %v3510, %v3305
    %3514 = vrot.lane.b32.xlu0 %v3511, 32
    %v3515 = vpop.permute.xlu0 %3514
    %v3517 = vmul.f32 %v3510, %v3515
    %3519 = vrot.lane.b32.xlu0 %v3517, 32
    %v3520 = vpop.permute.xlu0 %3519
    %v3522 = vadd.f32 %v3512, %v3520
    %v3523 = vtanh.pop %v3522
    %3525 = vrot.lane.b32.xlu0 %v3523, 32
    %v3526 = vpop.permute.xlu0 %3525
    %v3528 = vmul.f32 %v3510, %v3526
    %v3529 = vmax.f32 %v3426, 0.0
    %3531 = vrot.lane.b32.xlu0 %v3529, 64
    %v3532 = vpop.permute.xlu0 %3531
    %s3534 = scalar_lea.vmem [#allocation8], 8
    %3535 = vst.msk [vmem:[%s3534] sm:$0xff] %vm728, %v3532
    %v3536 = vmax.f32 %v3528, 0.0
    %3538 = vrot.lane.b32.xlu0 %v3536, 64
    %v3539 = vpop.permute.xlu0 %3538
    %s3541 = scalar_lea.vmem [#allocation9], 48
    %3542 = vst.msk [vmem:[%s3541] sm:$0xff] %vm728, %v3539
    %s3543 = scalar_lea.vmem [#allocation6], 16
    %v3544 = vld [vmem:[%s3543] sm:$0xff]
    %3546 = vrot.lane.b32.xlu0 %v3426, 64
    %v3547 = vpop.permute.xlu0 %3546
    %v3548 = vsel %vm728, %v3547, 0
    %3550 = vmatprep.subr.mxu0 0.0
    %3551 = vmatpush1.msra.mxu0 %v3109
    %3552 = vmatprep.subr.mxu0 0.0
    %3553 = vmatpush1.msra.mxu0 %v3110
    %3554 = vmatprep.subr.mxu0 0.0
    %3555 = vmatpush1.msra.mxu0 %v3111
    %3556 = vmatprep.subr.mxu0 0.0
    %3557 = vmatpush1.msra.mxu0 %v3112
    %3558 = vmatprep.subr.mxu0 0.0
    %3559 = vmatpush1.msra.mxu0 0.0
    %3560 = vmatprep.subr.mxu0 0.0
    %3561 = vmatpush1.msra.mxu0 0.0
    %3562 = vmatprep.subr.mxu0 0.0
    %3563 = vmatpush1.msra.mxu0 0.0
    %3564 = vmatprep.subr.mxu0 0.0
    %3565 = vmatpush1.msra.mxu0 0.0
    %3566 = vmatprep.subr.mxu0 0.0
    %3567 = vmatpush1.msra.mxu0 0.0
    %3568 = vmatprep.subr.mxu0 0.0
    %3569 = vmatpush1.msra.mxu0 0.0
    %3570 = vmatprep.subr.mxu0 0.0
    %3571 = vmatpush1.msra.mxu0 0.0
    %3572 = vmatprep.subr.mxu0 0.0
    %3573 = vmatpush1.msra.mxu0 0.0
    %3574 = vmatprep.subr.mxu0 0.0
    %3575 = vmatpush1.msra.mxu0 0.0
    %3576 = vmatprep.subr.mxu0 0.0
    %3577 = vmatpush1.msra.mxu0 0.0
    %3578 = vmatprep.subr.mxu0 0.0
    %3579 = vmatpush1.msra.mxu0 0.0
    %3580 = vmatprep.subr.mxu0 0.0
    %3581 = vmatpush1.msra.mxu0 0.0
    %3582 = vmatprep.subr.mxu0 0.0
    %3583 = vmatpush1.msra.mxu0 0.0
    %3584 = vmatprep.subr.mxu0 0.0
    %3585 = vmatpush1.msra.mxu0 0.0
    %3586 = vmatprep.subr.mxu0 0.0
    %3587 = vmatpush1.msra.mxu0 0.0
    %3588 = vmatprep.subr.mxu0 0.0
    %3589 = vmatpush1.msra.mxu0 0.0
    %3590 = vmatprep.subr.mxu0 0.0
    %3591 = vmatpush1.msra.mxu0 0.0
    %3592 = vmatprep.subr.mxu0 0.0
    %3593 = vmatpush1.msra.mxu0 0.0
    %3594 = vmatprep.subr.mxu0 0.0
    %3595 = vmatpush1.msra.mxu0 0.0
    %3596 = vmatprep.subr.mxu0 0.0
    %3597 = vmatpush1.msra.mxu0 0.0
    %3598 = vmatprep.subr.mxu0 0.0
    %3599 = vmatpush1.msra.mxu0 0.0
    %3600 = vmatprep.subr.mxu0 0.0
    %3601 = vmatpush1.msra.mxu0 0.0
    %3602 = vmatprep.subr.mxu0 0.0
    %3603 = vmatpush1.msra.mxu0 0.0
    %3604 = vmatprep.subr.mxu0 0.0
    %3605 = vmatpush1.msra.mxu0 0.0
    %3606 = vmatprep.subr.mxu0 0.0
    %3607 = vmatpush1.msra.mxu0 0.0
    %3608 = vmatprep.subr.mxu0 0.0
    %3609 = vmatpush1.msra.mxu0 0.0
    %3610 = vmatprep.subr.mxu0 0.0
    %3611 = vmatpush1.msra.mxu0 0.0
    %3612 = vmatprep.subr.mxu0 0.0
    %3613 = vmatpush1.msra.mxu0 0.0
    %3614 = vmatprep.mubr.f32.mxu0 0.0
    %3615 = vmatmul.mubr.f32.gmra.mrb[0].mxu0 %v3548
    %v3616 = vpop.f32.mrb[0].mxu0
    %v3617 = vadd.f32 0.0, %v3616
    %v3618 = vpop.f32.mrb[0].mxu0
    %3619 = vdwg.mxu0
    %v3620 = vadd.f32 %v3544, %v3617
    %v3621 = vxor.u32 %v3620, 2147483648
    %v3622 = vmul.f32 %v3621, 1.442695
    %v3623 = vpow.pop %v3622
    %v3624 = vadd.f32 %v3623, 1.0
    %v3625 = vrcp.pop %v3624
    %v3626 = vmul.f32 1.0, %v3625
    %v3627 = vtanh.pop %v3620
    %v3628 = vmul.f32 %v3626, %v3420
    %3630 = vrot.lane.b32.xlu0 %v3627, 32
    %v3631 = vpop.permute.xlu0 %3630
    %v3633 = vmul.f32 %v3626, %v3631
    %3635 = vrot.lane.b32.xlu0 %v3633, 32
    %v3636 = vpop.permute.xlu0 %3635
    %v3638 = vadd.f32 %v3628, %v3636
    %v3639 = vtanh.pop %v3638
    %3641 = vrot.lane.b32.xlu0 %v3639, 32
    %v3642 = vpop.permute.xlu0 %3641
    %v3644 = vmul.f32 %v3626, %v3642
    %s3645 = scalar_lea.vmem [#allocation7], 40
    %v3646 = vld [vmem:[%s3645] sm:$0xff]
    %3648 = vrot.lane.b32.xlu0 %v3528, 64
    %v3649 = vpop.permute.xlu0 %3648
    %v3650 = vsel %vm728, %v3649, 0
    %3652 = vmatprep.subr.mxu0 0.0
    %3653 = vmatpush1.msra.mxu0 %v3113
    %3654 = vmatprep.subr.mxu0 0.0
    %3655 = vmatpush1.msra.mxu0 %v3114
    %3656 = vmatprep.subr.mxu0 0.0
    %3657 = vmatpush1.msra.mxu0 %v3115
    %3658 = vmatprep.subr.mxu0 0.0
    %3659 = vmatpush1.msra.mxu0 %v3116
    %3660 = vmatprep.subr.mxu0 0.0
    %3661 = vmatpush1.msra.mxu0 0.0
    %3662 = vmatprep.subr.mxu0 0.0
    %3663 = vmatpush1.msra.mxu0 0.0
    %3664 = vmatprep.subr.mxu0 0.0
    %3665 = vmatpush1.msra.mxu0 0.0
    %3666 = vmatprep.subr.mxu0 0.0
    %3667 = vmatpush1.msra.mxu0 0.0
    %3668 = vmatprep.subr.mxu0 0.0
    %3669 = vmatpush1.msra.mxu0 0.0
    %3670 = vmatprep.subr.mxu0 0.0
    %3671 = vmatpush1.msra.mxu0 0.0
    %3672 = vmatprep.subr.mxu0 0.0
    %3673 = vmatpush1.msra.mxu0 0.0
    %3674 = vmatprep.subr.mxu0 0.0
    %3675 = vmatpush1.msra.mxu0 0.0
    %3676 = vmatprep.subr.mxu0 0.0
    %3677 = vmatpush1.msra.mxu0 0.0
    %3678 = vmatprep.subr.mxu0 0.0
    %3679 = vmatpush1.msra.mxu0 0.0
    %3680 = vmatprep.subr.mxu0 0.0
    %3681 = vmatpush1.msra.mxu0 0.0
    %3682 = vmatprep.subr.mxu0 0.0
    %3683 = vmatpush1.msra.mxu0 0.0
    %3684 = vmatprep.subr.mxu0 0.0
    %3685 = vmatpush1.msra.mxu0 0.0
    %3686 = vmatprep.subr.mxu0 0.0
    %3687 = vmatpush1.msra.mxu0 0.0
    %3688 = vmatprep.subr.mxu0 0.0
    %3689 = vmatpush1.msra.mxu0 0.0
    %3690 = vmatprep.subr.mxu0 0.0
    %3691 = vmatpush1.msra.mxu0 0.0
    %3692 = vmatprep.subr.mxu0 0.0
    %3693 = vmatpush1.msra.mxu0 0.0
    %3694 = vmatprep.subr.mxu0 0.0
    %3695 = vmatpush1.msra.mxu0 0.0
    %3696 = vmatprep.subr.mxu0 0.0
    %3697 = vmatpush1.msra.mxu0 0.0
    %3698 = vmatprep.subr.mxu0 0.0
    %3699 = vmatpush1.msra.mxu0 0.0
    %3700 = vmatprep.subr.mxu0 0.0
    %3701 = vmatpush1.msra.mxu0 0.0
    %3702 = vmatprep.subr.mxu0 0.0
    %3703 = vmatpush1.msra.mxu0 0.0
    %3704 = vmatprep.subr.mxu0 0.0
    %3705 = vmatpush1.msra.mxu0 0.0
    %3706 = vmatprep.subr.mxu0 0.0
    %3707 = vmatpush1.msra.mxu0 0.0
    %3708 = vmatprep.subr.mxu0 0.0
    %3709 = vmatpush1.msra.mxu0 0.0
    %3710 = vmatprep.subr.mxu0 0.0
    %3711 = vmatpush1.msra.mxu0 0.0
    %3712 = vmatprep.subr.mxu0 0.0
    %3713 = vmatpush1.msra.mxu0 0.0
    %3714 = vmatprep.subr.mxu0 0.0
    %3715 = vmatpush1.msra.mxu0 0.0
    %3716 = vmatprep.mubr.f32.mxu0 0.0
    %3717 = vmatmul.mubr.f32.gmra.mrb[0].mxu0 %v3650
    %v3718 = vpop.f32.mrb[0].mxu0
    %v3719 = vadd.f32 0.0, %v3718
    %v3720 = vpop.f32.mrb[0].mxu0
    %3721 = vdwg.mxu0
    %v3722 = vadd.f32 %v3646, %v3719
    %v3723 = vxor.u32 %v3722, 2147483648
    %v3724 = vmul.f32 %v3723, 1.442695
    %v3725 = vpow.pop %v3724
    %v3726 = vadd.f32 %v3725, 1.0
    %v3727 = vrcp.pop %v3726
    %v3728 = vmul.f32 1.0, %v3727
    %v3729 = vtanh.pop %v3722
    %v3730 = vmul.f32 %v3728, %v3522
    %3732 = vrot.lane.b32.xlu0 %v3729, 32
    %v3733 = vpop.permute.xlu0 %3732
    %v3735 = vmul.f32 %v3728, %v3733
    %3737 = vrot.lane.b32.xlu0 %v3735, 32
    %v3738 = vpop.permute.xlu0 %3737
    %v3740 = vadd.f32 %v3730, %v3738
    %v3741 = vtanh.pop %v3740
    %3743 = vrot.lane.b32.xlu0 %v3741, 32
    %v3744 = vpop.permute.xlu0 %3743
    %v3746 = vmul.f32 %v3728, %v3744
    %v3747 = vmax.f32 %v3644, 0.0
    %3749 = vrot.lane.b32.xlu0 %v3747, 64
    %v3750 = vpop.permute.xlu0 %3749
    %s3752 = scalar_lea.vmem [#allocation8], 16
    %3753 = vst.msk [vmem:[%s3752] sm:$0xff] %vm728, %v3750
    %v3754 = vmax.f32 %v3746, 0.0
    %3756 = vrot.lane.b32.xlu0 %v3754, 64
    %v3757 = vpop.permute.xlu0 %3756
    %s3759 = scalar_lea.vmem [#allocation9], 40
    %3760 = vst.msk [vmem:[%s3759] sm:$0xff] %vm728, %v3757
    %s3761 = scalar_lea.vmem [#allocation6], 24
    %v3762 = vld [vmem:[%s3761] sm:$0xff]
    %3764 = vrot.lane.b32.xlu0 %v3644, 64
    %v3765 = vpop.permute.xlu0 %3764
    %v3766 = vsel %vm728, %v3765, 0
    %3768 = vmatprep.subr.mxu0 0.0
    %3769 = vmatpush1.msra.mxu0 %v3109
    %3770 = vmatprep.subr.mxu0 0.0
    %3771 = vmatpush1.msra.mxu0 %v3110
    %3772 = vmatprep.subr.mxu0 0.0
    %3773 = vmatpush1.msra.mxu0 %v3111
    %3774 = vmatprep.subr.mxu0 0.0
    %3775 = vmatpush1.msra.mxu0 %v3112
    %3776 = vmatprep.subr.mxu0 0.0
    %3777 = vmatpush1.msra.mxu0 0.0
    %3778 = vmatprep.subr.mxu0 0.0
    %3779 = vmatpush1.msra.mxu0 0.0
    %3780 = vmatprep.subr.mxu0 0.0
    %3781 = vmatpush1.msra.mxu0 0.0
    %3782 = vmatprep.subr.mxu0 0.0
    %3783 = vmatpush1.msra.mxu0 0.0
    %3784 = vmatprep.subr.mxu0 0.0
    %3785 = vmatpush1.msra.mxu0 0.0
    %3786 = vmatprep.subr.mxu0 0.0
    %3787 = vmatpush1.msra.mxu0 0.0
    %3788 = vmatprep.subr.mxu0 0.0
    %3789 = vmatpush1.msra.mxu0 0.0
    %3790 = vmatprep.subr.mxu0 0.0
    %3791 = vmatpush1.msra.mxu0 0.0
    %3792 = vmatprep.subr.mxu0 0.0
    %3793 = vmatpush1.msra.mxu0 0.0
    %3794 = vmatprep.subr.mxu0 0.0
    %3795 = vmatpush1.msra.mxu0 0.0
    %3796 = vmatprep.subr.mxu0 0.0
    %3797 = vmatpush1.msra.mxu0 0.0
    %3798 = vmatprep.subr.mxu0 0.0
    %3799 = vmatpush1.msra.mxu0 0.0
    %3800 = vmatprep.subr.mxu0 0.0
    %3801 = vmatpush1.msra.mxu0 0.0
    %3802 = vmatprep.subr.mxu0 0.0
    %3803 = vmatpush1.msra.mxu0 0.0
    %3804 = vmatprep.subr.mxu0 0.0
    %3805 = vmatpush1.msra.mxu0 0.0
    %3806 = vmatprep.subr.mxu0 0.0
    %3807 = vmatpush1.msra.mxu0 0.0
    %3808 = vmatprep.subr.mxu0 0.0
    %3809 = vmatpush1.msra.mxu0 0.0
    %3810 = vmatprep.subr.mxu0 0.0
    %3811 = vmatpush1.msra.mxu0 0.0
    %3812 = vmatprep.subr.mxu0 0.0
    %3813 = vmatpush1.msra.mxu0 0.0
    %3814 = vmatprep.subr.mxu0 0.0
    %3815 = vmatpush1.msra.mxu0 0.0
    %3816 = vmatprep.subr.mxu0 0.0
    %3817 = vmatpush1.msra.mxu0 0.0
    %3818 = vmatprep.subr.mxu0 0.0
    %3819 = vmatpush1.msra.mxu0 0.0
    %3820 = vmatprep.subr.mxu0 0.0
    %3821 = vmatpush1.msra.mxu0 0.0
    %3822 = vmatprep.subr.mxu0 0.0
    %3823 = vmatpush1.msra.mxu0 0.0
    %3824 = vmatprep.subr.mxu0 0.0
    %3825 = vmatpush1.msra.mxu0 0.0
    %3826 = vmatprep.subr.mxu0 0.0
    %3827 = vmatpush1.msra.mxu0 0.0
    %3828 = vmatprep.subr.mxu0 0.0
    %3829 = vmatpush1.msra.mxu0 0.0
    %3830 = vmatprep.subr.mxu0 0.0
    %3831 = vmatpush1.msra.mxu0 0.0
    %3832 = vmatprep.mubr.f32.mxu0 0.0
    %3833 = vmatmul.mubr.f32.gmra.mrb[0].mxu0 %v3766
    %v3834 = vpop.f32.mrb[0].mxu0
    %v3835 = vadd.f32 0.0, %v3834
    %v3836 = vpop.f32.mrb[0].mxu0
    %3837 = vdwg.mxu0
    %v3838 = vadd.f32 %v3762, %v3835
    %v3839 = vxor.u32 %v3838, 2147483648
    %v3840 = vmul.f32 %v3839, 1.442695
    %v3841 = vpow.pop %v3840
    %v3842 = vadd.f32 %v3841, 1.0
    %v3843 = vrcp.pop %v3842
    %v3844 = vmul.f32 1.0, %v3843
    %v3845 = vtanh.pop %v3838
    %v3846 = vmul.f32 %v3844, %v3638
    %3848 = vrot.lane.b32.xlu0 %v3845, 32
    %v3849 = vpop.permute.xlu0 %3848
    %v3851 = vmul.f32 %v3844, %v3849
    %3853 = vrot.lane.b32.xlu0 %v3851, 32
    %v3854 = vpop.permute.xlu0 %3853
    %v3856 = vadd.f32 %v3846, %v3854
    %v3857 = vtanh.pop %v3856
    %3859 = vrot.lane.b32.xlu0 %v3857, 32
    %v3860 = vpop.permute.xlu0 %3859
    %v3862 = vmul.f32 %v3844, %v3860
    %s3863 = scalar_lea.vmem [#allocation7], 32
    %v3864 = vld [vmem:[%s3863] sm:$0xff]
    %3866 = vrot.lane.b32.xlu0 %v3746, 64
    %v3867 = vpop.permute.xlu0 %3866
    %v3868 = vsel %vm728, %v3867, 0
    %3870 = vmatprep.subr.mxu0 0.0
    %3871 = vmatpush1.msra.mxu0 %v3113
    %3872 = vmatprep.subr.mxu0 0.0
    %3873 = vmatpush1.msra.mxu0 %v3114
    %3874 = vmatprep.subr.mxu0 0.0
    %3875 = vmatpush1.msra.mxu0 %v3115
    %3876 = vmatprep.subr.mxu0 0.0
    %3877 = vmatpush1.msra.mxu0 %v3116
    %3878 = vmatprep.subr.mxu0 0.0
    %3879 = vmatpush1.msra.mxu0 0.0
    %3880 = vmatprep.subr.mxu0 0.0
    %3881 = vmatpush1.msra.mxu0 0.0
    %3882 = vmatprep.subr.mxu0 0.0
    %3883 = vmatpush1.msra.mxu0 0.0
    %3884 = vmatprep.subr.mxu0 0.0
    %3885 = vmatpush1.msra.mxu0 0.0
    %3886 = vmatprep.subr.mxu0 0.0
    %3887 = vmatpush1.msra.mxu0 0.0
    %3888 = vmatprep.subr.mxu0 0.0
    %3889 = vmatpush1.msra.mxu0 0.0
    %3890 = vmatprep.subr.mxu0 0.0
    %3891 = vmatpush1.msra.mxu0 0.0
    %3892 = vmatprep.subr.mxu0 0.0
    %3893 = vmatpush1.msra.mxu0 0.0
    %3894 = vmatprep.subr.mxu0 0.0
    %3895 = vmatpush1.msra.mxu0 0.0
    %3896 = vmatprep.subr.mxu0 0.0
    %3897 = vmatpush1.msra.mxu0 0.0
    %3898 = vmatprep.subr.mxu0 0.0
    %3899 = vmatpush1.msra.mxu0 0.0
    %3900 = vmatprep.subr.mxu0 0.0
    %3901 = vmatpush1.msra.mxu0 0.0
    %3902 = vmatprep.subr.mxu0 0.0
    %3903 = vmatpush1.msra.mxu0 0.0
    %3904 = vmatprep.subr.mxu0 0.0
    %3905 = vmatpush1.msra.mxu0 0.0
    %3906 = vmatprep.subr.mxu0 0.0
    %3907 = vmatpush1.msra.mxu0 0.0
    %3908 = vmatprep.subr.mxu0 0.0
    %3909 = vmatpush1.msra.mxu0 0.0
    %3910 = vmatprep.subr.mxu0 0.0
    %3911 = vmatpush1.msra.mxu0 0.0
    %3912 = vmatprep.subr.mxu0 0.0
    %3913 = vmatpush1.msra.mxu0 0.0
    %3914 = vmatprep.subr.mxu0 0.0
    %3915 = vmatpush1.msra.mxu0 0.0
    %3916 = vmatprep.subr.mxu0 0.0
    %3917 = vmatpush1.msra.mxu0 0.0
    %3918 = vmatprep.subr.mxu0 0.0
    %3919 = vmatpush1.msra.mxu0 0.0
    %3920 = vmatprep.subr.mxu0 0.0
    %3921 = vmatpush1.msra.mxu0 0.0
    %3922 = vmatprep.subr.mxu0 0.0
    %3923 = vmatpush1.msra.mxu0 0.0
    %3924 = vmatprep.subr.mxu0 0.0
    %3925 = vmatpush1.msra.mxu0 0.0
    %3926 = vmatprep.subr.mxu0 0.0
    %3927 = vmatpush1.msra.mxu0 0.0
    %3928 = vmatprep.subr.mxu0 0.0
    %3929 = vmatpush1.msra.mxu0 0.0
    %3930 = vmatprep.subr.mxu0 0.0
    %3931 = vmatpush1.msra.mxu0 0.0
    %3932 = vmatprep.subr.mxu0 0.0
    %3933 = vmatpush1.msra.mxu0 0.0
    %3934 = vmatprep.mubr.f32.mxu0 0.0
    %3935 = vmatmul.mubr.f32.gmra.mrb[0].mxu0 %v3868
    %v3936 = vpop.f32.mrb[0].mxu0
    %v3937 = vadd.f32 0.0, %v3936
    %v3938 = vpop.f32.mrb[0].mxu0
    %3939 = vdwg.mxu0
    %v3940 = vadd.f32 %v3864, %v3937
    %v3941 = vxor.u32 %v3940, 2147483648
    %v3942 = vmul.f32 %v3941, 1.442695
    %v3943 = vpow.pop %v3942
    %v3944 = vadd.f32 %v3943, 1.0
    %v3945 = vrcp.pop %v3944
    %v3946 = vmul.f32 1.0, %v3945
    %v3947 = vtanh.pop %v3940
    %v3948 = vmul.f32 %v3946, %v3740
    %3950 = vrot.lane.b32.xlu0 %v3947, 32
    %v3951 = vpop.permute.xlu0 %3950
    %v3953 = vmul.f32 %v3946, %v3951
    %3955 = vrot.lane.b32.xlu0 %v3953, 32
    %v3956 = vpop.permute.xlu0 %3955
    %v3958 = vadd.f32 %v3948, %v3956
    %v3959 = vtanh.pop %v3958
    %3961 = vrot.lane.b32.xlu0 %v3959, 32
    %v3962 = vpop.permute.xlu0 %3961
    %v3964 = vmul.f32 %v3946, %v3962
    %v3965 = vmax.f32 %v3862, 0.0
    %3967 = vrot.lane.b32.xlu0 %v3965, 64
    %v3968 = vpop.permute.xlu0 %3967
    %s3970 = scalar_lea.vmem [#allocation8], 24
    %3971 = vst.msk [vmem:[%s3970] sm:$0xff] %vm728, %v3968
    %v3972 = vmax.f32 %v3964, 0.0
    %3974 = vrot.lane.b32.xlu0 %v3972, 64
    %v3975 = vpop.permute.xlu0 %3974
    %s3977 = scalar_lea.vmem [#allocation9], 32
    %3978 = vst.msk [vmem:[%s3977] sm:$0xff] %vm728, %v3975
    %s3979 = scalar_lea.vmem [#allocation6], 32
    %v3980 = vld [vmem:[%s3979] sm:$0xff]
    %3982 = vrot.lane.b32.xlu0 %v3862, 64
    %v3983 = vpop.permute.xlu0 %3982
    %v3984 = vsel %vm728, %v3983, 0
    %3986 = vmatprep.subr.mxu0 0.0
    %3987 = vmatpush1.msra.mxu0 %v3109
    %3988 = vmatprep.subr.mxu0 0.0
    %3989 = vmatpush1.msra.mxu0 %v3110
    %3990 = vmatprep.subr.mxu0 0.0
    %3991 = vmatpush1.msra.mxu0 %v3111
    %3992 = vmatprep.subr.mxu0 0.0
    %3993 = vmatpush1.msra.mxu0 %v3112
    %3994 = vmatprep.subr.mxu0 0.0
    %3995 = vmatpush1.msra.mxu0 0.0
    %3996 = vmatprep.subr.mxu0 0.0
    %3997 = vmatpush1.msra.mxu0 0.0
    %3998 = vmatprep.subr.mxu0 0.0
    %3999 = vmatpush1.msra.mxu0 0.0
    %4000 = vmatprep.subr.mxu0 0.0
    %4001 = vmatpush1.msra.mxu0 0.0
    %4002 = vmatprep.subr.mxu0 0.0
    %4003 = vmatpush1.msra.mxu0 0.0
    %4004 = vmatprep.subr.mxu0 0.0
    %4005 = vmatpush1.msra.mxu0 0.0
    %4006 = vmatprep.subr.mxu0 0.0
    %4007 = vmatpush1.msra.mxu0 0.0
    %4008 = vmatprep.subr.mxu0 0.0
    %4009 = vmatpush1.msra.mxu0 0.0
    %4010 = vmatprep.subr.mxu0 0.0
    %4011 = vmatpush1.msra.mxu0 0.0
    %4012 = vmatprep.subr.mxu0 0.0
    %4013 = vmatpush1.msra.mxu0 0.0
    %4014 = vmatprep.subr.mxu0 0.0
    %4015 = vmatpush1.msra.mxu0 0.0
    %4016 = vmatprep.subr.mxu0 0.0
    %4017 = vmatpush1.msra.mxu0 0.0
    %4018 = vmatprep.subr.mxu0 0.0
    %4019 = vmatpush1.msra.mxu0 0.0
    %4020 = vmatprep.subr.mxu0 0.0
    %4021 = vmatpush1.msra.mxu0 0.0
    %4022 = vmatprep.subr.mxu0 0.0
    %4023 = vmatpush1.msra.mxu0 0.0
    %4024 = vmatprep.subr.mxu0 0.0
    %4025 = vmatpush1.msra.mxu0 0.0
    %4026 = vmatprep.subr.mxu0 0.0
    %4027 = vmatpush1.msra.mxu0 0.0
    %4028 = vmatprep.subr.mxu0 0.0
    %4029 = vmatpush1.msra.mxu0 0.0
    %4030 = vmatprep.subr.mxu0 0.0
    %4031 = vmatpush1.msra.mxu0 0.0
    %4032 = vmatprep.subr.mxu0 0.0
    %4033 = vmatpush1.msra.mxu0 0.0
    %4034 = vmatprep.subr.mxu0 0.0
    %4035 = vmatpush1.msra.mxu0 0.0
    %4036 = vmatprep.subr.mxu0 0.0
    %4037 = vmatpush1.msra.mxu0 0.0
    %4038 = vmatprep.subr.mxu0 0.0
    %4039 = vmatpush1.msra.mxu0 0.0
    %4040 = vmatprep.subr.mxu0 0.0
    %4041 = vmatpush1.msra.mxu0 0.0
    %4042 = vmatprep.subr.mxu0 0.0
    %4043 = vmatpush1.msra.mxu0 0.0
    %4044 = vmatprep.subr.mxu0 0.0
    %4045 = vmatpush1.msra.mxu0 0.0
    %4046 = vmatprep.subr.mxu0 0.0
    %4047 = vmatpush1.msra.mxu0 0.0
    %4048 = vmatprep.subr.mxu0 0.0
    %4049 = vmatpush1.msra.mxu0 0.0
    %4050 = vmatprep.mubr.f32.mxu0 0.0
    %4051 = vmatmul.mubr.f32.gmra.mrb[0].mxu0 %v3984
    %v4052 = vpop.f32.mrb[0].mxu0
    %v4053 = vadd.f32 0.0, %v4052
    %v4054 = vpop.f32.mrb[0].mxu0
    %4055 = vdwg.mxu0
    %v4056 = vadd.f32 %v3980, %v4053
    %v4057 = vxor.u32 %v4056, 2147483648
    %v4058 = vmul.f32 %v4057, 1.442695
    %v4059 = vpow.pop %v4058
    %v4060 = vadd.f32 %v4059, 1.0
    %v4061 = vrcp.pop %v4060
    %v4062 = vmul.f32 1.0, %v4061
    %v4063 = vtanh.pop %v4056
    %v4064 = vmul.f32 %v4062, %v3856
    %4066 = vrot.lane.b32.xlu0 %v4063, 32
    %v4067 = vpop.permute.xlu0 %4066
    %v4069 = vmul.f32 %v4062, %v4067
    %4071 = vrot.lane.b32.xlu0 %v4069, 32
    %v4072 = vpop.permute.xlu0 %4071
    %v4074 = vadd.f32 %v4064, %v4072
    %v4075 = vtanh.pop %v4074
    %4077 = vrot.lane.b32.xlu0 %v4075, 32
    %v4078 = vpop.permute.xlu0 %4077
    %v4080 = vmul.f32 %v4062, %v4078
    %s4081 = scalar_lea.vmem [#allocation7], 24
    %v4082 = vld [vmem:[%s4081] sm:$0xff]
    %4084 = vrot.lane.b32.xlu0 %v3964, 64
    %v4085 = vpop.permute.xlu0 %4084
    %v4086 = vsel %vm728, %v4085, 0
    %4088 = vmatprep.subr.mxu0 0.0
    %4089 = vmatpush1.msra.mxu0 %v3113
    %4090 = vmatprep.subr.mxu0 0.0
    %4091 = vmatpush1.msra.mxu0 %v3114
    %4092 = vmatprep.subr.mxu0 0.0
    %4093 = vmatpush1.msra.mxu0 %v3115
    %4094 = vmatprep.subr.mxu0 0.0
    %4095 = vmatpush1.msra.mxu0 %v3116
    %4096 = vmatprep.subr.mxu0 0.0
    %4097 = vmatpush1.msra.mxu0 0.0
    %4098 = vmatprep.subr.mxu0 0.0
    %4099 = vmatpush1.msra.mxu0 0.0
    %4100 = vmatprep.subr.mxu0 0.0
    %4101 = vmatpush1.msra.mxu0 0.0
    %4102 = vmatprep.subr.mxu0 0.0
    %4103 = vmatpush1.msra.mxu0 0.0
    %4104 = vmatprep.subr.mxu0 0.0
    %4105 = vmatpush1.msra.mxu0 0.0
    %4106 = vmatprep.subr.mxu0 0.0
    %4107 = vmatpush1.msra.mxu0 0.0
    %4108 = vmatprep.subr.mxu0 0.0
    %4109 = vmatpush1.msra.mxu0 0.0
    %4110 = vmatprep.subr.mxu0 0.0
    %4111 = vmatpush1.msra.mxu0 0.0
    %4112 = vmatprep.subr.mxu0 0.0
    %4113 = vmatpush1.msra.mxu0 0.0
    %4114 = vmatprep.subr.mxu0 0.0
    %4115 = vmatpush1.msra.mxu0 0.0
    %4116 = vmatprep.subr.mxu0 0.0
    %4117 = vmatpush1.msra.mxu0 0.0
    %4118 = vmatprep.subr.mxu0 0.0
    %4119 = vmatpush1.msra.mxu0 0.0
    %4120 = vmatprep.subr.mxu0 0.0
    %4121 = vmatpush1.msra.mxu0 0.0
    %4122 = vmatprep.subr.mxu0 0.0
    %4123 = vmatpush1.msra.mxu0 0.0
    %4124 = vmatprep.subr.mxu0 0.0
    %4125 = vmatpush1.msra.mxu0 0.0
    %4126 = vmatprep.subr.mxu0 0.0
    %4127 = vmatpush1.msra.mxu0 0.0
    %4128 = vmatprep.subr.mxu0 0.0
    %4129 = vmatpush1.msra.mxu0 0.0
    %4130 = vmatprep.subr.mxu0 0.0
    %4131 = vmatpush1.msra.mxu0 0.0
    %4132 = vmatprep.subr.mxu0 0.0
    %4133 = vmatpush1.msra.mxu0 0.0
    %4134 = vmatprep.subr.mxu0 0.0
    %4135 = vmatpush1.msra.mxu0 0.0
    %4136 = vmatprep.subr.mxu0 0.0
    %4137 = vmatpush1.msra.mxu0 0.0
    %4138 = vmatprep.subr.mxu0 0.0
    %4139 = vmatpush1.msra.mxu0 0.0
    %4140 = vmatprep.subr.mxu0 0.0
    %4141 = vmatpush1.msra.mxu0 0.0
    %4142 = vmatprep.subr.mxu0 0.0
    %4143 = vmatpush1.msra.mxu0 0.0
    %4144 = vmatprep.subr.mxu0 0.0
    %4145 = vmatpush1.msra.mxu0 0.0
    %4146 = vmatprep.subr.mxu0 0.0
    %4147 = vmatpush1.msra.mxu0 0.0
    %4148 = vmatprep.subr.mxu0 0.0
    %4149 = vmatpush1.msra.mxu0 0.0
    %4150 = vmatprep.subr.mxu0 0.0
    %4151 = vmatpush1.msra.mxu0 0.0
    %4152 = vmatprep.mubr.f32.mxu0 0.0
    %4153 = vmatmul.mubr.f32.gmra.mrb[0].mxu0 %v4086
    %v4154 = vpop.f32.mrb[0].mxu0
    %v4155 = vadd.f32 0.0, %v4154
    %v4156 = vpop.f32.mrb[0].mxu0
    %4157 = vdwg.mxu0
    %v4158 = vadd.f32 %v4082, %v4155
    %v4159 = vxor.u32 %v4158, 2147483648
    %v4160 = vmul.f32 %v4159, 1.442695
    %v4161 = vpow.pop %v4160
    %v4162 = vadd.f32 %v4161, 1.0
    %v4163 = vrcp.pop %v4162
    %v4164 = vmul.f32 1.0, %v4163
    %v4165 = vtanh.pop %v4158
    %v4166 = vmul.f32 %v4164, %v3958
    %4168 = vrot.lane.b32.xlu0 %v4165, 32
    %v4169 = vpop.permute.xlu0 %4168
    %v4171 = vmul.f32 %v4164, %v4169
    %4173 = vrot.lane.b32.xlu0 %v4171, 32
    %v4174 = vpop.permute.xlu0 %4173
    %v4176 = vadd.f32 %v4166, %v4174
    %v4177 = vtanh.pop %v4176
    %4179 = vrot.lane.b32.xlu0 %v4177, 32
    %v4180 = vpop.permute.xlu0 %4179
    %v4182 = vmul.f32 %v4164, %v4180
    %v4183 = vmax.f32 %v4080, 0.0
    %4185 = vrot.lane.b32.xlu0 %v4183, 64
    %v4186 = vpop.permute.xlu0 %4185
    %s4188 = scalar_lea.vmem [#allocation8], 32
    %4189 = vst.msk [vmem:[%s4188] sm:$0xff] %vm728, %v4186
    %v4190 = vmax.f32 %v4182, 0.0
    %4192 = vrot.lane.b32.xlu0 %v4190, 64
    %v4193 = vpop.permute.xlu0 %4192
    %s4195 = scalar_lea.vmem [#allocation9], 24
    %4196 = vst.msk [vmem:[%s4195] sm:$0xff] %vm728, %v4193
    %s4197 = scalar_lea.vmem [#allocation6], 40
    %v4198 = vld [vmem:[%s4197] sm:$0xff]
    %4200 = vrot.lane.b32.xlu0 %v4080, 64
    %v4201 = vpop.permute.xlu0 %4200
    %v4202 = vsel %vm728, %v4201, 0
    %4204 = vmatprep.subr.mxu0 0.0
    %4205 = vmatpush1.msra.mxu0 %v3109
    %4206 = vmatprep.subr.mxu0 0.0
    %4207 = vmatpush1.msra.mxu0 %v3110
    %4208 = vmatprep.subr.mxu0 0.0
    %4209 = vmatpush1.msra.mxu0 %v3111
    %4210 = vmatprep.subr.mxu0 0.0
    %4211 = vmatpush1.msra.mxu0 %v3112
    %4212 = vmatprep.subr.mxu0 0.0
    %4213 = vmatpush1.msra.mxu0 0.0
    %4214 = vmatprep.subr.mxu0 0.0
    %4215 = vmatpush1.msra.mxu0 0.0
    %4216 = vmatprep.subr.mxu0 0.0
    %4217 = vmatpush1.msra.mxu0 0.0
    %4218 = vmatprep.subr.mxu0 0.0
    %4219 = vmatpush1.msra.mxu0 0.0
    %4220 = vmatprep.subr.mxu0 0.0
    %4221 = vmatpush1.msra.mxu0 0.0
    %4222 = vmatprep.subr.mxu0 0.0
    %4223 = vmatpush1.msra.mxu0 0.0
    %4224 = vmatprep.subr.mxu0 0.0
    %4225 = vmatpush1.msra.mxu0 0.0
    %4226 = vmatprep.subr.mxu0 0.0
    %4227 = vmatpush1.msra.mxu0 0.0
    %4228 = vmatprep.subr.mxu0 0.0
    %4229 = vmatpush1.msra.mxu0 0.0
    %4230 = vmatprep.subr.mxu0 0.0
    %4231 = vmatpush1.msra.mxu0 0.0
    %4232 = vmatprep.subr.mxu0 0.0
    %4233 = vmatpush1.msra.mxu0 0.0
    %4234 = vmatprep.subr.mxu0 0.0
    %4235 = vmatpush1.msra.mxu0 0.0
    %4236 = vmatprep.subr.mxu0 0.0
    %4237 = vmatpush1.msra.mxu0 0.0
    %4238 = vmatprep.subr.mxu0 0.0
    %4239 = vmatpush1.msra.mxu0 0.0
    %4240 = vmatprep.subr.mxu0 0.0
    %4241 = vmatpush1.msra.mxu0 0.0
    %4242 = vmatprep.subr.mxu0 0.0
    %4243 = vmatpush1.msra.mxu0 0.0
    %4244 = vmatprep.subr.mxu0 0.0
    %4245 = vmatpush1.msra.mxu0 0.0
    %4246 = vmatprep.subr.mxu0 0.0
    %4247 = vmatpush1.msra.mxu0 0.0
    %4248 = vmatprep.subr.mxu0 0.0
    %4249 = vmatpush1.msra.mxu0 0.0
    %4250 = vmatprep.subr.mxu0 0.0
    %4251 = vmatpush1.msra.mxu0 0.0
    %4252 = vmatprep.subr.mxu0 0.0
    %4253 = vmatpush1.msra.mxu0 0.0
    %4254 = vmatprep.subr.mxu0 0.0
    %4255 = vmatpush1.msra.mxu0 0.0
    %4256 = vmatprep.subr.mxu0 0.0
    %4257 = vmatpush1.msra.mxu0 0.0
    %4258 = vmatprep.subr.mxu0 0.0
    %4259 = vmatpush1.msra.mxu0 0.0
    %4260 = vmatprep.subr.mxu0 0.0
    %4261 = vmatpush1.msra.mxu0 0.0
    %4262 = vmatprep.subr.mxu0 0.0
    %4263 = vmatpush1.msra.mxu0 0.0
    %4264 = vmatprep.subr.mxu0 0.0
    %4265 = vmatpush1.msra.mxu0 0.0
    %4266 = vmatprep.subr.mxu0 0.0
    %4267 = vmatpush1.msra.mxu0 0.0
    %4268 = vmatprep.mubr.f32.mxu0 0.0
    %4269 = vmatmul.mubr.f32.gmra.mrb[0].mxu0 %v4202
    %v4270 = vpop.f32.mrb[0].mxu0
    %v4271 = vadd.f32 0.0, %v4270
    %v4272 = vpop.f32.mrb[0].mxu0
    %4273 = vdwg.mxu0
    %v4274 = vadd.f32 %v4198, %v4271
    %v4275 = vxor.u32 %v4274, 2147483648
    %v4276 = vmul.f32 %v4275, 1.442695
    %v4277 = vpow.pop %v4276
    %v4278 = vadd.f32 %v4277, 1.0
    %v4279 = vrcp.pop %v4278
    %v4280 = vmul.f32 1.0, %v4279
    %v4281 = vtanh.pop %v4274
    %v4282 = vmul.f32 %v4280, %v4074
    %4284 = vrot.lane.b32.xlu0 %v4281, 32
    %v4285 = vpop.permute.xlu0 %4284
    %v4287 = vmul.f32 %v4280, %v4285
    %4289 = vrot.lane.b32.xlu0 %v4287, 32
    %v4290 = vpop.permute.xlu0 %4289
    %v4292 = vadd.f32 %v4282, %v4290
    %v4293 = vtanh.pop %v4292
    %4295 = vrot.lane.b32.xlu0 %v4293, 32
    %v4296 = vpop.permute.xlu0 %4295
    %v4298 = vmul.f32 %v4280, %v4296
    %s4299 = scalar_lea.vmem [#allocation7], 16
    %v4300 = vld [vmem:[%s4299] sm:$0xff]
    %4302 = vrot.lane.b32.xlu0 %v4182, 64
    %v4303 = vpop.permute.xlu0 %4302
    %v4304 = vsel %vm728, %v4303, 0
    %4306 = vmatprep.subr.mxu0 0.0
    %4307 = vmatpush1.msra.mxu0 %v3113
    %4308 = vmatprep.subr.mxu0 0.0
    %4309 = vmatpush1.msra.mxu0 %v3114
    %4310 = vmatprep.subr.mxu0 0.0
    %4311 = vmatpush1.msra.mxu0 %v3115
    %4312 = vmatprep.subr.mxu0 0.0
    %4313 = vmatpush1.msra.mxu0 %v3116
    %4314 = vmatprep.subr.mxu0 0.0
    %4315 = vmatpush1.msra.mxu0 0.0
    %4316 = vmatprep.subr.mxu0 0.0
    %4317 = vmatpush1.msra.mxu0 0.0
    %4318 = vmatprep.subr.mxu0 0.0
    %4319 = vmatpush1.msra.mxu0 0.0
    %4320 = vmatprep.subr.mxu0 0.0
    %4321 = vmatpush1.msra.mxu0 0.0
    %4322 = vmatprep.subr.mxu0 0.0
    %4323 = vmatpush1.msra.mxu0 0.0
    %4324 = vmatprep.subr.mxu0 0.0
    %4325 = vmatpush1.msra.mxu0 0.0
    %4326 = vmatprep.subr.mxu0 0.0
    %4327 = vmatpush1.msra.mxu0 0.0
    %4328 = vmatprep.subr.mxu0 0.0
    %4329 = vmatpush1.msra.mxu0 0.0
    %4330 = vmatprep.subr.mxu0 0.0
    %4331 = vmatpush1.msra.mxu0 0.0
    %4332 = vmatprep.subr.mxu0 0.0
    %4333 = vmatpush1.msra.mxu0 0.0
    %4334 = vmatprep.subr.mxu0 0.0
    %4335 = vmatpush1.msra.mxu0 0.0
    %4336 = vmatprep.subr.mxu0 0.0
    %4337 = vmatpush1.msra.mxu0 0.0
    %4338 = vmatprep.subr.mxu0 0.0
    %4339 = vmatpush1.msra.mxu0 0.0
    %4340 = vmatprep.subr.mxu0 0.0
    %4341 = vmatpush1.msra.mxu0 0.0
    %4342 = vmatprep.subr.mxu0 0.0
    %4343 = vmatpush1.msra.mxu0 0.0
    %4344 = vmatprep.subr.mxu0 0.0
    %4345 = vmatpush1.msra.mxu0 0.0
    %4346 = vmatprep.subr.mxu0 0.0
    %4347 = vmatpush1.msra.mxu0 0.0
    %4348 = vmatprep.subr.mxu0 0.0
    %4349 = vmatpush1.msra.mxu0 0.0
    %4350 = vmatprep.subr.mxu0 0.0
    %4351 = vmatpush1.msra.mxu0 0.0
    %4352 = vmatprep.subr.mxu0 0.0
    %4353 = vmatpush1.msra.mxu0 0.0
    %4354 = vmatprep.subr.mxu0 0.0
    %4355 = vmatpush1.msra.mxu0 0.0
    %4356 = vmatprep.subr.mxu0 0.0
    %4357 = vmatpush1.msra.mxu0 0.0
    %4358 = vmatprep.subr.mxu0 0.0
    %4359 = vmatpush1.msra.mxu0 0.0
    %4360 = vmatprep.subr.mxu0 0.0
    %4361 = vmatpush1.msra.mxu0 0.0
    %4362 = vmatprep.subr.mxu0 0.0
    %4363 = vmatpush1.msra.mxu0 0.0
    %4364 = vmatprep.subr.mxu0 0.0
    %4365 = vmatpush1.msra.mxu0 0.0
    %4366 = vmatprep.subr.mxu0 0.0
    %4367 = vmatpush1.msra.mxu0 0.0
    %4368 = vmatprep.subr.mxu0 0.0
    %4369 = vmatpush1.msra.mxu0 0.0
    %4370 = vmatprep.mubr.f32.mxu0 0.0
    %4371 = vmatmul.mubr.f32.gmra.mrb[0].mxu0 %v4304
    %v4372 = vpop.f32.mrb[0].mxu0
    %v4373 = vadd.f32 0.0, %v4372
    %v4374 = vpop.f32.mrb[0].mxu0
    %4375 = vdwg.mxu0
    %v4376 = vadd.f32 %v4300, %v4373
    %v4377 = vxor.u32 %v4376, 2147483648
    %v4378 = vmul.f32 %v4377, 1.442695
    %v4379 = vpow.pop %v4378
    %v4380 = vadd.f32 %v4379, 1.0
    %v4381 = vrcp.pop %v4380
    %v4382 = vmul.f32 1.0, %v4381
    %v4383 = vtanh.pop %v4376
    %v4384 = vmul.f32 %v4382, %v4176
    %4386 = vrot.lane.b32.xlu0 %v4383, 32
    %v4387 = vpop.permute.xlu0 %4386
    %v4389 = vmul.f32 %v4382, %v4387
    %4391 = vrot.lane.b32.xlu0 %v4389, 32
    %v4392 = vpop.permute.xlu0 %4391
    %v4394 = vadd.f32 %v4384, %v4392
    %v4395 = vtanh.pop %v4394
    %4397 = vrot.lane.b32.xlu0 %v4395, 32
    %v4398 = vpop.permute.xlu0 %4397
    %v4400 = vmul.f32 %v4382, %v4398
    %v4401 = vmax.f32 %v4298, 0.0
    %4403 = vrot.lane.b32.xlu0 %v4401, 64
    %v4404 = vpop.permute.xlu0 %4403
    %s4406 = scalar_lea.vmem [#allocation8], 40
    %4407 = vst.msk [vmem:[%s4406] sm:$0xff] %vm728, %v4404
    %v4408 = vmax.f32 %v4400, 0.0
    %4410 = vrot.lane.b32.xlu0 %v4408, 64
    %v4411 = vpop.permute.xlu0 %4410
    %s4413 = scalar_lea.vmem [#allocation9], 16
    %4414 = vst.msk [vmem:[%s4413] sm:$0xff] %vm728, %v4411
    %s4415 = scalar_lea.vmem [#allocation6], 48
    %v4416 = vld [vmem:[%s4415] sm:$0xff]
    %4418 = vrot.lane.b32.xlu0 %v4298, 64
    %v4419 = vpop.permute.xlu0 %4418
    %v4420 = vsel %vm728, %v4419, 0
    %4422 = vmatprep.subr.mxu0 0.0
    %4423 = vmatpush1.msra.mxu0 %v3109
    %4424 = vmatprep.subr.mxu0 0.0
    %4425 = vmatpush1.msra.mxu0 %v3110
    %4426 = vmatprep.subr.mxu0 0.0
    %4427 = vmatpush1.msra.mxu0 %v3111
    %4428 = vmatprep.subr.mxu0 0.0
    %4429 = vmatpush1.msra.mxu0 %v3112
    %4430 = vmatprep.subr.mxu0 0.0
    %4431 = vmatpush1.msra.mxu0 0.0
    %4432 = vmatprep.subr.mxu0 0.0
    %4433 = vmatpush1.msra.mxu0 0.0
    %4434 = vmatprep.subr.mxu0 0.0
    %4435 = vmatpush1.msra.mxu0 0.0
    %4436 = vmatprep.subr.mxu0 0.0
    %4437 = vmatpush1.msra.mxu0 0.0
    %4438 = vmatprep.subr.mxu0 0.0
    %4439 = vmatpush1.msra.mxu0 0.0
    %4440 = vmatprep.subr.mxu0 0.0
    %4441 = vmatpush1.msra.mxu0 0.0
    %4442 = vmatprep.subr.mxu0 0.0
    %4443 = vmatpush1.msra.mxu0 0.0
    %4444 = vmatprep.subr.mxu0 0.0
    %4445 = vmatpush1.msra.mxu0 0.0
    %4446 = vmatprep.subr.mxu0 0.0
    %4447 = vmatpush1.msra.mxu0 0.0
    %4448 = vmatprep.subr.mxu0 0.0
    %4449 = vmatpush1.msra.mxu0 0.0
    %4450 = vmatprep.subr.mxu0 0.0
    %4451 = vmatpush1.msra.mxu0 0.0
    %4452 = vmatprep.subr.mxu0 0.0
    %4453 = vmatpush1.msra.mxu0 0.0
    %4454 = vmatprep.subr.mxu0 0.0
    %4455 = vmatpush1.msra.mxu0 0.0
    %4456 = vmatprep.subr.mxu0 0.0
    %4457 = vmatpush1.msra.mxu0 0.0
    %4458 = vmatprep.subr.mxu0 0.0
    %4459 = vmatpush1.msra.mxu0 0.0
    %4460 = vmatprep.subr.mxu0 0.0
    %4461 = vmatpush1.msra.mxu0 0.0
    %4462 = vmatprep.subr.mxu0 0.0
    %4463 = vmatpush1.msra.mxu0 0.0
    %4464 = vmatprep.subr.mxu0 0.0
    %4465 = vmatpush1.msra.mxu0 0.0
    %4466 = vmatprep.subr.mxu0 0.0
    %4467 = vmatpush1.msra.mxu0 0.0
    %4468 = vmatprep.subr.mxu0 0.0
    %4469 = vmatpush1.msra.mxu0 0.0
    %4470 = vmatprep.subr.mxu0 0.0
    %4471 = vmatpush1.msra.mxu0 0.0
    %4472 = vmatprep.subr.mxu0 0.0
    %4473 = vmatpush1.msra.mxu0 0.0
    %4474 = vmatprep.subr.mxu0 0.0
    %4475 = vmatpush1.msra.mxu0 0.0
    %4476 = vmatprep.subr.mxu0 0.0
    %4477 = vmatpush1.msra.mxu0 0.0
    %4478 = vmatprep.subr.mxu0 0.0
    %4479 = vmatpush1.msra.mxu0 0.0
    %4480 = vmatprep.subr.mxu0 0.0
    %4481 = vmatpush1.msra.mxu0 0.0
    %4482 = vmatprep.subr.mxu0 0.0
    %4483 = vmatpush1.msra.mxu0 0.0
    %4484 = vmatprep.subr.mxu0 0.0
    %4485 = vmatpush1.msra.mxu0 0.0
    %4486 = vmatprep.mubr.f32.mxu0 0.0
    %4487 = vmatmul.mubr.f32.gmra.mrb[0].mxu0 %v4420
    %v4488 = vpop.f32.mrb[0].mxu0
    %v4489 = vadd.f32 0.0, %v4488
    %v4490 = vpop.f32.mrb[0].mxu0
    %4491 = vdwg.mxu0
    %v4492 = vadd.f32 %v4416, %v4489
    %v4493 = vxor.u32 %v4492, 2147483648
    %v4494 = vmul.f32 %v4493, 1.442695
    %v4495 = vpow.pop %v4494
    %v4496 = vadd.f32 %v4495, 1.0
    %v4497 = vrcp.pop %v4496
    %v4498 = vmul.f32 1.0, %v4497
    %v4499 = vtanh.pop %v4492
    %v4500 = vmul.f32 %v4498, %v4292
    %4502 = vrot.lane.b32.xlu0 %v4499, 32
    %v4503 = vpop.permute.xlu0 %4502
    %v4505 = vmul.f32 %v4498, %v4503
    %4507 = vrot.lane.b32.xlu0 %v4505, 32
    %v4508 = vpop.permute.xlu0 %4507
    %v4510 = vadd.f32 %v4500, %v4508
    %v4511 = vtanh.pop %v4510
    %4513 = vrot.lane.b32.xlu0 %v4511, 32
    %v4514 = vpop.permute.xlu0 %4513
    %v4516 = vmul.f32 %v4498, %v4514
    %s4517 = scalar_lea.vmem [#allocation7], 8
    %v4518 = vld [vmem:[%s4517] sm:$0xff]
    %4520 = vrot.lane.b32.xlu0 %v4400, 64
    %v4521 = vpop.permute.xlu0 %4520
    %v4522 = vsel %vm728, %v4521, 0
    %4524 = vmatprep.subr.mxu0 0.0
    %4525 = vmatpush1.msra.mxu0 %v3113
    %4526 = vmatprep.subr.mxu0 0.0
    %4527 = vmatpush1.msra.mxu0 %v3114
    %4528 = vmatprep.subr.mxu0 0.0
    %4529 = vmatpush1.msra.mxu0 %v3115
    %4530 = vmatprep.subr.mxu0 0.0
    %4531 = vmatpush1.msra.mxu0 %v3116
    %4532 = vmatprep.subr.mxu0 0.0
    %4533 = vmatpush1.msra.mxu0 0.0
    %4534 = vmatprep.subr.mxu0 0.0
    %4535 = vmatpush1.msra.mxu0 0.0
    %4536 = vmatprep.subr.mxu0 0.0
    %4537 = vmatpush1.msra.mxu0 0.0
    %4538 = vmatprep.subr.mxu0 0.0
    %4539 = vmatpush1.msra.mxu0 0.0
    %4540 = vmatprep.subr.mxu0 0.0
    %4541 = vmatpush1.msra.mxu0 0.0
    %4542 = vmatprep.subr.mxu0 0.0
    %4543 = vmatpush1.msra.mxu0 0.0
    %4544 = vmatprep.subr.mxu0 0.0
    %4545 = vmatpush1.msra.mxu0 0.0
    %4546 = vmatprep.subr.mxu0 0.0
    %4547 = vmatpush1.msra.mxu0 0.0
    %4548 = vmatprep.subr.mxu0 0.0
    %4549 = vmatpush1.msra.mxu0 0.0
    %4550 = vmatprep.subr.mxu0 0.0
    %4551 = vmatpush1.msra.mxu0 0.0
    %4552 = vmatprep.subr.mxu0 0.0
    %4553 = vmatpush1.msra.mxu0 0.0
    %4554 = vmatprep.subr.mxu0 0.0
    %4555 = vmatpush1.msra.mxu0 0.0
    %4556 = vmatprep.subr.mxu0 0.0
    %4557 = vmatpush1.msra.mxu0 0.0
    %4558 = vmatprep.subr.mxu0 0.0
    %4559 = vmatpush1.msra.mxu0 0.0
    %4560 = vmatprep.subr.mxu0 0.0
    %4561 = vmatpush1.msra.mxu0 0.0
    %4562 = vmatprep.subr.mxu0 0.0
    %4563 = vmatpush1.msra.mxu0 0.0
    %4564 = vmatprep.subr.mxu0 0.0
    %4565 = vmatpush1.msra.mxu0 0.0
    %4566 = vmatprep.subr.mxu0 0.0
    %4567 = vmatpush1.msra.mxu0 0.0
    %4568 = vmatprep.subr.mxu0 0.0
    %4569 = vmatpush1.msra.mxu0 0.0
    %4570 = vmatprep.subr.mxu0 0.0
    %4571 = vmatpush1.msra.mxu0 0.0
    %4572 = vmatprep.subr.mxu0 0.0
    %4573 = vmatpush1.msra.mxu0 0.0
    %4574 = vmatprep.subr.mxu0 0.0
    %4575 = vmatpush1.msra.mxu0 0.0
    %4576 = vmatprep.subr.mxu0 0.0
    %4577 = vmatpush1.msra.mxu0 0.0
    %4578 = vmatprep.subr.mxu0 0.0
    %4579 = vmatpush1.msra.mxu0 0.0
    %4580 = vmatprep.subr.mxu0 0.0
    %4581 = vmatpush1.msra.mxu0 0.0
    %4582 = vmatprep.subr.mxu0 0.0
    %4583 = vmatpush1.msra.mxu0 0.0
    %4584 = vmatprep.subr.mxu0 0.0
    %4585 = vmatpush1.msra.mxu0 0.0
    %4586 = vmatprep.subr.mxu0 0.0
    %4587 = vmatpush1.msra.mxu0 0.0
    %4588 = vmatprep.mubr.f32.mxu0 0.0
    %4589 = vmatmul.mubr.f32.gmra.mrb[0].mxu0 %v4522
    %v4590 = vpop.f32.mrb[0].mxu0
    %v4591 = vadd.f32 0.0, %v4590
    %v4592 = vpop.f32.mrb[0].mxu0
    %4593 = vdwg.mxu0
    %v4594 = vadd.f32 %v4518, %v4591
    %v4595 = vxor.u32 %v4594, 2147483648
    %v4596 = vmul.f32 %v4595, 1.442695
    %v4597 = vpow.pop %v4596
    %v4598 = vadd.f32 %v4597, 1.0
    %v4599 = vrcp.pop %v4598
    %v4600 = vmul.f32 1.0, %v4599
    %v4601 = vtanh.pop %v4594
    %v4602 = vmul.f32 %v4600, %v4394
    %4604 = vrot.lane.b32.xlu0 %v4601, 32
    %v4605 = vpop.permute.xlu0 %4604
    %v4607 = vmul.f32 %v4600, %v4605
    %4609 = vrot.lane.b32.xlu0 %v4607, 32
    %v4610 = vpop.permute.xlu0 %4609
    %v4612 = vadd.f32 %v4602, %v4610
    %v4613 = vtanh.pop %v4612
    %4615 = vrot.lane.b32.xlu0 %v4613, 32
    %v4616 = vpop.permute.xlu0 %4615
    %v4618 = vmul.f32 %v4600, %v4616
    %v4619 = vmax.f32 %v4516, 0.0
    %4621 = vrot.lane.b32.xlu0 %v4619, 64
    %v4622 = vpop.permute.xlu0 %4621
    %s4624 = scalar_lea.vmem [#allocation8], 48
    %4625 = vst.msk [vmem:[%s4624] sm:$0xff] %vm728, %v4622
    %v4626 = vmax.f32 %v4618, 0.0
    %4628 = vrot.lane.b32.xlu0 %v4626, 64
    %v4629 = vpop.permute.xlu0 %4628
    %s4631 = scalar_lea.vmem [#allocation9], 8
    %4632 = vst.msk [vmem:[%s4631] sm:$0xff] %vm728, %v4629
    %s4633 = scalar_lea.vmem [#allocation6], 56
    %v4634 = vld [vmem:[%s4633] sm:$0xff]
    %4636 = vrot.lane.b32.xlu0 %v4516, 64
    %v4637 = vpop.permute.xlu0 %4636
    %v4638 = vsel %vm728, %v4637, 0
    %4640 = vmatprep.subr.mxu0 0.0
    %4641 = vmatpush1.msra.mxu0 %v3109
    %4642 = vmatprep.subr.mxu0 0.0
    %4643 = vmatpush1.msra.mxu0 %v3110
    %4644 = vmatprep.subr.mxu0 0.0
    %4645 = vmatpush1.msra.mxu0 %v3111
    %4646 = vmatprep.subr.mxu0 0.0
    %4647 = vmatpush1.msra.mxu0 %v3112
    %4648 = vmatprep.subr.mxu0 0.0
    %4649 = vmatpush1.msra.mxu0 0.0
    %4650 = vmatprep.subr.mxu0 0.0
    %4651 = vmatpush1.msra.mxu0 0.0
    %4652 = vmatprep.subr.mxu0 0.0
    %4653 = vmatpush1.msra.mxu0 0.0
    %4654 = vmatprep.subr.mxu0 0.0
    %4655 = vmatpush1.msra.mxu0 0.0
    %4656 = vmatprep.subr.mxu0 0.0
    %4657 = vmatpush1.msra.mxu0 0.0
    %4658 = vmatprep.subr.mxu0 0.0
    %4659 = vmatpush1.msra.mxu0 0.0
    %4660 = vmatprep.subr.mxu0 0.0
    %4661 = vmatpush1.msra.mxu0 0.0
    %4662 = vmatprep.subr.mxu0 0.0
    %4663 = vmatpush1.msra.mxu0 0.0
    %4664 = vmatprep.subr.mxu0 0.0
    %4665 = vmatpush1.msra.mxu0 0.0
    %4666 = vmatprep.subr.mxu0 0.0
    %4667 = vmatpush1.msra.mxu0 0.0
    %4668 = vmatprep.subr.mxu0 0.0
    %4669 = vmatpush1.msra.mxu0 0.0
    %4670 = vmatprep.subr.mxu0 0.0
    %4671 = vmatpush1.msra.mxu0 0.0
    %4672 = vmatprep.subr.mxu0 0.0
    %4673 = vmatpush1.msra.mxu0 0.0
    %4674 = vmatprep.subr.mxu0 0.0
    %4675 = vmatpush1.msra.mxu0 0.0
    %4676 = vmatprep.subr.mxu0 0.0
    %4677 = vmatpush1.msra.mxu0 0.0
    %4678 = vmatprep.subr.mxu0 0.0
    %4679 = vmatpush1.msra.mxu0 0.0
    %4680 = vmatprep.subr.mxu0 0.0
    %4681 = vmatpush1.msra.mxu0 0.0
    %4682 = vmatprep.subr.mxu0 0.0
    %4683 = vmatpush1.msra.mxu0 0.0
    %4684 = vmatprep.subr.mxu0 0.0
    %4685 = vmatpush1.msra.mxu0 0.0
    %4686 = vmatprep.subr.mxu0 0.0
    %4687 = vmatpush1.msra.mxu0 0.0
    %4688 = vmatprep.subr.mxu0 0.0
    %4689 = vmatpush1.msra.mxu0 0.0
    %4690 = vmatprep.subr.mxu0 0.0
    %4691 = vmatpush1.msra.mxu0 0.0
    %4692 = vmatprep.subr.mxu0 0.0
    %4693 = vmatpush1.msra.mxu0 0.0
    %4694 = vmatprep.subr.mxu0 0.0
    %4695 = vmatpush1.msra.mxu0 0.0
    %4696 = vmatprep.subr.mxu0 0.0
    %4697 = vmatpush1.msra.mxu0 0.0
    %4698 = vmatprep.subr.mxu0 0.0
    %4699 = vmatpush1.msra.mxu0 0.0
    %4700 = vmatprep.subr.mxu0 0.0
    %4701 = vmatpush1.msra.mxu0 0.0
    %4702 = vmatprep.subr.mxu0 0.0
    %4703 = vmatpush1.msra.mxu0 0.0
    %4704 = vmatprep.mubr.f32.mxu0 0.0
    %4705 = vmatmul.mubr.f32.gmra.mrb[0].mxu0 %v4638
    %v4706 = vpop.f32.mrb[0].mxu0
    %v4707 = vadd.f32 0.0, %v4706
    %v4708 = vpop.f32.mrb[0].mxu0
    %4709 = vdwg.mxu0
    %v4710 = vadd.f32 %v4634, %v4707
    %v4711 = vxor.u32 %v4710, 2147483648
    %v4712 = vmul.f32 %v4711, 1.442695
    %v4713 = vpow.pop %v4712
    %v4714 = vadd.f32 %v4713, 1.0
    %v4715 = vrcp.pop %v4714
    %v4716 = vmul.f32 1.0, %v4715
    %v4717 = vtanh.pop %v4710
    %v4718 = vmul.f32 %v4716, %v4510
    %4720 = vrot.lane.b32.xlu0 %v4717, 32
    %v4721 = vpop.permute.xlu0 %4720
    %v4723 = vmul.f32 %v4716, %v4721
    %4725 = vrot.lane.b32.xlu0 %v4723, 32
    %v4726 = vpop.permute.xlu0 %4725
    %v4728 = vadd.f32 %v4718, %v4726
    %v4729 = vtanh.pop %v4728
    %4731 = vrot.lane.b32.xlu0 %v4729, 32
    %v4732 = vpop.permute.xlu0 %4731
    %v4734 = vmul.f32 %v4716, %v4732
    %v4735 = vld [vmem:[#allocation7] sm:$0xff]
    %4737 = vrot.lane.b32.xlu0 %v4618, 64
    %v4738 = vpop.permute.xlu0 %4737
    %v4739 = vsel %vm728, %v4738, 0
    %4741 = vmatprep.subr.mxu0 0.0
    %4742 = vmatpush1.msra.mxu0 %v3113
    %4743 = vmatprep.subr.mxu0 0.0
    %4744 = vmatpush1.msra.mxu0 %v3114
    %4745 = vmatprep.subr.mxu0 0.0
    %4746 = vmatpush1.msra.mxu0 %v3115
    %4747 = vmatprep.subr.mxu0 0.0
    %4748 = vmatpush1.msra.mxu0 %v3116
    %4749 = vmatprep.subr.mxu0 0.0
    %4750 = vmatpush1.msra.mxu0 0.0
    %4751 = vmatprep.subr.mxu0 0.0
    %4752 = vmatpush1.msra.mxu0 0.0
    %4753 = vmatprep.subr.mxu0 0.0
    %4754 = vmatpush1.msra.mxu0 0.0
    %4755 = vmatprep.subr.mxu0 0.0
    %4756 = vmatpush1.msra.mxu0 0.0
    %4757 = vmatprep.subr.mxu0 0.0
    %4758 = vmatpush1.msra.mxu0 0.0
    %4759 = vmatprep.subr.mxu0 0.0
    %4760 = vmatpush1.msra.mxu0 0.0
    %4761 = vmatprep.subr.mxu0 0.0
    %4762 = vmatpush1.msra.mxu0 0.0
    %4763 = vmatprep.subr.mxu0 0.0
    %4764 = vmatpush1.msra.mxu0 0.0
    %4765 = vmatprep.subr.mxu0 0.0
    %4766 = vmatpush1.msra.mxu0 0.0
    %4767 = vmatprep.subr.mxu0 0.0
    %4768 = vmatpush1.msra.mxu0 0.0
    %4769 = vmatprep.subr.mxu0 0.0
    %4770 = vmatpush1.msra.mxu0 0.0
    %4771 = vmatprep.subr.mxu0 0.0
    %4772 = vmatpush1.msra.mxu0 0.0
    %4773 = vmatprep.subr.mxu0 0.0
    %4774 = vmatpush1.msra.mxu0 0.0
    %4775 = vmatprep.subr.mxu0 0.0
    %4776 = vmatpush1.msra.mxu0 0.0
    %4777 = vmatprep.subr.mxu0 0.0
    %4778 = vmatpush1.msra.mxu0 0.0
    %4779 = vmatprep.subr.mxu0 0.0
    %4780 = vmatpush1.msra.mxu0 0.0
    %4781 = vmatprep.subr.mxu0 0.0
    %4782 = vmatpush1.msra.mxu0 0.0
    %4783 = vmatprep.subr.mxu0 0.0
    %4784 = vmatpush1.msra.mxu0 0.0
    %4785 = vmatprep.subr.mxu0 0.0
    %4786 = vmatpush1.msra.mxu0 0.0
    %4787 = vmatprep.subr.mxu0 0.0
    %4788 = vmatpush1.msra.mxu0 0.0
    %4789 = vmatprep.subr.mxu0 0.0
    %4790 = vmatpush1.msra.mxu0 0.0
    %4791 = vmatprep.subr.mxu0 0.0
    %4792 = vmatpush1.msra.mxu0 0.0
    %4793 = vmatprep.subr.mxu0 0.0
    %4794 = vmatpush1.msra.mxu0 0.0
    %4795 = vmatprep.subr.mxu0 0.0
    %4796 = vmatpush1.msra.mxu0 0.0
    %4797 = vmatprep.subr.mxu0 0.0
    %4798 = vmatpush1.msra.mxu0 0.0
    %4799 = vmatprep.subr.mxu0 0.0
    %4800 = vmatpush1.msra.mxu0 0.0
    %4801 = vmatprep.subr.mxu0 0.0
    %4802 = vmatpush1.msra.mxu0 0.0
    %4803 = vmatprep.subr.mxu0 0.0
    %4804 = vmatpush1.msra.mxu0 0.0
    %4805 = vmatprep.mubr.f32.mxu0 0.0
    %4806 = vmatmul.mubr.f32.gmra.mrb[0].mxu0 %v4739
    %v4807 = vpop.f32.mrb[0].mxu0
    %v4808 = vadd.f32 0.0, %v4807
    %v4809 = vpop.f32.mrb[0].mxu0
    %4810 = vdwg.mxu0
    %v4811 = vadd.f32 %v4735, %v4808
    %v4812 = vxor.u32 %v4811, 2147483648
    %v4813 = vmul.f32 %v4812, 1.442695
    %v4814 = vpow.pop %v4813
    %v4815 = vadd.f32 %v4814, 1.0
    %v4816 = vrcp.pop %v4815
    %v4817 = vmul.f32 1.0, %v4816
    %v4818 = vtanh.pop %v4811
    %v4819 = vmul.f32 %v4817, %v4612
    %4821 = vrot.lane.b32.xlu0 %v4818, 32
    %v4822 = vpop.permute.xlu0 %4821
    %v4824 = vmul.f32 %v4817, %v4822
    %4826 = vrot.lane.b32.xlu0 %v4824, 32
    %v4827 = vpop.permute.xlu0 %4826
    %v4829 = vadd.f32 %v4819, %v4827
    %v4830 = vtanh.pop %v4829
    %4832 = vrot.lane.b32.xlu0 %v4830, 32
    %v4833 = vpop.permute.xlu0 %4832
    %v4835 = vmul.f32 %v4817, %v4833
    %v4836 = vmax.f32 %v4734, 0.0
    %4838 = vrot.lane.b32.xlu0 %v4836, 64
    %v4839 = vpop.permute.xlu0 %4838
    %s4841 = scalar_lea.vmem [#allocation8], 56
    %4842 = vst.msk [vmem:[%s4841] sm:$0xff] %vm728, %v4839
    %v4843 = vmax.f32 %v4835, 0.0
    %4845 = vrot.lane.b32.xlu0 %v4843, 64
    %v4846 = vpop.permute.xlu0 %4845
    %4848 = vst.msk [vmem:[#allocation9] sm:$0xff] %vm728, %v4846
    %v4849 = vld [vmem:[#allocation8] sm:$0xff]
    %v4850 = vld [vmem:[#allocation8 + $0x8] sm:$0xff]
    %v4851 = vld [vmem:[#allocation8 + $0x10] sm:$0xff]
    %v4852 = vld [vmem:[#allocation8 + $0x18] sm:$0xff]
    %v4853 = vld [vmem:[#allocation8 + $0x20] sm:$0xff]
    %v4854 = vld [vmem:[#allocation8 + $0x28] sm:$0xff]
    %v4855 = vld [vmem:[#allocation8 + $0x30] sm:$0xff]
    %v4856 = vld [vmem:[#allocation8 + $0x38] sm:$0xff]
    %v4857 = vld [vmem:[#allocation9] sm:$0xff]
    %v4858 = vld [vmem:[#allocation9 + $0x8] sm:$0xff]
    %v4859 = vld [vmem:[#allocation9 + $0x10] sm:$0xff]
    %v4860 = vld [vmem:[#allocation9 + $0x18] sm:$0xff]
    %v4861 = vld [vmem:[#allocation9 + $0x20] sm:$0xff]
    %v4862 = vld [vmem:[#allocation9 + $0x28] sm:$0xff]
    %v4863 = vld [vmem:[#allocation9 + $0x30] sm:$0xff]
    %v4864 = vld [vmem:[#allocation9 + $0x38] sm:$0xff]
    %v4865 = vld [vmem:[#allocation22] sm:$0xff]
    %v4866 = vld [vmem:[#allocation22 + $0x8] sm:$0xff]
    %v4867 = vld [vmem:[#allocation22 + $0x10] sm:$0xff]
    %v4868 = vld [vmem:[#allocation22 + $0x18] sm:$0xff]
    %v4869 = vld [vmem:[#allocation22 + $0x20] sm:$0xff]
    %v4870 = vld [vmem:[#allocation22 + $0x28] sm:$0xff]
    %v4871 = vld [vmem:[#allocation22 + $0x30] sm:$0xff]
    %v4872 = vld [vmem:[#allocation22 + $0x38] sm:$0xff]
    %v4874 = vsel %vm728, %v4857, 0
    %v4877 = vsel %vm728, %v4858, 0
    %v4880 = vsel %vm728, %v4859, 0
    %v4883 = vsel %vm728, %v4860, 0
    %v4886 = vsel %vm728, %v4861, 0
    %v4889 = vsel %vm728, %v4862, 0
    %v4892 = vsel %vm728, %v4863, 0
    %v4895 = vsel %vm728, %v4864, 0
    %4897 = vmatprep.subr.mxu0 0.0
    %4898 = vmatpush1.msra.mxu0 %v4869
    %4899 = vmatprep.subr.mxu0 0.0
    %4900 = vmatpush1.msra.mxu0 %v4870
    %4901 = vmatprep.subr.mxu0 0.0
    %4902 = vmatpush1.msra.mxu0 %v4871
    %4903 = vmatprep.subr.mxu0 0.0
    %4904 = vmatpush1.msra.mxu0 %v4872
    %4905 = vmatprep.subr.mxu0 0.0
    %4906 = vmatpush1.msra.mxu0 0.0
    %4907 = vmatprep.subr.mxu0 0.0
    %4908 = vmatpush1.msra.mxu0 0.0
    %4909 = vmatprep.subr.mxu0 0.0
    %4910 = vmatpush1.msra.mxu0 0.0
    %4911 = vmatprep.subr.mxu0 0.0
    %4912 = vmatpush1.msra.mxu0 0.0
    %4913 = vmatprep.subr.mxu0 0.0
    %4914 = vmatpush1.msra.mxu0 0.0
    %4915 = vmatprep.subr.mxu0 0.0
    %4916 = vmatpush1.msra.mxu0 0.0
    %4917 = vmatprep.subr.mxu0 0.0
    %4918 = vmatpush1.msra.mxu0 0.0
    %4919 = vmatprep.subr.mxu0 0.0
    %4920 = vmatpush1.msra.mxu0 0.0
    %4921 = vmatprep.subr.mxu0 0.0
    %4922 = vmatpush1.msra.mxu0 0.0
    %4923 = vmatprep.subr.mxu0 0.0
    %4924 = vmatpush1.msra.mxu0 0.0
    %4925 = vmatprep.subr.mxu0 0.0
    %4926 = vmatpush1.msra.mxu0 0.0
    %4927 = vmatprep.subr.mxu0 0.0
    %4928 = vmatpush1.msra.mxu0 0.0
    %4929 = vmatprep.subr.mxu0 0.0
    %4930 = vmatpush1.msra.mxu0 0.0
    %4931 = vmatprep.subr.mxu0 0.0
    %4932 = vmatpush1.msra.mxu0 0.0
    %4933 = vmatprep.subr.mxu0 0.0
    %4934 = vmatpush1.msra.mxu0 0.0
    %4935 = vmatprep.subr.mxu0 0.0
    %4936 = vmatpush1.msra.mxu0 0.0
    %4937 = vmatprep.subr.mxu0 0.0
    %4938 = vmatpush1.msra.mxu0 0.0
    %4939 = vmatprep.subr.mxu0 0.0
    %4940 = vmatpush1.msra.mxu0 0.0
    %4941 = vmatprep.subr.mxu0 0.0
    %4942 = vmatpush1.msra.mxu0 0.0
    %4943 = vmatprep.subr.mxu0 0.0
    %4944 = vmatpush1.msra.mxu0 0.0
    %4945 = vmatprep.subr.mxu0 0.0
    %4946 = vmatpush1.msra.mxu0 0.0
    %4947 = vmatprep.subr.mxu0 0.0
    %4948 = vmatpush1.msra.mxu0 0.0
    %4949 = vmatprep.subr.mxu0 0.0
    %4950 = vmatpush1.msra.mxu0 0.0
    %4951 = vmatprep.subr.mxu0 0.0
    %4952 = vmatpush1.msra.mxu0 0.0
    %4953 = vmatprep.subr.mxu0 0.0
    %4954 = vmatpush1.msra.mxu0 0.0
    %4955 = vmatprep.subr.mxu0 0.0
    %4956 = vmatpush1.msra.mxu0 0.0
    %4957 = vmatprep.subr.mxu0 0.0
    %4958 = vmatpush1.msra.mxu0 0.0
    %4959 = vmatprep.subr.mxu0 0.0
    %4960 = vmatpush1.msra.mxu0 0.0
    %4961 = vmatprep.mubr.f32.mxu0 0.0
    %4962 = vmatmul.mubr.f32.gmra.mrb[0].mxu0 %v4874
    %v4963 = vpop.f32.mrb[0].mxu0
    %v4964 = vadd.f32 0.0, %v4963
    %v4965 = vpop.f32.mrb[0].mxu0
    %4966 = vmatprep.mubr.f32.mxu0 0.0
    %4967 = vmatmul.mubr.f32.gmra.mrb[0].mxu0 %v4877
    %v4968 = vpop.f32.mrb[0].mxu0
    %v4969 = vadd.f32 0.0, %v4968
    %v4970 = vpop.f32.mrb[0].mxu0
    %4971 = vmatprep.mubr.f32.mxu0 0.0
    %4972 = vmatmul.mubr.f32.gmra.mrb[0].mxu0 %v4880
    %v4973 = vpop.f32.mrb[0].mxu0
    %v4974 = vadd.f32 0.0, %v4973
    %v4975 = vpop.f32.mrb[0].mxu0
    %4976 = vmatprep.mubr.f32.mxu0 0.0
    %4977 = vmatmul.mubr.f32.gmra.mrb[0].mxu0 %v4883
    %v4978 = vpop.f32.mrb[0].mxu0
    %v4979 = vadd.f32 0.0, %v4978
    %v4980 = vpop.f32.mrb[0].mxu0
    %4981 = vmatprep.mubr.f32.mxu0 0.0
    %4982 = vmatmul.mubr.f32.gmra.mrb[0].mxu0 %v4886
    %v4983 = vpop.f32.mrb[0].mxu0
    %v4984 = vadd.f32 0.0, %v4983
    %v4985 = vpop.f32.mrb[0].mxu0
    %4986 = vmatprep.mubr.f32.mxu0 0.0
    %4987 = vmatmul.mubr.f32.gmra.mrb[0].mxu0 %v4889
    %v4988 = vpop.f32.mrb[0].mxu0
    %v4989 = vadd.f32 0.0, %v4988
    %v4990 = vpop.f32.mrb[0].mxu0
    %4991 = vmatprep.mubr.f32.mxu0 0.0
    %4992 = vmatmul.mubr.f32.gmra.mrb[0].mxu0 %v4892
    %v4993 = vpop.f32.mrb[0].mxu0
    %v4994 = vadd.f32 0.0, %v4993
    %v4995 = vpop.f32.mrb[0].mxu0
    %4996 = vmatprep.mubr.f32.mxu0 0.0
    %4997 = vmatmul.mubr.f32.gmra.mrb[0].mxu0 %v4895
    %v4998 = vpop.f32.mrb[0].mxu0
    %v4999 = vadd.f32 0.0, %v4998
    %v5000 = vpop.f32.mrb[0].mxu0
    %5001 = vdwg.mxu0
    %v5003 = vsel %vm728, %v4849, 0
    %v5006 = vsel %vm728, %v4850, 0
    %v5009 = vsel %vm728, %v4851, 0
    %v5012 = vsel %vm728, %v4852, 0
    %v5015 = vsel %vm728, %v4853, 0
    %v5018 = vsel %vm728, %v4854, 0
    %v5021 = vsel %vm728, %v4855, 0
    %v5024 = vsel %vm728, %v4856, 0
    %5026 = vmatprep.subr.mxu0 0.0
    %5027 = vmatpush1.msra.mxu0 %v4865
    %5028 = vmatprep.subr.mxu0 0.0
    %5029 = vmatpush1.msra.mxu0 %v4866
    %5030 = vmatprep.subr.mxu0 0.0
    %5031 = vmatpush1.msra.mxu0 %v4867
    %5032 = vmatprep.subr.mxu0 0.0
    %5033 = vmatpush1.msra.mxu0 %v4868
    %5034 = vmatprep.subr.mxu0 0.0
    %5035 = vmatpush1.msra.mxu0 0.0
    %5036 = vmatprep.subr.mxu0 0.0
    %5037 = vmatpush1.msra.mxu0 0.0
    %5038 = vmatprep.subr.mxu0 0.0
    %5039 = vmatpush1.msra.mxu0 0.0
    %5040 = vmatprep.subr.mxu0 0.0
    %5041 = vmatpush1.msra.mxu0 0.0
    %5042 = vmatprep.subr.mxu0 0.0
    %5043 = vmatpush1.msra.mxu0 0.0
    %5044 = vmatprep.subr.mxu0 0.0
    %5045 = vmatpush1.msra.mxu0 0.0
    %5046 = vmatprep.subr.mxu0 0.0
    %5047 = vmatpush1.msra.mxu0 0.0
    %5048 = vmatprep.subr.mxu0 0.0
    %5049 = vmatpush1.msra.mxu0 0.0
    %5050 = vmatprep.subr.mxu0 0.0
    %5051 = vmatpush1.msra.mxu0 0.0
    %5052 = vmatprep.subr.mxu0 0.0
    %5053 = vmatpush1.msra.mxu0 0.0
    %5054 = vmatprep.subr.mxu0 0.0
    %5055 = vmatpush1.msra.mxu0 0.0
    %5056 = vmatprep.subr.mxu0 0.0
    %5057 = vmatpush1.msra.mxu0 0.0
    %5058 = vmatprep.subr.mxu0 0.0
    %5059 = vmatpush1.msra.mxu0 0.0
    %5060 = vmatprep.subr.mxu0 0.0
    %5061 = vmatpush1.msra.mxu0 0.0
    %5062 = vmatprep.subr.mxu0 0.0
    %5063 = vmatpush1.msra.mxu0 0.0
    %5064 = vmatprep.subr.mxu0 0.0
    %5065 = vmatpush1.msra.mxu0 0.0
    %5066 = vmatprep.subr.mxu0 0.0
    %5067 = vmatpush1.msra.mxu0 0.0
    %5068 = vmatprep.subr.mxu0 0.0
    %5069 = vmatpush1.msra.mxu0 0.0
    %5070 = vmatprep.subr.mxu0 0.0
    %5071 = vmatpush1.msra.mxu0 0.0
    %5072 = vmatprep.subr.mxu0 0.0
    %5073 = vmatpush1.msra.mxu0 0.0
    %5074 = vmatprep.subr.mxu0 0.0
    %5075 = vmatpush1.msra.mxu0 0.0
    %5076 = vmatprep.subr.mxu0 0.0
    %5077 = vmatpush1.msra.mxu0 0.0
    %5078 = vmatprep.subr.mxu0 0.0
    %5079 = vmatpush1.msra.mxu0 0.0
    %5080 = vmatprep.subr.mxu0 0.0
    %5081 = vmatpush1.msra.mxu0 0.0
    %5082 = vmatprep.subr.mxu0 0.0
    %5083 = vmatpush1.msra.mxu0 0.0
    %5084 = vmatprep.subr.mxu0 0.0
    %5085 = vmatpush1.msra.mxu0 0.0
    %5086 = vmatprep.subr.mxu0 0.0
    %5087 = vmatpush1.msra.mxu0 0.0
    %5088 = vmatprep.subr.mxu0 0.0
    %5089 = vmatpush1.msra.mxu0 0.0
    %5090 = vmatprep.mubr.f32.mxu0 0.0
    %5091 = vmatmul.mubr.f32.gmra.mrb[0].mxu0 %v5003
    %v5092 = vpop.f32.mrb[0].mxu0
    %v5093 = vadd.f32 %v4964, %v5092
    %v5094 = vpop.f32.mrb[0].mxu0
    %5095 = vmatprep.mubr.f32.mxu0 0.0
    %5096 = vmatmul.mubr.f32.gmra.mrb[0].mxu0 %v5006
    %v5097 = vpop.f32.mrb[0].mxu0
    %v5098 = vadd.f32 %v4969, %v5097
    %v5099 = vpop.f32.mrb[0].mxu0
    %5100 = vmatprep.mubr.f32.mxu0 0.0
    %5101 = vmatmul.mubr.f32.gmra.mrb[0].mxu0 %v5009
    %v5102 = vpop.f32.mrb[0].mxu0
    %v5103 = vadd.f32 %v4974, %v5102
    %v5104 = vpop.f32.mrb[0].mxu0
    %5105 = vmatprep.mubr.f32.mxu0 0.0
    %5106 = vmatmul.mubr.f32.gmra.mrb[0].mxu0 %v5012
    %v5107 = vpop.f32.mrb[0].mxu0
    %v5108 = vadd.f32 %v4979, %v5107
    %v5109 = vpop.f32.mrb[0].mxu0
    %5110 = vmatprep.mubr.f32.mxu0 0.0
    %5111 = vmatmul.mubr.f32.gmra.mrb[0].mxu0 %v5015
    %v5112 = vpop.f32.mrb[0].mxu0
    %v5113 = vadd.f32 %v4984, %v5112
    %v5114 = vpop.f32.mrb[0].mxu0
    %5115 = vmatprep.mubr.f32.mxu0 0.0
    %5116 = vmatmul.mubr.f32.gmra.mrb[0].mxu0 %v5018
    %v5117 = vpop.f32.mrb[0].mxu0
    %v5118 = vadd.f32 %v4989, %v5117
    %v5119 = vpop.f32.mrb[0].mxu0
    %5120 = vmatprep.mubr.f32.mxu0 0.0
    %5121 = vmatmul.mubr.f32.gmra.mrb[0].mxu0 %v5021
    %v5122 = vpop.f32.mrb[0].mxu0
    %v5123 = vadd.f32 %v4994, %v5122
    %v5124 = vpop.f32.mrb[0].mxu0
    %5125 = vmatprep.mubr.f32.mxu0 0.0
    %5126 = vmatmul.mubr.f32.gmra.mrb[0].mxu0 %v5024
    %v5127 = vpop.f32.mrb[0].mxu0
    %v5128 = vadd.f32 %v4999, %v5127
    %v5129 = vpop.f32.mrb[0].mxu0
    %5130 = vdwg.mxu0
    %v5131 = vld [vmem:[%s15] sm:$0x1]
    %v5133 = vlaneseq
    %v5134 = vshrl.u32 %v5133, 7
    %v5135 = vsub.s32 0, %v5134
    %v5136 = vrot.slane %v5131, %v5135
    %v5138 = vadd.f32 %v5093, %v5136
    %v5139 = vadd.f32 %v5098, %v5136
    %v5140 = vadd.f32 %v5103, %v5136
    %v5141 = vadd.f32 %v5108, %v5136
    %v5142 = vadd.f32 %v5113, %v5136
    %v5143 = vadd.f32 %v5118, %v5136
    %v5144 = vadd.f32 %v5123, %v5136
    %v5145 = vadd.f32 %v5128, %v5136
    %5146 = vst.msk [vmem:[#allocation10] sm:$0xff] %vm315, %v5138
    %5147 = vst.msk [vmem:[#allocation10 + $0x8] sm:$0xff] %vm315, %v5139
    %5148 = vst.msk [vmem:[#allocation10 + $0x10] sm:$0xff] %vm315, %v5140
    %5149 = vst.msk [vmem:[#allocation10 + $0x18] sm:$0xff] %vm315, %v5141
    %5150 = vst.msk [vmem:[#allocation10 + $0x20] sm:$0xff] %vm315, %v5142
    %5151 = vst.msk [vmem:[#allocation10 + $0x28] sm:$0xff] %vm315, %v5143
    %5152 = vst.msk [vmem:[#allocation10 + $0x30] sm:$0xff] %vm315, %v5144
    %5153 = vst.msk [vmem:[#allocation10 + $0x38] sm:$0xff] %vm315, %v5145
    %v5154 = vld [vmem:[%s14] sm:$0xff]
    %v5155 = vld [vmem:[%s14 + $0x8] sm:$0xff]
    %s5156 = scalar_lea.vmem [#allocation10], 56
    %v5157 = vld [vmem:[%s5156] sm:$0xff]
    %vm5158 = vcmask 130048
    %v5159 = vsel %vm5158, 0.0, 0
    %5161 = vmatprep.subr.mxu0 0.0
    %5162 = vmatpush1.msra.mxu0 %v5154
    %5163 = vmatprep.subr.mxu0 0.0
    %5164 = vmatpush1.msra.mxu0 %v5155
    %5165 = vmatprep.subr.mxu0 0.0
    %5166 = vmatpush1.msra.mxu0 0.0
    %5167 = vmatprep.subr.mxu0 0.0
    %5168 = vmatpush1.msra.mxu0 0.0
    %5169 = vmatprep.subr.mxu0 0.0
    %5170 = vmatpush1.msra.mxu0 0.0
    %5171 = vmatprep.subr.mxu0 0.0
    %5172 = vmatpush1.msra.mxu0 0.0
    %5173 = vmatprep.subr.mxu0 0.0
    %5174 = vmatpush1.msra.mxu0 0.0
    %5175 = vmatprep.subr.mxu0 0.0
    %5176 = vmatpush1.msra.mxu0 0.0
    %5177 = vmatprep.subr.mxu0 0.0
    %5178 = vmatpush1.msra.mxu0 0.0
    %5179 = vmatprep.subr.mxu0 0.0
    %5180 = vmatpush1.msra.mxu0 0.0
    %5181 = vmatprep.subr.mxu0 0.0
    %5182 = vmatpush1.msra.mxu0 0.0
    %5183 = vmatprep.subr.mxu0 0.0
    %5184 = vmatpush1.msra.mxu0 0.0
    %5185 = vmatprep.subr.mxu0 0.0
    %5186 = vmatpush1.msra.mxu0 0.0
    %5187 = vmatprep.subr.mxu0 0.0
    %5188 = vmatpush1.msra.mxu0 0.0
    %5189 = vmatprep.subr.mxu0 0.0
    %5190 = vmatpush1.msra.mxu0 0.0
    %5191 = vmatprep.subr.mxu0 0.0
    %5192 = vmatpush1.msra.mxu0 0.0
    %5193 = vmatprep.subr.mxu0 0.0
    %5194 = vmatpush1.msra.mxu0 0.0
    %5195 = vmatprep.subr.mxu0 0.0
    %5196 = vmatpush1.msra.mxu0 0.0
    %5197 = vmatprep.subr.mxu0 0.0
    %5198 = vmatpush1.msra.mxu0 0.0
    %5199 = vmatprep.subr.mxu0 0.0
    %5200 = vmatpush1.msra.mxu0 0.0
    %5201 = vmatprep.subr.mxu0 0.0
    %5202 = vmatpush1.msra.mxu0 0.0
    %5203 = vmatprep.subr.mxu0 0.0
    %5204 = vmatpush1.msra.mxu0 0.0
    %5205 = vmatprep.subr.mxu0 0.0
    %5206 = vmatpush1.msra.mxu0 0.0
    %5207 = vmatprep.subr.mxu0 0.0
    %5208 = vmatpush1.msra.mxu0 0.0
    %5209 = vmatprep.subr.mxu0 0.0
    %5210 = vmatpush1.msra.mxu0 0.0
    %5211 = vmatprep.subr.mxu0 0.0
    %5212 = vmatpush1.msra.mxu0 0.0
    %5213 = vmatprep.subr.mxu0 0.0
    %5214 = vmatpush1.msra.mxu0 0.0
    %5215 = vmatprep.subr.mxu0 0.0
    %5216 = vmatpush1.msra.mxu0 0.0
    %5217 = vmatprep.subr.mxu0 0.0
    %5218 = vmatpush1.msra.mxu0 0.0
    %5219 = vmatprep.subr.mxu0 0.0
    %5220 = vmatpush1.msra.mxu0 0.0
    %5221 = vmatprep.subr.mxu0 0.0
    %5222 = vmatpush1.msra.mxu0 0.0
    %5223 = vmatprep.subr.mxu0 0.0
    %5224 = vmatpush1.msra.mxu0 0.0
    %5225 = vmatprep.mubr.f32.mxu0 0.0
    %5226 = vmatmul.mubr.f32.gmra.mrb[0].mxu0 %v5159
    %v5227 = vpop.f32.mrb[0].mxu0
    %v5228 = vadd.f32 0.0, %v5227
    %v5229 = vpop.f32.mrb[0].mxu0
    %5230 = vdwg.mxu0
    %v5231 = vadd.f32 %v5157, %v5228
    %v5232 = vxor.u32 %v5231, 2147483648
    %v5233 = vmul.f32 %v5232, 1.442695
    %v5234 = vpow.pop %v5233
    %v5235 = vadd.f32 %v5234, 1.0
    %v5236 = vrcp.pop %v5235
    %v5237 = vmul.f32 1.0, %v5236
    %v5238 = vtanh.pop %v5231
    %v5239 = vmul.f32 %v5237, 0.0
    %5241 = vrot.lane.b32.xlu0 %v5238, 80
    %v5242 = vpop.permute.xlu0 %5241
    %v5244 = vmul.f32 %v5237, %v5242
    %5246 = vrot.lane.b32.xlu0 %v5244, 16
    %v5247 = vpop.permute.xlu0 %5246
    %v5249 = vadd.f32 %v5239, %v5247
    %v5250 = vtanh.pop %v5249
    %5252 = vrot.lane.b32.xlu0 %v5250, 16
    %v5253 = vpop.permute.xlu0 %5252
    %v5255 = vmul.f32 %v5237, %v5253
    %s5256 = scalar_lea.vmem [#allocation10], 48
    %v5257 = vld [vmem:[%s5256] sm:$0xff]
    %5259 = vrot.lane.b32.xlu0 %v5255, 96
    %v5260 = vpop.permute.xlu0 %5259
    %v5261 = vsel %vm5158, %v5260, 0
    %5263 = vmatprep.subr.mxu0 0.0
    %5264 = vmatpush1.msra.mxu0 %v5154
    %5265 = vmatprep.subr.mxu0 0.0
    %5266 = vmatpush1.msra.mxu0 %v5155
    %5267 = vmatprep.subr.mxu0 0.0
    %5268 = vmatpush1.msra.mxu0 0.0
    %5269 = vmatprep.subr.mxu0 0.0
    %5270 = vmatpush1.msra.mxu0 0.0
    %5271 = vmatprep.subr.mxu0 0.0
    %5272 = vmatpush1.msra.mxu0 0.0
    %5273 = vmatprep.subr.mxu0 0.0
    %5274 = vmatpush1.msra.mxu0 0.0
    %5275 = vmatprep.subr.mxu0 0.0
    %5276 = vmatpush1.msra.mxu0 0.0
    %5277 = vmatprep.subr.mxu0 0.0
    %5278 = vmatpush1.msra.mxu0 0.0
    %5279 = vmatprep.subr.mxu0 0.0
    %5280 = vmatpush1.msra.mxu0 0.0
    %5281 = vmatprep.subr.mxu0 0.0
    %5282 = vmatpush1.msra.mxu0 0.0
    %5283 = vmatprep.subr.mxu0 0.0
    %5284 = vmatpush1.msra.mxu0 0.0
    %5285 = vmatprep.subr.mxu0 0.0
    %5286 = vmatpush1.msra.mxu0 0.0
    %5287 = vmatprep.subr.mxu0 0.0
    %5288 = vmatpush1.msra.mxu0 0.0
    %5289 = vmatprep.subr.mxu0 0.0
    %5290 = vmatpush1.msra.mxu0 0.0
    %5291 = vmatprep.subr.mxu0 0.0
    %5292 = vmatpush1.msra.mxu0 0.0
    %5293 = vmatprep.subr.mxu0 0.0
    %5294 = vmatpush1.msra.mxu0 0.0
    %5295 = vmatprep.subr.mxu0 0.0
    %5296 = vmatpush1.msra.mxu0 0.0
    %5297 = vmatprep.subr.mxu0 0.0
    %5298 = vmatpush1.msra.mxu0 0.0
    %5299 = vmatprep.subr.mxu0 0.0
    %5300 = vmatpush1.msra.mxu0 0.0
    %5301 = vmatprep.subr.mxu0 0.0
    %5302 = vmatpush1.msra.mxu0 0.0
    %5303 = vmatprep.subr.mxu0 0.0
    %5304 = vmatpush1.msra.mxu0 0.0
    %5305 = vmatprep.subr.mxu0 0.0
    %5306 = vmatpush1.msra.mxu0 0.0
    %5307 = vmatprep.subr.mxu0 0.0
    %5308 = vmatpush1.msra.mxu0 0.0
    %5309 = vmatprep.subr.mxu0 0.0
    %5310 = vmatpush1.msra.mxu0 0.0
    %5311 = vmatprep.subr.mxu0 0.0
    %5312 = vmatpush1.msra.mxu0 0.0
    %5313 = vmatprep.subr.mxu0 0.0
    %5314 = vmatpush1.msra.mxu0 0.0
    %5315 = vmatprep.subr.mxu0 0.0
    %5316 = vmatpush1.msra.mxu0 0.0
    %5317 = vmatprep.subr.mxu0 0.0
    %5318 = vmatpush1.msra.mxu0 0.0
    %5319 = vmatprep.subr.mxu0 0.0
    %5320 = vmatpush1.msra.mxu0 0.0
    %5321 = vmatprep.subr.mxu0 0.0
    %5322 = vmatpush1.msra.mxu0 0.0
    %5323 = vmatprep.subr.mxu0 0.0
    %5324 = vmatpush1.msra.mxu0 0.0
    %5325 = vmatprep.subr.mxu0 0.0
    %5326 = vmatpush1.msra.mxu0 0.0
    %5327 = vmatprep.mubr.f32.mxu0 0.0
    %5328 = vmatmul.mubr.f32.gmra.mrb[0].mxu0 %v5261
    %v5329 = vpop.f32.mrb[0].mxu0
    %v5330 = vadd.f32 0.0, %v5329
    %v5331 = vpop.f32.mrb[0].mxu0
    %5332 = vdwg.mxu0
    %v5333 = vadd.f32 %v5257, %v5330
    %v5334 = vxor.u32 %v5333, 2147483648
    %v5335 = vmul.f32 %v5334, 1.442695
    %v5336 = vpow.pop %v5335
    %v5337 = vadd.f32 %v5336, 1.0
    %v5338 = vrcp.pop %v5337
    %v5339 = vmul.f32 1.0, %v5338
    %v5340 = vtanh.pop %v5333
    %v5341 = vmul.f32 %v5339, %v5249
    %5343 = vrot.lane.b32.xlu0 %v5340, 80
    %v5344 = vpop.permute.xlu0 %5343
    %v5346 = vmul.f32 %v5339, %v5344
    %5348 = vrot.lane.b32.xlu0 %v5346, 16
    %v5349 = vpop.permute.xlu0 %5348
    %v5351 = vadd.f32 %v5341, %v5349
    %v5352 = vtanh.pop %v5351
    %5354 = vrot.lane.b32.xlu0 %v5352, 16
    %v5355 = vpop.permute.xlu0 %5354
    %v5357 = vmul.f32 %v5339, %v5355
    %s5358 = scalar_lea.vmem [#allocation10], 40
    %v5359 = vld [vmem:[%s5358] sm:$0xff]
    %5361 = vrot.lane.b32.xlu0 %v5357, 96
    %v5362 = vpop.permute.xlu0 %5361
    %v5363 = vsel %vm5158, %v5362, 0
    %5365 = vmatprep.subr.mxu0 0.0
    %5366 = vmatpush1.msra.mxu0 %v5154
    %5367 = vmatprep.subr.mxu0 0.0
    %5368 = vmatpush1.msra.mxu0 %v5155
    %5369 = vmatprep.subr.mxu0 0.0
    %5370 = vmatpush1.msra.mxu0 0.0
    %5371 = vmatprep.subr.mxu0 0.0
    %5372 = vmatpush1.msra.mxu0 0.0
    %5373 = vmatprep.subr.mxu0 0.0
    %5374 = vmatpush1.msra.mxu0 0.0
    %5375 = vmatprep.subr.mxu0 0.0
    %5376 = vmatpush1.msra.mxu0 0.0
    %5377 = vmatprep.subr.mxu0 0.0
    %5378 = vmatpush1.msra.mxu0 0.0
    %5379 = vmatprep.subr.mxu0 0.0
    %5380 = vmatpush1.msra.mxu0 0.0
    %5381 = vmatprep.subr.mxu0 0.0
    %5382 = vmatpush1.msra.mxu0 0.0
    %5383 = vmatprep.subr.mxu0 0.0
    %5384 = vmatpush1.msra.mxu0 0.0
    %5385 = vmatprep.subr.mxu0 0.0
    %5386 = vmatpush1.msra.mxu0 0.0
    %5387 = vmatprep.subr.mxu0 0.0
    %5388 = vmatpush1.msra.mxu0 0.0
    %5389 = vmatprep.subr.mxu0 0.0
    %5390 = vmatpush1.msra.mxu0 0.0
    %5391 = vmatprep.subr.mxu0 0.0
    %5392 = vmatpush1.msra.mxu0 0.0
    %5393 = vmatprep.subr.mxu0 0.0
    %5394 = vmatpush1.msra.mxu0 0.0
    %5395 = vmatprep.subr.mxu0 0.0
    %5396 = vmatpush1.msra.mxu0 0.0
    %5397 = vmatprep.subr.mxu0 0.0
    %5398 = vmatpush1.msra.mxu0 0.0
    %5399 = vmatprep.subr.mxu0 0.0
    %5400 = vmatpush1.msra.mxu0 0.0
    %5401 = vmatprep.subr.mxu0 0.0
    %5402 = vmatpush1.msra.mxu0 0.0
    %5403 = vmatprep.subr.mxu0 0.0
    %5404 = vmatpush1.msra.mxu0 0.0
    %5405 = vmatprep.subr.mxu0 0.0
    %5406 = vmatpush1.msra.mxu0 0.0
    %5407 = vmatprep.subr.mxu0 0.0
    %5408 = vmatpush1.msra.mxu0 0.0
    %5409 = vmatprep.subr.mxu0 0.0
    %5410 = vmatpush1.msra.mxu0 0.0
    %5411 = vmatprep.subr.mxu0 0.0
    %5412 = vmatpush1.msra.mxu0 0.0
    %5413 = vmatprep.subr.mxu0 0.0
    %5414 = vmatpush1.msra.mxu0 0.0
    %5415 = vmatprep.subr.mxu0 0.0
    %5416 = vmatpush1.msra.mxu0 0.0
    %5417 = vmatprep.subr.mxu0 0.0
    %5418 = vmatpush1.msra.mxu0 0.0
    %5419 = vmatprep.subr.mxu0 0.0
    %5420 = vmatpush1.msra.mxu0 0.0
    %5421 = vmatprep.subr.mxu0 0.0
    %5422 = vmatpush1.msra.mxu0 0.0
    %5423 = vmatprep.subr.mxu0 0.0
    %5424 = vmatpush1.msra.mxu0 0.0
    %5425 = vmatprep.subr.mxu0 0.0
    %5426 = vmatpush1.msra.mxu0 0.0
    %5427 = vmatprep.subr.mxu0 0.0
    %5428 = vmatpush1.msra.mxu0 0.0
    %5429 = vmatprep.mubr.f32.mxu0 0.0
    %5430 = vmatmul.mubr.f32.gmra.mrb[0].mxu0 %v5363
    %v5431 = vpop.f32.mrb[0].mxu0
    %v5432 = vadd.f32 0.0, %v5431
    %v5433 = vpop.f32.mrb[0].mxu0
    %5434 = vdwg.mxu0
    %v5435 = vadd.f32 %v5359, %v5432
    %v5436 = vxor.u32 %v5435, 2147483648
    %v5437 = vmul.f32 %v5436, 1.442695
    %v5438 = vpow.pop %v5437
    %v5439 = vadd.f32 %v5438, 1.0
    %v5440 = vrcp.pop %v5439
    %v5441 = vmul.f32 1.0, %v5440
    %v5442 = vtanh.pop %v5435
    %v5443 = vmul.f32 %v5441, %v5351
    %5445 = vrot.lane.b32.xlu0 %v5442, 80
    %v5446 = vpop.permute.xlu0 %5445
    %v5448 = vmul.f32 %v5441, %v5446
    %5450 = vrot.lane.b32.xlu0 %v5448, 16
    %v5451 = vpop.permute.xlu0 %5450
    %v5453 = vadd.f32 %v5443, %v5451
    %v5454 = vtanh.pop %v5453
    %5456 = vrot.lane.b32.xlu0 %v5454, 16
    %v5457 = vpop.permute.xlu0 %5456
    %v5459 = vmul.f32 %v5441, %v5457
    %s5460 = scalar_lea.vmem [#allocation10], 32
    %v5461 = vld [vmem:[%s5460] sm:$0xff]
    %5463 = vrot.lane.b32.xlu0 %v5459, 96
    %v5464 = vpop.permute.xlu0 %5463
    %v5465 = vsel %vm5158, %v5464, 0
    %5467 = vmatprep.subr.mxu0 0.0
    %5468 = vmatpush1.msra.mxu0 %v5154
    %5469 = vmatprep.subr.mxu0 0.0
    %5470 = vmatpush1.msra.mxu0 %v5155
    %5471 = vmatprep.subr.mxu0 0.0
    %5472 = vmatpush1.msra.mxu0 0.0
    %5473 = vmatprep.subr.mxu0 0.0
    %5474 = vmatpush1.msra.mxu0 0.0
    %5475 = vmatprep.subr.mxu0 0.0
    %5476 = vmatpush1.msra.mxu0 0.0
    %5477 = vmatprep.subr.mxu0 0.0
    %5478 = vmatpush1.msra.mxu0 0.0
    %5479 = vmatprep.subr.mxu0 0.0
    %5480 = vmatpush1.msra.mxu0 0.0
    %5481 = vmatprep.subr.mxu0 0.0
    %5482 = vmatpush1.msra.mxu0 0.0
    %5483 = vmatprep.subr.mxu0 0.0
    %5484 = vmatpush1.msra.mxu0 0.0
    %5485 = vmatprep.subr.mxu0 0.0
    %5486 = vmatpush1.msra.mxu0 0.0
    %5487 = vmatprep.subr.mxu0 0.0
    %5488 = vmatpush1.msra.mxu0 0.0
    %5489 = vmatprep.subr.mxu0 0.0
    %5490 = vmatpush1.msra.mxu0 0.0
    %5491 = vmatprep.subr.mxu0 0.0
    %5492 = vmatpush1.msra.mxu0 0.0
    %5493 = vmatprep.subr.mxu0 0.0
    %5494 = vmatpush1.msra.mxu0 0.0
    %5495 = vmatprep.subr.mxu0 0.0
    %5496 = vmatpush1.msra.mxu0 0.0
    %5497 = vmatprep.subr.mxu0 0.0
    %5498 = vmatpush1.msra.mxu0 0.0
    %5499 = vmatprep.subr.mxu0 0.0
    %5500 = vmatpush1.msra.mxu0 0.0
    %5501 = vmatprep.subr.mxu0 0.0
    %5502 = vmatpush1.msra.mxu0 0.0
    %5503 = vmatprep.subr.mxu0 0.0
    %5504 = vmatpush1.msra.mxu0 0.0
    %5505 = vmatprep.subr.mxu0 0.0
    %5506 = vmatpush1.msra.mxu0 0.0
    %5507 = vmatprep.subr.mxu0 0.0
    %5508 = vmatpush1.msra.mxu0 0.0
    %5509 = vmatprep.subr.mxu0 0.0
    %5510 = vmatpush1.msra.mxu0 0.0
    %5511 = vmatprep.subr.mxu0 0.0
    %5512 = vmatpush1.msra.mxu0 0.0
    %5513 = vmatprep.subr.mxu0 0.0
    %5514 = vmatpush1.msra.mxu0 0.0
    %5515 = vmatprep.subr.mxu0 0.0
    %5516 = vmatpush1.msra.mxu0 0.0
    %5517 = vmatprep.subr.mxu0 0.0
    %5518 = vmatpush1.msra.mxu0 0.0
    %5519 = vmatprep.subr.mxu0 0.0
    %5520 = vmatpush1.msra.mxu0 0.0
    %5521 = vmatprep.subr.mxu0 0.0
    %5522 = vmatpush1.msra.mxu0 0.0
    %5523 = vmatprep.subr.mxu0 0.0
    %5524 = vmatpush1.msra.mxu0 0.0
    %5525 = vmatprep.subr.mxu0 0.0
    %5526 = vmatpush1.msra.mxu0 0.0
    %5527 = vmatprep.subr.mxu0 0.0
    %5528 = vmatpush1.msra.mxu0 0.0
    %5529 = vmatprep.subr.mxu0 0.0
    %5530 = vmatpush1.msra.mxu0 0.0
    %5531 = vmatprep.mubr.f32.mxu0 0.0
    %5532 = vmatmul.mubr.f32.gmra.mrb[0].mxu0 %v5465
    %v5533 = vpop.f32.mrb[0].mxu0
    %v5534 = vadd.f32 0.0, %v5533
    %v5535 = vpop.f32.mrb[0].mxu0
    %5536 = vdwg.mxu0
    %v5537 = vadd.f32 %v5461, %v5534
    %v5538 = vxor.u32 %v5537, 2147483648
    %v5539 = vmul.f32 %v5538, 1.442695
    %v5540 = vpow.pop %v5539
    %v5541 = vadd.f32 %v5540, 1.0
    %v5542 = vrcp.pop %v5541
    %v5543 = vmul.f32 1.0, %v5542
    %v5544 = vtanh.pop %v5537
    %v5545 = vmul.f32 %v5543, %v5453
    %5547 = vrot.lane.b32.xlu0 %v5544, 80
    %v5548 = vpop.permute.xlu0 %5547
    %v5550 = vmul.f32 %v5543, %v5548
    %5552 = vrot.lane.b32.xlu0 %v5550, 16
    %v5553 = vpop.permute.xlu0 %5552
    %v5555 = vadd.f32 %v5545, %v5553
    %v5556 = vtanh.pop %v5555
    %5558 = vrot.lane.b32.xlu0 %v5556, 16
    %v5559 = vpop.permute.xlu0 %5558
    %v5561 = vmul.f32 %v5543, %v5559
    %s5562 = scalar_lea.vmem [#allocation10], 24
    %v5563 = vld [vmem:[%s5562] sm:$0xff]
    %5565 = vrot.lane.b32.xlu0 %v5561, 96
    %v5566 = vpop.permute.xlu0 %5565
    %v5567 = vsel %vm5158, %v5566, 0
    %5569 = vmatprep.subr.mxu0 0.0
    %5570 = vmatpush1.msra.mxu0 %v5154
    %5571 = vmatprep.subr.mxu0 0.0
    %5572 = vmatpush1.msra.mxu0 %v5155
    %5573 = vmatprep.subr.mxu0 0.0
    %5574 = vmatpush1.msra.mxu0 0.0
    %5575 = vmatprep.subr.mxu0 0.0
    %5576 = vmatpush1.msra.mxu0 0.0
    %5577 = vmatprep.subr.mxu0 0.0
    %5578 = vmatpush1.msra.mxu0 0.0
    %5579 = vmatprep.subr.mxu0 0.0
    %5580 = vmatpush1.msra.mxu0 0.0
    %5581 = vmatprep.subr.mxu0 0.0
    %5582 = vmatpush1.msra.mxu0 0.0
    %5583 = vmatprep.subr.mxu0 0.0
    %5584 = vmatpush1.msra.mxu0 0.0
    %5585 = vmatprep.subr.mxu0 0.0
    %5586 = vmatpush1.msra.mxu0 0.0
    %5587 = vmatprep.subr.mxu0 0.0
    %5588 = vmatpush1.msra.mxu0 0.0
    %5589 = vmatprep.subr.mxu0 0.0
    %5590 = vmatpush1.msra.mxu0 0.0
    %5591 = vmatprep.subr.mxu0 0.0
    %5592 = vmatpush1.msra.mxu0 0.0
    %5593 = vmatprep.subr.mxu0 0.0
    %5594 = vmatpush1.msra.mxu0 0.0
    %5595 = vmatprep.subr.mxu0 0.0
    %5596 = vmatpush1.msra.mxu0 0.0
    %5597 = vmatprep.subr.mxu0 0.0
    %5598 = vmatpush1.msra.mxu0 0.0
    %5599 = vmatprep.subr.mxu0 0.0
    %5600 = vmatpush1.msra.mxu0 0.0
    %5601 = vmatprep.subr.mxu0 0.0
    %5602 = vmatpush1.msra.mxu0 0.0
    %5603 = vmatprep.subr.mxu0 0.0
    %5604 = vmatpush1.msra.mxu0 0.0
    %5605 = vmatprep.subr.mxu0 0.0
    %5606 = vmatpush1.msra.mxu0 0.0
    %5607 = vmatprep.subr.mxu0 0.0
    %5608 = vmatpush1.msra.mxu0 0.0
    %5609 = vmatprep.subr.mxu0 0.0
    %5610 = vmatpush1.msra.mxu0 0.0
    %5611 = vmatprep.subr.mxu0 0.0
    %5612 = vmatpush1.msra.mxu0 0.0
    %5613 = vmatprep.subr.mxu0 0.0
    %5614 = vmatpush1.msra.mxu0 0.0
    %5615 = vmatprep.subr.mxu0 0.0
    %5616 = vmatpush1.msra.mxu0 0.0
    %5617 = vmatprep.subr.mxu0 0.0
    %5618 = vmatpush1.msra.mxu0 0.0
    %5619 = vmatprep.subr.mxu0 0.0
    %5620 = vmatpush1.msra.mxu0 0.0
    %5621 = vmatprep.subr.mxu0 0.0
    %5622 = vmatpush1.msra.mxu0 0.0
    %5623 = vmatprep.subr.mxu0 0.0
    %5624 = vmatpush1.msra.mxu0 0.0
    %5625 = vmatprep.subr.mxu0 0.0
    %5626 = vmatpush1.msra.mxu0 0.0
    %5627 = vmatprep.subr.mxu0 0.0
    %5628 = vmatpush1.msra.mxu0 0.0
    %5629 = vmatprep.subr.mxu0 0.0
    %5630 = vmatpush1.msra.mxu0 0.0
    %5631 = vmatprep.subr.mxu0 0.0
    %5632 = vmatpush1.msra.mxu0 0.0
    %5633 = vmatprep.mubr.f32.mxu0 0.0
    %5634 = vmatmul.mubr.f32.gmra.mrb[0].mxu0 %v5567
    %v5635 = vpop.f32.mrb[0].mxu0
    %v5636 = vadd.f32 0.0, %v5635
    %v5637 = vpop.f32.mrb[0].mxu0
    %5638 = vdwg.mxu0
    %v5639 = vadd.f32 %v5563, %v5636
    %v5640 = vxor.u32 %v5639, 2147483648
    %v5641 = vmul.f32 %v5640, 1.442695
    %v5642 = vpow.pop %v5641
    %v5643 = vadd.f32 %v5642, 1.0
    %v5644 = vrcp.pop %v5643
    %v5645 = vmul.f32 1.0, %v5644
    %v5646 = vtanh.pop %v5639
    %v5647 = vmul.f32 %v5645, %v5555
    %5649 = vrot.lane.b32.xlu0 %v5646, 80
    %v5650 = vpop.permute.xlu0 %5649
    %v5652 = vmul.f32 %v5645, %v5650
    %5654 = vrot.lane.b32.xlu0 %v5652, 16
    %v5655 = vpop.permute.xlu0 %5654
    %v5657 = vadd.f32 %v5647, %v5655
    %v5658 = vtanh.pop %v5657
    %5660 = vrot.lane.b32.xlu0 %v5658, 16
    %v5661 = vpop.permute.xlu0 %5660
    %v5663 = vmul.f32 %v5645, %v5661
    %s5664 = scalar_lea.vmem [#allocation10], 16
    %v5665 = vld [vmem:[%s5664] sm:$0xff]
    %5667 = vrot.lane.b32.xlu0 %v5663, 96
    %v5668 = vpop.permute.xlu0 %5667
    %v5669 = vsel %vm5158, %v5668, 0
    %5671 = vmatprep.subr.mxu0 0.0
    %5672 = vmatpush1.msra.mxu0 %v5154
    %5673 = vmatprep.subr.mxu0 0.0
    %5674 = vmatpush1.msra.mxu0 %v5155
    %5675 = vmatprep.subr.mxu0 0.0
    %5676 = vmatpush1.msra.mxu0 0.0
    %5677 = vmatprep.subr.mxu0 0.0
    %5678 = vmatpush1.msra.mxu0 0.0
    %5679 = vmatprep.subr.mxu0 0.0
    %5680 = vmatpush1.msra.mxu0 0.0
    %5681 = vmatprep.subr.mxu0 0.0
    %5682 = vmatpush1.msra.mxu0 0.0
    %5683 = vmatprep.subr.mxu0 0.0
    %5684 = vmatpush1.msra.mxu0 0.0
    %5685 = vmatprep.subr.mxu0 0.0
    %5686 = vmatpush1.msra.mxu0 0.0
    %5687 = vmatprep.subr.mxu0 0.0
    %5688 = vmatpush1.msra.mxu0 0.0
    %5689 = vmatprep.subr.mxu0 0.0
    %5690 = vmatpush1.msra.mxu0 0.0
    %5691 = vmatprep.subr.mxu0 0.0
    %5692 = vmatpush1.msra.mxu0 0.0
    %5693 = vmatprep.subr.mxu0 0.0
    %5694 = vmatpush1.msra.mxu0 0.0
    %5695 = vmatprep.subr.mxu0 0.0
    %5696 = vmatpush1.msra.mxu0 0.0
    %5697 = vmatprep.subr.mxu0 0.0
    %5698 = vmatpush1.msra.mxu0 0.0
    %5699 = vmatprep.subr.mxu0 0.0
    %5700 = vmatpush1.msra.mxu0 0.0
    %5701 = vmatprep.subr.mxu0 0.0
    %5702 = vmatpush1.msra.mxu0 0.0
    %5703 = vmatprep.subr.mxu0 0.0
    %5704 = vmatpush1.msra.mxu0 0.0
    %5705 = vmatprep.subr.mxu0 0.0
    %5706 = vmatpush1.msra.mxu0 0.0
    %5707 = vmatprep.subr.mxu0 0.0
    %5708 = vmatpush1.msra.mxu0 0.0
    %5709 = vmatprep.subr.mxu0 0.0
    %5710 = vmatpush1.msra.mxu0 0.0
    %5711 = vmatprep.subr.mxu0 0.0
    %5712 = vmatpush1.msra.mxu0 0.0
    %5713 = vmatprep.subr.mxu0 0.0
    %5714 = vmatpush1.msra.mxu0 0.0
    %5715 = vmatprep.subr.mxu0 0.0
    %5716 = vmatpush1.msra.mxu0 0.0
    %5717 = vmatprep.subr.mxu0 0.0
    %5718 = vmatpush1.msra.mxu0 0.0
    %5719 = vmatprep.subr.mxu0 0.0
    %5720 = vmatpush1.msra.mxu0 0.0
    %5721 = vmatprep.subr.mxu0 0.0
    %5722 = vmatpush1.msra.mxu0 0.0
    %5723 = vmatprep.subr.mxu0 0.0
    %5724 = vmatpush1.msra.mxu0 0.0
    %5725 = vmatprep.subr.mxu0 0.0
    %5726 = vmatpush1.msra.mxu0 0.0
    %5727 = vmatprep.subr.mxu0 0.0
    %5728 = vmatpush1.msra.mxu0 0.0
    %5729 = vmatprep.subr.mxu0 0.0
    %5730 = vmatpush1.msra.mxu0 0.0
    %5731 = vmatprep.subr.mxu0 0.0
    %5732 = vmatpush1.msra.mxu0 0.0
    %5733 = vmatprep.subr.mxu0 0.0
    %5734 = vmatpush1.msra.mxu0 0.0
    %5735 = vmatprep.mubr.f32.mxu0 0.0
    %5736 = vmatmul.mubr.f32.gmra.mrb[0].mxu0 %v5669
    %v5737 = vpop.f32.mrb[0].mxu0
    %v5738 = vadd.f32 0.0, %v5737
    %v5739 = vpop.f32.mrb[0].mxu0
    %5740 = vdwg.mxu0
    %v5741 = vadd.f32 %v5665, %v5738
    %v5742 = vxor.u32 %v5741, 2147483648
    %v5743 = vmul.f32 %v5742, 1.442695
    %v5744 = vpow.pop %v5743
    %v5745 = vadd.f32 %v5744, 1.0
    %v5746 = vrcp.pop %v5745
    %v5747 = vmul.f32 1.0, %v5746
    %v5748 = vtanh.pop %v5741
    %v5749 = vmul.f32 %v5747, %v5657
    %5751 = vrot.lane.b32.xlu0 %v5748, 80
    %v5752 = vpop.permute.xlu0 %5751
    %v5754 = vmul.f32 %v5747, %v5752
    %5756 = vrot.lane.b32.xlu0 %v5754, 16
    %v5757 = vpop.permute.xlu0 %5756
    %v5759 = vadd.f32 %v5749, %v5757
    %v5760 = vtanh.pop %v5759
    %5762 = vrot.lane.b32.xlu0 %v5760, 16
    %v5763 = vpop.permute.xlu0 %5762
    %v5765 = vmul.f32 %v5747, %v5763
    %s5766 = scalar_lea.vmem [#allocation10], 8
    %v5767 = vld [vmem:[%s5766] sm:$0xff]
    %5769 = vrot.lane.b32.xlu0 %v5765, 96
    %v5770 = vpop.permute.xlu0 %5769
    %v5771 = vsel %vm5158, %v5770, 0
    %5773 = vmatprep.subr.mxu0 0.0
    %5774 = vmatpush1.msra.mxu0 %v5154
    %5775 = vmatprep.subr.mxu0 0.0
    %5776 = vmatpush1.msra.mxu0 %v5155
    %5777 = vmatprep.subr.mxu0 0.0
    %5778 = vmatpush1.msra.mxu0 0.0
    %5779 = vmatprep.subr.mxu0 0.0
    %5780 = vmatpush1.msra.mxu0 0.0
    %5781 = vmatprep.subr.mxu0 0.0
    %5782 = vmatpush1.msra.mxu0 0.0
    %5783 = vmatprep.subr.mxu0 0.0
    %5784 = vmatpush1.msra.mxu0 0.0
    %5785 = vmatprep.subr.mxu0 0.0
    %5786 = vmatpush1.msra.mxu0 0.0
    %5787 = vmatprep.subr.mxu0 0.0
    %5788 = vmatpush1.msra.mxu0 0.0
    %5789 = vmatprep.subr.mxu0 0.0
    %5790 = vmatpush1.msra.mxu0 0.0
    %5791 = vmatprep.subr.mxu0 0.0
    %5792 = vmatpush1.msra.mxu0 0.0
    %5793 = vmatprep.subr.mxu0 0.0
    %5794 = vmatpush1.msra.mxu0 0.0
    %5795 = vmatprep.subr.mxu0 0.0
    %5796 = vmatpush1.msra.mxu0 0.0
    %5797 = vmatprep.subr.mxu0 0.0
    %5798 = vmatpush1.msra.mxu0 0.0
    %5799 = vmatprep.subr.mxu0 0.0
    %5800 = vmatpush1.msra.mxu0 0.0
    %5801 = vmatprep.subr.mxu0 0.0
    %5802 = vmatpush1.msra.mxu0 0.0
    %5803 = vmatprep.subr.mxu0 0.0
    %5804 = vmatpush1.msra.mxu0 0.0
    %5805 = vmatprep.subr.mxu0 0.0
    %5806 = vmatpush1.msra.mxu0 0.0
    %5807 = vmatprep.subr.mxu0 0.0
    %5808 = vmatpush1.msra.mxu0 0.0
    %5809 = vmatprep.subr.mxu0 0.0
    %5810 = vmatpush1.msra.mxu0 0.0
    %5811 = vmatprep.subr.mxu0 0.0
    %5812 = vmatpush1.msra.mxu0 0.0
    %5813 = vmatprep.subr.mxu0 0.0
    %5814 = vmatpush1.msra.mxu0 0.0
    %5815 = vmatprep.subr.mxu0 0.0
    %5816 = vmatpush1.msra.mxu0 0.0
    %5817 = vmatprep.subr.mxu0 0.0
    %5818 = vmatpush1.msra.mxu0 0.0
    %5819 = vmatprep.subr.mxu0 0.0
    %5820 = vmatpush1.msra.mxu0 0.0
    %5821 = vmatprep.subr.mxu0 0.0
    %5822 = vmatpush1.msra.mxu0 0.0
    %5823 = vmatprep.subr.mxu0 0.0
    %5824 = vmatpush1.msra.mxu0 0.0
    %5825 = vmatprep.subr.mxu0 0.0
    %5826 = vmatpush1.msra.mxu0 0.0
    %5827 = vmatprep.subr.mxu0 0.0
    %5828 = vmatpush1.msra.mxu0 0.0
    %5829 = vmatprep.subr.mxu0 0.0
    %5830 = vmatpush1.msra.mxu0 0.0
    %5831 = vmatprep.subr.mxu0 0.0
    %5832 = vmatpush1.msra.mxu0 0.0
    %5833 = vmatprep.subr.mxu0 0.0
    %5834 = vmatpush1.msra.mxu0 0.0
    %5835 = vmatprep.subr.mxu0 0.0
    %5836 = vmatpush1.msra.mxu0 0.0
    %5837 = vmatprep.mubr.f32.mxu0 0.0
    %5838 = vmatmul.mubr.f32.gmra.mrb[0].mxu0 %v5771
    %v5839 = vpop.f32.mrb[0].mxu0
    %v5840 = vadd.f32 0.0, %v5839
    %v5841 = vpop.f32.mrb[0].mxu0
    %5842 = vdwg.mxu0
    %v5843 = vadd.f32 %v5767, %v5840
    %v5844 = vxor.u32 %v5843, 2147483648
    %v5845 = vmul.f32 %v5844, 1.442695
    %v5846 = vpow.pop %v5845
    %v5847 = vadd.f32 %v5846, 1.0
    %v5848 = vrcp.pop %v5847
    %v5849 = vmul.f32 1.0, %v5848
    %v5850 = vtanh.pop %v5843
    %v5851 = vmul.f32 %v5849, %v5759
    %5853 = vrot.lane.b32.xlu0 %v5850, 80
    %v5854 = vpop.permute.xlu0 %5853
    %v5856 = vmul.f32 %v5849, %v5854
    %5858 = vrot.lane.b32.xlu0 %v5856, 16
    %v5859 = vpop.permute.xlu0 %5858
    %v5861 = vadd.f32 %v5851, %v5859
    %v5862 = vtanh.pop %v5861
    %5864 = vrot.lane.b32.xlu0 %v5862, 16
    %v5865 = vpop.permute.xlu0 %5864
    %v5867 = vmul.f32 %v5849, %v5865
    %v5868 = vld [vmem:[#allocation10] sm:$0xff]
    %5870 = vrot.lane.b32.xlu0 %v5867, 96
    %v5871 = vpop.permute.xlu0 %5870
    %v5872 = vsel %vm5158, %v5871, 0
    %5874 = vmatprep.subr.mxu0 0.0
    %5875 = vmatpush1.msra.mxu0 %v5154
    %5876 = vmatprep.subr.mxu0 0.0
    %5877 = vmatpush1.msra.mxu0 %v5155
    %5878 = vmatprep.subr.mxu0 0.0
    %5879 = vmatpush1.msra.mxu0 0.0
    %5880 = vmatprep.subr.mxu0 0.0
    %5881 = vmatpush1.msra.mxu0 0.0
    %5882 = vmatprep.subr.mxu0 0.0
    %5883 = vmatpush1.msra.mxu0 0.0
    %5884 = vmatprep.subr.mxu0 0.0
    %5885 = vmatpush1.msra.mxu0 0.0
    %5886 = vmatprep.subr.mxu0 0.0
    %5887 = vmatpush1.msra.mxu0 0.0
    %5888 = vmatprep.subr.mxu0 0.0
    %5889 = vmatpush1.msra.mxu0 0.0
    %5890 = vmatprep.subr.mxu0 0.0
    %5891 = vmatpush1.msra.mxu0 0.0
    %5892 = vmatprep.subr.mxu0 0.0
    %5893 = vmatpush1.msra.mxu0 0.0
    %5894 = vmatprep.subr.mxu0 0.0
    %5895 = vmatpush1.msra.mxu0 0.0
    %5896 = vmatprep.subr.mxu0 0.0
    %5897 = vmatpush1.msra.mxu0 0.0
    %5898 = vmatprep.subr.mxu0 0.0
    %5899 = vmatpush1.msra.mxu0 0.0
    %5900 = vmatprep.subr.mxu0 0.0
    %5901 = vmatpush1.msra.mxu0 0.0
    %5902 = vmatprep.subr.mxu0 0.0
    %5903 = vmatpush1.msra.mxu0 0.0
    %5904 = vmatprep.subr.mxu0 0.0
    %5905 = vmatpush1.msra.mxu0 0.0
    %5906 = vmatprep.subr.mxu0 0.0
    %5907 = vmatpush1.msra.mxu0 0.0
    %5908 = vmatprep.subr.mxu0 0.0
    %5909 = vmatpush1.msra.mxu0 0.0
    %5910 = vmatprep.subr.mxu0 0.0
    %5911 = vmatpush1.msra.mxu0 0.0
    %5912 = vmatprep.subr.mxu0 0.0
    %5913 = vmatpush1.msra.mxu0 0.0
    %5914 = vmatprep.subr.mxu0 0.0
    %5915 = vmatpush1.msra.mxu0 0.0
    %5916 = vmatprep.subr.mxu0 0.0
    %5917 = vmatpush1.msra.mxu0 0.0
    %5918 = vmatprep.subr.mxu0 0.0
    %5919 = vmatpush1.msra.mxu0 0.0
    %5920 = vmatprep.subr.mxu0 0.0
    %5921 = vmatpush1.msra.mxu0 0.0
    %5922 = vmatprep.subr.mxu0 0.0
    %5923 = vmatpush1.msra.mxu0 0.0
    %5924 = vmatprep.subr.mxu0 0.0
    %5925 = vmatpush1.msra.mxu0 0.0
    %5926 = vmatprep.subr.mxu0 0.0
    %5927 = vmatpush1.msra.mxu0 0.0
    %5928 = vmatprep.subr.mxu0 0.0
    %5929 = vmatpush1.msra.mxu0 0.0
    %5930 = vmatprep.subr.mxu0 0.0
    %5931 = vmatpush1.msra.mxu0 0.0
    %5932 = vmatprep.subr.mxu0 0.0
    %5933 = vmatpush1.msra.mxu0 0.0
    %5934 = vmatprep.subr.mxu0 0.0
    %5935 = vmatpush1.msra.mxu0 0.0
    %5936 = vmatprep.subr.mxu0 0.0
    %5937 = vmatpush1.msra.mxu0 0.0
    %5938 = vmatprep.mubr.f32.mxu0 0.0
    %5939 = vmatmul.mubr.f32.gmra.mrb[0].mxu0 %v5872
    %v5940 = vpop.f32.mrb[0].mxu0
    %v5941 = vadd.f32 0.0, %v5940
    %v5942 = vpop.f32.mrb[0].mxu0
    %5943 = vdwg.mxu0
    %v5944 = vadd.f32 %v5868, %v5941
    %v5945 = vxor.u32 %v5944, 2147483648
    %v5946 = vmul.f32 %v5945, 1.442695
    %v5947 = vpow.pop %v5946
    %v5948 = vadd.f32 %v5947, 1.0
    %v5949 = vrcp.pop %v5948
    %v5950 = vmul.f32 1.0, %v5949
    %v5951 = vtanh.pop %v5944
    %v5952 = vmul.f32 %v5950, %v5861
    %5954 = vrot.lane.b32.xlu0 %v5951, 80
    %v5955 = vpop.permute.xlu0 %5954
    %v5957 = vmul.f32 %v5950, %v5955
    %5959 = vrot.lane.b32.xlu0 %v5957, 16
    %v5960 = vpop.permute.xlu0 %5959
    %v5962 = vadd.f32 %v5952, %v5960
    %v5963 = vtanh.pop %v5962
    %5965 = vrot.lane.b32.xlu0 %v5963, 16
    %v5966 = vpop.permute.xlu0 %5965
    %v5968 = vmul.f32 %v5950, %v5966
    %5970 = vrot.lane.b32.xlu0 %v5968, 96
    %v5971 = vpop.permute.xlu0 %5970
    %5973 = vst.msk [vmem:[%s16] sm:$0xff] %vm5158, %v5971
    // Predicated region
    $region98: #{quadruplet_lstm.1} parent=1 // pred_check
      _
    $region99: #{quadruplet_lstm.1} parent=1 // pred_check_branch
      %5975 = sbr.rel (0) target = $region101
    $region100: #{quadruplet_lstm.1} parent=1 // pred_region
      _
    $region101: #{quadruplet_lstm.1} parent=1 // pred_fallthru
      _
    // Predicated region
    $region102: #{quadruplet_lstm.1} parent=1 // pred_check
      _
    $region103: #{quadruplet_lstm.1} parent=1 // pred_check_branch
      %5977 = sbr.rel (0) target = $region105
    $region104: #{quadruplet_lstm.1} parent=1 // pred_region
      _
    $region105: #{quadruplet_lstm.1} parent=1 // pred_fallthru
      _
    %5978 = vsyncpa [#allocation12], 1
    %5979 = vsyncpa [#allocation14], 1
    %5980 = vsyncpa [#allocation17], 1
    %5981 = vsyncpa [#allocation20], 1
    %5982 = vsyncpa [#allocation23], 1

</llo_original>
